<compile_context>
chip_gen: v6e
topology: v6e:2x2x1
jax: 0.10.0
libtpu: 0.0.40
codegen_flags: <defaults>
</compile_context>

<pallas_src>
import math

import jax
import jax.numpy as jnp
from jax import lax
from jax.experimental import pallas as pl
from jax.experimental.pallas import tpu as pltpu


# ---------------------------------------------------------------------------
# Fused InceptionC kernel: one batch tile per grid step, everything in VMEM.
# ---------------------------------------------------------------------------
def _inception_c_kernel(
        x_ref,
        w1_ref, b1_ref,
        w71_ref, b71_ref, w72_ref, b72_ref, w73_ref, b73_ref,
        wd1_ref, bd1_ref, wd2_ref, bd2_ref, wd3_ref, bd3_ref,
        wd4_ref, bd4_ref, wd5_ref, bd5_ref,
        wp_ref, bp_ref,
        o_ref,
        padw_ref, padh_ref, padp_ref):
    nb, H, W, Cin = x_ref.shape
    c7 = w72_ref.shape[-1]
    M = nb * H * W

    # Zero the halo scratch every step (cheap, and safe under megacore sharding
    # where program_id==0 may never run on a given core).  Only interiors are
    # rewritten below, so halos stay zero for every stage.
    padw_ref[...] = jnp.zeros_like(padw_ref)
    padh_ref[...] = jnp.zeros_like(padh_ref)
    padp_ref[...] = jnp.zeros_like(padp_ref)

    x = x_ref[...]                                   # (nb, H, W, Cin) bf16
    x2 = x.reshape(M, Cin)

    def relu_bias(acc, b_ref, out_dtype):
        return jnp.maximum(acc + b_ref[...], 0.0).astype(out_dtype)

    def conv1x1(inp2d, w_ref, b_ref, out_dtype):
        acc = jnp.dot(inp2d, w_ref[...], preferred_element_type=jnp.float32)
        return relu_bias(acc, b_ref, out_dtype)

    def conv1x7(h2d, w_ref, b_ref, out_dtype):       # taps slide along W
        padw_ref[:, :, 3:3 + W, :] = h2d.reshape(nb, H, W, c7)
        cout = w_ref.shape[-1]
        acc = jnp.zeros((M, cout), jnp.float32)
        for dw in range(7):
            patch = padw_ref[:, :, dw:dw + W, :].reshape(M, c7)
            acc = acc + jnp.dot(patch, w_ref[dw],
                                preferred_element_type=jnp.float32)
        return relu_bias(acc, b_ref, out_dtype)

    def conv7x1(h2d, w_ref, b_ref, out_dtype):       # taps slide along H
        padh_ref[:, 3:3 + H, :, :] = h2d.reshape(nb, H, W, c7)
        cout = w_ref.shape[-1]
        acc = jnp.zeros((M, cout), jnp.float32)
        for dh in range(7):
            patch = padh_ref[:, dh:dh + H, :, :].reshape(M, c7)
            acc = acc + jnp.dot(patch, w_ref[dh],
                                preferred_element_type=jnp.float32)
        return relu_bias(acc, b_ref, out_dtype)

    c1 = b1_ref.shape[-1]
    c2 = b73_ref.shape[-1]
    c3 = bd5_ref.shape[-1]
    c4 = bp_ref.shape[-1]

    # --- branch1x1 -------------------------------------------------------
    y1 = conv1x1(x2, w1_ref, b1_ref, jnp.float32)
    o_ref[:, :, :, 0:c1] = y1.reshape(nb, H, W, c1)

    # --- branch7x7: 1x1 -> 1x7 -> 7x1 (bf16 intermediates, VMEM resident) -
    h = conv1x1(x2, w71_ref, b71_ref, jnp.bfloat16)
    h = conv1x7(h, w72_ref, b72_ref, jnp.bfloat16)
    y7 = conv7x1(h, w73_ref, b73_ref, jnp.float32)
    o_ref[:, :, :, c1:c1 + c2] = y7.reshape(nb, H, W, c2)

    # --- branch7x7dbl: 1x1 -> 7x1 -> 1x7 -> 7x1 -> 1x7 ---------------------
    h = conv1x1(x2, wd1_ref, bd1_ref, jnp.bfloat16)
    h = conv7x1(h, wd2_ref, bd2_ref, jnp.bfloat16)
    h = conv1x7(h, wd3_ref, bd3_ref, jnp.bfloat16)
    h = conv7x1(h, wd4_ref, bd4_ref, jnp.bfloat16)
    yd = conv1x7(h, wd5_ref, bd5_ref, jnp.float32)
    o_ref[:, :, :, c1 + c2:c1 + c2 + c3] = yd.reshape(nb, H, W, c3)

    # --- branch_pool: separable 3x3 avg (count_include_pad) + 1x1 ----------
    padp_ref[:, 1:1 + H, 1:1 + W, :] = x
    rs = (padp_ref[:, :, 0:W, :].astype(jnp.float32)
          + padp_ref[:, :, 1:W + 1, :].astype(jnp.float32)
          + padp_ref[:, :, 2:W + 2, :].astype(jnp.float32))
    s = rs[:, 0:H, :, :] + rs[:, 1:H + 1, :, :] + rs[:, 2:H + 2, :, :]
    pooled = (s * (1.0 / 9.0)).astype(jnp.bfloat16).reshape(M, Cin)
    yp = conv1x1(pooled, wp_ref, bp_ref, jnp.float32)
    o_ref[:, :, :, c1 + c2 + c3:c1 + c2 + c3 + c4] = yp.reshape(nb, H, W, c4)


# ---------------------------------------------------------------------------
# InceptionC forward (Pallas-backed, NCHW in / NCHW out)
# ---------------------------------------------------------------------------
_WEIGHT_ORDER = ('w1', 'b1', 'w71', 'b71', 'w72', 'b72', 'w73', 'b73',
                 'wd1', 'bd1', 'wd2', 'bd2', 'wd3', 'bd3', 'wd4', 'bd4',
                 'wd5', 'bd5', 'wp', 'bp')


def inception_c(x_nchw, pp, nb_max=4):
    x = jnp.transpose(x_nchw, (0, 2, 3, 1)).astype(jnp.bfloat16)   # NCHW -> NHWC
    N, H, W, Cin = x.shape
    c7 = pp['w72'].shape[-1]
    c_out = (pp['b1'].shape[-1] + pp['b73'].shape[-1]
             + pp['bd5'].shape[-1] + pp['bp'].shape[-1])

    # Images per grid step: amortize per-step overhead but keep >= 2 grid steps
    # so a 2-TC chip (v7x) shards the parallel axis evenly.
    nb = max(1, min(nb_max, (N + 1) // 2))
    grid = (pl.cdiv(N, nb),)

    weights = [pp[k] for k in _WEIGHT_ORDER]

    def const_spec(a):
        nd = a.ndim
        return pl.BlockSpec(a.shape, lambda i, _nd=nd: (0,) * _nd)

    out_nhwc = pl.pallas_call(
        _inception_c_kernel,
        out_shape=jax.ShapeDtypeStruct((N, H, W, c_out), jnp.float32),
        grid=grid,
        in_specs=[pl.BlockSpec((nb, H, W, Cin), lambda i: (i, 0, 0, 0))]
                 + [const_spec(a) for a in weights],
        out_specs=pl.BlockSpec((nb, H, W, c_out), lambda i: (i, 0, 0, 0)),
        scratch_shapes=[
            pltpu.VMEM((nb, H, W + 6, c7), jnp.bfloat16),    # W-halo buffer (1x7)
            pltpu.VMEM((nb, H + 6, W, c7), jnp.bfloat16),    # H-halo buffer (7x1)
            pltpu.VMEM((nb, H + 2, W + 2, Cin), jnp.bfloat16),  # pool halo buffer
        ],
        compiler_params=pltpu.CompilerParams(dimension_semantics=("parallel",)),
    )(x, *weights)
    return jnp.transpose(out_nhwc, (0, 3, 1, 2))               # NHWC -> NCHW


# ---------------------------------------------------------------------------
# One-time parameter preparation (BN folding, bf16 repack)
# ---------------------------------------------------------------------------
def prepare_params(p):
    def mat1x1(pr):                        # (Cout, Cin, 1, 1) -> (Cin, Cout) bf16
        w = pr['w'] * pr['scale'][:, None, None, None]
        return jnp.transpose(w[:, :, 0, 0], (1, 0)).astype(jnp.bfloat16)

    def taps(pr):                          # (Cout, Cin, kh, kw) -> (kh*kw, Cin, Cout)
        w = pr['w'] * pr['scale'][:, None, None, None]
        cout, cin, kh, kw = w.shape
        return jnp.transpose(w, (2, 3, 1, 0)).reshape(kh * kw, cin, cout).astype(jnp.bfloat16)

    def b(pr):
        return pr['bias'].astype(jnp.float32)[None, :]

    return dict(
        w1=mat1x1(p['branch1x1']), b1=b(p['branch1x1']),
        w71=mat1x1(p['branch7x7_1']), b71=b(p['branch7x7_1']),
        w72=taps(p['branch7x7_2']), b72=b(p['branch7x7_2']),
        w73=taps(p['branch7x7_3']), b73=b(p['branch7x7_3']),
        wd1=mat1x1(p['branch7x7dbl_1']), bd1=b(p['branch7x7dbl_1']),
        wd2=taps(p['branch7x7dbl_2']), bd2=b(p['branch7x7dbl_2']),
        wd3=taps(p['branch7x7dbl_3']), bd3=b(p['branch7x7dbl_3']),
        wd4=taps(p['branch7x7dbl_4']), bd4=b(p['branch7x7dbl_4']),
        wd5=taps(p['branch7x7dbl_5']), bd5=b(p['branch7x7dbl_5']),
        wp=mat1x1(p['branch_pool']), bp=b(p['branch_pool']),
    )


# ---------------------------------------------------------------------------
# Deterministic parameter init (BasicConv2d: conv w/o bias + BN(eps=1e-3))
# ---------------------------------------------------------------------------
def make_bc_params(key, cin, cout, kh, kw):
    k1, k2, k3, k4, k5 = jax.random.split(key, 5)
    fan_in = cin * kh * kw
    w = jax.random.normal(k1, (cout, cin, kh, kw), jnp.float32) / math.sqrt(fan_in)
    gamma = jax.random.uniform(k2, (cout,), jnp.float32, 0.5, 1.5)
    beta = 0.1 * jax.random.normal(k3, (cout,), jnp.float32)
    rmean = 0.1 * jax.random.normal(k4, (cout,), jnp.float32)
    rvar = jax.random.uniform(k5, (cout,), jnp.float32, 0.5, 1.5)
    scale = gamma / jnp.sqrt(rvar + 1e-3)
    bias = beta - scale * rmean
    return dict(w=w, scale=scale, bias=bias)


# ---------------------------------------------------------------------------
# Pure-JAX reference (lax convs) with matching bf16 rounding points
# ---------------------------------------------------------------------------
def _ref_cbr(x_bf16, pr, out_dtype):
    w, scale, bias = pr['w'], pr['scale'], pr['bias']
    _, _, kh, kw = w.shape
    ph, pw = (kh - 1) // 2, (kw - 1) // 2
    wf = (w * scale[:, None, None, None]).astype(jnp.bfloat16)
    wf = jnp.transpose(wf, (2, 3, 1, 0))                              # HWIO
    y = lax.conv_general_dilated(x_bf16, wf, (1, 1), ((ph, ph), (pw, pw)),
                                 dimension_numbers=('NHWC', 'HWIO', 'NHWC'),
                                 preferred_element_type=jnp.float32)
    return jnp.maximum(y + bias.astype(jnp.float32), 0.0).astype(out_dtype)


def reference_forward(x_nchw, p):
    x = jnp.transpose(x_nchw, (0, 2, 3, 1)).astype(jnp.bfloat16)
    N, H, W, C = x.shape
    b1 = _ref_cbr(x, p['branch1x1'], jnp.float32)
    b7 = _ref_cbr(x, p['branch7x7_1'], jnp.bfloat16)
    b7 = _ref_cbr(b7, p['branch7x7_2'], jnp.bfloat16)
    b7 = _ref_cbr(b7, p['branch7x7_3'], jnp.float32)
    d = _ref_cbr(x, p['branch7x7dbl_1'], jnp.bfloat16)
    d = _ref_cbr(d, p['branch7x7dbl_2'], jnp.bfloat16)
    d = _ref_cbr(d, p['branch7x7dbl_3'], jnp.bfloat16)
    d = _ref_cbr(d, p['branch7x7dbl_4'], jnp.bfloat16)
    d = _ref_cbr(d, p['branch7x7dbl_5'], jnp.float32)
    # separable 3x3 avg pool (count_include_pad), same association as the kernel
    xp = jnp.pad(x, ((0, 0), (1, 1), (1, 1), (0, 0)))
    rs = (xp[:, :, 0:W, :].astype(jnp.float32)
          + xp[:, :, 1:W + 1, :].astype(jnp.float32)
          + xp[:, :, 2:W + 2, :].astype(jnp.float32))
    s = rs[:, 0:H, :, :] + rs[:, 1:H + 1, :, :] + rs[:, 2:H + 2, :, :]
    pooled = (s * (1.0 / 9.0)).astype(jnp.bfloat16)
    bp = _ref_cbr(pooled, p['branch_pool'], jnp.float32)
    out = jnp.concatenate([b1, b7, d, bp], axis=-1)
    return jnp.transpose(out, (0, 3, 1, 2))


if __name__ == "__main__":
    key = jax.random.PRNGKey(0)
    N, Cin, H, W = 2, 16, 8, 8
    c7 = 16
    ks = jax.random.split(key, 11)
    params = {
        'branch1x1':      make_bc_params(ks[0], Cin, 192, 1, 1),
        'branch7x7_1':    make_bc_params(ks[1], Cin, c7, 1, 1),
        'branch7x7_2':    make_bc_params(ks[2], c7, c7, 1, 7),
        'branch7x7_3':    make_bc_params(ks[3], c7, 192, 7, 1),
        'branch7x7dbl_1': make_bc_params(ks[4], Cin, c7, 1, 1),
        'branch7x7dbl_2': make_bc_params(ks[5], c7, c7, 7, 1),
        'branch7x7dbl_3': make_bc_params(ks[6], c7, c7, 1, 7),
        'branch7x7dbl_4': make_bc_params(ks[7], c7, c7, 7, 1),
        'branch7x7dbl_5': make_bc_params(ks[8], c7, 192, 1, 7),
        'branch_pool':    make_bc_params(ks[9], Cin, 192, 1, 1),
    }
    x = jax.random.normal(ks[10], (N, Cin, H, W), jnp.float32)

    prep = prepare_params(params)             # one-time BN folding / bf16 repack
    fwd = jax.jit(inception_c)
    out = fwd(x, prep)
    jax.block_until_ready(out)
    assert out.shape == (N, 192 * 4, H, W), out.shape

    ref = reference_forward(x, params)
    err = float(jnp.max(jnp.abs(out - ref)))
    assert jnp.allclose(out, ref, atol=5e-3, rtol=5e-3), err

    print("KERNEL_OK")
</pallas_src>

<mosaic_0001>
module attributes {stable_mosaic.version = 11 : i64} {
  func.func @_inception_c_kernel(%arg0: i32, %arg1: memref<1x8x8x16xbf16, #tpu.memory_space<vmem>>, %arg2: memref<16x192xbf16, #tpu.memory_space<vmem>>, %arg3: memref<1x192xf32, #tpu.memory_space<vmem>>, %arg4: memref<16x16xbf16, #tpu.memory_space<vmem>>, %arg5: memref<1x16xf32, #tpu.memory_space<vmem>>, %arg6: memref<7x16x16xbf16, #tpu.memory_space<vmem>>, %arg7: memref<1x16xf32, #tpu.memory_space<vmem>>, %arg8: memref<7x16x192xbf16, #tpu.memory_space<vmem>>, %arg9: memref<1x192xf32, #tpu.memory_space<vmem>>, %arg10: memref<16x16xbf16, #tpu.memory_space<vmem>>, %arg11: memref<1x16xf32, #tpu.memory_space<vmem>>, %arg12: memref<7x16x16xbf16, #tpu.memory_space<vmem>>, %arg13: memref<1x16xf32, #tpu.memory_space<vmem>>, %arg14: memref<7x16x16xbf16, #tpu.memory_space<vmem>>, %arg15: memref<1x16xf32, #tpu.memory_space<vmem>>, %arg16: memref<7x16x16xbf16, #tpu.memory_space<vmem>>, %arg17: memref<1x16xf32, #tpu.memory_space<vmem>>, %arg18: memref<7x16x192xbf16, #tpu.memory_space<vmem>>, %arg19: memref<1x192xf32, #tpu.memory_space<vmem>>, %arg20: memref<16x192xbf16, #tpu.memory_space<vmem>>, %arg21: memref<1x192xf32, #tpu.memory_space<vmem>>, %arg22: memref<1x8x8x768xf32, #tpu.memory_space<vmem>>, %arg23: memref<1x8x14x16xbf16, #tpu.memory_space<vmem>>, %arg24: memref<1x14x8x16xbf16, #tpu.memory_space<vmem>>, %arg25: memref<1x10x10x16xbf16, #tpu.memory_space<vmem>>) attributes {dimension_semantics = [#tpu.dimension_semantics<parallel>], iteration_bounds = array<i64: 2>, scalar_prefetch = 0 : i64, scratch_operands = 3 : i64, tpu.core_type = #tpu.core_type<tc>, window_params = [{transform_indices = @transform_0, window_bounds = array<i64: 1, 8, 8, 16>}, {pipeline_mode = #tpu.pipeline_mode<synchronous>, transform_indices = @transform_1, window_bounds = array<i64: 16, 192>}, {pipeline_mode = #tpu.pipeline_mode<synchronous>, transform_indices = @transform_2, window_bounds = array<i64: 1, 192>}, {pipeline_mode = #tpu.pipeline_mode<synchronous>, transform_indices = @transform_3, window_bounds = array<i64: 16, 16>}, {pipeline_mode = #tpu.pipeline_mode<synchronous>, transform_indices = @transform_4, window_bounds = array<i64: 1, 16>}, {pipeline_mode = #tpu.pipeline_mode<synchronous>, transform_indices = @transform_5, window_bounds = array<i64: 7, 16, 16>}, {pipeline_mode = #tpu.pipeline_mode<synchronous>, transform_indices = @transform_6, window_bounds = array<i64: 1, 16>}, {pipeline_mode = #tpu.pipeline_mode<synchronous>, transform_indices = @transform_7, window_bounds = array<i64: 7, 16, 192>}, {pipeline_mode = #tpu.pipeline_mode<synchronous>, transform_indices = @transform_8, window_bounds = array<i64: 1, 192>}, {pipeline_mode = #tpu.pipeline_mode<synchronous>, transform_indices = @transform_9, window_bounds = array<i64: 16, 16>}, {pipeline_mode = #tpu.pipeline_mode<synchronous>, transform_indices = @transform_10, window_bounds = array<i64: 1, 16>}, {pipeline_mode = #tpu.pipeline_mode<synchronous>, transform_indices = @transform_11, window_bounds = array<i64: 7, 16, 16>}, {pipeline_mode = #tpu.pipeline_mode<synchronous>, transform_indices = @transform_12, window_bounds = array<i64: 1, 16>}, {pipeline_mode = #tpu.pipeline_mode<synchronous>, transform_indices = @transform_13, window_bounds = array<i64: 7, 16, 16>}, {pipeline_mode = #tpu.pipeline_mode<synchronous>, transform_indices = @transform_14, window_bounds = array<i64: 1, 16>}, {pipeline_mode = #tpu.pipeline_mode<synchronous>, transform_indices = @transform_15, window_bounds = array<i64: 7, 16, 16>}, {pipeline_mode = #tpu.pipeline_mode<synchronous>, transform_indices = @transform_16, window_bounds = array<i64: 1, 16>}, {pipeline_mode = #tpu.pipeline_mode<synchronous>, transform_indices = @transform_17, window_bounds = array<i64: 7, 16, 192>}, {pipeline_mode = #tpu.pipeline_mode<synchronous>, transform_indices = @transform_18, window_bounds = array<i64: 1, 192>}, {pipeline_mode = #tpu.pipeline_mode<synchronous>, transform_indices = @transform_19, window_bounds = array<i64: 16, 192>}, {pipeline_mode = #tpu.pipeline_mode<synchronous>, transform_indices = @transform_20, window_bounds = array<i64: 1, 192>}, {transform_indices = @transform_21, window_bounds = array<i64: 1, 8, 8, 768>}]} {
    %cst = arith.constant 0.000000e+00 : bf16
    %0 = vector.broadcast %cst : bf16 to vector<1x8x14x16xbf16>
    %c0 = arith.constant 0 : index
    %c0_0 = arith.constant 0 : index
    %c0_1 = arith.constant 0 : index
    %c0_2 = arith.constant 0 : index
    %1 = vector.load %arg23[%c0, %c0_0, %c0_1, %c0_2] : memref<1x8x14x16xbf16, #tpu.memory_space<vmem>>, vector<1x8x14x16xbf16>
    tpu.vector_store %arg23[%c0, %c0_0, %c0_1, %c0_2], %0 {strides = array<i32>} : memref<1x8x14x16xbf16, #tpu.memory_space<vmem>>, vector<1x8x14x16xbf16>,
    %cst_3 = arith.constant 0.000000e+00 : bf16
    %2 = vector.broadcast %cst_3 : bf16 to vector<1x14x8x16xbf16>
    %c0_4 = arith.constant 0 : index
    %c0_5 = arith.constant 0 : index
    %c0_6 = arith.constant 0 : index
    %c0_7 = arith.constant 0 : index
    %3 = vector.load %arg24[%c0_4, %c0_5, %c0_6, %c0_7] : memref<1x14x8x16xbf16, #tpu.memory_space<vmem>>, vector<1x14x8x16xbf16>
    tpu.vector_store %arg24[%c0_4, %c0_5, %c0_6, %c0_7], %2 {strides = array<i32>} : memref<1x14x8x16xbf16, #tpu.memory_space<vmem>>, vector<1x14x8x16xbf16>,
    %cst_8 = arith.constant 0.000000e+00 : bf16
    %4 = vector.broadcast %cst_8 : bf16 to vector<1x10x10x16xbf16>
    %c0_9 = arith.constant 0 : index
    %c0_10 = arith.constant 0 : index
    %c0_11 = arith.constant 0 : index
    %c0_12 = arith.constant 0 : index
    %5 = vector.load %arg25[%c0_9, %c0_10, %c0_11, %c0_12] : memref<1x10x10x16xbf16, #tpu.memory_space<vmem>>, vector<1x10x10x16xbf16>
    tpu.vector_store %arg25[%c0_9, %c0_10, %c0_11, %c0_12], %4 {strides = array<i32>} : memref<1x10x10x16xbf16, #tpu.memory_space<vmem>>, vector<1x10x10x16xbf16>,
    %c0_13 = arith.constant 0 : index
    %c0_14 = arith.constant 0 : index
    %c0_15 = arith.constant 0 : index
    %c0_16 = arith.constant 0 : index
    %6 = vector.load %arg1[%c0_13, %c0_14, %c0_15, %c0_16] : memref<1x8x8x16xbf16, #tpu.memory_space<vmem>>, vector<1x8x8x16xbf16>
    %7 = vector.shape_cast %6 : vector<1x8x8x16xbf16> to vector<64x16xbf16>
    %c0_17 = arith.constant 0 : index
    %c0_18 = arith.constant 0 : index
    %8 = vector.load %arg2[%c0_17, %c0_18] : memref<16x192xbf16, #tpu.memory_space<vmem>>, vector<16x192xbf16>
    %cst_19 = arith.constant dense<0.000000e+00> : vector<64x192xf32>
    %9 = tpu.matmul %7, %8, %cst_19 {dimension_numbers = #tpu.dot_dimension_numbers<[1], [0], [0], [1], [0, 0, 1, 1], [], []>} : vector<64x16xbf16>, vector<16x192xbf16>, vector<64x192xf32> -> vector<64x192xf32>
    %c0_20 = arith.constant 0 : index
    %c0_21 = arith.constant 0 : index
    %10 = vector.load %arg3[%c0_20, %c0_21] : memref<1x192xf32, #tpu.memory_space<vmem>>, vector<1x192xf32>
    %11 = vector.broadcast %10 : vector<1x192xf32> to vector<64x192xf32>
    %12 = arith.addf %9, %11 : vector<64x192xf32>
    %cst_22 = arith.constant 0.000000e+00 : f32
    %13 = vector.broadcast %cst_22 : f32 to vector<64x192xf32>
    %14 = arith.maximumf %12, %13 : vector<64x192xf32>
    %15 = vector.shape_cast %14 : vector<64x192xf32> to vector<1x8x8x192xf32>
    %c0_23 = arith.constant 0 : index
    %c0_24 = arith.constant 0 : index
    %c0_25 = arith.constant 0 : index
    %c0_26 = arith.constant 0 : index
    %16 = vector.load %arg22[%c0_23, %c0_24, %c0_25, %c0_26] : memref<1x8x8x768xf32, #tpu.memory_space<vmem>>, vector<1x8x8x192xf32>
    tpu.vector_store %arg22[%c0_23, %c0_24, %c0_25, %c0_26], %15 {strides = array<i32>} : memref<1x8x8x768xf32, #tpu.memory_space<vmem>>, vector<1x8x8x192xf32>,
    %c0_27 = arith.constant 0 : index
    %c0_28 = arith.constant 0 : index
    %17 = vector.load %arg4[%c0_27, %c0_28] : memref<16x16xbf16, #tpu.memory_space<vmem>>, vector<16x16xbf16>
    %cst_29 = arith.constant dense<0.000000e+00> : vector<64x16xf32>
    %18 = tpu.matmul %7, %17, %cst_29 {dimension_numbers = #tpu.dot_dimension_numbers<[1], [0], [0], [1], [0, 0, 1, 1], [], []>} : vector<64x16xbf16>, vector<16x16xbf16>, vector<64x16xf32> -> vector<64x16xf32>
    %c0_30 = arith.constant 0 : index
    %c0_31 = arith.constant 0 : index
    %19 = vector.load %arg5[%c0_30, %c0_31] : memref<1x16xf32, #tpu.memory_space<vmem>>, vector<1x16xf32>
    %20 = vector.broadcast %19 : vector<1x16xf32> to vector<64x16xf32>
    %21 = arith.addf %18, %20 : vector<64x16xf32>
    %cst_32 = arith.constant 0.000000e+00 : f32
    %22 = vector.broadcast %cst_32 : f32 to vector<64x16xf32>
    %23 = arith.maximumf %21, %22 : vector<64x16xf32>
    %24 = arith.truncf %23 : vector<64x16xf32> to vector<64x16xbf16>
    %25 = vector.shape_cast %24 : vector<64x16xbf16> to vector<1x8x8x16xbf16>
    %c0_33 = arith.constant 0 : index
    %c0_34 = arith.constant 0 : index
    %c3 = arith.constant 3 : index
    %c0_35 = arith.constant 0 : index
    %26 = vector.load %arg23[%c0_33, %c0_34, %c3, %c0_35] : memref<1x8x14x16xbf16, #tpu.memory_space<vmem>>, vector<1x8x8x16xbf16>
    tpu.vector_store %arg23[%c0_33, %c0_34, %c3, %c0_35], %25 {strides = array<i32>} : memref<1x8x14x16xbf16, #tpu.memory_space<vmem>>, vector<1x8x8x16xbf16>,
    %cst_36 = arith.constant 0.000000e+00 : f32
    %27 = vector.broadcast %cst_36 : f32 to vector<64x16xf32>
    %c0_37 = arith.constant 0 : index
    %c0_38 = arith.constant 0 : index
    %c0_39 = arith.constant 0 : index
    %c0_40 = arith.constant 0 : index
    %28 = vector.load %arg23[%c0_37, %c0_38, %c0_39, %c0_40] : memref<1x8x14x16xbf16, #tpu.memory_space<vmem>>, vector<1x8x8x16xbf16>
    %29 = vector.shape_cast %28 : vector<1x8x8x16xbf16> to vector<64x16xbf16>
    %c0_41 = arith.constant 0 : index
    %c0_42 = arith.constant 0 : index
    %c0_43 = arith.constant 0 : index
    %30 = vector.load %arg6[%c0_41, %c0_42, %c0_43] : memref<7x16x16xbf16, #tpu.memory_space<vmem>>, vector<1x16x16xbf16>
    %31 = vector.shape_cast %30 : vector<1x16x16xbf16> to vector<16x16xbf16>
    %cst_44 = arith.constant dense<0.000000e+00> : vector<64x16xf32>
    %32 = tpu.matmul %29, %31, %cst_44 {dimension_numbers = #tpu.dot_dimension_numbers<[1], [0], [0], [1], [0, 0, 1, 1], [], []>} : vector<64x16xbf16>, vector<16x16xbf16>, vector<64x16xf32> -> vector<64x16xf32>
    %33 = arith.addf %27, %32 : vector<64x16xf32>
    %c0_45 = arith.constant 0 : index
    %c0_46 = arith.constant 0 : index
    %c1 = arith.constant 1 : index
    %c0_47 = arith.constant 0 : index
    %34 = vector.load %arg23[%c0_45, %c0_46, %c1, %c0_47] : memref<1x8x14x16xbf16, #tpu.memory_space<vmem>>, vector<1x8x8x16xbf16>
    %35 = vector.shape_cast %34 : vector<1x8x8x16xbf16> to vector<64x16xbf16>
    %c1_48 = arith.constant 1 : index
    %c0_49 = arith.constant 0 : index
    %c0_50 = arith.constant 0 : index
    %36 = vector.load %arg6[%c1_48, %c0_49, %c0_50] : memref<7x16x16xbf16, #tpu.memory_space<vmem>>, vector<1x16x16xbf16>
    %37 = vector.shape_cast %36 : vector<1x16x16xbf16> to vector<16x16xbf16>
    %cst_51 = arith.constant dense<0.000000e+00> : vector<64x16xf32>
    %38 = tpu.matmul %35, %37, %cst_51 {dimension_numbers = #tpu.dot_dimension_numbers<[1], [0], [0], [1], [0, 0, 1, 1], [], []>} : vector<64x16xbf16>, vector<16x16xbf16>, vector<64x16xf32> -> vector<64x16xf32>
    %39 = arith.addf %33, %38 : vector<64x16xf32>
    %c0_52 = arith.constant 0 : index
    %c0_53 = arith.constant 0 : index
    %c2 = arith.constant 2 : index
    %c0_54 = arith.constant 0 : index
    %40 = vector.load %arg23[%c0_52, %c0_53, %c2, %c0_54] : memref<1x8x14x16xbf16, #tpu.memory_space<vmem>>, vector<1x8x8x16xbf16>
    %41 = vector.shape_cast %40 : vector<1x8x8x16xbf16> to vector<64x16xbf16>
    %c2_55 = arith.constant 2 : index
    %c0_56 = arith.constant 0 : index
    %c0_57 = arith.constant 0 : index
    %42 = vector.load %arg6[%c2_55, %c0_56, %c0_57] : memref<7x16x16xbf16, #tpu.memory_space<vmem>>, vector<1x16x16xbf16>
    %43 = vector.shape_cast %42 : vector<1x16x16xbf16> to vector<16x16xbf16>
    %cst_58 = arith.constant dense<0.000000e+00> : vector<64x16xf32>
    %44 = tpu.matmul %41, %43, %cst_58 {dimension_numbers = #tpu.dot_dimension_numbers<[1], [0], [0], [1], [0, 0, 1, 1], [], []>} : vector<64x16xbf16>, vector<16x16xbf16>, vector<64x16xf32> -> vector<64x16xf32>
    %45 = arith.addf %39, %44 : vector<64x16xf32>
    %c0_59 = arith.constant 0 : index
    %c0_60 = arith.constant 0 : index
    %c3_61 = arith.constant 3 : index
    %c0_62 = arith.constant 0 : index
    %46 = vector.load %arg23[%c0_59, %c0_60, %c3_61, %c0_62] : memref<1x8x14x16xbf16, #tpu.memory_space<vmem>>, vector<1x8x8x16xbf16>
    %47 = vector.shape_cast %46 : vector<1x8x8x16xbf16> to vector<64x16xbf16>
    %c3_63 = arith.constant 3 : index
    %c0_64 = arith.constant 0 : index
    %c0_65 = arith.constant 0 : index
    %48 = vector.load %arg6[%c3_63, %c0_64, %c0_65] : memref<7x16x16xbf16, #tpu.memory_space<vmem>>, vector<1x16x16xbf16>
    %49 = vector.shape_cast %48 : vector<1x16x16xbf16> to vector<16x16xbf16>
    %cst_66 = arith.constant dense<0.000000e+00> : vector<64x16xf32>
    %50 = tpu.matmul %47, %49, %cst_66 {dimension_numbers = #tpu.dot_dimension_numbers<[1], [0], [0], [1], [0, 0, 1, 1], [], []>} : vector<64x16xbf16>, vector<16x16xbf16>, vector<64x16xf32> -> vector<64x16xf32>
    %51 = arith.addf %45, %50 : vector<64x16xf32>
    %c0_67 = arith.constant 0 : index
    %c0_68 = arith.constant 0 : index
    %c4 = arith.constant 4 : index
    %c0_69 = arith.constant 0 : index
    %52 = vector.load %arg23[%c0_67, %c0_68, %c4, %c0_69] : memref<1x8x14x16xbf16, #tpu.memory_space<vmem>>, vector<1x8x8x16xbf16>
    %53 = vector.shape_cast %52 : vector<1x8x8x16xbf16> to vector<64x16xbf16>
    %c4_70 = arith.constant 4 : index
    %c0_71 = arith.constant 0 : index
    %c0_72 = arith.constant 0 : index
    %54 = vector.load %arg6[%c4_70, %c0_71, %c0_72] : memref<7x16x16xbf16, #tpu.memory_space<vmem>>, vector<1x16x16xbf16>
    %55 = vector.shape_cast %54 : vector<1x16x16xbf16> to vector<16x16xbf16>
    %cst_73 = arith.constant dense<0.000000e+00> : vector<64x16xf32>
    %56 = tpu.matmul %53, %55, %cst_73 {dimension_numbers = #tpu.dot_dimension_numbers<[1], [0], [0], [1], [0, 0, 1, 1], [], []>} : vector<64x16xbf16>, vector<16x16xbf16>, vector<64x16xf32> -> vector<64x16xf32>
    %57 = arith.addf %51, %56 : vector<64x16xf32>
    %c0_74 = arith.constant 0 : index
    %c0_75 = arith.constant 0 : index
    %c5 = arith.constant 5 : index
    %c0_76 = arith.constant 0 : index
    %58 = vector.load %arg23[%c0_74, %c0_75, %c5, %c0_76] : memref<1x8x14x16xbf16, #tpu.memory_space<vmem>>, vector<1x8x8x16xbf16>
    %59 = vector.shape_cast %58 : vector<1x8x8x16xbf16> to vector<64x16xbf16>
    %c5_77 = arith.constant 5 : index
    %c0_78 = arith.constant 0 : index
    %c0_79 = arith.constant 0 : index
    %60 = vector.load %arg6[%c5_77, %c0_78, %c0_79] : memref<7x16x16xbf16, #tpu.memory_space<vmem>>, vector<1x16x16xbf16>
    %61 = vector.shape_cast %60 : vector<1x16x16xbf16> to vector<16x16xbf16>
    %cst_80 = arith.constant dense<0.000000e+00> : vector<64x16xf32>
    %62 = tpu.matmul %59, %61, %cst_80 {dimension_numbers = #tpu.dot_dimension_numbers<[1], [0], [0], [1], [0, 0, 1, 1], [], []>} : vector<64x16xbf16>, vector<16x16xbf16>, vector<64x16xf32> -> vector<64x16xf32>
    %63 = arith.addf %57, %62 : vector<64x16xf32>
    %c0_81 = arith.constant 0 : index
    %c0_82 = arith.constant 0 : index
    %c6 = arith.constant 6 : index
    %c0_83 = arith.constant 0 : index
    %64 = vector.load %arg23[%c0_81, %c0_82, %c6, %c0_83] : memref<1x8x14x16xbf16, #tpu.memory_space<vmem>>, vector<1x8x8x16xbf16>
    %65 = vector.shape_cast %64 : vector<1x8x8x16xbf16> to vector<64x16xbf16>
    %c6_84 = arith.constant 6 : index
    %c0_85 = arith.constant 0 : index
    %c0_86 = arith.constant 0 : index
    %66 = vector.load %arg6[%c6_84, %c0_85, %c0_86] : memref<7x16x16xbf16, #tpu.memory_space<vmem>>, vector<1x16x16xbf16>
    %67 = vector.shape_cast %66 : vector<1x16x16xbf16> to vector<16x16xbf16>
    %cst_87 = arith.constant dense<0.000000e+00> : vector<64x16xf32>
    %68 = tpu.matmul %65, %67, %cst_87 {dimension_numbers = #tpu.dot_dimension_numbers<[1], [0], [0], [1], [0, 0, 1, 1], [], []>} : vector<64x16xbf16>, vector<16x16xbf16>, vector<64x16xf32> -> vector<64x16xf32>
    %69 = arith.addf %63, %68 : vector<64x16xf32>
    %c0_88 = arith.constant 0 : index
    %c0_89 = arith.constant 0 : index
    %70 = vector.load %arg7[%c0_88, %c0_89] : memref<1x16xf32, #tpu.memory_space<vmem>>, vector<1x16xf32>
    %71 = vector.broadcast %70 : vector<1x16xf32> to vector<64x16xf32>
    %72 = arith.addf %69, %71 : vector<64x16xf32>
    %cst_90 = arith.constant 0.000000e+00 : f32
    %73 = vector.broadcast %cst_90 : f32 to vector<64x16xf32>
    %74 = arith.maximumf %72, %73 : vector<64x16xf32>
    %75 = arith.truncf %74 : vector<64x16xf32> to vector<64x16xbf16>
    %76 = vector.shape_cast %75 : vector<64x16xbf16> to vector<1x8x8x16xbf16>
    %c0_91 = arith.constant 0 : index
    %c3_92 = arith.constant 3 : index
    %c0_93 = arith.constant 0 : index
    %c0_94 = arith.constant 0 : index
    %77 = vector.load %arg24[%c0_91, %c3_92, %c0_93, %c0_94] : memref<1x14x8x16xbf16, #tpu.memory_space<vmem>>, vector<1x8x8x16xbf16>
    tpu.vector_store %arg24[%c0_91, %c3_92, %c0_93, %c0_94], %76 {strides = array<i32>} : memref<1x14x8x16xbf16, #tpu.memory_space<vmem>>, vector<1x8x8x16xbf16>,
    %cst_95 = arith.constant 0.000000e+00 : f32
    %78 = vector.broadcast %cst_95 : f32 to vector<64x192xf32>
    %c0_96 = arith.constant 0 : index
    %c0_97 = arith.constant 0 : index
    %c0_98 = arith.constant 0 : index
    %c0_99 = arith.constant 0 : index
    %79 = vector.load %arg24[%c0_96, %c0_97, %c0_98, %c0_99] : memref<1x14x8x16xbf16, #tpu.memory_space<vmem>>, vector<1x8x8x16xbf16>
    %80 = vector.shape_cast %79 : vector<1x8x8x16xbf16> to vector<64x16xbf16>
    %c0_100 = arith.constant 0 : index
    %c0_101 = arith.constant 0 : index
    %c0_102 = arith.constant 0 : index
    %81 = vector.load %arg8[%c0_100, %c0_101, %c0_102] : memref<7x16x192xbf16, #tpu.memory_space<vmem>>, vector<1x16x192xbf16>
    %82 = vector.shape_cast %81 : vector<1x16x192xbf16> to vector<16x192xbf16>
    %cst_103 = arith.constant dense<0.000000e+00> : vector<64x192xf32>
    %83 = tpu.matmul %80, %82, %cst_103 {dimension_numbers = #tpu.dot_dimension_numbers<[1], [0], [0], [1], [0, 0, 1, 1], [], []>} : vector<64x16xbf16>, vector<16x192xbf16>, vector<64x192xf32> -> vector<64x192xf32>
    %84 = arith.addf %78, %83 : vector<64x192xf32>
    %c0_104 = arith.constant 0 : index
    %c1_105 = arith.constant 1 : index
    %c0_106 = arith.constant 0 : index
    %c0_107 = arith.constant 0 : index
    %85 = vector.load %arg24[%c0_104, %c1_105, %c0_106, %c0_107] : memref<1x14x8x16xbf16, #tpu.memory_space<vmem>>, vector<1x8x8x16xbf16>
    %86 = vector.shape_cast %85 : vector<1x8x8x16xbf16> to vector<64x16xbf16>
    %c1_108 = arith.constant 1 : index
    %c0_109 = arith.constant 0 : index
    %c0_110 = arith.constant 0 : index
    %87 = vector.load %arg8[%c1_108, %c0_109, %c0_110] : memref<7x16x192xbf16, #tpu.memory_space<vmem>>, vector<1x16x192xbf16>
    %88 = vector.shape_cast %87 : vector<1x16x192xbf16> to vector<16x192xbf16>
    %cst_111 = arith.constant dense<0.000000e+00> : vector<64x192xf32>
    %89 = tpu.matmul %86, %88, %cst_111 {dimension_numbers = #tpu.dot_dimension_numbers<[1], [0], [0], [1], [0, 0, 1, 1], [], []>} : vector<64x16xbf16>, vector<16x192xbf16>, vector<64x192xf32> -> vector<64x192xf32>
    %90 = arith.addf %84, %89 : vector<64x192xf32>
    %c0_112 = arith.constant 0 : index
    %c2_113 = arith.constant 2 : index
    %c0_114 = arith.constant 0 : index
    %c0_115 = arith.constant 0 : index
    %91 = vector.load %arg24[%c0_112, %c2_113, %c0_114, %c0_115] : memref<1x14x8x16xbf16, #tpu.memory_space<vmem>>, vector<1x8x8x16xbf16>
    %92 = vector.shape_cast %91 : vector<1x8x8x16xbf16> to vector<64x16xbf16>
    %c2_116 = arith.constant 2 : index
    %c0_117 = arith.constant 0 : index
    %c0_118 = arith.constant 0 : index
    %93 = vector.load %arg8[%c2_116, %c0_117, %c0_118] : memref<7x16x192xbf16, #tpu.memory_space<vmem>>, vector<1x16x192xbf16>
    %94 = vector.shape_cast %93 : vector<1x16x192xbf16> to vector<16x192xbf16>
    %cst_119 = arith.constant dense<0.000000e+00> : vector<64x192xf32>
    %95 = tpu.matmul %92, %94, %cst_119 {dimension_numbers = #tpu.dot_dimension_numbers<[1], [0], [0], [1], [0, 0, 1, 1], [], []>} : vector<64x16xbf16>, vector<16x192xbf16>, vector<64x192xf32> -> vector<64x192xf32>
    %96 = arith.addf %90, %95 : vector<64x192xf32>
    %c0_120 = arith.constant 0 : index
    %c3_121 = arith.constant 3 : index
    %c0_122 = arith.constant 0 : index
    %c0_123 = arith.constant 0 : index
    %97 = vector.load %arg24[%c0_120, %c3_121, %c0_122, %c0_123] : memref<1x14x8x16xbf16, #tpu.memory_space<vmem>>, vector<1x8x8x16xbf16>
    %98 = vector.shape_cast %97 : vector<1x8x8x16xbf16> to vector<64x16xbf16>
    %c3_124 = arith.constant 3 : index
    %c0_125 = arith.constant 0 : index
    %c0_126 = arith.constant 0 : index
    %99 = vector.load %arg8[%c3_124, %c0_125, %c0_126] : memref<7x16x192xbf16, #tpu.memory_space<vmem>>, vector<1x16x192xbf16>
    %100 = vector.shape_cast %99 : vector<1x16x192xbf16> to vector<16x192xbf16>
    %cst_127 = arith.constant dense<0.000000e+00> : vector<64x192xf32>
    %101 = tpu.matmul %98, %100, %cst_127 {dimension_numbers = #tpu.dot_dimension_numbers<[1], [0], [0], [1], [0, 0, 1, 1], [], []>} : vector<64x16xbf16>, vector<16x192xbf16>, vector<64x192xf32> -> vector<64x192xf32>
    %102 = arith.addf %96, %101 : vector<64x192xf32>
    %c0_128 = arith.constant 0 : index
    %c4_129 = arith.constant 4 : index
    %c0_130 = arith.constant 0 : index
    %c0_131 = arith.constant 0 : index
    %103 = vector.load %arg24[%c0_128, %c4_129, %c0_130, %c0_131] : memref<1x14x8x16xbf16, #tpu.memory_space<vmem>>, vector<1x8x8x16xbf16>
    %104 = vector.shape_cast %103 : vector<1x8x8x16xbf16> to vector<64x16xbf16>
    %c4_132 = arith.constant 4 : index
    %c0_133 = arith.constant 0 : index
    %c0_134 = arith.constant 0 : index
    %105 = vector.load %arg8[%c4_132, %c0_133, %c0_134] : memref<7x16x192xbf16, #tpu.memory_space<vmem>>, vector<1x16x192xbf16>
    %106 = vector.shape_cast %105 : vector<1x16x192xbf16> to vector<16x192xbf16>
    %cst_135 = arith.constant dense<0.000000e+00> : vector<64x192xf32>
    %107 = tpu.matmul %104, %106, %cst_135 {dimension_numbers = #tpu.dot_dimension_numbers<[1], [0], [0], [1], [0, 0, 1, 1], [], []>} : vector<64x16xbf16>, vector<16x192xbf16>, vector<64x192xf32> -> vector<64x192xf32>
    %108 = arith.addf %102, %107 : vector<64x192xf32>
    %c0_136 = arith.constant 0 : index
    %c5_137 = arith.constant 5 : index
    %c0_138 = arith.constant 0 : index
    %c0_139 = arith.constant 0 : index
    %109 = vector.load %arg24[%c0_136, %c5_137, %c0_138, %c0_139] : memref<1x14x8x16xbf16, #tpu.memory_space<vmem>>, vector<1x8x8x16xbf16>
    %110 = vector.shape_cast %109 : vector<1x8x8x16xbf16> to vector<64x16xbf16>
    %c5_140 = arith.constant 5 : index
    %c0_141 = arith.constant 0 : index
    %c0_142 = arith.constant 0 : index
    %111 = vector.load %arg8[%c5_140, %c0_141, %c0_142] : memref<7x16x192xbf16, #tpu.memory_space<vmem>>, vector<1x16x192xbf16>
    %112 = vector.shape_cast %111 : vector<1x16x192xbf16> to vector<16x192xbf16>
    %cst_143 = arith.constant dense<0.000000e+00> : vector<64x192xf32>
    %113 = tpu.matmul %110, %112, %cst_143 {dimension_numbers = #tpu.dot_dimension_numbers<[1], [0], [0], [1], [0, 0, 1, 1], [], []>} : vector<64x16xbf16>, vector<16x192xbf16>, vector<64x192xf32> -> vector<64x192xf32>
    %114 = arith.addf %108, %113 : vector<64x192xf32>
    %c0_144 = arith.constant 0 : index
    %c6_145 = arith.constant 6 : index
    %c0_146 = arith.constant 0 : index
    %c0_147 = arith.constant 0 : index
    %115 = vector.load %arg24[%c0_144, %c6_145, %c0_146, %c0_147] : memref<1x14x8x16xbf16, #tpu.memory_space<vmem>>, vector<1x8x8x16xbf16>
    %116 = vector.shape_cast %115 : vector<1x8x8x16xbf16> to vector<64x16xbf16>
    %c6_148 = arith.constant 6 : index
    %c0_149 = arith.constant 0 : index
    %c0_150 = arith.constant 0 : index
    %117 = vector.load %arg8[%c6_148, %c0_149, %c0_150] : memref<7x16x192xbf16, #tpu.memory_space<vmem>>, vector<1x16x192xbf16>
    %118 = vector.shape_cast %117 : vector<1x16x192xbf16> to vector<16x192xbf16>
    %cst_151 = arith.constant dense<0.000000e+00> : vector<64x192xf32>
    %119 = tpu.matmul %116, %118, %cst_151 {dimension_numbers = #tpu.dot_dimension_numbers<[1], [0], [0], [1], [0, 0, 1, 1], [], []>} : vector<64x16xbf16>, vector<16x192xbf16>, vector<64x192xf32> -> vector<64x192xf32>
    %120 = arith.addf %114, %119 : vector<64x192xf32>
    %c0_152 = arith.constant 0 : index
    %c0_153 = arith.constant 0 : index
    %121 = vector.load %arg9[%c0_152, %c0_153] : memref<1x192xf32, #tpu.memory_space<vmem>>, vector<1x192xf32>
    %122 = vector.broadcast %121 : vector<1x192xf32> to vector<64x192xf32>
    %123 = arith.addf %120, %122 : vector<64x192xf32>
    %cst_154 = arith.constant 0.000000e+00 : f32
    %124 = vector.broadcast %cst_154 : f32 to vector<64x192xf32>
    %125 = arith.maximumf %123, %124 : vector<64x192xf32>
    %126 = vector.shape_cast %125 : vector<64x192xf32> to vector<1x8x8x192xf32>
    %c0_155 = arith.constant 0 : index
    %c0_156 = arith.constant 0 : index
    %c0_157 = arith.constant 0 : index
    %c192 = arith.constant 192 : index
    %127 = vector.load %arg22[%c0_155, %c0_156, %c0_157, %c192] : memref<1x8x8x768xf32, #tpu.memory_space<vmem>>, vector<1x8x8x192xf32>
    tpu.vector_store %arg22[%c0_155, %c0_156, %c0_157, %c192], %126 {strides = array<i32>} : memref<1x8x8x768xf32, #tpu.memory_space<vmem>>, vector<1x8x8x192xf32>,
    %c0_158 = arith.constant 0 : index
    %c0_159 = arith.constant 0 : index
    %128 = vector.load %arg10[%c0_158, %c0_159] : memref<16x16xbf16, #tpu.memory_space<vmem>>, vector<16x16xbf16>
    %cst_160 = arith.constant dense<0.000000e+00> : vector<64x16xf32>
    %129 = tpu.matmul %7, %128, %cst_160 {dimension_numbers = #tpu.dot_dimension_numbers<[1], [0], [0], [1], [0, 0, 1, 1], [], []>} : vector<64x16xbf16>, vector<16x16xbf16>, vector<64x16xf32> -> vector<64x16xf32>
    %c0_161 = arith.constant 0 : index
    %c0_162 = arith.constant 0 : index
    %130 = vector.load %arg11[%c0_161, %c0_162] : memref<1x16xf32, #tpu.memory_space<vmem>>, vector<1x16xf32>
    %131 = vector.broadcast %130 : vector<1x16xf32> to vector<64x16xf32>
    %132 = arith.addf %129, %131 : vector<64x16xf32>
    %cst_163 = arith.constant 0.000000e+00 : f32
    %133 = vector.broadcast %cst_163 : f32 to vector<64x16xf32>
    %134 = arith.maximumf %132, %133 : vector<64x16xf32>
    %135 = arith.truncf %134 : vector<64x16xf32> to vector<64x16xbf16>
    %136 = vector.shape_cast %135 : vector<64x16xbf16> to vector<1x8x8x16xbf16>
    %c0_164 = arith.constant 0 : index
    %c3_165 = arith.constant 3 : index
    %c0_166 = arith.constant 0 : index
    %c0_167 = arith.constant 0 : index
    %137 = vector.load %arg24[%c0_164, %c3_165, %c0_166, %c0_167] : memref<1x14x8x16xbf16, #tpu.memory_space<vmem>>, vector<1x8x8x16xbf16>
    tpu.vector_store %arg24[%c0_164, %c3_165, %c0_166, %c0_167], %136 {strides = array<i32>} : memref<1x14x8x16xbf16, #tpu.memory_space<vmem>>, vector<1x8x8x16xbf16>,
    %cst_168 = arith.constant 0.000000e+00 : f32
    %138 = vector.broadcast %cst_168 : f32 to vector<64x16xf32>
    %c0_169 = arith.constant 0 : index
    %c0_170 = arith.constant 0 : index
    %c0_171 = arith.constant 0 : index
    %c0_172 = arith.constant 0 : index
    %139 = vector.load %arg24[%c0_169, %c0_170, %c0_171, %c0_172] : memref<1x14x8x16xbf16, #tpu.memory_space<vmem>>, vector<1x8x8x16xbf16>
    %140 = vector.shape_cast %139 : vector<1x8x8x16xbf16> to vector<64x16xbf16>
    %c0_173 = arith.constant 0 : index
    %c0_174 = arith.constant 0 : index
    %c0_175 = arith.constant 0 : index
    %141 = vector.load %arg12[%c0_173, %c0_174, %c0_175] : memref<7x16x16xbf16, #tpu.memory_space<vmem>>, vector<1x16x16xbf16>
    %142 = vector.shape_cast %141 : vector<1x16x16xbf16> to vector<16x16xbf16>
    %cst_176 = arith.constant dense<0.000000e+00> : vector<64x16xf32>
    %143 = tpu.matmul %140, %142, %cst_176 {dimension_numbers = #tpu.dot_dimension_numbers<[1], [0], [0], [1], [0, 0, 1, 1], [], []>} : vector<64x16xbf16>, vector<16x16xbf16>, vector<64x16xf32> -> vector<64x16xf32>
    %144 = arith.addf %138, %143 : vector<64x16xf32>
    %c0_177 = arith.constant 0 : index
    %c1_178 = arith.constant 1 : index
    %c0_179 = arith.constant 0 : index
    %c0_180 = arith.constant 0 : index
    %145 = vector.load %arg24[%c0_177, %c1_178, %c0_179, %c0_180] : memref<1x14x8x16xbf16, #tpu.memory_space<vmem>>, vector<1x8x8x16xbf16>
    %146 = vector.shape_cast %145 : vector<1x8x8x16xbf16> to vector<64x16xbf16>
    %c1_181 = arith.constant 1 : index
    %c0_182 = arith.constant 0 : index
    %c0_183 = arith.constant 0 : index
    %147 = vector.load %arg12[%c1_181, %c0_182, %c0_183] : memref<7x16x16xbf16, #tpu.memory_space<vmem>>, vector<1x16x16xbf16>
    %148 = vector.shape_cast %147 : vector<1x16x16xbf16> to vector<16x16xbf16>
    %cst_184 = arith.constant dense<0.000000e+00> : vector<64x16xf32>
    %149 = tpu.matmul %146, %148, %cst_184 {dimension_numbers = #tpu.dot_dimension_numbers<[1], [0], [0], [1], [0, 0, 1, 1], [], []>} : vector<64x16xbf16>, vector<16x16xbf16>, vector<64x16xf32> -> vector<64x16xf32>
    %150 = arith.addf %144, %149 : vector<64x16xf32>
    %c0_185 = arith.constant 0 : index
    %c2_186 = arith.constant 2 : index
    %c0_187 = arith.constant 0 : index
    %c0_188 = arith.constant 0 : index
    %151 = vector.load %arg24[%c0_185, %c2_186, %c0_187, %c0_188] : memref<1x14x8x16xbf16, #tpu.memory_space<vmem>>, vector<1x8x8x16xbf16>
    %152 = vector.shape_cast %151 : vector<1x8x8x16xbf16> to vector<64x16xbf16>
    %c2_189 = arith.constant 2 : index
    %c0_190 = arith.constant 0 : index
    %c0_191 = arith.constant 0 : index
    %153 = vector.load %arg12[%c2_189, %c0_190, %c0_191] : memref<7x16x16xbf16, #tpu.memory_space<vmem>>, vector<1x16x16xbf16>
    %154 = vector.shape_cast %153 : vector<1x16x16xbf16> to vector<16x16xbf16>
    %cst_192 = arith.constant dense<0.000000e+00> : vector<64x16xf32>
    %155 = tpu.matmul %152, %154, %cst_192 {dimension_numbers = #tpu.dot_dimension_numbers<[1], [0], [0], [1], [0, 0, 1, 1], [], []>} : vector<64x16xbf16>, vector<16x16xbf16>, vector<64x16xf32> -> vector<64x16xf32>
    %156 = arith.addf %150, %155 : vector<64x16xf32>
    %c0_193 = arith.constant 0 : index
    %c3_194 = arith.constant 3 : index
    %c0_195 = arith.constant 0 : index
    %c0_196 = arith.constant 0 : index
    %157 = vector.load %arg24[%c0_193, %c3_194, %c0_195, %c0_196] : memref<1x14x8x16xbf16, #tpu.memory_space<vmem>>, vector<1x8x8x16xbf16>
    %158 = vector.shape_cast %157 : vector<1x8x8x16xbf16> to vector<64x16xbf16>
    %c3_197 = arith.constant 3 : index
    %c0_198 = arith.constant 0 : index
    %c0_199 = arith.constant 0 : index
    %159 = vector.load %arg12[%c3_197, %c0_198, %c0_199] : memref<7x16x16xbf16, #tpu.memory_space<vmem>>, vector<1x16x16xbf16>
    %160 = vector.shape_cast %159 : vector<1x16x16xbf16> to vector<16x16xbf16>
    %cst_200 = arith.constant dense<0.000000e+00> : vector<64x16xf32>
    %161 = tpu.matmul %158, %160, %cst_200 {dimension_numbers = #tpu.dot_dimension_numbers<[1], [0], [0], [1], [0, 0, 1, 1], [], []>} : vector<64x16xbf16>, vector<16x16xbf16>, vector<64x16xf32> -> vector<64x16xf32>
    %162 = arith.addf %156, %161 : vector<64x16xf32>
    %c0_201 = arith.constant 0 : index
    %c4_202 = arith.constant 4 : index
    %c0_203 = arith.constant 0 : index
    %c0_204 = arith.constant 0 : index
    %163 = vector.load %arg24[%c0_201, %c4_202, %c0_203, %c0_204] : memref<1x14x8x16xbf16, #tpu.memory_space<vmem>>, vector<1x8x8x16xbf16>
    %164 = vector.shape_cast %163 : vector<1x8x8x16xbf16> to vector<64x16xbf16>
    %c4_205 = arith.constant 4 : index
    %c0_206 = arith.constant 0 : index
    %c0_207 = arith.constant 0 : index
    %165 = vector.load %arg12[%c4_205, %c0_206, %c0_207] : memref<7x16x16xbf16, #tpu.memory_space<vmem>>, vector<1x16x16xbf16>
    %166 = vector.shape_cast %165 : vector<1x16x16xbf16> to vector<16x16xbf16>
    %cst_208 = arith.constant dense<0.000000e+00> : vector<64x16xf32>
    %167 = tpu.matmul %164, %166, %cst_208 {dimension_numbers = #tpu.dot_dimension_numbers<[1], [0], [0], [1], [0, 0, 1, 1], [], []>} : vector<64x16xbf16>, vector<16x16xbf16>, vector<64x16xf32> -> vector<64x16xf32>
    %168 = arith.addf %162, %167 : vector<64x16xf32>
    %c0_209 = arith.constant 0 : index
    %c5_210 = arith.constant 5 : index
    %c0_211 = arith.constant 0 : index
    %c0_212 = arith.constant 0 : index
    %169 = vector.load %arg24[%c0_209, %c5_210, %c0_211, %c0_212] : memref<1x14x8x16xbf16, #tpu.memory_space<vmem>>, vector<1x8x8x16xbf16>
    %170 = vector.shape_cast %169 : vector<1x8x8x16xbf16> to vector<64x16xbf16>
    %c5_213 = arith.constant 5 : index
    %c0_214 = arith.constant 0 : index
    %c0_215 = arith.constant 0 : index
    %171 = vector.load %arg12[%c5_213, %c0_214, %c0_215] : memref<7x16x16xbf16, #tpu.memory_space<vmem>>, vector<1x16x16xbf16>
    %172 = vector.shape_cast %171 : vector<1x16x16xbf16> to vector<16x16xbf16>
    %cst_216 = arith.constant dense<0.000000e+00> : vector<64x16xf32>
    %173 = tpu.matmul %170, %172, %cst_216 {dimension_numbers = #tpu.dot_dimension_numbers<[1], [0], [0], [1], [0, 0, 1, 1], [], []>} : vector<64x16xbf16>, vector<16x16xbf16>, vector<64x16xf32> -> vector<64x16xf32>
    %174 = arith.addf %168, %173 : vector<64x16xf32>
    %c0_217 = arith.constant 0 : index
    %c6_218 = arith.constant 6 : index
    %c0_219 = arith.constant 0 : index
    %c0_220 = arith.constant 0 : index
    %175 = vector.load %arg24[%c0_217, %c6_218, %c0_219, %c0_220] : memref<1x14x8x16xbf16, #tpu.memory_space<vmem>>, vector<1x8x8x16xbf16>
    %176 = vector.shape_cast %175 : vector<1x8x8x16xbf16> to vector<64x16xbf16>
    %c6_221 = arith.constant 6 : index
    %c0_222 = arith.constant 0 : index
    %c0_223 = arith.constant 0 : index
    %177 = vector.load %arg12[%c6_221, %c0_222, %c0_223] : memref<7x16x16xbf16, #tpu.memory_space<vmem>>, vector<1x16x16xbf16>
    %178 = vector.shape_cast %177 : vector<1x16x16xbf16> to vector<16x16xbf16>
    %cst_224 = arith.constant dense<0.000000e+00> : vector<64x16xf32>
    %179 = tpu.matmul %176, %178, %cst_224 {dimension_numbers = #tpu.dot_dimension_numbers<[1], [0], [0], [1], [0, 0, 1, 1], [], []>} : vector<64x16xbf16>, vector<16x16xbf16>, vector<64x16xf32> -> vector<64x16xf32>
    %180 = arith.addf %174, %179 : vector<64x16xf32>
    %c0_225 = arith.constant 0 : index
    %c0_226 = arith.constant 0 : index
    %181 = vector.load %arg13[%c0_225, %c0_226] : memref<1x16xf32, #tpu.memory_space<vmem>>, vector<1x16xf32>
    %182 = vector.broadcast %181 : vector<1x16xf32> to vector<64x16xf32>
    %183 = arith.addf %180, %182 : vector<64x16xf32>
    %cst_227 = arith.constant 0.000000e+00 : f32
    %184 = vector.broadcast %cst_227 : f32 to vector<64x16xf32>
    %185 = arith.maximumf %183, %184 : vector<64x16xf32>
    %186 = arith.truncf %185 : vector<64x16xf32> to vector<64x16xbf16>
    %187 = vector.shape_cast %186 : vector<64x16xbf16> to vector<1x8x8x16xbf16>
    %c0_228 = arith.constant 0 : index
    %c0_229 = arith.constant 0 : index
    %c3_230 = arith.constant 3 : index
    %c0_231 = arith.constant 0 : index
    %188 = vector.load %arg23[%c0_228, %c0_229, %c3_230, %c0_231] : memref<1x8x14x16xbf16, #tpu.memory_space<vmem>>, vector<1x8x8x16xbf16>
    tpu.vector_store %arg23[%c0_228, %c0_229, %c3_230, %c0_231], %187 {strides = array<i32>} : memref<1x8x14x16xbf16, #tpu.memory_space<vmem>>, vector<1x8x8x16xbf16>,
    %cst_232 = arith.constant 0.000000e+00 : f32
    %189 = vector.broadcast %cst_232 : f32 to vector<64x16xf32>
    %c0_233 = arith.constant 0 : index
    %c0_234 = arith.constant 0 : index
    %c0_235 = arith.constant 0 : index
    %c0_236 = arith.constant 0 : index
    %190 = vector.load %arg23[%c0_233, %c0_234, %c0_235, %c0_236] : memref<1x8x14x16xbf16, #tpu.memory_space<vmem>>, vector<1x8x8x16xbf16>
    %191 = vector.shape_cast %190 : vector<1x8x8x16xbf16> to vector<64x16xbf16>
    %c0_237 = arith.constant 0 : index
    %c0_238 = arith.constant 0 : index
    %c0_239 = arith.constant 0 : index
    %192 = vector.load %arg14[%c0_237, %c0_238, %c0_239] : memref<7x16x16xbf16, #tpu.memory_space<vmem>>, vector<1x16x16xbf16>
    %193 = vector.shape_cast %192 : vector<1x16x16xbf16> to vector<16x16xbf16>
    %cst_240 = arith.constant dense<0.000000e+00> : vector<64x16xf32>
    %194 = tpu.matmul %191, %193, %cst_240 {dimension_numbers = #tpu.dot_dimension_numbers<[1], [0], [0], [1], [0, 0, 1, 1], [], []>} : vector<64x16xbf16>, vector<16x16xbf16>, vector<64x16xf32> -> vector<64x16xf32>
    %195 = arith.addf %189, %194 : vector<64x16xf32>
    %c0_241 = arith.constant 0 : index
    %c0_242 = arith.constant 0 : index
    %c1_243 = arith.constant 1 : index
    %c0_244 = arith.constant 0 : index
    %196 = vector.load %arg23[%c0_241, %c0_242, %c1_243, %c0_244] : memref<1x8x14x16xbf16, #tpu.memory_space<vmem>>, vector<1x8x8x16xbf16>
    %197 = vector.shape_cast %196 : vector<1x8x8x16xbf16> to vector<64x16xbf16>
    %c1_245 = arith.constant 1 : index
    %c0_246 = arith.constant 0 : index
    %c0_247 = arith.constant 0 : index
    %198 = vector.load %arg14[%c1_245, %c0_246, %c0_247] : memref<7x16x16xbf16, #tpu.memory_space<vmem>>, vector<1x16x16xbf16>
    %199 = vector.shape_cast %198 : vector<1x16x16xbf16> to vector<16x16xbf16>
    %cst_248 = arith.constant dense<0.000000e+00> : vector<64x16xf32>
    %200 = tpu.matmul %197, %199, %cst_248 {dimension_numbers = #tpu.dot_dimension_numbers<[1], [0], [0], [1], [0, 0, 1, 1], [], []>} : vector<64x16xbf16>, vector<16x16xbf16>, vector<64x16xf32> -> vector<64x16xf32>
    %201 = arith.addf %195, %200 : vector<64x16xf32>
    %c0_249 = arith.constant 0 : index
    %c0_250 = arith.constant 0 : index
    %c2_251 = arith.constant 2 : index
    %c0_252 = arith.constant 0 : index
    %202 = vector.load %arg23[%c0_249, %c0_250, %c2_251, %c0_252] : memref<1x8x14x16xbf16, #tpu.memory_space<vmem>>, vector<1x8x8x16xbf16>
    %203 = vector.shape_cast %202 : vector<1x8x8x16xbf16> to vector<64x16xbf16>
    %c2_253 = arith.constant 2 : index
    %c0_254 = arith.constant 0 : index
    %c0_255 = arith.constant 0 : index
    %204 = vector.load %arg14[%c2_253, %c0_254, %c0_255] : memref<7x16x16xbf16, #tpu.memory_space<vmem>>, vector<1x16x16xbf16>
    %205 = vector.shape_cast %204 : vector<1x16x16xbf16> to vector<16x16xbf16>
    %cst_256 = arith.constant dense<0.000000e+00> : vector<64x16xf32>
    %206 = tpu.matmul %203, %205, %cst_256 {dimension_numbers = #tpu.dot_dimension_numbers<[1], [0], [0], [1], [0, 0, 1, 1], [], []>} : vector<64x16xbf16>, vector<16x16xbf16>, vector<64x16xf32> -> vector<64x16xf32>
    %207 = arith.addf %201, %206 : vector<64x16xf32>
    %c0_257 = arith.constant 0 : index
    %c0_258 = arith.constant 0 : index
    %c3_259 = arith.constant 3 : index
    %c0_260 = arith.constant 0 : index
    %208 = vector.load %arg23[%c0_257, %c0_258, %c3_259, %c0_260] : memref<1x8x14x16xbf16, #tpu.memory_space<vmem>>, vector<1x8x8x16xbf16>
    %209 = vector.shape_cast %208 : vector<1x8x8x16xbf16> to vector<64x16xbf16>
    %c3_261 = arith.constant 3 : index
    %c0_262 = arith.constant 0 : index
    %c0_263 = arith.constant 0 : index
    %210 = vector.load %arg14[%c3_261, %c0_262, %c0_263] : memref<7x16x16xbf16, #tpu.memory_space<vmem>>, vector<1x16x16xbf16>
    %211 = vector.shape_cast %210 : vector<1x16x16xbf16> to vector<16x16xbf16>
    %cst_264 = arith.constant dense<0.000000e+00> : vector<64x16xf32>
    %212 = tpu.matmul %209, %211, %cst_264 {dimension_numbers = #tpu.dot_dimension_numbers<[1], [0], [0], [1], [0, 0, 1, 1], [], []>} : vector<64x16xbf16>, vector<16x16xbf16>, vector<64x16xf32> -> vector<64x16xf32>
    %213 = arith.addf %207, %212 : vector<64x16xf32>
    %c0_265 = arith.constant 0 : index
    %c0_266 = arith.constant 0 : index
    %c4_267 = arith.constant 4 : index
    %c0_268 = arith.constant 0 : index
    %214 = vector.load %arg23[%c0_265, %c0_266, %c4_267, %c0_268] : memref<1x8x14x16xbf16, #tpu.memory_space<vmem>>, vector<1x8x8x16xbf16>
    %215 = vector.shape_cast %214 : vector<1x8x8x16xbf16> to vector<64x16xbf16>
    %c4_269 = arith.constant 4 : index
    %c0_270 = arith.constant 0 : index
    %c0_271 = arith.constant 0 : index
    %216 = vector.load %arg14[%c4_269, %c0_270, %c0_271] : memref<7x16x16xbf16, #tpu.memory_space<vmem>>, vector<1x16x16xbf16>
    %217 = vector.shape_cast %216 : vector<1x16x16xbf16> to vector<16x16xbf16>
    %cst_272 = arith.constant dense<0.000000e+00> : vector<64x16xf32>
    %218 = tpu.matmul %215, %217, %cst_272 {dimension_numbers = #tpu.dot_dimension_numbers<[1], [0], [0], [1], [0, 0, 1, 1], [], []>} : vector<64x16xbf16>, vector<16x16xbf16>, vector<64x16xf32> -> vector<64x16xf32>
    %219 = arith.addf %213, %218 : vector<64x16xf32>
    %c0_273 = arith.constant 0 : index
    %c0_274 = arith.constant 0 : index
    %c5_275 = arith.constant 5 : index
    %c0_276 = arith.constant 0 : index
    %220 = vector.load %arg23[%c0_273, %c0_274, %c5_275, %c0_276] : memref<1x8x14x16xbf16, #tpu.memory_space<vmem>>, vector<1x8x8x16xbf16>
    %221 = vector.shape_cast %220 : vector<1x8x8x16xbf16> to vector<64x16xbf16>
    %c5_277 = arith.constant 5 : index
    %c0_278 = arith.constant 0 : index
    %c0_279 = arith.constant 0 : index
    %222 = vector.load %arg14[%c5_277, %c0_278, %c0_279] : memref<7x16x16xbf16, #tpu.memory_space<vmem>>, vector<1x16x16xbf16>
    %223 = vector.shape_cast %222 : vector<1x16x16xbf16> to vector<16x16xbf16>
    %cst_280 = arith.constant dense<0.000000e+00> : vector<64x16xf32>
    %224 = tpu.matmul %221, %223, %cst_280 {dimension_numbers = #tpu.dot_dimension_numbers<[1], [0], [0], [1], [0, 0, 1, 1], [], []>} : vector<64x16xbf16>, vector<16x16xbf16>, vector<64x16xf32> -> vector<64x16xf32>
    %225 = arith.addf %219, %224 : vector<64x16xf32>
    %c0_281 = arith.constant 0 : index
    %c0_282 = arith.constant 0 : index
    %c6_283 = arith.constant 6 : index
    %c0_284 = arith.constant 0 : index
    %226 = vector.load %arg23[%c0_281, %c0_282, %c6_283, %c0_284] : memref<1x8x14x16xbf16, #tpu.memory_space<vmem>>, vector<1x8x8x16xbf16>
    %227 = vector.shape_cast %226 : vector<1x8x8x16xbf16> to vector<64x16xbf16>
    %c6_285 = arith.constant 6 : index
    %c0_286 = arith.constant 0 : index
    %c0_287 = arith.constant 0 : index
    %228 = vector.load %arg14[%c6_285, %c0_286, %c0_287] : memref<7x16x16xbf16, #tpu.memory_space<vmem>>, vector<1x16x16xbf16>
    %229 = vector.shape_cast %228 : vector<1x16x16xbf16> to vector<16x16xbf16>
    %cst_288 = arith.constant dense<0.000000e+00> : vector<64x16xf32>
    %230 = tpu.matmul %227, %229, %cst_288 {dimension_numbers = #tpu.dot_dimension_numbers<[1], [0], [0], [1], [0, 0, 1, 1], [], []>} : vector<64x16xbf16>, vector<16x16xbf16>, vector<64x16xf32> -> vector<64x16xf32>
    %231 = arith.addf %225, %230 : vector<64x16xf32>
    %c0_289 = arith.constant 0 : index
    %c0_290 = arith.constant 0 : index
    %232 = vector.load %arg15[%c0_289, %c0_290] : memref<1x16xf32, #tpu.memory_space<vmem>>, vector<1x16xf32>
    %233 = vector.broadcast %232 : vector<1x16xf32> to vector<64x16xf32>
    %234 = arith.addf %231, %233 : vector<64x16xf32>
    %cst_291 = arith.constant 0.000000e+00 : f32
    %235 = vector.broadcast %cst_291 : f32 to vector<64x16xf32>
    %236 = arith.maximumf %234, %235 : vector<64x16xf32>
    %237 = arith.truncf %236 : vector<64x16xf32> to vector<64x16xbf16>
    %238 = vector.shape_cast %237 : vector<64x16xbf16> to vector<1x8x8x16xbf16>
    %c0_292 = arith.constant 0 : index
    %c3_293 = arith.constant 3 : index
    %c0_294 = arith.constant 0 : index
    %c0_295 = arith.constant 0 : index
    %239 = vector.load %arg24[%c0_292, %c3_293, %c0_294, %c0_295] : memref<1x14x8x16xbf16, #tpu.memory_space<vmem>>, vector<1x8x8x16xbf16>
    tpu.vector_store %arg24[%c0_292, %c3_293, %c0_294, %c0_295], %238 {strides = array<i32>} : memref<1x14x8x16xbf16, #tpu.memory_space<vmem>>, vector<1x8x8x16xbf16>,
    %cst_296 = arith.constant 0.000000e+00 : f32
    %240 = vector.broadcast %cst_296 : f32 to vector<64x16xf32>
    %c0_297 = arith.constant 0 : index
    %c0_298 = arith.constant 0 : index
    %c0_299 = arith.constant 0 : index
    %c0_300 = arith.constant 0 : index
    %241 = vector.load %arg24[%c0_297, %c0_298, %c0_299, %c0_300] : memref<1x14x8x16xbf16, #tpu.memory_space<vmem>>, vector<1x8x8x16xbf16>
    %242 = vector.shape_cast %241 : vector<1x8x8x16xbf16> to vector<64x16xbf16>
    %c0_301 = arith.constant 0 : index
    %c0_302 = arith.constant 0 : index
    %c0_303 = arith.constant 0 : index
    %243 = vector.load %arg16[%c0_301, %c0_302, %c0_303] : memref<7x16x16xbf16, #tpu.memory_space<vmem>>, vector<1x16x16xbf16>
    %244 = vector.shape_cast %243 : vector<1x16x16xbf16> to vector<16x16xbf16>
    %cst_304 = arith.constant dense<0.000000e+00> : vector<64x16xf32>
    %245 = tpu.matmul %242, %244, %cst_304 {dimension_numbers = #tpu.dot_dimension_numbers<[1], [0], [0], [1], [0, 0, 1, 1], [], []>} : vector<64x16xbf16>, vector<16x16xbf16>, vector<64x16xf32> -> vector<64x16xf32>
    %246 = arith.addf %240, %245 : vector<64x16xf32>
    %c0_305 = arith.constant 0 : index
    %c1_306 = arith.constant 1 : index
    %c0_307 = arith.constant 0 : index
    %c0_308 = arith.constant 0 : index
    %247 = vector.load %arg24[%c0_305, %c1_306, %c0_307, %c0_308] : memref<1x14x8x16xbf16, #tpu.memory_space<vmem>>, vector<1x8x8x16xbf16>
    %248 = vector.shape_cast %247 : vector<1x8x8x16xbf16> to vector<64x16xbf16>
    %c1_309 = arith.constant 1 : index
    %c0_310 = arith.constant 0 : index
    %c0_311 = arith.constant 0 : index
    %249 = vector.load %arg16[%c1_309, %c0_310, %c0_311] : memref<7x16x16xbf16, #tpu.memory_space<vmem>>, vector<1x16x16xbf16>
    %250 = vector.shape_cast %249 : vector<1x16x16xbf16> to vector<16x16xbf16>
    %cst_312 = arith.constant dense<0.000000e+00> : vector<64x16xf32>
    %251 = tpu.matmul %248, %250, %cst_312 {dimension_numbers = #tpu.dot_dimension_numbers<[1], [0], [0], [1], [0, 0, 1, 1], [], []>} : vector<64x16xbf16>, vector<16x16xbf16>, vector<64x16xf32> -> vector<64x16xf32>
    %252 = arith.addf %246, %251 : vector<64x16xf32>
    %c0_313 = arith.constant 0 : index
    %c2_314 = arith.constant 2 : index
    %c0_315 = arith.constant 0 : index
    %c0_316 = arith.constant 0 : index
    %253 = vector.load %arg24[%c0_313, %c2_314, %c0_315, %c0_316] : memref<1x14x8x16xbf16, #tpu.memory_space<vmem>>, vector<1x8x8x16xbf16>
    %254 = vector.shape_cast %253 : vector<1x8x8x16xbf16> to vector<64x16xbf16>
    %c2_317 = arith.constant 2 : index
    %c0_318 = arith.constant 0 : index
    %c0_319 = arith.constant 0 : index
    %255 = vector.load %arg16[%c2_317, %c0_318, %c0_319] : memref<7x16x16xbf16, #tpu.memory_space<vmem>>, vector<1x16x16xbf16>
    %256 = vector.shape_cast %255 : vector<1x16x16xbf16> to vector<16x16xbf16>
    %cst_320 = arith.constant dense<0.000000e+00> : vector<64x16xf32>
    %257 = tpu.matmul %254, %256, %cst_320 {dimension_numbers = #tpu.dot_dimension_numbers<[1], [0], [0], [1], [0, 0, 1, 1], [], []>} : vector<64x16xbf16>, vector<16x16xbf16>, vector<64x16xf32> -> vector<64x16xf32>
    %258 = arith.addf %252, %257 : vector<64x16xf32>
    %c0_321 = arith.constant 0 : index
    %c3_322 = arith.constant 3 : index
    %c0_323 = arith.constant 0 : index
    %c0_324 = arith.constant 0 : index
    %259 = vector.load %arg24[%c0_321, %c3_322, %c0_323, %c0_324] : memref<1x14x8x16xbf16, #tpu.memory_space<vmem>>, vector<1x8x8x16xbf16>
    %260 = vector.shape_cast %259 : vector<1x8x8x16xbf16> to vector<64x16xbf16>
    %c3_325 = arith.constant 3 : index
    %c0_326 = arith.constant 0 : index
    %c0_327 = arith.constant 0 : index
    %261 = vector.load %arg16[%c3_325, %c0_326, %c0_327] : memref<7x16x16xbf16, #tpu.memory_space<vmem>>, vector<1x16x16xbf16>
    %262 = vector.shape_cast %261 : vector<1x16x16xbf16> to vector<16x16xbf16>
    %cst_328 = arith.constant dense<0.000000e+00> : vector<64x16xf32>
    %263 = tpu.matmul %260, %262, %cst_328 {dimension_numbers = #tpu.dot_dimension_numbers<[1], [0], [0], [1], [0, 0, 1, 1], [], []>} : vector<64x16xbf16>, vector<16x16xbf16>, vector<64x16xf32> -> vector<64x16xf32>
    %264 = arith.addf %258, %263 : vector<64x16xf32>
    %c0_329 = arith.constant 0 : index
    %c4_330 = arith.constant 4 : index
    %c0_331 = arith.constant 0 : index
    %c0_332 = arith.constant 0 : index
    %265 = vector.load %arg24[%c0_329, %c4_330, %c0_331, %c0_332] : memref<1x14x8x16xbf16, #tpu.memory_space<vmem>>, vector<1x8x8x16xbf16>
    %266 = vector.shape_cast %265 : vector<1x8x8x16xbf16> to vector<64x16xbf16>
    %c4_333 = arith.constant 4 : index
    %c0_334 = arith.constant 0 : index
    %c0_335 = arith.constant 0 : index
    %267 = vector.load %arg16[%c4_333, %c0_334, %c0_335] : memref<7x16x16xbf16, #tpu.memory_space<vmem>>, vector<1x16x16xbf16>
    %268 = vector.shape_cast %267 : vector<1x16x16xbf16> to vector<16x16xbf16>
    %cst_336 = arith.constant dense<0.000000e+00> : vector<64x16xf32>
    %269 = tpu.matmul %266, %268, %cst_336 {dimension_numbers = #tpu.dot_dimension_numbers<[1], [0], [0], [1], [0, 0, 1, 1], [], []>} : vector<64x16xbf16>, vector<16x16xbf16>, vector<64x16xf32> -> vector<64x16xf32>
    %270 = arith.addf %264, %269 : vector<64x16xf32>
    %c0_337 = arith.constant 0 : index
    %c5_338 = arith.constant 5 : index
    %c0_339 = arith.constant 0 : index
    %c0_340 = arith.constant 0 : index
    %271 = vector.load %arg24[%c0_337, %c5_338, %c0_339, %c0_340] : memref<1x14x8x16xbf16, #tpu.memory_space<vmem>>, vector<1x8x8x16xbf16>
    %272 = vector.shape_cast %271 : vector<1x8x8x16xbf16> to vector<64x16xbf16>
    %c5_341 = arith.constant 5 : index
    %c0_342 = arith.constant 0 : index
    %c0_343 = arith.constant 0 : index
    %273 = vector.load %arg16[%c5_341, %c0_342, %c0_343] : memref<7x16x16xbf16, #tpu.memory_space<vmem>>, vector<1x16x16xbf16>
    %274 = vector.shape_cast %273 : vector<1x16x16xbf16> to vector<16x16xbf16>
    %cst_344 = arith.constant dense<0.000000e+00> : vector<64x16xf32>
    %275 = tpu.matmul %272, %274, %cst_344 {dimension_numbers = #tpu.dot_dimension_numbers<[1], [0], [0], [1], [0, 0, 1, 1], [], []>} : vector<64x16xbf16>, vector<16x16xbf16>, vector<64x16xf32> -> vector<64x16xf32>
    %276 = arith.addf %270, %275 : vector<64x16xf32>
    %c0_345 = arith.constant 0 : index
    %c6_346 = arith.constant 6 : index
    %c0_347 = arith.constant 0 : index
    %c0_348 = arith.constant 0 : index
    %277 = vector.load %arg24[%c0_345, %c6_346, %c0_347, %c0_348] : memref<1x14x8x16xbf16, #tpu.memory_space<vmem>>, vector<1x8x8x16xbf16>
    %278 = vector.shape_cast %277 : vector<1x8x8x16xbf16> to vector<64x16xbf16>
    %c6_349 = arith.constant 6 : index
    %c0_350 = arith.constant 0 : index
    %c0_351 = arith.constant 0 : index
    %279 = vector.load %arg16[%c6_349, %c0_350, %c0_351] : memref<7x16x16xbf16, #tpu.memory_space<vmem>>, vector<1x16x16xbf16>
    %280 = vector.shape_cast %279 : vector<1x16x16xbf16> to vector<16x16xbf16>
    %cst_352 = arith.constant dense<0.000000e+00> : vector<64x16xf32>
    %281 = tpu.matmul %278, %280, %cst_352 {dimension_numbers = #tpu.dot_dimension_numbers<[1], [0], [0], [1], [0, 0, 1, 1], [], []>} : vector<64x16xbf16>, vector<16x16xbf16>, vector<64x16xf32> -> vector<64x16xf32>
    %282 = arith.addf %276, %281 : vector<64x16xf32>
    %c0_353 = arith.constant 0 : index
    %c0_354 = arith.constant 0 : index
    %283 = vector.load %arg17[%c0_353, %c0_354] : memref<1x16xf32, #tpu.memory_space<vmem>>, vector<1x16xf32>
    %284 = vector.broadcast %283 : vector<1x16xf32> to vector<64x16xf32>
    %285 = arith.addf %282, %284 : vector<64x16xf32>
    %cst_355 = arith.constant 0.000000e+00 : f32
    %286 = vector.broadcast %cst_355 : f32 to vector<64x16xf32>
    %287 = arith.maximumf %285, %286 : vector<64x16xf32>
    %288 = arith.truncf %287 : vector<64x16xf32> to vector<64x16xbf16>
    %289 = vector.shape_cast %288 : vector<64x16xbf16> to vector<1x8x8x16xbf16>
    %c0_356 = arith.constant 0 : index
    %c0_357 = arith.constant 0 : index
    %c3_358 = arith.constant 3 : index
    %c0_359 = arith.constant 0 : index
    %290 = vector.load %arg23[%c0_356, %c0_357, %c3_358, %c0_359] : memref<1x8x14x16xbf16, #tpu.memory_space<vmem>>, vector<1x8x8x16xbf16>
    tpu.vector_store %arg23[%c0_356, %c0_357, %c3_358, %c0_359], %289 {strides = array<i32>} : memref<1x8x14x16xbf16, #tpu.memory_space<vmem>>, vector<1x8x8x16xbf16>,
    %cst_360 = arith.constant 0.000000e+00 : f32
    %291 = vector.broadcast %cst_360 : f32 to vector<64x192xf32>
    %c0_361 = arith.constant 0 : index
    %c0_362 = arith.constant 0 : index
    %c0_363 = arith.constant 0 : index
    %c0_364 = arith.constant 0 : index
    %292 = vector.load %arg23[%c0_361, %c0_362, %c0_363, %c0_364] : memref<1x8x14x16xbf16, #tpu.memory_space<vmem>>, vector<1x8x8x16xbf16>
    %293 = vector.shape_cast %292 : vector<1x8x8x16xbf16> to vector<64x16xbf16>
    %c0_365 = arith.constant 0 : index
    %c0_366 = arith.constant 0 : index
    %c0_367 = arith.constant 0 : index
    %294 = vector.load %arg18[%c0_365, %c0_366, %c0_367] : memref<7x16x192xbf16, #tpu.memory_space<vmem>>, vector<1x16x192xbf16>
    %295 = vector.shape_cast %294 : vector<1x16x192xbf16> to vector<16x192xbf16>
    %cst_368 = arith.constant dense<0.000000e+00> : vector<64x192xf32>
    %296 = tpu.matmul %293, %295, %cst_368 {dimension_numbers = #tpu.dot_dimension_numbers<[1], [0], [0], [1], [0, 0, 1, 1], [], []>} : vector<64x16xbf16>, vector<16x192xbf16>, vector<64x192xf32> -> vector<64x192xf32>
    %297 = arith.addf %291, %296 : vector<64x192xf32>
    %c0_369 = arith.constant 0 : index
    %c0_370 = arith.constant 0 : index
    %c1_371 = arith.constant 1 : index
    %c0_372 = arith.constant 0 : index
    %298 = vector.load %arg23[%c0_369, %c0_370, %c1_371, %c0_372] : memref<1x8x14x16xbf16, #tpu.memory_space<vmem>>, vector<1x8x8x16xbf16>
    %299 = vector.shape_cast %298 : vector<1x8x8x16xbf16> to vector<64x16xbf16>
    %c1_373 = arith.constant 1 : index
    %c0_374 = arith.constant 0 : index
    %c0_375 = arith.constant 0 : index
    %300 = vector.load %arg18[%c1_373, %c0_374, %c0_375] : memref<7x16x192xbf16, #tpu.memory_space<vmem>>, vector<1x16x192xbf16>
    %301 = vector.shape_cast %300 : vector<1x16x192xbf16> to vector<16x192xbf16>
    %cst_376 = arith.constant dense<0.000000e+00> : vector<64x192xf32>
    %302 = tpu.matmul %299, %301, %cst_376 {dimension_numbers = #tpu.dot_dimension_numbers<[1], [0], [0], [1], [0, 0, 1, 1], [], []>} : vector<64x16xbf16>, vector<16x192xbf16>, vector<64x192xf32> -> vector<64x192xf32>
    %303 = arith.addf %297, %302 : vector<64x192xf32>
    %c0_377 = arith.constant 0 : index
    %c0_378 = arith.constant 0 : index
    %c2_379 = arith.constant 2 : index
    %c0_380 = arith.constant 0 : index
    %304 = vector.load %arg23[%c0_377, %c0_378, %c2_379, %c0_380] : memref<1x8x14x16xbf16, #tpu.memory_space<vmem>>, vector<1x8x8x16xbf16>
    %305 = vector.shape_cast %304 : vector<1x8x8x16xbf16> to vector<64x16xbf16>
    %c2_381 = arith.constant 2 : index
    %c0_382 = arith.constant 0 : index
    %c0_383 = arith.constant 0 : index
    %306 = vector.load %arg18[%c2_381, %c0_382, %c0_383] : memref<7x16x192xbf16, #tpu.memory_space<vmem>>, vector<1x16x192xbf16>
    %307 = vector.shape_cast %306 : vector<1x16x192xbf16> to vector<16x192xbf16>
    %cst_384 = arith.constant dense<0.000000e+00> : vector<64x192xf32>
    %308 = tpu.matmul %305, %307, %cst_384 {dimension_numbers = #tpu.dot_dimension_numbers<[1], [0], [0], [1], [0, 0, 1, 1], [], []>} : vector<64x16xbf16>, vector<16x192xbf16>, vector<64x192xf32> -> vector<64x192xf32>
    %309 = arith.addf %303, %308 : vector<64x192xf32>
    %c0_385 = arith.constant 0 : index
    %c0_386 = arith.constant 0 : index
    %c3_387 = arith.constant 3 : index
    %c0_388 = arith.constant 0 : index
    %310 = vector.load %arg23[%c0_385, %c0_386, %c3_387, %c0_388] : memref<1x8x14x16xbf16, #tpu.memory_space<vmem>>, vector<1x8x8x16xbf16>
    %311 = vector.shape_cast %310 : vector<1x8x8x16xbf16> to vector<64x16xbf16>
    %c3_389 = arith.constant 3 : index
    %c0_390 = arith.constant 0 : index
    %c0_391 = arith.constant 0 : index
    %312 = vector.load %arg18[%c3_389, %c0_390, %c0_391] : memref<7x16x192xbf16, #tpu.memory_space<vmem>>, vector<1x16x192xbf16>
    %313 = vector.shape_cast %312 : vector<1x16x192xbf16> to vector<16x192xbf16>
    %cst_392 = arith.constant dense<0.000000e+00> : vector<64x192xf32>
    %314 = tpu.matmul %311, %313, %cst_392 {dimension_numbers = #tpu.dot_dimension_numbers<[1], [0], [0], [1], [0, 0, 1, 1], [], []>} : vector<64x16xbf16>, vector<16x192xbf16>, vector<64x192xf32> -> vector<64x192xf32>
    %315 = arith.addf %309, %314 : vector<64x192xf32>
    %c0_393 = arith.constant 0 : index
    %c0_394 = arith.constant 0 : index
    %c4_395 = arith.constant 4 : index
    %c0_396 = arith.constant 0 : index
    %316 = vector.load %arg23[%c0_393, %c0_394, %c4_395, %c0_396] : memref<1x8x14x16xbf16, #tpu.memory_space<vmem>>, vector<1x8x8x16xbf16>
    %317 = vector.shape_cast %316 : vector<1x8x8x16xbf16> to vector<64x16xbf16>
    %c4_397 = arith.constant 4 : index
    %c0_398 = arith.constant 0 : index
    %c0_399 = arith.constant 0 : index
    %318 = vector.load %arg18[%c4_397, %c0_398, %c0_399] : memref<7x16x192xbf16, #tpu.memory_space<vmem>>, vector<1x16x192xbf16>
    %319 = vector.shape_cast %318 : vector<1x16x192xbf16> to vector<16x192xbf16>
    %cst_400 = arith.constant dense<0.000000e+00> : vector<64x192xf32>
    %320 = tpu.matmul %317, %319, %cst_400 {dimension_numbers = #tpu.dot_dimension_numbers<[1], [0], [0], [1], [0, 0, 1, 1], [], []>} : vector<64x16xbf16>, vector<16x192xbf16>, vector<64x192xf32> -> vector<64x192xf32>
    %321 = arith.addf %315, %320 : vector<64x192xf32>
    %c0_401 = arith.constant 0 : index
    %c0_402 = arith.constant 0 : index
    %c5_403 = arith.constant 5 : index
    %c0_404 = arith.constant 0 : index
    %322 = vector.load %arg23[%c0_401, %c0_402, %c5_403, %c0_404] : memref<1x8x14x16xbf16, #tpu.memory_space<vmem>>, vector<1x8x8x16xbf16>
    %323 = vector.shape_cast %322 : vector<1x8x8x16xbf16> to vector<64x16xbf16>
    %c5_405 = arith.constant 5 : index
    %c0_406 = arith.constant 0 : index
    %c0_407 = arith.constant 0 : index
    %324 = vector.load %arg18[%c5_405, %c0_406, %c0_407] : memref<7x16x192xbf16, #tpu.memory_space<vmem>>, vector<1x16x192xbf16>
    %325 = vector.shape_cast %324 : vector<1x16x192xbf16> to vector<16x192xbf16>
    %cst_408 = arith.constant dense<0.000000e+00> : vector<64x192xf32>
    %326 = tpu.matmul %323, %325, %cst_408 {dimension_numbers = #tpu.dot_dimension_numbers<[1], [0], [0], [1], [0, 0, 1, 1], [], []>} : vector<64x16xbf16>, vector<16x192xbf16>, vector<64x192xf32> -> vector<64x192xf32>
    %327 = arith.addf %321, %326 : vector<64x192xf32>
    %c0_409 = arith.constant 0 : index
    %c0_410 = arith.constant 0 : index
    %c6_411 = arith.constant 6 : index
    %c0_412 = arith.constant 0 : index
    %328 = vector.load %arg23[%c0_409, %c0_410, %c6_411, %c0_412] : memref<1x8x14x16xbf16, #tpu.memory_space<vmem>>, vector<1x8x8x16xbf16>
    %329 = vector.shape_cast %328 : vector<1x8x8x16xbf16> to vector<64x16xbf16>
    %c6_413 = arith.constant 6 : index
    %c0_414 = arith.constant 0 : index
    %c0_415 = arith.constant 0 : index
    %330 = vector.load %arg18[%c6_413, %c0_414, %c0_415] : memref<7x16x192xbf16, #tpu.memory_space<vmem>>, vector<1x16x192xbf16>
    %331 = vector.shape_cast %330 : vector<1x16x192xbf16> to vector<16x192xbf16>
    %cst_416 = arith.constant dense<0.000000e+00> : vector<64x192xf32>
    %332 = tpu.matmul %329, %331, %cst_416 {dimension_numbers = #tpu.dot_dimension_numbers<[1], [0], [0], [1], [0, 0, 1, 1], [], []>} : vector<64x16xbf16>, vector<16x192xbf16>, vector<64x192xf32> -> vector<64x192xf32>
    %333 = arith.addf %327, %332 : vector<64x192xf32>
    %c0_417 = arith.constant 0 : index
    %c0_418 = arith.constant 0 : index
    %334 = vector.load %arg19[%c0_417, %c0_418] : memref<1x192xf32, #tpu.memory_space<vmem>>, vector<1x192xf32>
    %335 = vector.broadcast %334 : vector<1x192xf32> to vector<64x192xf32>
    %336 = arith.addf %333, %335 : vector<64x192xf32>
    %cst_419 = arith.constant 0.000000e+00 : f32
    %337 = vector.broadcast %cst_419 : f32 to vector<64x192xf32>
    %338 = arith.maximumf %336, %337 : vector<64x192xf32>
    %339 = vector.shape_cast %338 : vector<64x192xf32> to vector<1x8x8x192xf32>
    %c0_420 = arith.constant 0 : index
    %c0_421 = arith.constant 0 : index
    %c0_422 = arith.constant 0 : index
    %c384 = arith.constant 384 : index
    %340 = vector.load %arg22[%c0_420, %c0_421, %c0_422, %c384] : memref<1x8x8x768xf32, #tpu.memory_space<vmem>>, vector<1x8x8x192xf32>
    tpu.vector_store %arg22[%c0_420, %c0_421, %c0_422, %c384], %339 {strides = array<i32>} : memref<1x8x8x768xf32, #tpu.memory_space<vmem>>, vector<1x8x8x192xf32>,
    %c0_423 = arith.constant 0 : index
    %c1_424 = arith.constant 1 : index
    %c1_425 = arith.constant 1 : index
    %c0_426 = arith.constant 0 : index
    %341 = vector.load %arg25[%c0_423, %c1_424, %c1_425, %c0_426] : memref<1x10x10x16xbf16, #tpu.memory_space<vmem>>, vector<1x8x8x16xbf16>
    tpu.vector_store %arg25[%c0_423, %c1_424, %c1_425, %c0_426], %6 {strides = array<i32>} : memref<1x10x10x16xbf16, #tpu.memory_space<vmem>>, vector<1x8x8x16xbf16>,
    %c0_427 = arith.constant 0 : index
    %c0_428 = arith.constant 0 : index
    %c0_429 = arith.constant 0 : index
    %c0_430 = arith.constant 0 : index
    %342 = vector.load %arg25[%c0_427, %c0_428, %c0_429, %c0_430] : memref<1x10x10x16xbf16, #tpu.memory_space<vmem>>, vector<1x10x8x16xbf16>
    %343 = arith.extf %342 : vector<1x10x8x16xbf16> to vector<1x10x8x16xf32>
    %c0_431 = arith.constant 0 : index
    %c0_432 = arith.constant 0 : index
    %c1_433 = arith.constant 1 : index
    %c0_434 = arith.constant 0 : index
    %344 = vector.load %arg25[%c0_431, %c0_432, %c1_433, %c0_434] : memref<1x10x10x16xbf16, #tpu.memory_space<vmem>>, vector<1x10x8x16xbf16>
    %345 = arith.extf %344 : vector<1x10x8x16xbf16> to vector<1x10x8x16xf32>
    %346 = arith.addf %343, %345 : vector<1x10x8x16xf32>
    %c0_435 = arith.constant 0 : index
    %c0_436 = arith.constant 0 : index
    %c2_437 = arith.constant 2 : index
    %c0_438 = arith.constant 0 : index
    %347 = vector.load %arg25[%c0_435, %c0_436, %c2_437, %c0_438] : memref<1x10x10x16xbf16, #tpu.memory_space<vmem>>, vector<1x10x8x16xbf16>
    %348 = arith.extf %347 : vector<1x10x8x16xbf16> to vector<1x10x8x16xf32>
    %349 = arith.addf %346, %348 : vector<1x10x8x16xf32>
    %350 = vector.extract_strided_slice %349 {offsets = [0, 0, 0, 0], sizes = [1, 8, 8, 16], strides = [1, 1, 1, 1]} : vector<1x10x8x16xf32> to vector<1x8x8x16xf32>
    %351 = vector.extract_strided_slice %349 {offsets = [0, 1, 0, 0], sizes = [1, 8, 8, 16], strides = [1, 1, 1, 1]} : vector<1x10x8x16xf32> to vector<1x8x8x16xf32>
    %352 = arith.addf %350, %351 : vector<1x8x8x16xf32>
    %353 = vector.extract_strided_slice %349 {offsets = [0, 2, 0, 0], sizes = [1, 8, 8, 16], strides = [1, 1, 1, 1]} : vector<1x10x8x16xf32> to vector<1x8x8x16xf32>
    %354 = arith.addf %352, %353 : vector<1x8x8x16xf32>
    %cst_439 = arith.constant 0.111111112 : f32
    %355 = vector.broadcast %cst_439 : f32 to vector<1x8x8x16xf32>
    %356 = arith.mulf %354, %355 : vector<1x8x8x16xf32>
    %357 = arith.truncf %356 : vector<1x8x8x16xf32> to vector<1x8x8x16xbf16>
    %358 = vector.shape_cast %357 : vector<1x8x8x16xbf16> to vector<64x16xbf16>
    %c0_440 = arith.constant 0 : index
    %c0_441 = arith.constant 0 : index
    %359 = vector.load %arg20[%c0_440, %c0_441] : memref<16x192xbf16, #tpu.memory_space<vmem>>, vector<16x192xbf16>
    %cst_442 = arith.constant dense<0.000000e+00> : vector<64x192xf32>
    %360 = tpu.matmul %358, %359, %cst_442 {dimension_numbers = #tpu.dot_dimension_numbers<[1], [0], [0], [1], [0, 0, 1, 1], [], []>} : vector<64x16xbf16>, vector<16x192xbf16>, vector<64x192xf32> -> vector<64x192xf32>
    %c0_443 = arith.constant 0 : index
    %c0_444 = arith.constant 0 : index
    %361 = vector.load %arg21[%c0_443, %c0_444] : memref<1x192xf32, #tpu.memory_space<vmem>>, vector<1x192xf32>
    %362 = vector.broadcast %361 : vector<1x192xf32> to vector<64x192xf32>
    %363 = arith.addf %360, %362 : vector<64x192xf32>
    %cst_445 = arith.constant 0.000000e+00 : f32
    %364 = vector.broadcast %cst_445 : f32 to vector<64x192xf32>
    %365 = arith.maximumf %363, %364 : vector<64x192xf32>
    %366 = vector.shape_cast %365 : vector<64x192xf32> to vector<1x8x8x192xf32>
    %c0_446 = arith.constant 0 : index
    %c0_447 = arith.constant 0 : index
    %c0_448 = arith.constant 0 : index
    %c576 = arith.constant 576 : index
    %367 = vector.load %arg22[%c0_446, %c0_447, %c0_448, %c576] : memref<1x8x8x768xf32, #tpu.memory_space<vmem>>, vector<1x8x8x192xf32>
    tpu.vector_store %arg22[%c0_446, %c0_447, %c0_448, %c576], %366 {strides = array<i32>} : memref<1x8x8x768xf32, #tpu.memory_space<vmem>>, vector<1x8x8x192xf32>,
    return
  }
  func.func @transform_0(%arg0: i32) -> (i32, i32, i32, i32) {
    %c0_i32 = arith.constant 0 : i32
    %c0_i32_0 = arith.constant 0 : i32
    %c0_i32_1 = arith.constant 0 : i32
    %c0_i32_2 = arith.constant 0 : i32
    return %arg0, %c0_i32, %c0_i32_0, %c0_i32_1 : i32, i32, i32, i32
  }
  func.func @transform_1(%arg0: i32) -> (i32, i32) {
    %c0_i32 = arith.constant 0 : i32
    %c0_i32_0 = arith.constant 0 : i32
    %c0_i32_1 = arith.constant 0 : i32
    return %c0_i32, %c0_i32_0 : i32, i32
  }
  func.func @transform_2(%arg0: i32) -> (i32, i32) {
    %c0_i32 = arith.constant 0 : i32
    %c0_i32_0 = arith.constant 0 : i32
    %c0_i32_1 = arith.constant 0 : i32
    return %c0_i32, %c0_i32_0 : i32, i32
  }
  func.func @transform_3(%arg0: i32) -> (i32, i32) {
    %c0_i32 = arith.constant 0 : i32
    %c0_i32_0 = arith.constant 0 : i32
    %c0_i32_1 = arith.constant 0 : i32
    return %c0_i32, %c0_i32_0 : i32, i32
  }
  func.func @transform_4(%arg0: i32) -> (i32, i32) {
    %c0_i32 = arith.constant 0 : i32
    %c0_i32_0 = arith.constant 0 : i32
    %c0_i32_1 = arith.constant 0 : i32
    return %c0_i32, %c0_i32_0 : i32, i32
  }
  func.func @transform_5(%arg0: i32) -> (i32, i32, i32) {
    %c0_i32 = arith.constant 0 : i32
    %c0_i32_0 = arith.constant 0 : i32
    %c0_i32_1 = arith.constant 0 : i32
    %c0_i32_2 = arith.constant 0 : i32
    return %c0_i32, %c0_i32_0, %c0_i32_1 : i32, i32, i32
  }
  func.func @transform_6(%arg0: i32) -> (i32, i32) {
    %c0_i32 = arith.constant 0 : i32
    %c0_i32_0 = arith.constant 0 : i32
    %c0_i32_1 = arith.constant 0 : i32
    return %c0_i32, %c0_i32_0 : i32, i32
  }
  func.func @transform_7(%arg0: i32) -> (i32, i32, i32) {
    %c0_i32 = arith.constant 0 : i32
    %c0_i32_0 = arith.constant 0 : i32
    %c0_i32_1 = arith.constant 0 : i32
    %c0_i32_2 = arith.constant 0 : i32
    return %c0_i32, %c0_i32_0, %c0_i32_1 : i32, i32, i32
  }
  func.func @transform_8(%arg0: i32) -> (i32, i32) {
    %c0_i32 = arith.constant 0 : i32
    %c0_i32_0 = arith.constant 0 : i32
    %c0_i32_1 = arith.constant 0 : i32
    return %c0_i32, %c0_i32_0 : i32, i32
  }
  func.func @transform_9(%arg0: i32) -> (i32, i32) {
    %c0_i32 = arith.constant 0 : i32
    %c0_i32_0 = arith.constant 0 : i32
    %c0_i32_1 = arith.constant 0 : i32
    return %c0_i32, %c0_i32_0 : i32, i32
  }
  func.func @transform_10(%arg0: i32) -> (i32, i32) {
    %c0_i32 = arith.constant 0 : i32
    %c0_i32_0 = arith.constant 0 : i32
    %c0_i32_1 = arith.constant 0 : i32
    return %c0_i32, %c0_i32_0 : i32, i32
  }
  func.func @transform_11(%arg0: i32) -> (i32, i32, i32) {
    %c0_i32 = arith.constant 0 : i32
    %c0_i32_0 = arith.constant 0 : i32
    %c0_i32_1 = arith.constant 0 : i32
    %c0_i32_2 = arith.constant 0 : i32
    return %c0_i32, %c0_i32_0, %c0_i32_1 : i32, i32, i32
  }
  func.func @transform_12(%arg0: i32) -> (i32, i32) {
    %c0_i32 = arith.constant 0 : i32
    %c0_i32_0 = arith.constant 0 : i32
    %c0_i32_1 = arith.constant 0 : i32
    return %c0_i32, %c0_i32_0 : i32, i32
  }
  func.func @transform_13(%arg0: i32) -> (i32, i32, i32) {
    %c0_i32 = arith.constant 0 : i32
    %c0_i32_0 = arith.constant 0 : i32
    %c0_i32_1 = arith.constant 0 : i32
    %c0_i32_2 = arith.constant 0 : i32
    return %c0_i32, %c0_i32_0, %c0_i32_1 : i32, i32, i32
  }
  func.func @transform_14(%arg0: i32) -> (i32, i32) {
    %c0_i32 = arith.constant 0 : i32
    %c0_i32_0 = arith.constant 0 : i32
    %c0_i32_1 = arith.constant 0 : i32
    return %c0_i32, %c0_i32_0 : i32, i32
  }
  func.func @transform_15(%arg0: i32) -> (i32, i32, i32) {
    %c0_i32 = arith.constant 0 : i32
    %c0_i32_0 = arith.constant 0 : i32
    %c0_i32_1 = arith.constant 0 : i32
    %c0_i32_2 = arith.constant 0 : i32
    return %c0_i32, %c0_i32_0, %c0_i32_1 : i32, i32, i32
  }
  func.func @transform_16(%arg0: i32) -> (i32, i32) {
    %c0_i32 = arith.constant 0 : i32
    %c0_i32_0 = arith.constant 0 : i32
    %c0_i32_1 = arith.constant 0 : i32
    return %c0_i32, %c0_i32_0 : i32, i32
  }
  func.func @transform_17(%arg0: i32) -> (i32, i32, i32) {
    %c0_i32 = arith.constant 0 : i32
    %c0_i32_0 = arith.constant 0 : i32
    %c0_i32_1 = arith.constant 0 : i32
    %c0_i32_2 = arith.constant 0 : i32
    return %c0_i32, %c0_i32_0, %c0_i32_1 : i32, i32, i32
  }
  func.func @transform_18(%arg0: i32) -> (i32, i32) {
    %c0_i32 = arith.constant 0 : i32
    %c0_i32_0 = arith.constant 0 : i32
    %c0_i32_1 = arith.constant 0 : i32
    return %c0_i32, %c0_i32_0 : i32, i32
  }
  func.func @transform_19(%arg0: i32) -> (i32, i32) {
    %c0_i32 = arith.constant 0 : i32
    %c0_i32_0 = arith.constant 0 : i32
    %c0_i32_1 = arith.constant 0 : i32
    return %c0_i32, %c0_i32_0 : i32, i32
  }
  func.func @transform_20(%arg0: i32) -> (i32, i32) {
    %c0_i32 = arith.constant 0 : i32
    %c0_i32_0 = arith.constant 0 : i32
    %c0_i32_1 = arith.constant 0 : i32
    return %c0_i32, %c0_i32_0 : i32, i32
  }
  func.func @transform_21(%arg0: i32) -> (i32, i32, i32, i32) {
    %c0_i32 = arith.constant 0 : i32
    %c0_i32_0 = arith.constant 0 : i32
    %c0_i32_1 = arith.constant 0 : i32
    %c0_i32_2 = arith.constant 0 : i32
    return %arg0, %c0_i32, %c0_i32_0, %c0_i32_1 : i32, i32, i32, i32
  }
}

</mosaic_0001>

<llo_original>
// kernel: inception_c.1
$region0: #{inception_c.1}
  #allocation0 [shape = 'u32[]', space=smem, size = 0x4, offset = 0x4, fixed_abs, tag = 'smem constant byte address 0x4 - core index']
  #allocation1 [shape = 'u32[144,128]{1,0:T(1,128)}', space=vmem, size = 0x12000, scoped, tag = 'internal scratch']
  #allocation2 [shape = 'bf16[1,8,14,16]{3,2,1,0:T(8,128)(2,1)}', space=vmem, size = 0x8000, scoped, tag = 'scratch operand']
  #allocation3 [shape = 'bf16[1,14,8,16]{3,2,1,0:T(8,128)(2,1)}', space=vmem, size = 0x7000, scoped, tag = 'scratch operand']
  #allocation4 [shape = 'bf16[1,10,10,16]{3,2,1,0:T(8,128)(2,1)}', space=vmem, size = 0xa000, scoped, tag = 'scratch operand']
  %s0 = inlined_call_operand.vmem [shape: bf16[2,8,8,16], index: 0, kind: input, shape index: {}]
  %s1 = inlined_call_operand.hbm [shape: bf16[16,192], index: 1, kind: input, shape index: {}]
  %s2 = inlined_call_operand.hbm [shape: f32[1,192], index: 2, kind: input, shape index: {}]
  %s3 = inlined_call_operand.hbm [shape: bf16[16,16], index: 3, kind: input, shape index: {}]
  %s4 = inlined_call_operand.hbm [shape: f32[1,16], index: 4, kind: input, shape index: {}]
  %s5 = inlined_call_operand.hbm [shape: bf16[7,16,16], index: 5, kind: input, shape index: {}]
  %s6 = inlined_call_operand.hbm [shape: f32[1,16], index: 6, kind: input, shape index: {}]
  %s7 = inlined_call_operand.vmem [shape: bf16[7,16,192], index: 7, kind: input, shape index: {}]
  %s8 = inlined_call_operand.hbm [shape: f32[1,192], index: 8, kind: input, shape index: {}]
  %s9 = inlined_call_operand.hbm [shape: bf16[16,16], index: 9, kind: input, shape index: {}]
  %s10 = inlined_call_operand.hbm [shape: f32[1,16], index: 10, kind: input, shape index: {}]
  %s11 = inlined_call_operand.hbm [shape: bf16[7,16,16], index: 11, kind: input, shape index: {}]
  %s12 = inlined_call_operand.hbm [shape: f32[1,16], index: 12, kind: input, shape index: {}]
  %s13 = inlined_call_operand.hbm [shape: bf16[7,16,16], index: 13, kind: input, shape index: {}]
  %s14 = inlined_call_operand.hbm [shape: f32[1,16], index: 14, kind: input, shape index: {}]
  %s15 = inlined_call_operand.hbm [shape: bf16[7,16,16], index: 15, kind: input, shape index: {}]
  %s16 = inlined_call_operand.hbm [shape: f32[1,16], index: 16, kind: input, shape index: {}]
  %s17 = inlined_call_operand.vmem [shape: bf16[7,16,192], index: 17, kind: input, shape index: {}]
  %s18 = inlined_call_operand.hbm [shape: f32[1,192], index: 18, kind: input, shape index: {}]
  %s19 = inlined_call_operand.hbm [shape: bf16[16,192], index: 19, kind: input, shape index: {}]
  %s20 = inlined_call_operand.hbm [shape: f32[1,192], index: 20, kind: input, shape index: {}]
  %s21 = inlined_call_operand.hbm [shape: f32[2,8,8,768], index: 21, kind: output, shape index: {}]
  %s22 = sld [smem:[#allocation0]]
  $region189: #{inception_c.1} parent=0
    _
  %s24 = ssub.s32 1, %s22
  %s25 = scalar_select 0, %s24, %s22
  $region1: #{inception_c.1} parent=0
    #allocation5 [shape = 'u8[8192]{0}', space=vmem, size = 0x2000, scoped, tag = 'input window, operand 1, single buffered']
    #allocation6 [shape = 's32[2]{0}', space=sflag, size = 0x8, scoped, tag = 'scoped memory for inception_c.1']
    #allocation7 [shape = 's32[2]{0}', space=sflag, size = 0x8, scoped, tag = 'scoped memory for inception_c.1']
    #allocation8 [shape = 'u8[1024]{0}', space=vmem, size = 0x400, scoped, tag = 'input window, operand 2, single buffered']
    #allocation9 [shape = 's32[1]{0}', space=sflag, size = 0x4, scoped, tag = 'scoped memory for inception_c.1']
    #allocation10 [shape = 'u8[4096]{0}', space=vmem, size = 0x1000, scoped, tag = 'input window, operand 3, single buffered']
    #allocation11 [shape = 'u8[512]{0}', space=vmem, size = 0x400, scoped, tag = 'input window, operand 4, single buffered']
    #allocation12 [shape = 's32[1]{0}', space=sflag, size = 0x4, scoped, tag = 'scoped memory for inception_c.1']
    #allocation13 [shape = 'u8[28672]{0}', space=vmem, size = 0x7000, scoped, tag = 'input window, operand 5, single buffered']
    #allocation14 [shape = 'u8[512]{0}', space=vmem, size = 0x400, scoped, tag = 'input window, operand 6, single buffered']
    #allocation15 [shape = 's32[1]{0}', space=sflag, size = 0x4, scoped, tag = 'scoped memory for inception_c.1']
    #allocation16 [shape = 'u8[1024]{0}', space=vmem, size = 0x400, scoped, tag = 'input window, operand 8, single buffered']
    #allocation17 [shape = 'u8[4096]{0}', space=vmem, size = 0x1000, scoped, tag = 'input window, operand 9, single buffered']
    #allocation18 [shape = 's32[1]{0}', space=sflag, size = 0x4, scoped, tag = 'scoped memory for inception_c.1']
    #allocation19 [shape = 'u8[512]{0}', space=vmem, size = 0x400, scoped, tag = 'input window, operand 10, single buffered']
    #allocation20 [shape = 'u8[28672]{0}', space=vmem, size = 0x7000, scoped, tag = 'input window, operand 11, single buffered']
    #allocation21 [shape = 's32[1]{0}', space=sflag, size = 0x4, scoped, tag = 'scoped memory for inception_c.1']
    #allocation22 [shape = 'u8[512]{0}', space=vmem, size = 0x400, scoped, tag = 'input window, operand 12, single buffered']
    #allocation23 [shape = 'u8[28672]{0}', space=vmem, size = 0x7000, scoped, tag = 'input window, operand 13, single buffered']
    #allocation24 [shape = 's32[1]{0}', space=sflag, size = 0x4, scoped, tag = 'scoped memory for inception_c.1']
    #allocation25 [shape = 'u8[512]{0}', space=vmem, size = 0x400, scoped, tag = 'input window, operand 14, single buffered']
    #allocation26 [shape = 'u8[28672]{0}', space=vmem, size = 0x7000, scoped, tag = 'input window, operand 15, single buffered']
    #allocation27 [shape = 's32[1]{0}', space=sflag, size = 0x4, scoped, tag = 'scoped memory for inception_c.1']
    #allocation28 [shape = 'u8[512]{0}', space=vmem, size = 0x400, scoped, tag = 'input window, operand 16, single buffered']
    #allocation29 [shape = 'u8[1024]{0}', space=vmem, size = 0x400, scoped, tag = 'input window, operand 18, single buffered']
    #allocation30 [shape = 's32[1]{0}', space=sflag, size = 0x4, scoped, tag = 'scoped memory for inception_c.1']
    #allocation31 [shape = 'u8[8192]{0}', space=vmem, size = 0x2000, scoped, tag = 'input window, operand 19, single buffered']
    #allocation32 [shape = 'u8[1024]{0}', space=vmem, size = 0x400, scoped, tag = 'input window, operand 20, single buffered']
    #allocation33 [shape = 's32[1]{0}', space=sflag, size = 0x4, scoped, tag = 'scoped memory for inception_c.1']
    #allocation34 [shape = 'u8[393216]{0}', space=vmem, size = 0x60000, scoped, tag = 'output window, operand 0']
    %26 = vsyncpa [#allocation6], 0
    %27 = vsyncpa [#allocation9], 0
    %28 = vsyncpa [#allocation12], 0
    %29 = vsyncpa [#allocation15], 0
    %30 = vsyncpa [#allocation18], 0
    %31 = vsyncpa [#allocation21], 0
    %32 = vsyncpa [#allocation24], 0
    %33 = vsyncpa [#allocation27], 0
    %34 = vsyncpa [#allocation30], 0
    %35 = vsyncpa [#allocation33], 0
    %36 = vsyncpa [#allocation7], 0
    %s37 = scalar_lea.sflag [#allocation7], 1
    %38 = vsyncpa %s37, 0
    loop: start=0, step=1, limit=4
    $region2: #{inception_c.1} parent=1 // loop_pre_header
      _
    $region3: #{inception_c.1} parent=1 // loop_header
      %s40 = sphi 0, %s44
      %p41 = scmp.ge.s32.totalorder %s40, 4
      %s50 = sphi 0, %s52
      %s53 = sphi 0, %s50
      %s54 = sphi 0, %s53
      %s70 = sphi 0, %s54
      %s74 = sphi 0, %s74
      %s76 = sphi 0, %s74
      %s77 = sphi 0, %s76
      %s91 = sphi 0, %s77
      %s95 = sphi 0, %s95
      %s97 = sphi 0, %s95
      %s98 = sphi 0, %s97
      %s112 = sphi 0, %s98
      %s116 = sphi 0, %s116
      %s118 = sphi 0, %s116
      %s119 = sphi 0, %s118
      %s133 = sphi 0, %s119
      %s137 = sphi 0, %s137
      %s139 = sphi 0, %s137
      %s140 = sphi 0, %s139
      %s154 = sphi 0, %s140
      %s158 = sphi 0, %s158
      %s160 = sphi 0, %s158
      %s161 = sphi 0, %s160
      %s175 = sphi 0, %s161
      %s179 = sphi 0, %s179
      %s181 = sphi 0, %s179
      %s182 = sphi 0, %s181
      %s196 = sphi 0, %s182
      %s200 = sphi 0, %s200
      %s202 = sphi 0, %s200
      %s203 = sphi 0, %s202
      %s217 = sphi 0, %s203
      %s221 = sphi 0, %s221
      %s223 = sphi 0, %s221
      %s224 = sphi 0, %s223
      %s238 = sphi 0, %s224
      %s242 = sphi 0, %s242
      %s244 = sphi 0, %s242
      %s245 = sphi 0, %s244
      %s259 = sphi 0, %s245
      %s263 = sphi 0, %s263
      %s265 = sphi 0, %s263
      %s266 = sphi 0, %s265
      %s280 = sphi 0, %s266
      %s284 = sphi 0, %s284
      %s286 = sphi 0, %s284
      %s287 = sphi 0, %s286
      %s301 = sphi 0, %s287
      %s305 = sphi 0, %s305
      %s307 = sphi 0, %s305
      %s308 = sphi 0, %s307
      %s322 = sphi 0, %s308
      %s326 = sphi 0, %s326
      %s328 = sphi 0, %s326
      %s329 = sphi 0, %s328
      %s343 = sphi 0, %s329
      %s347 = sphi 0, %s347
      %s349 = sphi 0, %s347
      %s350 = sphi 0, %s349
      %s364 = sphi 0, %s350
      %s368 = sphi 0, %s368
      %s370 = sphi 0, %s368
      %s371 = sphi 0, %s370
      %s385 = sphi 0, %s371
      %s389 = sphi 0, %s389
      %s391 = sphi 0, %s389
      %s392 = sphi 0, %s391
      %s406 = sphi 0, %s392
      %s410 = sphi 0, %s410
      %s412 = sphi 0, %s410
      %s413 = sphi 0, %s412
      %s427 = sphi 0, %s413
      %s431 = sphi 0, %s431
      %s433 = sphi 0, %s431
      %s434 = sphi 0, %s433
      %s448 = sphi 0, %s434
      %s452 = sphi 0, %s452
      %s454 = sphi 0, %s452
      %s455 = sphi 0, %s454
      %s469 = sphi 0, %s455
      %s473 = sphi 0, %s473
      %s475 = sphi 0, %s473
      %s476 = sphi 0, %s475
      %s490 = sphi 0, %s476
      %s496 = sphi 0, %s498
      %s499 = sphi 0, %s496
      %s500 = sphi 0, %s499
      %s516 = sphi 0, %s500
    $region4: #{inception_c.1} parent=1 // loop_header_branch
      %43 = sbr.rel (%p41) target = $region8
    $region5: #{inception_c.1} parent=1 // loop_body
      %s45 = ssub.s32 %s40, 1
      %s46 = ssub.s32 %s40, 2
      %s47 = sadd.s32 %s40, 1
      %s48 = ssub.s32 %s40, %s47
      %p49 = scmp.eq.s32.totalorder %s48, 0
      %s51 = sadd.s32 %s50, 1
      %s52 = scalar_select %p49, %s50, %s51
      %p55 = pneg %p49
      %p56 = scmp.eq.s32.totalorder %s40, 1
      %p57 = por %p55, %p56
      %p58 = scmp.ne.s32.totalorder %s50, %s53
      %p59 = scmp.eq.s32.totalorder %s40, 0
      %p60 = por %p58, %p59
      %p61 = scmp.ne.s32.totalorder %s50, %s53
      %p62 = scmp.eq.s32.totalorder %s45, 1
      %p63 = por %p61, %p62
      %p64 = scmp.ne.s32.totalorder %s53, %s54
      %p65 = scmp.eq.s32.totalorder %s45, 0
      %p66 = por %p64, %p65
      %p67 = scmp.ne.s32.totalorder %s53, %s54
      %p68 = scmp.eq.s32.totalorder %s46, 1
      %p69 = por %p67, %p68
      %p71 = scmp.ne.s32.totalorder %s54, %s70
      %p72 = scmp.eq.s32.totalorder %s46, 0
      %p73 = por %p71, %p72
      %s75 = sadd.s32 %s74, 1
      %p78 = scmp.eq.s32.totalorder %s40, 1
      %p79 = scmp.ne.s32.totalorder %s74, %s76
      %p80 = scmp.eq.s32.totalorder %s40, 0
      %p81 = por %p79, %p80
      %p82 = scmp.ne.s32.totalorder %s74, %s76
      %p83 = scmp.eq.s32.totalorder %s45, 1
      %p84 = por %p82, %p83
      %p85 = scmp.ne.s32.totalorder %s76, %s77
      %p86 = scmp.eq.s32.totalorder %s45, 0
      %p87 = por %p85, %p86
      %p88 = scmp.ne.s32.totalorder %s76, %s77
      %p89 = scmp.eq.s32.totalorder %s46, 1
      %p90 = por %p88, %p89
      %p92 = scmp.ne.s32.totalorder %s77, %s91
      %p93 = scmp.eq.s32.totalorder %s46, 0
      %p94 = por %p92, %p93
      %s96 = sadd.s32 %s95, 1
      %p99 = scmp.eq.s32.totalorder %s40, 1
      %p100 = scmp.ne.s32.totalorder %s95, %s97
      %p101 = scmp.eq.s32.totalorder %s40, 0
      %p102 = por %p100, %p101
      %p103 = scmp.ne.s32.totalorder %s95, %s97
      %p104 = scmp.eq.s32.totalorder %s45, 1
      %p105 = por %p103, %p104
      %p106 = scmp.ne.s32.totalorder %s97, %s98
      %p107 = scmp.eq.s32.totalorder %s45, 0
      %p108 = por %p106, %p107
      %p109 = scmp.ne.s32.totalorder %s97, %s98
      %p110 = scmp.eq.s32.totalorder %s46, 1
      %p111 = por %p109, %p110
      %p113 = scmp.ne.s32.totalorder %s98, %s112
      %p114 = scmp.eq.s32.totalorder %s46, 0
      %p115 = por %p113, %p114
      %s117 = sadd.s32 %s116, 1
      %p120 = scmp.eq.s32.totalorder %s40, 1
      %p121 = scmp.ne.s32.totalorder %s116, %s118
      %p122 = scmp.eq.s32.totalorder %s40, 0
      %p123 = por %p121, %p122
      %p124 = scmp.ne.s32.totalorder %s116, %s118
      %p125 = scmp.eq.s32.totalorder %s45, 1
      %p126 = por %p124, %p125
      %p127 = scmp.ne.s32.totalorder %s118, %s119
      %p128 = scmp.eq.s32.totalorder %s45, 0
      %p129 = por %p127, %p128
      %p130 = scmp.ne.s32.totalorder %s118, %s119
      %p131 = scmp.eq.s32.totalorder %s46, 1
      %p132 = por %p130, %p131
      %p134 = scmp.ne.s32.totalorder %s119, %s133
      %p135 = scmp.eq.s32.totalorder %s46, 0
      %p136 = por %p134, %p135
      %s138 = sadd.s32 %s137, 1
      %p141 = scmp.eq.s32.totalorder %s40, 1
      %p142 = scmp.ne.s32.totalorder %s137, %s139
      %p143 = scmp.eq.s32.totalorder %s40, 0
      %p144 = por %p142, %p143
      %p145 = scmp.ne.s32.totalorder %s137, %s139
      %p146 = scmp.eq.s32.totalorder %s45, 1
      %p147 = por %p145, %p146
      %p148 = scmp.ne.s32.totalorder %s139, %s140
      %p149 = scmp.eq.s32.totalorder %s45, 0
      %p150 = por %p148, %p149
      %p151 = scmp.ne.s32.totalorder %s139, %s140
      %p152 = scmp.eq.s32.totalorder %s46, 1
      %p153 = por %p151, %p152
      %p155 = scmp.ne.s32.totalorder %s140, %s154
      %p156 = scmp.eq.s32.totalorder %s46, 0
      %p157 = por %p155, %p156
      %s159 = sadd.s32 %s158, 1
      %p162 = scmp.eq.s32.totalorder %s40, 1
      %p163 = scmp.ne.s32.totalorder %s158, %s160
      %p164 = scmp.eq.s32.totalorder %s40, 0
      %p165 = por %p163, %p164
      %p166 = scmp.ne.s32.totalorder %s158, %s160
      %p167 = scmp.eq.s32.totalorder %s45, 1
      %p168 = por %p166, %p167
      %p169 = scmp.ne.s32.totalorder %s160, %s161
      %p170 = scmp.eq.s32.totalorder %s45, 0
      %p171 = por %p169, %p170
      %p172 = scmp.ne.s32.totalorder %s160, %s161
      %p173 = scmp.eq.s32.totalorder %s46, 1
      %p174 = por %p172, %p173
      %p176 = scmp.ne.s32.totalorder %s161, %s175
      %p177 = scmp.eq.s32.totalorder %s46, 0
      %p178 = por %p176, %p177
      %s180 = sadd.s32 %s179, 1
      %p183 = scmp.eq.s32.totalorder %s40, 1
      %p184 = scmp.ne.s32.totalorder %s179, %s181
      %p185 = scmp.eq.s32.totalorder %s40, 0
      %p186 = por %p184, %p185
      %p187 = scmp.ne.s32.totalorder %s179, %s181
      %p188 = scmp.eq.s32.totalorder %s45, 1
      %p189 = por %p187, %p188
      %p190 = scmp.ne.s32.totalorder %s181, %s182
      %p191 = scmp.eq.s32.totalorder %s45, 0
      %p192 = por %p190, %p191
      %p193 = scmp.ne.s32.totalorder %s181, %s182
      %p194 = scmp.eq.s32.totalorder %s46, 1
      %p195 = por %p193, %p194
      %p197 = scmp.ne.s32.totalorder %s182, %s196
      %p198 = scmp.eq.s32.totalorder %s46, 0
      %p199 = por %p197, %p198
      %s201 = sadd.s32 %s200, 1
      %p204 = scmp.eq.s32.totalorder %s40, 1
      %p205 = scmp.ne.s32.totalorder %s200, %s202
      %p206 = scmp.eq.s32.totalorder %s40, 0
      %p207 = por %p205, %p206
      %p208 = scmp.ne.s32.totalorder %s200, %s202
      %p209 = scmp.eq.s32.totalorder %s45, 1
      %p210 = por %p208, %p209
      %p211 = scmp.ne.s32.totalorder %s202, %s203
      %p212 = scmp.eq.s32.totalorder %s45, 0
      %p213 = por %p211, %p212
      %p214 = scmp.ne.s32.totalorder %s202, %s203
      %p215 = scmp.eq.s32.totalorder %s46, 1
      %p216 = por %p214, %p215
      %p218 = scmp.ne.s32.totalorder %s203, %s217
      %p219 = scmp.eq.s32.totalorder %s46, 0
      %p220 = por %p218, %p219
      %s222 = sadd.s32 %s221, 1
      %p225 = scmp.eq.s32.totalorder %s40, 1
      %p226 = scmp.ne.s32.totalorder %s221, %s223
      %p227 = scmp.eq.s32.totalorder %s40, 0
      %p228 = por %p226, %p227
      %p229 = scmp.ne.s32.totalorder %s221, %s223
      %p230 = scmp.eq.s32.totalorder %s45, 1
      %p231 = por %p229, %p230
      %p232 = scmp.ne.s32.totalorder %s223, %s224
      %p233 = scmp.eq.s32.totalorder %s45, 0
      %p234 = por %p232, %p233
      %p235 = scmp.ne.s32.totalorder %s223, %s224
      %p236 = scmp.eq.s32.totalorder %s46, 1
      %p237 = por %p235, %p236
      %p239 = scmp.ne.s32.totalorder %s224, %s238
      %p240 = scmp.eq.s32.totalorder %s46, 0
      %p241 = por %p239, %p240
      %s243 = sadd.s32 %s242, 1
      %p246 = scmp.eq.s32.totalorder %s40, 1
      %p247 = scmp.ne.s32.totalorder %s242, %s244
      %p248 = scmp.eq.s32.totalorder %s40, 0
      %p249 = por %p247, %p248
      %p250 = scmp.ne.s32.totalorder %s242, %s244
      %p251 = scmp.eq.s32.totalorder %s45, 1
      %p252 = por %p250, %p251
      %p253 = scmp.ne.s32.totalorder %s244, %s245
      %p254 = scmp.eq.s32.totalorder %s45, 0
      %p255 = por %p253, %p254
      %p256 = scmp.ne.s32.totalorder %s244, %s245
      %p257 = scmp.eq.s32.totalorder %s46, 1
      %p258 = por %p256, %p257
      %p260 = scmp.ne.s32.totalorder %s245, %s259
      %p261 = scmp.eq.s32.totalorder %s46, 0
      %p262 = por %p260, %p261
      %s264 = sadd.s32 %s263, 1
      %p267 = scmp.eq.s32.totalorder %s40, 1
      %p268 = scmp.ne.s32.totalorder %s263, %s265
      %p269 = scmp.eq.s32.totalorder %s40, 0
      %p270 = por %p268, %p269
      %p271 = scmp.ne.s32.totalorder %s263, %s265
      %p272 = scmp.eq.s32.totalorder %s45, 1
      %p273 = por %p271, %p272
      %p274 = scmp.ne.s32.totalorder %s265, %s266
      %p275 = scmp.eq.s32.totalorder %s45, 0
      %p276 = por %p274, %p275
      %p277 = scmp.ne.s32.totalorder %s265, %s266
      %p278 = scmp.eq.s32.totalorder %s46, 1
      %p279 = por %p277, %p278
      %p281 = scmp.ne.s32.totalorder %s266, %s280
      %p282 = scmp.eq.s32.totalorder %s46, 0
      %p283 = por %p281, %p282
      %s285 = sadd.s32 %s284, 1
      %p288 = scmp.eq.s32.totalorder %s40, 1
      %p289 = scmp.ne.s32.totalorder %s284, %s286
      %p290 = scmp.eq.s32.totalorder %s40, 0
      %p291 = por %p289, %p290
      %p292 = scmp.ne.s32.totalorder %s284, %s286
      %p293 = scmp.eq.s32.totalorder %s45, 1
      %p294 = por %p292, %p293
      %p295 = scmp.ne.s32.totalorder %s286, %s287
      %p296 = scmp.eq.s32.totalorder %s45, 0
      %p297 = por %p295, %p296
      %p298 = scmp.ne.s32.totalorder %s286, %s287
      %p299 = scmp.eq.s32.totalorder %s46, 1
      %p300 = por %p298, %p299
      %p302 = scmp.ne.s32.totalorder %s287, %s301
      %p303 = scmp.eq.s32.totalorder %s46, 0
      %p304 = por %p302, %p303
      %s306 = sadd.s32 %s305, 1
      %p309 = scmp.eq.s32.totalorder %s40, 1
      %p310 = scmp.ne.s32.totalorder %s305, %s307
      %p311 = scmp.eq.s32.totalorder %s40, 0
      %p312 = por %p310, %p311
      %p313 = scmp.ne.s32.totalorder %s305, %s307
      %p314 = scmp.eq.s32.totalorder %s45, 1
      %p315 = por %p313, %p314
      %p316 = scmp.ne.s32.totalorder %s307, %s308
      %p317 = scmp.eq.s32.totalorder %s45, 0
      %p318 = por %p316, %p317
      %p319 = scmp.ne.s32.totalorder %s307, %s308
      %p320 = scmp.eq.s32.totalorder %s46, 1
      %p321 = por %p319, %p320
      %p323 = scmp.ne.s32.totalorder %s308, %s322
      %p324 = scmp.eq.s32.totalorder %s46, 0
      %p325 = por %p323, %p324
      %s327 = sadd.s32 %s326, 1
      %p330 = scmp.eq.s32.totalorder %s40, 1
      %p331 = scmp.ne.s32.totalorder %s326, %s328
      %p332 = scmp.eq.s32.totalorder %s40, 0
      %p333 = por %p331, %p332
      %p334 = scmp.ne.s32.totalorder %s326, %s328
      %p335 = scmp.eq.s32.totalorder %s45, 1
      %p336 = por %p334, %p335
      %p337 = scmp.ne.s32.totalorder %s328, %s329
      %p338 = scmp.eq.s32.totalorder %s45, 0
      %p339 = por %p337, %p338
      %p340 = scmp.ne.s32.totalorder %s328, %s329
      %p341 = scmp.eq.s32.totalorder %s46, 1
      %p342 = por %p340, %p341
      %p344 = scmp.ne.s32.totalorder %s329, %s343
      %p345 = scmp.eq.s32.totalorder %s46, 0
      %p346 = por %p344, %p345
      %s348 = sadd.s32 %s347, 1
      %p351 = scmp.eq.s32.totalorder %s40, 1
      %p352 = scmp.ne.s32.totalorder %s347, %s349
      %p353 = scmp.eq.s32.totalorder %s40, 0
      %p354 = por %p352, %p353
      %p355 = scmp.ne.s32.totalorder %s347, %s349
      %p356 = scmp.eq.s32.totalorder %s45, 1
      %p357 = por %p355, %p356
      %p358 = scmp.ne.s32.totalorder %s349, %s350
      %p359 = scmp.eq.s32.totalorder %s45, 0
      %p360 = por %p358, %p359
      %p361 = scmp.ne.s32.totalorder %s349, %s350
      %p362 = scmp.eq.s32.totalorder %s46, 1
      %p363 = por %p361, %p362
      %p365 = scmp.ne.s32.totalorder %s350, %s364
      %p366 = scmp.eq.s32.totalorder %s46, 0
      %p367 = por %p365, %p366
      %s369 = sadd.s32 %s368, 1
      %p372 = scmp.eq.s32.totalorder %s40, 1
      %p373 = scmp.ne.s32.totalorder %s368, %s370
      %p374 = scmp.eq.s32.totalorder %s40, 0
      %p375 = por %p373, %p374
      %p376 = scmp.ne.s32.totalorder %s368, %s370
      %p377 = scmp.eq.s32.totalorder %s45, 1
      %p378 = por %p376, %p377
      %p379 = scmp.ne.s32.totalorder %s370, %s371
      %p380 = scmp.eq.s32.totalorder %s45, 0
      %p381 = por %p379, %p380
      %p382 = scmp.ne.s32.totalorder %s370, %s371
      %p383 = scmp.eq.s32.totalorder %s46, 1
      %p384 = por %p382, %p383
      %p386 = scmp.ne.s32.totalorder %s371, %s385
      %p387 = scmp.eq.s32.totalorder %s46, 0
      %p388 = por %p386, %p387
      %s390 = sadd.s32 %s389, 1
      %p393 = scmp.eq.s32.totalorder %s40, 1
      %p394 = scmp.ne.s32.totalorder %s389, %s391
      %p395 = scmp.eq.s32.totalorder %s40, 0
      %p396 = por %p394, %p395
      %p397 = scmp.ne.s32.totalorder %s389, %s391
      %p398 = scmp.eq.s32.totalorder %s45, 1
      %p399 = por %p397, %p398
      %p400 = scmp.ne.s32.totalorder %s391, %s392
      %p401 = scmp.eq.s32.totalorder %s45, 0
      %p402 = por %p400, %p401
      %p403 = scmp.ne.s32.totalorder %s391, %s392
      %p404 = scmp.eq.s32.totalorder %s46, 1
      %p405 = por %p403, %p404
      %p407 = scmp.ne.s32.totalorder %s392, %s406
      %p408 = scmp.eq.s32.totalorder %s46, 0
      %p409 = por %p407, %p408
      %s411 = sadd.s32 %s410, 1
      %p414 = scmp.eq.s32.totalorder %s40, 1
      %p415 = scmp.ne.s32.totalorder %s410, %s412
      %p416 = scmp.eq.s32.totalorder %s40, 0
      %p417 = por %p415, %p416
      %p418 = scmp.ne.s32.totalorder %s410, %s412
      %p419 = scmp.eq.s32.totalorder %s45, 1
      %p420 = por %p418, %p419
      %p421 = scmp.ne.s32.totalorder %s412, %s413
      %p422 = scmp.eq.s32.totalorder %s45, 0
      %p423 = por %p421, %p422
      %p424 = scmp.ne.s32.totalorder %s412, %s413
      %p425 = scmp.eq.s32.totalorder %s46, 1
      %p426 = por %p424, %p425
      %p428 = scmp.ne.s32.totalorder %s413, %s427
      %p429 = scmp.eq.s32.totalorder %s46, 0
      %p430 = por %p428, %p429
      %s432 = sadd.s32 %s431, 1
      %p435 = scmp.eq.s32.totalorder %s40, 1
      %p436 = scmp.ne.s32.totalorder %s431, %s433
      %p437 = scmp.eq.s32.totalorder %s40, 0
      %p438 = por %p436, %p437
      %p439 = scmp.ne.s32.totalorder %s431, %s433
      %p440 = scmp.eq.s32.totalorder %s45, 1
      %p441 = por %p439, %p440
      %p442 = scmp.ne.s32.totalorder %s433, %s434
      %p443 = scmp.eq.s32.totalorder %s45, 0
      %p444 = por %p442, %p443
      %p445 = scmp.ne.s32.totalorder %s433, %s434
      %p446 = scmp.eq.s32.totalorder %s46, 1
      %p447 = por %p445, %p446
      %p449 = scmp.ne.s32.totalorder %s434, %s448
      %p450 = scmp.eq.s32.totalorder %s46, 0
      %p451 = por %p449, %p450
      %s453 = sadd.s32 %s452, 1
      %p456 = scmp.eq.s32.totalorder %s40, 1
      %p457 = scmp.ne.s32.totalorder %s452, %s454
      %p458 = scmp.eq.s32.totalorder %s40, 0
      %p459 = por %p457, %p458
      %p460 = scmp.ne.s32.totalorder %s452, %s454
      %p461 = scmp.eq.s32.totalorder %s45, 1
      %p462 = por %p460, %p461
      %p463 = scmp.ne.s32.totalorder %s454, %s455
      %p464 = scmp.eq.s32.totalorder %s45, 0
      %p465 = por %p463, %p464
      %p466 = scmp.ne.s32.totalorder %s454, %s455
      %p467 = scmp.eq.s32.totalorder %s46, 1
      %p468 = por %p466, %p467
      %p470 = scmp.ne.s32.totalorder %s455, %s469
      %p471 = scmp.eq.s32.totalorder %s46, 0
      %p472 = por %p470, %p471
      %s474 = sadd.s32 %s473, 1
      %p477 = scmp.eq.s32.totalorder %s40, 1
      %p478 = scmp.ne.s32.totalorder %s473, %s475
      %p479 = scmp.eq.s32.totalorder %s40, 0
      %p480 = por %p478, %p479
      %p481 = scmp.ne.s32.totalorder %s473, %s475
      %p482 = scmp.eq.s32.totalorder %s45, 1
      %p483 = por %p481, %p482
      %p484 = scmp.ne.s32.totalorder %s475, %s476
      %p485 = scmp.eq.s32.totalorder %s45, 0
      %p486 = por %p484, %p485
      %p487 = scmp.ne.s32.totalorder %s475, %s476
      %p488 = scmp.eq.s32.totalorder %s46, 1
      %p489 = por %p487, %p488
      %p491 = scmp.ne.s32.totalorder %s476, %s490
      %p492 = scmp.eq.s32.totalorder %s46, 0
      %p493 = por %p491, %p492
      %s494 = ssub.s32 %s40, %s47
      %p495 = scmp.eq.s32.totalorder %s494, 0
      %s497 = sadd.s32 %s496, 1
      %s498 = scalar_select %p495, %s496, %s497
      %p501 = pneg %p495
      %p502 = scmp.eq.s32.totalorder %s40, 1
      %p503 = por %p501, %p502
      %p504 = scmp.ne.s32.totalorder %s496, %s499
      %p505 = scmp.eq.s32.totalorder %s40, 0
      %p506 = por %p504, %p505
      %p507 = scmp.ne.s32.totalorder %s496, %s499
      %p508 = scmp.eq.s32.totalorder %s45, 1
      %p509 = por %p507, %p508
      %p510 = scmp.ne.s32.totalorder %s499, %s500
      %p511 = scmp.eq.s32.totalorder %s45, 0
      %p512 = por %p510, %p511
      %p513 = scmp.ne.s32.totalorder %s499, %s500
      %p514 = scmp.eq.s32.totalorder %s46, 1
      %p515 = por %p513, %p514
      %p517 = scmp.ne.s32.totalorder %s500, %s516
      %p518 = scmp.eq.s32.totalorder %s46, 0
      %p519 = por %p517, %p518
      %p520 = scmp.le.s32.totalorder 1, %s40
      %p521 = scmp.lt.s32.totalorder %s40, 3
      %p522 = pnand %p520, %p521
      %p523 = pneg %p522
      // Predicated region
      $region9: #{inception_c.1} parent=5 // pred_check
        _
      $region10: #{inception_c.1} parent=5 // pred_check_branch
        %525 = sbr.rel (%p522) target = $region12
      $region11: #{inception_c.1} parent=5 // pred_region
        %s526 = ssub.s32 %s40, 1
        // Predicated region
        $region13: #{inception_c.1} parent=11 // pred_check
          %p527 = pneg %p87
        $region14: #{inception_c.1} parent=11 // pred_check_branch
          %529 = sbr.rel (%p527) target = $region16
        $region15: #{inception_c.1} parent=11 // pred_region
          %s531 = ssub.s32 256, 256
          %532 = vsyncadd [#allocation6], %s531
          %s533 = sshll.u32 [#allocation5], 4
          %s534 = int_to_ptr.vmem [resolvable:$true] %s533
          %539 = dma.hbm_to_vmem [thread:$0]  %s1, 256, %s534, [#allocation6], 128, 128, 8
        $region16: #{inception_c.1} parent=11 // pred_fallthru
          _
        // Predicated region
        $region17: #{inception_c.1} parent=11 // pred_check
          %p540 = pneg %p108
        $region18: #{inception_c.1} parent=11 // pred_check_branch
          %542 = sbr.rel (%p540) target = $region20
        $region19: #{inception_c.1} parent=11 // pred_region
          %s544 = ssub.s32 32, 32
          %545 = vsyncadd [#allocation9], %s544
          %s547 = sshll.u32 [#allocation8], 4
          %s548 = int_to_ptr.vmem [resolvable:$true] %s547
          %550 = dma.hbm_to_vmem [thread:$0]  %s2, 32, %s548, [#allocation9]
        $region20: #{inception_c.1} parent=11 // pred_fallthru
          _
        // Predicated region
        $region21: #{inception_c.1} parent=11 // pred_check
          %p551 = pneg %p129
        $region22: #{inception_c.1} parent=11 // pred_check_branch
          %553 = sbr.rel (%p551) target = $region24
        $region23: #{inception_c.1} parent=11 // pred_region
          %s555 = ssub.s32 128, 128
          %556 = vsyncadd [#allocation9], %s555
          %s557 = sshll.u32 [#allocation10], 4
          %s558 = int_to_ptr.vmem [resolvable:$true] %s557
          %563 = dma.hbm_to_vmem [thread:$0]  %s3, 128, %s558, [#allocation9], 64, 64, 4
        $region24: #{inception_c.1} parent=11 // pred_fallthru
          _
        // Predicated region
        $region25: #{inception_c.1} parent=11 // pred_check
          %p564 = pneg %p150
        $region26: #{inception_c.1} parent=11 // pred_check_branch
          %566 = sbr.rel (%p564) target = $region28
        $region27: #{inception_c.1} parent=11 // pred_region
          %s568 = ssub.s32 16, 16
          %569 = vsyncadd [#allocation12], %s568
          %s571 = sshll.u32 [#allocation11], 4
          %s572 = int_to_ptr.vmem [resolvable:$true] %s571
          %574 = dma.hbm_to_vmem [thread:$0]  %s4, 16, %s572, [#allocation12]
        $region28: #{inception_c.1} parent=11 // pred_fallthru
          _
        // Predicated region
        $region29: #{inception_c.1} parent=11 // pred_check
          %p575 = pneg %p171
        $region30: #{inception_c.1} parent=11 // pred_check_branch
          %577 = sbr.rel (%p575) target = $region32
        $region31: #{inception_c.1} parent=11 // pred_region
          %s579 = ssub.s32 896, 896
          %580 = vsyncadd [#allocation12], %s579
          %s581 = sshll.u32 [#allocation13], 4
          %s582 = int_to_ptr.vmem [resolvable:$true] %s581
          %587 = dma.hbm_to_vmem [thread:$0]  %s5, 896, %s582, [#allocation12], 64, 64, 4
        $region32: #{inception_c.1} parent=11 // pred_fallthru
          _
        // Predicated region
        $region33: #{inception_c.1} parent=11 // pred_check
          %p588 = pneg %p192
        $region34: #{inception_c.1} parent=11 // pred_check_branch
          %590 = sbr.rel (%p588) target = $region36
        $region35: #{inception_c.1} parent=11 // pred_region
          %s592 = ssub.s32 16, 16
          %593 = vsyncadd [#allocation15], %s592
          %s595 = sshll.u32 [#allocation14], 4
          %s596 = int_to_ptr.vmem [resolvable:$true] %s595
          %598 = dma.hbm_to_vmem [thread:$0]  %s6, 16, %s596, [#allocation15]
        $region36: #{inception_c.1} parent=11 // pred_fallthru
          _
        // Predicated region
        $region37: #{inception_c.1} parent=11 // pred_check
          %p599 = pneg %p213
        $region38: #{inception_c.1} parent=11 // pred_check_branch
          %601 = sbr.rel (%p599) target = $region40
        $region39: #{inception_c.1} parent=11 // pred_region
          _
        $region40: #{inception_c.1} parent=11 // pred_fallthru
          _
        // Predicated region
        $region41: #{inception_c.1} parent=11 // pred_check
          %p602 = pneg %p234
        $region42: #{inception_c.1} parent=11 // pred_check_branch
          %604 = sbr.rel (%p602) target = $region44
        $region43: #{inception_c.1} parent=11 // pred_region
          %s606 = ssub.s32 32, 32
          %607 = vsyncadd [#allocation15], %s606
          %s609 = sshll.u32 [#allocation16], 4
          %s610 = int_to_ptr.vmem [resolvable:$true] %s609
          %612 = dma.hbm_to_vmem [thread:$0]  %s8, 32, %s610, [#allocation15]
        $region44: #{inception_c.1} parent=11 // pred_fallthru
          _
        // Predicated region
        $region45: #{inception_c.1} parent=11 // pred_check
          %p613 = pneg %p255
        $region46: #{inception_c.1} parent=11 // pred_check_branch
          %615 = sbr.rel (%p613) target = $region48
        $region47: #{inception_c.1} parent=11 // pred_region
          %s617 = ssub.s32 128, 128
          %618 = vsyncadd [#allocation18], %s617
          %s619 = sshll.u32 [#allocation17], 4
          %s620 = int_to_ptr.vmem [resolvable:$true] %s619
          %625 = dma.hbm_to_vmem [thread:$0]  %s9, 128, %s620, [#allocation18], 64, 64, 4
        $region48: #{inception_c.1} parent=11 // pred_fallthru
          _
        // Predicated region
        $region49: #{inception_c.1} parent=11 // pred_check
          %p626 = pneg %p276
        $region50: #{inception_c.1} parent=11 // pred_check_branch
          %628 = sbr.rel (%p626) target = $region52
        $region51: #{inception_c.1} parent=11 // pred_region
          %s630 = ssub.s32 16, 16
          %631 = vsyncadd [#allocation18], %s630
          %s633 = sshll.u32 [#allocation19], 4
          %s634 = int_to_ptr.vmem [resolvable:$true] %s633
          %636 = dma.hbm_to_vmem [thread:$0]  %s10, 16, %s634, [#allocation18]
        $region52: #{inception_c.1} parent=11 // pred_fallthru
          _
        // Predicated region
        $region53: #{inception_c.1} parent=11 // pred_check
          %p637 = pneg %p297
        $region54: #{inception_c.1} parent=11 // pred_check_branch
          %639 = sbr.rel (%p637) target = $region56
        $region55: #{inception_c.1} parent=11 // pred_region
          %s641 = ssub.s32 896, 896
          %642 = vsyncadd [#allocation21], %s641
          %s643 = sshll.u32 [#allocation20], 4
          %s644 = int_to_ptr.vmem [resolvable:$true] %s643
          %649 = dma.hbm_to_vmem [thread:$0]  %s11, 896, %s644, [#allocation21], 64, 64, 4
        $region56: #{inception_c.1} parent=11 // pred_fallthru
          _
        // Predicated region
        $region57: #{inception_c.1} parent=11 // pred_check
          %p650 = pneg %p318
        $region58: #{inception_c.1} parent=11 // pred_check_branch
          %652 = sbr.rel (%p650) target = $region60
        $region59: #{inception_c.1} parent=11 // pred_region
          %s654 = ssub.s32 16, 16
          %655 = vsyncadd [#allocation21], %s654
          %s657 = sshll.u32 [#allocation22], 4
          %s658 = int_to_ptr.vmem [resolvable:$true] %s657
          %660 = dma.hbm_to_vmem [thread:$0]  %s12, 16, %s658, [#allocation21]
        $region60: #{inception_c.1} parent=11 // pred_fallthru
          _
        // Predicated region
        $region61: #{inception_c.1} parent=11 // pred_check
          %p661 = pneg %p339
        $region62: #{inception_c.1} parent=11 // pred_check_branch
          %663 = sbr.rel (%p661) target = $region64
        $region63: #{inception_c.1} parent=11 // pred_region
          %s665 = ssub.s32 896, 896
          %666 = vsyncadd [#allocation24], %s665
          %s667 = sshll.u32 [#allocation23], 4
          %s668 = int_to_ptr.vmem [resolvable:$true] %s667
          %673 = dma.hbm_to_vmem [thread:$0]  %s13, 896, %s668, [#allocation24], 64, 64, 4
        $region64: #{inception_c.1} parent=11 // pred_fallthru
          _
        // Predicated region
        $region65: #{inception_c.1} parent=11 // pred_check
          %p674 = pneg %p360
        $region66: #{inception_c.1} parent=11 // pred_check_branch
          %676 = sbr.rel (%p674) target = $region68
        $region67: #{inception_c.1} parent=11 // pred_region
          %s678 = ssub.s32 16, 16
          %679 = vsyncadd [#allocation24], %s678
          %s681 = sshll.u32 [#allocation25], 4
          %s682 = int_to_ptr.vmem [resolvable:$true] %s681
          %684 = dma.hbm_to_vmem [thread:$0]  %s14, 16, %s682, [#allocation24]
        $region68: #{inception_c.1} parent=11 // pred_fallthru
          _
        // Predicated region
        $region69: #{inception_c.1} parent=11 // pred_check
          %p685 = pneg %p381
        $region70: #{inception_c.1} parent=11 // pred_check_branch
          %687 = sbr.rel (%p685) target = $region72
        $region71: #{inception_c.1} parent=11 // pred_region
          %s689 = ssub.s32 896, 896
          %690 = vsyncadd [#allocation27], %s689
          %s691 = sshll.u32 [#allocation26], 4
          %s692 = int_to_ptr.vmem [resolvable:$true] %s691
          %697 = dma.hbm_to_vmem [thread:$0]  %s15, 896, %s692, [#allocation27], 64, 64, 4
        $region72: #{inception_c.1} parent=11 // pred_fallthru
          _
        // Predicated region
        $region73: #{inception_c.1} parent=11 // pred_check
          %p698 = pneg %p402
        $region74: #{inception_c.1} parent=11 // pred_check_branch
          %700 = sbr.rel (%p698) target = $region76
        $region75: #{inception_c.1} parent=11 // pred_region
          %s702 = ssub.s32 16, 16
          %703 = vsyncadd [#allocation27], %s702
          %s705 = sshll.u32 [#allocation28], 4
          %s706 = int_to_ptr.vmem [resolvable:$true] %s705
          %708 = dma.hbm_to_vmem [thread:$0]  %s16, 16, %s706, [#allocation27]
        $region76: #{inception_c.1} parent=11 // pred_fallthru
          _
        // Predicated region
        $region77: #{inception_c.1} parent=11 // pred_check
          %p709 = pneg %p423
        $region78: #{inception_c.1} parent=11 // pred_check_branch
          %711 = sbr.rel (%p709) target = $region80
        $region79: #{inception_c.1} parent=11 // pred_region
          _
        $region80: #{inception_c.1} parent=11 // pred_fallthru
          _
        // Predicated region
        $region81: #{inception_c.1} parent=11 // pred_check
          %p712 = pneg %p444
        $region82: #{inception_c.1} parent=11 // pred_check_branch
          %714 = sbr.rel (%p712) target = $region84
        $region83: #{inception_c.1} parent=11 // pred_region
          %s716 = ssub.s32 32, 32
          %717 = vsyncadd [#allocation30], %s716
          %s719 = sshll.u32 [#allocation29], 4
          %s720 = int_to_ptr.vmem [resolvable:$true] %s719
          %722 = dma.hbm_to_vmem [thread:$0]  %s18, 32, %s720, [#allocation30]
        $region84: #{inception_c.1} parent=11 // pred_fallthru
          _
        // Predicated region
        $region85: #{inception_c.1} parent=11 // pred_check
          %p723 = pneg %p465
        $region86: #{inception_c.1} parent=11 // pred_check_branch
          %725 = sbr.rel (%p723) target = $region88
        $region87: #{inception_c.1} parent=11 // pred_region
          %s727 = ssub.s32 256, 256
          %728 = vsyncadd [#allocation30], %s727
          %s729 = sshll.u32 [#allocation31], 4
          %s730 = int_to_ptr.vmem [resolvable:$true] %s729
          %735 = dma.hbm_to_vmem [thread:$0]  %s19, 256, %s730, [#allocation30], 128, 128, 8
        $region88: #{inception_c.1} parent=11 // pred_fallthru
          _
        // Predicated region
        $region89: #{inception_c.1} parent=11 // pred_check
          %p736 = pneg %p486
        $region90: #{inception_c.1} parent=11 // pred_check_branch
          %738 = sbr.rel (%p736) target = $region92
        $region91: #{inception_c.1} parent=11 // pred_region
          %s740 = ssub.s32 32, 32
          %741 = vsyncadd [#allocation33], %s740
          %s743 = sshll.u32 [#allocation32], 4
          %s744 = int_to_ptr.vmem [resolvable:$true] %s743
          %746 = dma.hbm_to_vmem [thread:$0]  %s20, 32, %s744, [#allocation33]
        $region92: #{inception_c.1} parent=11 // pred_fallthru
          _
      $region12: #{inception_c.1} parent=5 // pred_fallthru
        _
      %p747 = scmp.lt.s32.totalorder %s40, 2
      // Predicated region
      $region93: #{inception_c.1} parent=5 // pred_check
        %p748 = pneg %p747
      $region94: #{inception_c.1} parent=5 // pred_check_branch
        %750 = sbr.rel (%p748) target = $region96
      $region95: #{inception_c.1} parent=5 // pred_region
        // Predicated region
        $region97: #{inception_c.1} parent=95 // pred_check
          %p751 = pneg %p60
        $region98: #{inception_c.1} parent=95 // pred_check_branch
          %753 = sbr.rel (%p751) target = $region100
        $region99: #{inception_c.1} parent=95 // pred_region
          %p754 = scmp.lt.s32.totalorder %s40, 1
          %s755 = scalar_select %p754, %s40, 1
          %s756 = smul.addr %s755, 8
          %s757 = smul.addr %s756, 4
          %s758 = scalar_lea.vmem %s0, %s757
        $region100: #{inception_c.1} parent=95 // pred_fallthru
          _
      $region96: #{inception_c.1} parent=5 // pred_fallthru
        _
      %p759 = scmp.le.s32.totalorder 1, %s40
      %p760 = scmp.lt.s32.totalorder %s40, 3
      %p761 = pnand %p759, %p760
      %p762 = pneg %p761
      // Predicated region
      $region101: #{inception_c.1} parent=5 // pred_check
        _
      $region102: #{inception_c.1} parent=5 // pred_check_branch
        %764 = sbr.rel (%p761) target = $region104
      $region103: #{inception_c.1} parent=5 // pred_region
        %s765 = ssub.s32 %s40, 1
        // Predicated region
        $region105: #{inception_c.1} parent=103 // pred_check
          %p766 = pneg %p87
        $region106: #{inception_c.1} parent=103 // pred_check_branch
          %768 = sbr.rel (%p766) target = $region108
        $region107: #{inception_c.1} parent=103 // pred_region
          %769 = dma.done [#allocation6], 256
        $region108: #{inception_c.1} parent=103 // pred_fallthru
          _
        // Predicated region
        $region109: #{inception_c.1} parent=103 // pred_check
          %p770 = pneg %p108
        $region110: #{inception_c.1} parent=103 // pred_check_branch
          %772 = sbr.rel (%p770) target = $region112
        $region111: #{inception_c.1} parent=103 // pred_region
          %773 = dma.done [#allocation9], 32
        $region112: #{inception_c.1} parent=103 // pred_fallthru
          _
        // Predicated region
        $region113: #{inception_c.1} parent=103 // pred_check
          %p774 = pneg %p129
        $region114: #{inception_c.1} parent=103 // pred_check_branch
          %776 = sbr.rel (%p774) target = $region116
        $region115: #{inception_c.1} parent=103 // pred_region
          %777 = dma.done [#allocation9], 128
        $region116: #{inception_c.1} parent=103 // pred_fallthru
          _
        // Predicated region
        $region117: #{inception_c.1} parent=103 // pred_check
          %p778 = pneg %p150
        $region118: #{inception_c.1} parent=103 // pred_check_branch
          %780 = sbr.rel (%p778) target = $region120
        $region119: #{inception_c.1} parent=103 // pred_region
          %781 = dma.done [#allocation12], 16
        $region120: #{inception_c.1} parent=103 // pred_fallthru
          _
        // Predicated region
        $region121: #{inception_c.1} parent=103 // pred_check
          %p782 = pneg %p171
        $region122: #{inception_c.1} parent=103 // pred_check_branch
          %784 = sbr.rel (%p782) target = $region124
        $region123: #{inception_c.1} parent=103 // pred_region
          %785 = dma.done [#allocation12], 896
        $region124: #{inception_c.1} parent=103 // pred_fallthru
          _
        // Predicated region
        $region125: #{inception_c.1} parent=103 // pred_check
          %p786 = pneg %p192
        $region126: #{inception_c.1} parent=103 // pred_check_branch
          %788 = sbr.rel (%p786) target = $region128
        $region127: #{inception_c.1} parent=103 // pred_region
          %789 = dma.done [#allocation15], 16
        $region128: #{inception_c.1} parent=103 // pred_fallthru
          _
        // Predicated region
        $region129: #{inception_c.1} parent=103 // pred_check
          %p790 = pneg %p234
        $region130: #{inception_c.1} parent=103 // pred_check_branch
          %792 = sbr.rel (%p790) target = $region132
        $region131: #{inception_c.1} parent=103 // pred_region
          %793 = dma.done [#allocation15], 32
        $region132: #{inception_c.1} parent=103 // pred_fallthru
          _
        // Predicated region
        $region133: #{inception_c.1} parent=103 // pred_check
          %p794 = pneg %p255
        $region134: #{inception_c.1} parent=103 // pred_check_branch
          %796 = sbr.rel (%p794) target = $region136
        $region135: #{inception_c.1} parent=103 // pred_region
          %797 = dma.done [#allocation18], 128
        $region136: #{inception_c.1} parent=103 // pred_fallthru
          _
        // Predicated region
        $region137: #{inception_c.1} parent=103 // pred_check
          %p798 = pneg %p276
        $region138: #{inception_c.1} parent=103 // pred_check_branch
          %800 = sbr.rel (%p798) target = $region140
        $region139: #{inception_c.1} parent=103 // pred_region
          %801 = dma.done [#allocation18], 16
        $region140: #{inception_c.1} parent=103 // pred_fallthru
          _
        // Predicated region
        $region141: #{inception_c.1} parent=103 // pred_check
          %p802 = pneg %p297
        $region142: #{inception_c.1} parent=103 // pred_check_branch
          %804 = sbr.rel (%p802) target = $region144
        $region143: #{inception_c.1} parent=103 // pred_region
          %805 = dma.done [#allocation21], 896
        $region144: #{inception_c.1} parent=103 // pred_fallthru
          _
        // Predicated region
        $region145: #{inception_c.1} parent=103 // pred_check
          %p806 = pneg %p318
        $region146: #{inception_c.1} parent=103 // pred_check_branch
          %808 = sbr.rel (%p806) target = $region148
        $region147: #{inception_c.1} parent=103 // pred_region
          %809 = dma.done [#allocation21], 16
        $region148: #{inception_c.1} parent=103 // pred_fallthru
          _
        // Predicated region
        $region149: #{inception_c.1} parent=103 // pred_check
          %p810 = pneg %p339
        $region150: #{inception_c.1} parent=103 // pred_check_branch
          %812 = sbr.rel (%p810) target = $region152
        $region151: #{inception_c.1} parent=103 // pred_region
          %813 = dma.done [#allocation24], 896
        $region152: #{inception_c.1} parent=103 // pred_fallthru
          _
        // Predicated region
        $region153: #{inception_c.1} parent=103 // pred_check
          %p814 = pneg %p360
        $region154: #{inception_c.1} parent=103 // pred_check_branch
          %816 = sbr.rel (%p814) target = $region156
        $region155: #{inception_c.1} parent=103 // pred_region
          %817 = dma.done [#allocation24], 16
        $region156: #{inception_c.1} parent=103 // pred_fallthru
          _
        // Predicated region
        $region157: #{inception_c.1} parent=103 // pred_check
          %p818 = pneg %p381
        $region158: #{inception_c.1} parent=103 // pred_check_branch
          %820 = sbr.rel (%p818) target = $region160
        $region159: #{inception_c.1} parent=103 // pred_region
          %821 = dma.done [#allocation27], 896
        $region160: #{inception_c.1} parent=103 // pred_fallthru
          _
        // Predicated region
        $region161: #{inception_c.1} parent=103 // pred_check
          %p822 = pneg %p402
        $region162: #{inception_c.1} parent=103 // pred_check_branch
          %824 = sbr.rel (%p822) target = $region164
        $region163: #{inception_c.1} parent=103 // pred_region
          %825 = dma.done [#allocation27], 16
        $region164: #{inception_c.1} parent=103 // pred_fallthru
          _
        // Predicated region
        $region165: #{inception_c.1} parent=103 // pred_check
          %p826 = pneg %p444
        $region166: #{inception_c.1} parent=103 // pred_check_branch
          %828 = sbr.rel (%p826) target = $region168
        $region167: #{inception_c.1} parent=103 // pred_region
          %829 = dma.done [#allocation30], 32
        $region168: #{inception_c.1} parent=103 // pred_fallthru
          _
        // Predicated region
        $region169: #{inception_c.1} parent=103 // pred_check
          %p830 = pneg %p465
        $region170: #{inception_c.1} parent=103 // pred_check_branch
          %832 = sbr.rel (%p830) target = $region172
        $region171: #{inception_c.1} parent=103 // pred_region
          %833 = dma.done [#allocation30], 256
        $region172: #{inception_c.1} parent=103 // pred_fallthru
          _
        // Predicated region
        $region173: #{inception_c.1} parent=103 // pred_check
          %p834 = pneg %p486
        $region174: #{inception_c.1} parent=103 // pred_check_branch
          %836 = sbr.rel (%p834) target = $region176
        $region175: #{inception_c.1} parent=103 // pred_region
          %837 = dma.done [#allocation33], 32
        $region176: #{inception_c.1} parent=103 // pred_fallthru
          _
        %p838 = scmp.lt.s32.totalorder %s45, 1
        %s839 = scalar_select %p838, %s45, 1
        %s840 = smul.addr %s839, 8
        %s841 = smul.addr %s840, 4
        %s842 = scalar_lea.vmem %s0, %s841
        %p843 = pneg %p66
        %p844 = pneg %p63
        %p845 = pneg %p87
        %p846 = pneg %p84
        %p847 = pneg %p108
        %p848 = pneg %p105
        %p849 = pneg %p129
        %p850 = pneg %p126
        %p851 = pneg %p150
        %p852 = pneg %p147
        %p853 = pneg %p171
        %p854 = pneg %p168
        %p855 = pneg %p192
        %p856 = pneg %p189
        %p857 = pneg %p213
        %p858 = pneg %p210
        %p859 = pneg %p234
        %p860 = pneg %p231
        %p861 = pneg %p255
        %p862 = pneg %p252
        %p863 = pneg %p276
        %p864 = pneg %p273
        %p865 = pneg %p297
        %p866 = pneg %p294
        %p867 = pneg %p318
        %p868 = pneg %p315
        %p869 = pneg %p339
        %p870 = pneg %p336
        %p871 = pneg %p360
        %p872 = pneg %p357
        %p873 = pneg %p381
        %p874 = pneg %p378
        %p875 = pneg %p402
        %p876 = pneg %p399
        %p877 = pneg %p423
        %p878 = pneg %p420
        %p879 = pneg %p444
        %p880 = pneg %p441
        %p881 = pneg %p465
        %p882 = pneg %p462
        %p883 = pneg %p486
        %p884 = pneg %p483
        %p885 = pneg %p512
        %p886 = pneg %p509
        %s887 = sand.u32 %s499, 1
        %s888 = scalar_lea.sflag [#allocation7], %s887
        %s889 = sand.u32 %s499, 1
        %s890 = smul.addr %s889, 384
        %s891 = scalar_lea.vmem [#allocation34], %s890
        %p892 = scmp.lt.s32.totalorder %s45, 1
        %s893 = scalar_select %p892, %s45, 1
        %s894 = smul.addr %s893, 8
        %s895 = smul.addr %s894, 4
        %s896 = scalar_lea.vmem %s0, %s895
        %vm898 = vcmask 125952
        %899 = vst.msk [vmem:[#allocation2] sm:$0xf] %vm898, 0
        %vm900 = vcmask 124928
        %901 = vst.msk [vmem:[#allocation2 + $0x4] sm:$0x7] %vm900, 0
        %902 = vst.msk [vmem:[#allocation2 + $0x8] sm:$0xf] %vm898, 0
        %903 = vst.msk [vmem:[#allocation2 + $0xc] sm:$0x7] %vm900, 0
        %904 = vst.msk [vmem:[#allocation2 + $0x10] sm:$0xf] %vm898, 0
        %905 = vst.msk [vmem:[#allocation2 + $0x14] sm:$0x7] %vm900, 0
        %906 = vst.msk [vmem:[#allocation2 + $0x18] sm:$0xf] %vm898, 0
        %907 = vst.msk [vmem:[#allocation2 + $0x1c] sm:$0x7] %vm900, 0
        %908 = vst.msk [vmem:[#allocation2 + $0x20] sm:$0xf] %vm898, 0
        %909 = vst.msk [vmem:[#allocation2 + $0x24] sm:$0x7] %vm900, 0
        %910 = vst.msk [vmem:[#allocation2 + $0x28] sm:$0xf] %vm898, 0
        %911 = vst.msk [vmem:[#allocation2 + $0x2c] sm:$0x7] %vm900, 0
        %912 = vst.msk [vmem:[#allocation2 + $0x30] sm:$0xf] %vm898, 0
        %913 = vst.msk [vmem:[#allocation2 + $0x34] sm:$0x7] %vm900, 0
        %914 = vst.msk [vmem:[#allocation2 + $0x38] sm:$0xf] %vm898, 0
        %915 = vst.msk [vmem:[#allocation2 + $0x3c] sm:$0x7] %vm900, 0
        %916 = vst.msk [vmem:[#allocation3] sm:$0xf] %vm898, 0
        %917 = vst.msk [vmem:[#allocation3 + $0x4] sm:$0xf] %vm898, 0
        %918 = vst.msk [vmem:[#allocation3 + $0x8] sm:$0xf] %vm898, 0
        %919 = vst.msk [vmem:[#allocation3 + $0xc] sm:$0xf] %vm898, 0
        %920 = vst.msk [vmem:[#allocation3 + $0x10] sm:$0xf] %vm898, 0
        %921 = vst.msk [vmem:[#allocation3 + $0x14] sm:$0xf] %vm898, 0
        %922 = vst.msk [vmem:[#allocation3 + $0x18] sm:$0xf] %vm898, 0
        %923 = vst.msk [vmem:[#allocation3 + $0x1c] sm:$0xf] %vm898, 0
        %924 = vst.msk [vmem:[#allocation3 + $0x20] sm:$0xf] %vm898, 0
        %925 = vst.msk [vmem:[#allocation3 + $0x24] sm:$0xf] %vm898, 0
        %926 = vst.msk [vmem:[#allocation3 + $0x28] sm:$0xf] %vm898, 0
        %927 = vst.msk [vmem:[#allocation3 + $0x2c] sm:$0xf] %vm898, 0
        %928 = vst.msk [vmem:[#allocation3 + $0x30] sm:$0xf] %vm898, 0
        %929 = vst.msk [vmem:[#allocation3 + $0x34] sm:$0xf] %vm898, 0
        %930 = vst.msk [vmem:[#allocation4] sm:$0xf] %vm898, 0
        %vm931 = vcmask 122880
        %932 = vst.msk [vmem:[#allocation4 + $0x4] sm:$0x1] %vm931, 0
        %933 = vst.msk [vmem:[#allocation4 + $0x8] sm:$0xf] %vm898, 0
        %934 = vst.msk [vmem:[#allocation4 + $0xc] sm:$0x1] %vm931, 0
        %935 = vst.msk [vmem:[#allocation4 + $0x10] sm:$0xf] %vm898, 0
        %936 = vst.msk [vmem:[#allocation4 + $0x14] sm:$0x1] %vm931, 0
        %937 = vst.msk [vmem:[#allocation4 + $0x18] sm:$0xf] %vm898, 0
        %938 = vst.msk [vmem:[#allocation4 + $0x1c] sm:$0x1] %vm931, 0
        %939 = vst.msk [vmem:[#allocation4 + $0x20] sm:$0xf] %vm898, 0
        %940 = vst.msk [vmem:[#allocation4 + $0x24] sm:$0x1] %vm931, 0
        %941 = vst.msk [vmem:[#allocation4 + $0x28] sm:$0xf] %vm898, 0
        %942 = vst.msk [vmem:[#allocation4 + $0x2c] sm:$0x1] %vm931, 0
        %943 = vst.msk [vmem:[#allocation4 + $0x30] sm:$0xf] %vm898, 0
        %944 = vst.msk [vmem:[#allocation4 + $0x34] sm:$0x1] %vm931, 0
        %945 = vst.msk [vmem:[#allocation4 + $0x38] sm:$0xf] %vm898, 0
        %946 = vst.msk [vmem:[#allocation4 + $0x3c] sm:$0x1] %vm931, 0
        %947 = vst.msk [vmem:[#allocation4 + $0x40] sm:$0xf] %vm898, 0
        %948 = vst.msk [vmem:[#allocation4 + $0x44] sm:$0x1] %vm931, 0
        %949 = vst.msk [vmem:[#allocation4 + $0x48] sm:$0xf] %vm898, 0
        %950 = vst.msk [vmem:[#allocation4 + $0x4c] sm:$0x1] %vm931, 0
        %v951 = vld [vmem:[%s896] sm:$0xf]
        %v952 = vld [vmem:[%s896 + $0x4] sm:$0xf]
        %v953 = vld [vmem:[%s896 + $0x8] sm:$0xf]
        %v954 = vld [vmem:[%s896 + $0xc] sm:$0xf]
        %v955 = vld [vmem:[%s896 + $0x10] sm:$0xf]
        %v956 = vld [vmem:[%s896 + $0x14] sm:$0xf]
        %v957 = vld [vmem:[%s896 + $0x18] sm:$0xf]
        %v958 = vld [vmem:[%s896 + $0x1c] sm:$0xf]
        %v959 = vld [vmem:[#allocation5] sm:$0xff]
        %v960 = vld [vmem:[#allocation5 + $0x8] sm:$0xff]
        %v961 = vld [vmem:[#allocation8] sm:$0x3]
        %v963 = vlaneseq
        %v964 = vshrl.u32 %v963, 7
        %v965 = vsub.s32 0, %v964
        %v966 = vrot.slane %v961, %v965
        %v967 = vlaneseq
        %v968 = vshrl.u32 %v967, 7
        %v969 = vsub.s32 1, %v968
        %v970 = vrot.slane %v961, %v969
        %v981 = vunpack.c.l.b16 %v951
        %v982 = vunpack.c.l.b16 %v952
        %v983 = vunpack.c.l.b16 %v953
        %v984 = vunpack.c.l.b16 %v954
        %v985 = vunpack.c.l.b16 %v955
        %v986 = vunpack.c.l.b16 %v956
        %v987 = vunpack.c.l.b16 %v957
        %v988 = vunpack.c.l.b16 %v958
        %v989 = vpack.c.b16 %v982, %v981
        %v990 = vpack.c.b16 %v984, %v983
        %v991 = vpack.c.b16 %v986, %v985
        %v992 = vpack.c.b16 %v988, %v987
        %v995 = vunpack.c.l.b16 %v959
        %v996 = vunpack.c.h.b16 %v959
        %v997 = vunpack.c.l.b16 %v960
        %v998 = vunpack.c.h.b16 %v960
        %v999 = vpack.c.b16 %v997, %v995
        %v1000 = vpack.c.b16 %v998, %v996
        %vm1003 = vcmask 130048
        %v1005 = vsel %vm1003, %v989, 0
        %v1008 = vsel %vm1003, %v990, 0
        %v1011 = vsel %vm1003, %v991, 0
        %v1014 = vsel %vm1003, %v992, 0
        %1016 = vmatprep.subr.bf16.mxu0 0
        %1017 = vmatpush1.bf16.msra.mxu0 0
        %1018 = vmatprep.subr.bf16.mxu0 0
        %1019 = vmatpush1.bf16.msra.mxu0 0
        %1020 = vmatprep.subr.bf16.mxu0 0
        %1021 = vmatpush1.bf16.msra.mxu0 0
        %1022 = vmatprep.subr.bf16.mxu0 0
        %1023 = vmatpush1.bf16.msra.mxu0 0
        %1024 = vmatprep.subr.bf16.mxu0 0
        %1025 = vmatpush1.bf16.msra.mxu0 0
        %1026 = vmatprep.subr.bf16.mxu0 0
        %1027 = vmatpush1.bf16.msra.mxu0 0
        %1028 = vmatprep.subr.bf16.mxu0 0
        %1029 = vmatpush1.bf16.msra.mxu0 0
        %1030 = vmatprep.subr.bf16.mxu0 %v1000
        %1031 = vmatpush1.bf16.msra.mxu0 %v999
        %1032 = vmatprep.subr.bf16.mxu0 0
        %1033 = vmatpush2.bf16.msra.mxu0 0
        %1034 = vmatprep.subr.bf16.mxu0 0
        %1035 = vmatpush2.bf16.msra.mxu0 0
        %1036 = vmatprep.subr.bf16.mxu0 0
        %1037 = vmatpush2.bf16.msra.mxu0 0
        %1038 = vmatprep.subr.bf16.mxu0 0
        %1039 = vmatpush2.bf16.msra.mxu0 0
        %1040 = vmatprep.subr.bf16.mxu0 0
        %1041 = vmatpush2.bf16.msra.mxu0 0
        %1042 = vmatprep.subr.bf16.mxu0 0
        %1043 = vmatpush2.bf16.msra.mxu0 0
        %1044 = vmatprep.subr.bf16.mxu0 0
        %1045 = vmatpush2.bf16.msra.mxu0 0
        %1046 = vmatprep.subr.bf16.mxu0 0
        %1047 = vmatpush2.bf16.msra.mxu0 0
        %1048 = vmatprep.mubr.bf16.mxu0 0
        %1049 = vmatmul.mubr.bf16.gmra.mxu0 %v1005
        %v1050 = vpop.f32.mrf.mxu0
        %v1051 = vadd.f32 %v966, %v1050
        %v1052 = vpop.f32.mrf.mxu0
        %v1053 = vadd.f32 %v970, %v1052
        %v1054 = vpop.f32.mrf.mxu0
        %v1055 = vadd.f32 %v966, %v1054
        %v1056 = vpop.f32.mrf.mxu0
        %v1057 = vadd.f32 %v970, %v1056
        %1058 = vmatprep.mubr.bf16.mxu0 0
        %1059 = vmatmul.mubr.bf16.gmra.mxu0 %v1008
        %v1060 = vpop.f32.mrf.mxu0
        %v1061 = vadd.f32 %v966, %v1060
        %v1062 = vpop.f32.mrf.mxu0
        %v1063 = vadd.f32 %v970, %v1062
        %v1064 = vpop.f32.mrf.mxu0
        %v1065 = vadd.f32 %v966, %v1064
        %v1066 = vpop.f32.mrf.mxu0
        %v1067 = vadd.f32 %v970, %v1066
        %1068 = vmatprep.mubr.bf16.mxu0 0
        %1069 = vmatmul.mubr.bf16.gmra.mxu0 %v1011
        %v1070 = vpop.f32.mrf.mxu0
        %v1071 = vadd.f32 %v966, %v1070
        %v1072 = vpop.f32.mrf.mxu0
        %v1073 = vadd.f32 %v970, %v1072
        %v1074 = vpop.f32.mrf.mxu0
        %v1075 = vadd.f32 %v966, %v1074
        %v1076 = vpop.f32.mrf.mxu0
        %v1077 = vadd.f32 %v970, %v1076
        %1078 = vmatprep.mubr.bf16.mxu0 0
        %1079 = vmatmul.mubr.bf16.gmra.mxu0 %v1014
        %v1080 = vpop.f32.mrf.mxu0
        %v1081 = vadd.f32 %v966, %v1080
        %v1082 = vpop.f32.mrf.mxu0
        %v1083 = vadd.f32 %v970, %v1082
        %v1084 = vpop.f32.mrf.mxu0
        %v1085 = vadd.f32 %v966, %v1084
        %v1086 = vpop.f32.mrf.mxu0
        %v1087 = vadd.f32 %v970, %v1086
        %1088 = vdwg.mxu0
        %v1089 = vmax.f32 %v1051, 0.0
        %v1090 = vmax.f32 %v1053, 0.0
        %v1091 = vmax.f32 %v1055, 0.0
        %v1092 = vmax.f32 %v1057, 0.0
        %v1093 = vmax.f32 %v1061, 0.0
        %v1094 = vmax.f32 %v1063, 0.0
        %v1095 = vmax.f32 %v1065, 0.0
        %v1096 = vmax.f32 %v1067, 0.0
        %v1097 = vmax.f32 %v1071, 0.0
        %v1098 = vmax.f32 %v1073, 0.0
        %v1099 = vmax.f32 %v1075, 0.0
        %v1100 = vmax.f32 %v1077, 0.0
        %v1101 = vmax.f32 %v1081, 0.0
        %v1102 = vmax.f32 %v1083, 0.0
        %v1103 = vmax.f32 %v1085, 0.0
        %v1104 = vmax.f32 %v1087, 0.0
        %1105 = vst [vmem:[%s891] sm:$0xff] %v1089
        %vm1106 = vcmask 523264
        %1107 = vst.msk [vmem:[%s891 + $0x8] sm:$0xff] %vm1106, %v1090
        %1108 = vst [vmem:[%s891 + $0x30] sm:$0xff] %v1091
        %1109 = vst.msk [vmem:[%s891 + $0x38] sm:$0xff] %vm1106, %v1092
        %1110 = vst [vmem:[%s891 + $0x60] sm:$0xff] %v1093
        %1111 = vst.msk [vmem:[%s891 + $0x68] sm:$0xff] %vm1106, %v1094
        %1112 = vst [vmem:[%s891 + $0x90] sm:$0xff] %v1095
        %1113 = vst.msk [vmem:[%s891 + $0x98] sm:$0xff] %vm1106, %v1096
        %1114 = vst [vmem:[%s891 + $0xc0] sm:$0xff] %v1097
        %1115 = vst.msk [vmem:[%s891 + $0xc8] sm:$0xff] %vm1106, %v1098
        %1116 = vst [vmem:[%s891 + $0xf0] sm:$0xff] %v1099
        %1117 = vst.msk [vmem:[%s891 + $0xf8] sm:$0xff] %vm1106, %v1100
        %1118 = vst [vmem:[%s891 + $0x120] sm:$0xff] %v1101
        %1119 = vst.msk [vmem:[%s891 + $0x128] sm:$0xff] %vm1106, %v1102
        %1120 = vst [vmem:[%s891 + $0x150] sm:$0xff] %v1103
        %1121 = vst.msk [vmem:[%s891 + $0x158] sm:$0xff] %vm1106, %v1104
        %v1122 = vld [vmem:[#allocation10] sm:$0xf]
        %v1123 = vld [vmem:[#allocation10 + $0x4] sm:$0xf]
        %v1124 = vld [vmem:[#allocation11] sm:$0x1]
        %v1126 = vlaneseq
        %v1127 = vshrl.u32 %v1126, 7
        %v1128 = vsub.s32 0, %v1127
        %v1129 = vrot.slane %v1124, %v1128
        %v1133 = vunpack.c.l.b16 %v1122
        %v1134 = vunpack.c.l.b16 %v1123
        %v1135 = vpack.c.b16 %v1134, %v1133
        %1137 = vmatprep.subr.bf16.mxu0 0
        %1138 = vmatpush1.bf16.msra.mxu0 0
        %1139 = vmatprep.subr.bf16.mxu0 0
        %1140 = vmatpush1.bf16.msra.mxu0 0
        %1141 = vmatprep.subr.bf16.mxu0 0
        %1142 = vmatpush1.bf16.msra.mxu0 0
        %1143 = vmatprep.subr.bf16.mxu0 0
        %1144 = vmatpush1.bf16.msra.mxu0 0
        %1145 = vmatprep.subr.bf16.mxu0 0
        %1146 = vmatpush1.bf16.msra.mxu0 0
        %1147 = vmatprep.subr.bf16.mxu0 0
        %1148 = vmatpush1.bf16.msra.mxu0 0
        %1149 = vmatprep.subr.bf16.mxu0 0
        %1150 = vmatpush1.bf16.msra.mxu0 0
        %1151 = vmatprep.subr.bf16.mxu0 0
        %1152 = vmatpush1.bf16.msra.mxu0 %v1135
        %1153 = vmatprep.subr.bf16.mxu0 0
        %1154 = vmatpush2.bf16.msra.mxu0 0
        %1155 = vmatprep.subr.bf16.mxu0 0
        %1156 = vmatpush2.bf16.msra.mxu0 0
        %1157 = vmatprep.subr.bf16.mxu0 0
        %1158 = vmatpush2.bf16.msra.mxu0 0
        %1159 = vmatprep.subr.bf16.mxu0 0
        %1160 = vmatpush2.bf16.msra.mxu0 0
        %1161 = vmatprep.subr.bf16.mxu0 0
        %1162 = vmatpush2.bf16.msra.mxu0 0
        %1163 = vmatprep.subr.bf16.mxu0 0
        %1164 = vmatpush2.bf16.msra.mxu0 0
        %1165 = vmatprep.subr.bf16.mxu0 0
        %1166 = vmatpush2.bf16.msra.mxu0 0
        %1167 = vmatprep.subr.bf16.mxu0 0
        %1168 = vmatpush2.bf16.msra.mxu0 0
        %1169 = vmatprep.mubr.bf16.mxu0 0
        %1170 = vmatmul.mubr.bf16.gmra.mxu0 %v1005
        %v1171 = vpop.f32.mrf.mxu0
        %v1172 = vadd.f32 %v1129, %v1171
        %v1173 = vpop.f32.mrf.mxu0
        %v1174 = vpop.f32.mrf.mxu0
        %v1175 = vadd.f32 %v1129, %v1174
        %v1176 = vpop.f32.mrf.mxu0
        %1177 = vmatprep.mubr.bf16.mxu0 0
        %1178 = vmatmul.mubr.bf16.gmra.mxu0 %v1008
        %v1179 = vpop.f32.mrf.mxu0
        %v1180 = vadd.f32 %v1129, %v1179
        %v1181 = vpop.f32.mrf.mxu0
        %v1182 = vpop.f32.mrf.mxu0
        %v1183 = vadd.f32 %v1129, %v1182
        %v1184 = vpop.f32.mrf.mxu0
        %1185 = vmatprep.mubr.bf16.mxu0 0
        %1186 = vmatmul.mubr.bf16.gmra.mxu0 %v1011
        %v1187 = vpop.f32.mrf.mxu0
        %v1188 = vadd.f32 %v1129, %v1187
        %v1189 = vpop.f32.mrf.mxu0
        %v1190 = vpop.f32.mrf.mxu0
        %v1191 = vadd.f32 %v1129, %v1190
        %v1192 = vpop.f32.mrf.mxu0
        %1193 = vmatprep.mubr.bf16.mxu0 0
        %1194 = vmatmul.mubr.bf16.gmra.mxu0 %v1014
        %v1195 = vpop.f32.mrf.mxu0
        %v1196 = vadd.f32 %v1129, %v1195
        %v1197 = vpop.f32.mrf.mxu0
        %v1198 = vpop.f32.mrf.mxu0
        %v1199 = vadd.f32 %v1129, %v1198
        %v1200 = vpop.f32.mrf.mxu0
        %1201 = vdwg.mxu0
        %v1202 = vmax.f32 %v1172, 0.0
        %v1203 = vmax.f32 %v1175, 0.0
        %v1204 = vmax.f32 %v1180, 0.0
        %v1205 = vmax.f32 %v1183, 0.0
        %v1206 = vmax.f32 %v1188, 0.0
        %v1207 = vmax.f32 %v1191, 0.0
        %v1208 = vmax.f32 %v1196, 0.0
        %v1209 = vmax.f32 %v1199, 0.0
        %v1210 = vpack.c.bf16 %v1203, %v1202
        %v1211 = vpack.c.bf16 %v1205, %v1204
        %v1212 = vpack.c.bf16 %v1207, %v1206
        %v1213 = vpack.c.bf16 %v1209, %v1208
        %v1218 = vunpack.c.l.b16 %v1210
        %v1219 = vunpack.c.h.b16 %v1210
        %v1220 = vunpack.c.l.b16 %v1211
        %v1221 = vunpack.c.h.b16 %v1211
        %v1222 = vunpack.c.l.b16 %v1212
        %v1223 = vunpack.c.h.b16 %v1212
        %v1224 = vunpack.c.l.b16 %v1213
        %v1225 = vunpack.c.h.b16 %v1213
        %v1226 = vpack.c.b16 %v1218, %v1218
        %v1227 = vpack.c.b16 %v1219, %v1219
        %v1228 = vpack.c.b16 %v1220, %v1220
        %v1229 = vpack.c.b16 %v1221, %v1221
        %v1230 = vpack.c.b16 %v1222, %v1222
        %v1231 = vpack.c.b16 %v1223, %v1223
        %v1232 = vpack.c.b16 %v1224, %v1224
        %v1233 = vpack.c.b16 %v1225, %v1225
        %v1235 = vshrl.u32 %v1226, 16
        %v1237 = vrot.slane %v1235, 6
        %v1238 = vshll.u32 %v1226, 16
        %v1240 = vrot.slane %v1238, 7
        %v1241 = vor.u32 %v1237, %v1240
        %v1242 = vrot.slane %v1241, 4
        %v1244 = vshrl.u32 %v1227, 16
        %v1246 = vrot.slane %v1244, 6
        %v1247 = vshll.u32 %v1227, 16
        %v1249 = vrot.slane %v1247, 7
        %v1250 = vor.u32 %v1246, %v1249
        %v1251 = vrot.slane %v1250, 4
        %v1253 = vshrl.u32 %v1228, 16
        %v1255 = vrot.slane %v1253, 6
        %v1256 = vshll.u32 %v1228, 16
        %v1258 = vrot.slane %v1256, 7
        %v1259 = vor.u32 %v1255, %v1258
        %v1260 = vrot.slane %v1259, 4
        %v1262 = vshrl.u32 %v1229, 16
        %v1264 = vrot.slane %v1262, 6
        %v1265 = vshll.u32 %v1229, 16
        %v1267 = vrot.slane %v1265, 7
        %v1268 = vor.u32 %v1264, %v1267
        %v1269 = vrot.slane %v1268, 4
        %v1271 = vshrl.u32 %v1230, 16
        %v1273 = vrot.slane %v1271, 6
        %v1274 = vshll.u32 %v1230, 16
        %v1276 = vrot.slane %v1274, 7
        %v1277 = vor.u32 %v1273, %v1276
        %v1278 = vrot.slane %v1277, 4
        %v1280 = vshrl.u32 %v1231, 16
        %v1282 = vrot.slane %v1280, 6
        %v1283 = vshll.u32 %v1231, 16
        %v1285 = vrot.slane %v1283, 7
        %v1286 = vor.u32 %v1282, %v1285
        %v1287 = vrot.slane %v1286, 4
        %v1289 = vshrl.u32 %v1232, 16
        %v1291 = vrot.slane %v1289, 6
        %v1292 = vshll.u32 %v1232, 16
        %v1294 = vrot.slane %v1292, 7
        %v1295 = vor.u32 %v1291, %v1294
        %v1296 = vrot.slane %v1295, 4
        %v1298 = vshrl.u32 %v1233, 16
        %v1300 = vrot.slane %v1298, 6
        %v1301 = vshll.u32 %v1233, 16
        %v1303 = vrot.slane %v1301, 7
        %v1304 = vor.u32 %v1300, %v1303
        %v1305 = vrot.slane %v1304, 4
        %vm1322 = vcmask 125953
        %vm1323 = vsmask.f32 7942
        %vm1324 = vmand %vm1322, %vm1323
        %v1325 = vld [vmem:[#allocation2] sm:$0xe]
        %v1326 = vsel %vm1324, %v1241, %v1325
        %1327 = vst [vmem:[#allocation2] sm:$0xe] %v1326
        %vm1328 = vcmask 123904
        %vm1329 = vsmask.f32 1280
        %vm1330 = vmand %vm1328, %vm1329
        %v1331 = vld [vmem:[#allocation2 + $0x4] sm:$0x3]
        %v1332 = vsel %vm1330, %v1242, %v1331
        %1333 = vst [vmem:[#allocation2 + $0x4] sm:$0x3] %v1332
        %v1334 = vld [vmem:[#allocation2 + $0x8] sm:$0xe]
        %v1335 = vsel %vm1324, %v1250, %v1334
        %1336 = vst [vmem:[#allocation2 + $0x8] sm:$0xe] %v1335
        %v1337 = vld [vmem:[#allocation2 + $0xc] sm:$0x3]
        %v1338 = vsel %vm1330, %v1251, %v1337
        %1339 = vst [vmem:[#allocation2 + $0xc] sm:$0x3] %v1338
        %v1340 = vld [vmem:[#allocation2 + $0x10] sm:$0xe]
        %v1341 = vsel %vm1324, %v1259, %v1340
        %1342 = vst [vmem:[#allocation2 + $0x10] sm:$0xe] %v1341
        %v1343 = vld [vmem:[#allocation2 + $0x14] sm:$0x3]
        %v1344 = vsel %vm1330, %v1260, %v1343
        %1345 = vst [vmem:[#allocation2 + $0x14] sm:$0x3] %v1344
        %v1346 = vld [vmem:[#allocation2 + $0x18] sm:$0xe]
        %v1347 = vsel %vm1324, %v1268, %v1346
        %1348 = vst [vmem:[#allocation2 + $0x18] sm:$0xe] %v1347
        %v1349 = vld [vmem:[#allocation2 + $0x1c] sm:$0x3]
        %v1350 = vsel %vm1330, %v1269, %v1349
        %1351 = vst [vmem:[#allocation2 + $0x1c] sm:$0x3] %v1350
        %v1352 = vld [vmem:[#allocation2 + $0x20] sm:$0xe]
        %v1353 = vsel %vm1324, %v1277, %v1352
        %1354 = vst [vmem:[#allocation2 + $0x20] sm:$0xe] %v1353
        %v1355 = vld [vmem:[#allocation2 + $0x24] sm:$0x3]
        %v1356 = vsel %vm1330, %v1278, %v1355
        %1357 = vst [vmem:[#allocation2 + $0x24] sm:$0x3] %v1356
        %v1358 = vld [vmem:[#allocation2 + $0x28] sm:$0xe]
        %v1359 = vsel %vm1324, %v1286, %v1358
        %1360 = vst [vmem:[#allocation2 + $0x28] sm:$0xe] %v1359
        %v1361 = vld [vmem:[#allocation2 + $0x2c] sm:$0x3]
        %v1362 = vsel %vm1330, %v1287, %v1361
        %1363 = vst [vmem:[#allocation2 + $0x2c] sm:$0x3] %v1362
        %v1364 = vld [vmem:[#allocation2 + $0x30] sm:$0xe]
        %v1365 = vsel %vm1324, %v1295, %v1364
        %1366 = vst [vmem:[#allocation2 + $0x30] sm:$0xe] %v1365
        %v1367 = vld [vmem:[#allocation2 + $0x34] sm:$0x3]
        %v1368 = vsel %vm1330, %v1296, %v1367
        %1369 = vst [vmem:[#allocation2 + $0x34] sm:$0x3] %v1368
        %v1370 = vld [vmem:[#allocation2 + $0x38] sm:$0xe]
        %v1371 = vsel %vm1324, %v1304, %v1370
        %1372 = vst [vmem:[#allocation2 + $0x38] sm:$0xe] %v1371
        %v1373 = vld [vmem:[#allocation2 + $0x3c] sm:$0x3]
        %v1374 = vsel %vm1330, %v1305, %v1373
        %1375 = vst [vmem:[#allocation2 + $0x3c] sm:$0x3] %v1374
        %v1376 = vld [vmem:[#allocation2] sm:$0xf]
        %v1377 = vld [vmem:[#allocation2 + $0x8] sm:$0xf]
        %v1378 = vld [vmem:[#allocation2 + $0x10] sm:$0xf]
        %v1379 = vld [vmem:[#allocation2 + $0x18] sm:$0xf]
        %v1380 = vld [vmem:[#allocation2 + $0x20] sm:$0xf]
        %v1381 = vld [vmem:[#allocation2 + $0x28] sm:$0xf]
        %v1382 = vld [vmem:[#allocation2 + $0x30] sm:$0xf]
        %v1383 = vld [vmem:[#allocation2 + $0x38] sm:$0xf]
        %v1384 = vld [vmem:[#allocation13] sm:$0xf]
        %v1385 = vld [vmem:[#allocation13 + $0x4] sm:$0xf]
        %v1386 = vld [vmem:[#allocation2 + $0x4] sm:$0x1]
        %v1387 = vld [vmem:[#allocation2 + $0xc] sm:$0x1]
        %v1388 = vld [vmem:[#allocation2 + $0x14] sm:$0x1]
        %v1389 = vld [vmem:[#allocation2 + $0x1c] sm:$0x1]
        %v1390 = vld [vmem:[#allocation2 + $0x24] sm:$0x1]
        %v1391 = vld [vmem:[#allocation2 + $0x2c] sm:$0x1]
        %v1392 = vld [vmem:[#allocation2 + $0x34] sm:$0x1]
        %v1393 = vld [vmem:[#allocation2 + $0x3c] sm:$0x1]
        %vm1394 = vsmask.f32 3328
        %vm1395 = vsmask.f32 7440
        %vm1396 = vmor %vm1394, %vm1395
        %v1398 = vshrl.u32 %v1376, 16
        %v1400 = vrot.slane %v1398, 4
        %v1401 = vshll.u32 %v1376, 16
        %v1403 = vrot.slane %v1401, 5
        %v1404 = vor.u32 %v1400, %v1403
        %v1405 = vrot.slane %v1404, 4
        %v1407 = vshll.u32 %v1386, 16
        %v1409 = vrot.slane %v1407, 5
        %v1410 = vsel %vm1396, %v1405, %v1409
        %v1412 = vshrl.u32 %v1377, 16
        %v1414 = vrot.slane %v1412, 4
        %v1415 = vshll.u32 %v1377, 16
        %v1417 = vrot.slane %v1415, 5
        %v1418 = vor.u32 %v1414, %v1417
        %v1419 = vrot.slane %v1418, 4
        %v1421 = vshll.u32 %v1387, 16
        %v1423 = vrot.slane %v1421, 5
        %v1424 = vsel %vm1396, %v1419, %v1423
        %v1426 = vshrl.u32 %v1378, 16
        %v1428 = vrot.slane %v1426, 4
        %v1429 = vshll.u32 %v1378, 16
        %v1431 = vrot.slane %v1429, 5
        %v1432 = vor.u32 %v1428, %v1431
        %v1433 = vrot.slane %v1432, 4
        %v1435 = vshll.u32 %v1388, 16
        %v1437 = vrot.slane %v1435, 5
        %v1438 = vsel %vm1396, %v1433, %v1437
        %v1440 = vshrl.u32 %v1379, 16
        %v1442 = vrot.slane %v1440, 4
        %v1443 = vshll.u32 %v1379, 16
        %v1445 = vrot.slane %v1443, 5
        %v1446 = vor.u32 %v1442, %v1445
        %v1447 = vrot.slane %v1446, 4
        %v1449 = vshll.u32 %v1389, 16
        %v1451 = vrot.slane %v1449, 5
        %v1452 = vsel %vm1396, %v1447, %v1451
        %v1454 = vshrl.u32 %v1380, 16
        %v1456 = vrot.slane %v1454, 4
        %v1457 = vshll.u32 %v1380, 16
        %v1459 = vrot.slane %v1457, 5
        %v1460 = vor.u32 %v1456, %v1459
        %v1461 = vrot.slane %v1460, 4
        %v1463 = vshll.u32 %v1390, 16
        %v1465 = vrot.slane %v1463, 5
        %v1466 = vsel %vm1396, %v1461, %v1465
        %v1468 = vshrl.u32 %v1381, 16
        %v1470 = vrot.slane %v1468, 4
        %v1471 = vshll.u32 %v1381, 16
        %v1473 = vrot.slane %v1471, 5
        %v1474 = vor.u32 %v1470, %v1473
        %v1475 = vrot.slane %v1474, 4
        %v1477 = vshll.u32 %v1391, 16
        %v1479 = vrot.slane %v1477, 5
        %v1480 = vsel %vm1396, %v1475, %v1479
        %v1482 = vshrl.u32 %v1382, 16
        %v1484 = vrot.slane %v1482, 4
        %v1485 = vshll.u32 %v1382, 16
        %v1487 = vrot.slane %v1485, 5
        %v1488 = vor.u32 %v1484, %v1487
        %v1489 = vrot.slane %v1488, 4
        %v1491 = vshll.u32 %v1392, 16
        %v1493 = vrot.slane %v1491, 5
        %v1494 = vsel %vm1396, %v1489, %v1493
        %v1496 = vshrl.u32 %v1383, 16
        %v1498 = vrot.slane %v1496, 4
        %v1499 = vshll.u32 %v1383, 16
        %v1501 = vrot.slane %v1499, 5
        %v1502 = vor.u32 %v1498, %v1501
        %v1503 = vrot.slane %v1502, 4
        %v1505 = vshll.u32 %v1393, 16
        %v1507 = vrot.slane %v1505, 5
        %v1508 = vsel %vm1396, %v1503, %v1507
        %s1509 = scalar_lea.vmem [#allocation13], 8
        %v1510 = vld [vmem:[%s1509] sm:$0xf]
        %v1511 = vld [vmem:[%s1509 + $0x4] sm:$0xf]
        %v1512 = vunpack.c.l.b16 %v1410
        %v1513 = vunpack.c.l.b16 %v1424
        %v1514 = vunpack.c.l.b16 %v1438
        %v1515 = vunpack.c.l.b16 %v1452
        %v1516 = vunpack.c.l.b16 %v1466
        %v1517 = vunpack.c.l.b16 %v1480
        %v1518 = vunpack.c.l.b16 %v1494
        %v1519 = vunpack.c.l.b16 %v1508
        %v1520 = vpack.c.b16 %v1513, %v1512
        %v1521 = vpack.c.b16 %v1515, %v1514
        %v1522 = vpack.c.b16 %v1517, %v1516
        %v1523 = vpack.c.b16 %v1519, %v1518
        %v1526 = vunpack.c.l.b16 %v1510
        %v1527 = vunpack.c.l.b16 %v1511
        %v1528 = vpack.c.b16 %v1527, %v1526
        %v1531 = vsel %vm1003, %v1520, 0
        %v1534 = vsel %vm1003, %v1521, 0
        %v1537 = vsel %vm1003, %v1522, 0
        %v1540 = vsel %vm1003, %v1523, 0
        %1542 = vmatprep.subr.bf16.mxu0 0
        %1543 = vmatpush1.bf16.msra.mxu0 0
        %1544 = vmatprep.subr.bf16.mxu0 0
        %1545 = vmatpush1.bf16.msra.mxu0 0
        %1546 = vmatprep.subr.bf16.mxu0 0
        %1547 = vmatpush1.bf16.msra.mxu0 0
        %1548 = vmatprep.subr.bf16.mxu0 0
        %1549 = vmatpush1.bf16.msra.mxu0 0
        %1550 = vmatprep.subr.bf16.mxu0 0
        %1551 = vmatpush1.bf16.msra.mxu0 0
        %1552 = vmatprep.subr.bf16.mxu0 0
        %1553 = vmatpush1.bf16.msra.mxu0 0
        %1554 = vmatprep.subr.bf16.mxu0 0
        %1555 = vmatpush1.bf16.msra.mxu0 0
        %1556 = vmatprep.subr.bf16.mxu0 0
        %1557 = vmatpush1.bf16.msra.mxu0 %v1528
        %1558 = vmatprep.subr.bf16.mxu0 0
        %1559 = vmatpush2.bf16.msra.mxu0 0
        %1560 = vmatprep.subr.bf16.mxu0 0
        %1561 = vmatpush2.bf16.msra.mxu0 0
        %1562 = vmatprep.subr.bf16.mxu0 0
        %1563 = vmatpush2.bf16.msra.mxu0 0
        %1564 = vmatprep.subr.bf16.mxu0 0
        %1565 = vmatpush2.bf16.msra.mxu0 0
        %1566 = vmatprep.subr.bf16.mxu0 0
        %1567 = vmatpush2.bf16.msra.mxu0 0
        %1568 = vmatprep.subr.bf16.mxu0 0
        %1569 = vmatpush2.bf16.msra.mxu0 0
        %1570 = vmatprep.subr.bf16.mxu0 0
        %1571 = vmatpush2.bf16.msra.mxu0 0
        %1572 = vmatprep.subr.bf16.mxu0 0
        %1573 = vmatpush2.bf16.msra.mxu0 0
        %1574 = vmatprep.mubr.bf16.mxu0 0
        %1575 = vmatmul.mubr.bf16.gmra.mxu0 %v1531
        %v1576 = vpop.f32.mrf.mxu0
        %v1577 = vadd.f32 0.0, %v1576
        %v1578 = vpop.f32.mrf.mxu0
        %v1579 = vpop.f32.mrf.mxu0
        %v1580 = vadd.f32 0.0, %v1579
        %v1581 = vpop.f32.mrf.mxu0
        %1582 = vmatprep.mubr.bf16.mxu0 0
        %1583 = vmatmul.mubr.bf16.gmra.mxu0 %v1534
        %v1584 = vpop.f32.mrf.mxu0
        %v1585 = vadd.f32 0.0, %v1584
        %v1586 = vpop.f32.mrf.mxu0
        %v1587 = vpop.f32.mrf.mxu0
        %v1588 = vadd.f32 0.0, %v1587
        %v1589 = vpop.f32.mrf.mxu0
        %1590 = vmatprep.mubr.bf16.mxu0 0
        %1591 = vmatmul.mubr.bf16.gmra.mxu0 %v1537
        %v1592 = vpop.f32.mrf.mxu0
        %v1593 = vadd.f32 0.0, %v1592
        %v1594 = vpop.f32.mrf.mxu0
        %v1595 = vpop.f32.mrf.mxu0
        %v1596 = vadd.f32 0.0, %v1595
        %v1597 = vpop.f32.mrf.mxu0
        %1598 = vmatprep.mubr.bf16.mxu0 0
        %1599 = vmatmul.mubr.bf16.gmra.mxu0 %v1540
        %v1600 = vpop.f32.mrf.mxu0
        %v1601 = vadd.f32 0.0, %v1600
        %v1602 = vpop.f32.mrf.mxu0
        %v1603 = vpop.f32.mrf.mxu0
        %v1604 = vadd.f32 0.0, %v1603
        %v1605 = vpop.f32.mrf.mxu0
        %1606 = vdwg.mxu0
        %v1615 = vunpack.c.l.b16 %v1376
        %v1616 = vunpack.c.l.b16 %v1377
        %v1617 = vunpack.c.l.b16 %v1378
        %v1618 = vunpack.c.l.b16 %v1379
        %v1619 = vunpack.c.l.b16 %v1380
        %v1620 = vunpack.c.l.b16 %v1381
        %v1621 = vunpack.c.l.b16 %v1382
        %v1622 = vunpack.c.l.b16 %v1383
        %v1623 = vpack.c.b16 %v1616, %v1615
        %v1624 = vpack.c.b16 %v1618, %v1617
        %v1625 = vpack.c.b16 %v1620, %v1619
        %v1626 = vpack.c.b16 %v1622, %v1621
        %v1629 = vunpack.c.l.b16 %v1384
        %v1630 = vunpack.c.l.b16 %v1385
        %v1631 = vpack.c.b16 %v1630, %v1629
        %v1634 = vsel %vm1003, %v1623, 0
        %v1637 = vsel %vm1003, %v1624, 0
        %v1640 = vsel %vm1003, %v1625, 0
        %v1643 = vsel %vm1003, %v1626, 0
        %1645 = vmatprep.subr.bf16.mxu0 0
        %1646 = vmatpush1.bf16.msra.mxu0 0
        %1647 = vmatprep.subr.bf16.mxu0 0
        %1648 = vmatpush1.bf16.msra.mxu0 0
        %1649 = vmatprep.subr.bf16.mxu0 0
        %1650 = vmatpush1.bf16.msra.mxu0 0
        %1651 = vmatprep.subr.bf16.mxu0 0
        %1652 = vmatpush1.bf16.msra.mxu0 0
        %1653 = vmatprep.subr.bf16.mxu0 0
        %1654 = vmatpush1.bf16.msra.mxu0 0
        %1655 = vmatprep.subr.bf16.mxu0 0
        %1656 = vmatpush1.bf16.msra.mxu0 0
        %1657 = vmatprep.subr.bf16.mxu0 0
        %1658 = vmatpush1.bf16.msra.mxu0 0
        %1659 = vmatprep.subr.bf16.mxu0 0
        %1660 = vmatpush1.bf16.msra.mxu0 %v1631
        %1661 = vmatprep.subr.bf16.mxu0 0
        %1662 = vmatpush2.bf16.msra.mxu0 0
        %1663 = vmatprep.subr.bf16.mxu0 0
        %1664 = vmatpush2.bf16.msra.mxu0 0
        %1665 = vmatprep.subr.bf16.mxu0 0
        %1666 = vmatpush2.bf16.msra.mxu0 0
        %1667 = vmatprep.subr.bf16.mxu0 0
        %1668 = vmatpush2.bf16.msra.mxu0 0
        %1669 = vmatprep.subr.bf16.mxu0 0
        %1670 = vmatpush2.bf16.msra.mxu0 0
        %1671 = vmatprep.subr.bf16.mxu0 0
        %1672 = vmatpush2.bf16.msra.mxu0 0
        %1673 = vmatprep.subr.bf16.mxu0 0
        %1674 = vmatpush2.bf16.msra.mxu0 0
        %1675 = vmatprep.subr.bf16.mxu0 0
        %1676 = vmatpush2.bf16.msra.mxu0 0
        %1677 = vmatprep.mubr.bf16.mxu0 0
        %1678 = vmatmul.mubr.bf16.gmra.mxu0 %v1634
        %v1679 = vpop.f32.mrf.mxu0
        %v1680 = vadd.f32 %v1577, %v1679
        %v1681 = vpop.f32.mrf.mxu0
        %v1682 = vpop.f32.mrf.mxu0
        %v1683 = vadd.f32 %v1580, %v1682
        %v1684 = vpop.f32.mrf.mxu0
        %1685 = vmatprep.mubr.bf16.mxu0 0
        %1686 = vmatmul.mubr.bf16.gmra.mxu0 %v1637
        %v1687 = vpop.f32.mrf.mxu0
        %v1688 = vadd.f32 %v1585, %v1687
        %v1689 = vpop.f32.mrf.mxu0
        %v1690 = vpop.f32.mrf.mxu0
        %v1691 = vadd.f32 %v1588, %v1690
        %v1692 = vpop.f32.mrf.mxu0
        %1693 = vmatprep.mubr.bf16.mxu0 0
        %1694 = vmatmul.mubr.bf16.gmra.mxu0 %v1640
        %v1695 = vpop.f32.mrf.mxu0
        %v1696 = vadd.f32 %v1593, %v1695
        %v1697 = vpop.f32.mrf.mxu0
        %v1698 = vpop.f32.mrf.mxu0
        %v1699 = vadd.f32 %v1596, %v1698
        %v1700 = vpop.f32.mrf.mxu0
        %1701 = vmatprep.mubr.bf16.mxu0 0
        %1702 = vmatmul.mubr.bf16.gmra.mxu0 %v1643
        %v1703 = vpop.f32.mrf.mxu0
        %v1704 = vadd.f32 %v1601, %v1703
        %v1705 = vpop.f32.mrf.mxu0
        %v1706 = vpop.f32.mrf.mxu0
        %v1707 = vadd.f32 %v1604, %v1706
        %v1708 = vpop.f32.mrf.mxu0
        %1709 = vdwg.mxu0
        %v1710 = vld [vmem:[#allocation2] sm:$0xe]
        %v1711 = vld [vmem:[#allocation2 + $0x8] sm:$0xe]
        %v1712 = vld [vmem:[#allocation2 + $0x10] sm:$0xe]
        %v1713 = vld [vmem:[#allocation2 + $0x18] sm:$0xe]
        %v1714 = vld [vmem:[#allocation2 + $0x20] sm:$0xe]
        %v1715 = vld [vmem:[#allocation2 + $0x28] sm:$0xe]
        %v1716 = vld [vmem:[#allocation2 + $0x30] sm:$0xe]
        %v1717 = vld [vmem:[#allocation2 + $0x38] sm:$0xe]
        %vm1734 = vcmask 1042432
        %vm1735 = vcmask 1046532
        %vm1736 = vmor %vm1734, %vm1735
        %v1737 = vrot.slane %v1710, 5
        %v1738 = vrot.slane %v1737, 4
        %v1739 = vrot.slane %v1386, 5
        %v1740 = vsel %vm1736, %v1738, %v1739
        %v1741 = vrot.slane %v1711, 5
        %v1742 = vrot.slane %v1741, 4
        %v1743 = vrot.slane %v1387, 5
        %v1744 = vsel %vm1736, %v1742, %v1743
        %v1745 = vrot.slane %v1712, 5
        %v1746 = vrot.slane %v1745, 4
        %v1747 = vrot.slane %v1388, 5
        %v1748 = vsel %vm1736, %v1746, %v1747
        %v1749 = vrot.slane %v1713, 5
        %v1750 = vrot.slane %v1749, 4
        %v1751 = vrot.slane %v1389, 5
        %v1752 = vsel %vm1736, %v1750, %v1751
        %v1753 = vrot.slane %v1714, 5
        %v1754 = vrot.slane %v1753, 4
        %v1755 = vrot.slane %v1390, 5
        %v1756 = vsel %vm1736, %v1754, %v1755
        %v1757 = vrot.slane %v1715, 5
        %v1758 = vrot.slane %v1757, 4
        %v1759 = vrot.slane %v1391, 5
        %v1760 = vsel %vm1736, %v1758, %v1759
        %v1761 = vrot.slane %v1716, 5
        %v1762 = vrot.slane %v1761, 4
        %v1763 = vrot.slane %v1392, 5
        %v1764 = vsel %vm1736, %v1762, %v1763
        %v1765 = vrot.slane %v1717, 5
        %v1766 = vrot.slane %v1765, 4
        %v1767 = vrot.slane %v1393, 5
        %v1768 = vsel %vm1736, %v1766, %v1767
        %s1769 = scalar_lea.vmem [#allocation13], 16
        %v1770 = vld [vmem:[%s1769] sm:$0xf]
        %v1771 = vld [vmem:[%s1769 + $0x4] sm:$0xf]
        %v1772 = vunpack.c.l.b16 %v1740
        %v1773 = vunpack.c.l.b16 %v1744
        %v1774 = vunpack.c.l.b16 %v1748
        %v1775 = vunpack.c.l.b16 %v1752
        %v1776 = vunpack.c.l.b16 %v1756
        %v1777 = vunpack.c.l.b16 %v1760
        %v1778 = vunpack.c.l.b16 %v1764
        %v1779 = vunpack.c.l.b16 %v1768
        %v1780 = vpack.c.b16 %v1773, %v1772
        %v1781 = vpack.c.b16 %v1775, %v1774
        %v1782 = vpack.c.b16 %v1777, %v1776
        %v1783 = vpack.c.b16 %v1779, %v1778
        %v1786 = vunpack.c.l.b16 %v1770
        %v1787 = vunpack.c.l.b16 %v1771
        %v1788 = vpack.c.b16 %v1787, %v1786
        %v1791 = vsel %vm1003, %v1780, 0
        %v1794 = vsel %vm1003, %v1781, 0
        %v1797 = vsel %vm1003, %v1782, 0
        %v1800 = vsel %vm1003, %v1783, 0
        %1802 = vmatprep.subr.bf16.mxu0 0
        %1803 = vmatpush1.bf16.msra.mxu0 0
        %1804 = vmatprep.subr.bf16.mxu0 0
        %1805 = vmatpush1.bf16.msra.mxu0 0
        %1806 = vmatprep.subr.bf16.mxu0 0
        %1807 = vmatpush1.bf16.msra.mxu0 0
        %1808 = vmatprep.subr.bf16.mxu0 0
        %1809 = vmatpush1.bf16.msra.mxu0 0
        %1810 = vmatprep.subr.bf16.mxu0 0
        %1811 = vmatpush1.bf16.msra.mxu0 0
        %1812 = vmatprep.subr.bf16.mxu0 0
        %1813 = vmatpush1.bf16.msra.mxu0 0
        %1814 = vmatprep.subr.bf16.mxu0 0
        %1815 = vmatpush1.bf16.msra.mxu0 0
        %1816 = vmatprep.subr.bf16.mxu0 0
        %1817 = vmatpush1.bf16.msra.mxu0 %v1788
        %1818 = vmatprep.subr.bf16.mxu0 0
        %1819 = vmatpush2.bf16.msra.mxu0 0
        %1820 = vmatprep.subr.bf16.mxu0 0
        %1821 = vmatpush2.bf16.msra.mxu0 0
        %1822 = vmatprep.subr.bf16.mxu0 0
        %1823 = vmatpush2.bf16.msra.mxu0 0
        %1824 = vmatprep.subr.bf16.mxu0 0
        %1825 = vmatpush2.bf16.msra.mxu0 0
        %1826 = vmatprep.subr.bf16.mxu0 0
        %1827 = vmatpush2.bf16.msra.mxu0 0
        %1828 = vmatprep.subr.bf16.mxu0 0
        %1829 = vmatpush2.bf16.msra.mxu0 0
        %1830 = vmatprep.subr.bf16.mxu0 0
        %1831 = vmatpush2.bf16.msra.mxu0 0
        %1832 = vmatprep.subr.bf16.mxu0 0
        %1833 = vmatpush2.bf16.msra.mxu0 0
        %1834 = vmatprep.mubr.bf16.mxu0 0
        %1835 = vmatmul.mubr.bf16.gmra.mxu0 %v1791
        %v1836 = vpop.f32.mrf.mxu0
        %v1837 = vadd.f32 0.0, %v1836
        %v1838 = vpop.f32.mrf.mxu0
        %v1839 = vpop.f32.mrf.mxu0
        %v1840 = vadd.f32 0.0, %v1839
        %v1841 = vpop.f32.mrf.mxu0
        %1842 = vmatprep.mubr.bf16.mxu0 0
        %1843 = vmatmul.mubr.bf16.gmra.mxu0 %v1794
        %v1844 = vpop.f32.mrf.mxu0
        %v1845 = vadd.f32 0.0, %v1844
        %v1846 = vpop.f32.mrf.mxu0
        %v1847 = vpop.f32.mrf.mxu0
        %v1848 = vadd.f32 0.0, %v1847
        %v1849 = vpop.f32.mrf.mxu0
        %1850 = vmatprep.mubr.bf16.mxu0 0
        %1851 = vmatmul.mubr.bf16.gmra.mxu0 %v1797
        %v1852 = vpop.f32.mrf.mxu0
        %v1853 = vadd.f32 0.0, %v1852
        %v1854 = vpop.f32.mrf.mxu0
        %v1855 = vpop.f32.mrf.mxu0
        %v1856 = vadd.f32 0.0, %v1855
        %v1857 = vpop.f32.mrf.mxu0
        %1858 = vmatprep.mubr.bf16.mxu0 0
        %1859 = vmatmul.mubr.bf16.gmra.mxu0 %v1800
        %v1860 = vpop.f32.mrf.mxu0
        %v1861 = vadd.f32 0.0, %v1860
        %v1862 = vpop.f32.mrf.mxu0
        %v1863 = vpop.f32.mrf.mxu0
        %v1864 = vadd.f32 0.0, %v1863
        %v1865 = vpop.f32.mrf.mxu0
        %1866 = vdwg.mxu0
        %v1867 = vadd.f32 %v1680, %v1837
        %v1868 = vadd.f32 %v1683, %v1840
        %v1869 = vadd.f32 %v1688, %v1845
        %v1870 = vadd.f32 %v1691, %v1848
        %v1871 = vadd.f32 %v1696, %v1853
        %v1872 = vadd.f32 %v1699, %v1856
        %v1873 = vadd.f32 %v1704, %v1861
        %v1874 = vadd.f32 %v1707, %v1864
        %v1875 = vld [vmem:[#allocation2 + $0x4] sm:$0x3]
        %v1876 = vld [vmem:[#allocation2 + $0xc] sm:$0x3]
        %v1877 = vld [vmem:[#allocation2 + $0x14] sm:$0x3]
        %v1878 = vld [vmem:[#allocation2 + $0x1c] sm:$0x3]
        %v1879 = vld [vmem:[#allocation2 + $0x24] sm:$0x3]
        %v1880 = vld [vmem:[#allocation2 + $0x2c] sm:$0x3]
        %v1881 = vld [vmem:[#allocation2 + $0x34] sm:$0x3]
        %v1882 = vld [vmem:[#allocation2 + $0x3c] sm:$0x3]
        %vm1883 = vsmask.f32 2304
        %vm1884 = vsmask.f32 6416
        %vm1885 = vmor %vm1883, %vm1884
        %v1887 = vshrl.u32 %v1710, 16
        %v1889 = vrot.slane %v1887, 5
        %v1890 = vshll.u32 %v1710, 16
        %v1892 = vrot.slane %v1890, 6
        %v1893 = vor.u32 %v1889, %v1892
        %v1894 = vrot.slane %v1893, 4
        %v1896 = vshrl.u32 %v1875, 16
        %v1898 = vrot.slane %v1896, 5
        %v1899 = vshll.u32 %v1875, 16
        %v1901 = vrot.slane %v1899, 6
        %v1902 = vor.u32 %v1898, %v1901
        %v1903 = vsel %vm1885, %v1894, %v1902
        %v1905 = vshrl.u32 %v1711, 16
        %v1907 = vrot.slane %v1905, 5
        %v1908 = vshll.u32 %v1711, 16
        %v1910 = vrot.slane %v1908, 6
        %v1911 = vor.u32 %v1907, %v1910
        %v1912 = vrot.slane %v1911, 4
        %v1914 = vshrl.u32 %v1876, 16
        %v1916 = vrot.slane %v1914, 5
        %v1917 = vshll.u32 %v1876, 16
        %v1919 = vrot.slane %v1917, 6
        %v1920 = vor.u32 %v1916, %v1919
        %v1921 = vsel %vm1885, %v1912, %v1920
        %v1923 = vshrl.u32 %v1712, 16
        %v1925 = vrot.slane %v1923, 5
        %v1926 = vshll.u32 %v1712, 16
        %v1928 = vrot.slane %v1926, 6
        %v1929 = vor.u32 %v1925, %v1928
        %v1930 = vrot.slane %v1929, 4
        %v1932 = vshrl.u32 %v1877, 16
        %v1934 = vrot.slane %v1932, 5
        %v1935 = vshll.u32 %v1877, 16
        %v1937 = vrot.slane %v1935, 6
        %v1938 = vor.u32 %v1934, %v1937
        %v1939 = vsel %vm1885, %v1930, %v1938
        %v1941 = vshrl.u32 %v1713, 16
        %v1943 = vrot.slane %v1941, 5
        %v1944 = vshll.u32 %v1713, 16
        %v1946 = vrot.slane %v1944, 6
        %v1947 = vor.u32 %v1943, %v1946
        %v1948 = vrot.slane %v1947, 4
        %v1950 = vshrl.u32 %v1878, 16
        %v1952 = vrot.slane %v1950, 5
        %v1953 = vshll.u32 %v1878, 16
        %v1955 = vrot.slane %v1953, 6
        %v1956 = vor.u32 %v1952, %v1955
        %v1957 = vsel %vm1885, %v1948, %v1956
        %v1959 = vshrl.u32 %v1714, 16
        %v1961 = vrot.slane %v1959, 5
        %v1962 = vshll.u32 %v1714, 16
        %v1964 = vrot.slane %v1962, 6
        %v1965 = vor.u32 %v1961, %v1964
        %v1966 = vrot.slane %v1965, 4
        %v1968 = vshrl.u32 %v1879, 16
        %v1970 = vrot.slane %v1968, 5
        %v1971 = vshll.u32 %v1879, 16
        %v1973 = vrot.slane %v1971, 6
        %v1974 = vor.u32 %v1970, %v1973
        %v1975 = vsel %vm1885, %v1966, %v1974
        %v1977 = vshrl.u32 %v1715, 16
        %v1979 = vrot.slane %v1977, 5
        %v1980 = vshll.u32 %v1715, 16
        %v1982 = vrot.slane %v1980, 6
        %v1983 = vor.u32 %v1979, %v1982
        %v1984 = vrot.slane %v1983, 4
        %v1986 = vshrl.u32 %v1880, 16
        %v1988 = vrot.slane %v1986, 5
        %v1989 = vshll.u32 %v1880, 16
        %v1991 = vrot.slane %v1989, 6
        %v1992 = vor.u32 %v1988, %v1991
        %v1993 = vsel %vm1885, %v1984, %v1992
        %v1995 = vshrl.u32 %v1716, 16
        %v1997 = vrot.slane %v1995, 5
        %v1998 = vshll.u32 %v1716, 16
        %v2000 = vrot.slane %v1998, 6
        %v2001 = vor.u32 %v1997, %v2000
        %v2002 = vrot.slane %v2001, 4
        %v2004 = vshrl.u32 %v1881, 16
        %v2006 = vrot.slane %v2004, 5
        %v2007 = vshll.u32 %v1881, 16
        %v2009 = vrot.slane %v2007, 6
        %v2010 = vor.u32 %v2006, %v2009
        %v2011 = vsel %vm1885, %v2002, %v2010
        %v2013 = vshrl.u32 %v1717, 16
        %v2015 = vrot.slane %v2013, 5
        %v2016 = vshll.u32 %v1717, 16
        %v2018 = vrot.slane %v2016, 6
        %v2019 = vor.u32 %v2015, %v2018
        %v2020 = vrot.slane %v2019, 4
        %v2022 = vshrl.u32 %v1882, 16
        %v2024 = vrot.slane %v2022, 5
        %v2025 = vshll.u32 %v1882, 16
        %v2027 = vrot.slane %v2025, 6
        %v2028 = vor.u32 %v2024, %v2027
        %v2029 = vsel %vm1885, %v2020, %v2028
        %s2030 = scalar_lea.vmem [#allocation13], 24
        %v2031 = vld [vmem:[%s2030] sm:$0xf]
        %v2032 = vld [vmem:[%s2030 + $0x4] sm:$0xf]
        %v2033 = vunpack.c.l.b16 %v1903
        %v2034 = vunpack.c.l.b16 %v1921
        %v2035 = vunpack.c.l.b16 %v1939
        %v2036 = vunpack.c.l.b16 %v1957
        %v2037 = vunpack.c.l.b16 %v1975
        %v2038 = vunpack.c.l.b16 %v1993
        %v2039 = vunpack.c.l.b16 %v2011
        %v2040 = vunpack.c.l.b16 %v2029
        %v2041 = vpack.c.b16 %v2034, %v2033
        %v2042 = vpack.c.b16 %v2036, %v2035
        %v2043 = vpack.c.b16 %v2038, %v2037
        %v2044 = vpack.c.b16 %v2040, %v2039
        %v2047 = vunpack.c.l.b16 %v2031
        %v2048 = vunpack.c.l.b16 %v2032
        %v2049 = vpack.c.b16 %v2048, %v2047
        %v2052 = vsel %vm1003, %v2041, 0
        %v2055 = vsel %vm1003, %v2042, 0
        %v2058 = vsel %vm1003, %v2043, 0
        %v2061 = vsel %vm1003, %v2044, 0
        %2063 = vmatprep.subr.bf16.mxu0 0
        %2064 = vmatpush1.bf16.msra.mxu0 0
        %2065 = vmatprep.subr.bf16.mxu0 0
        %2066 = vmatpush1.bf16.msra.mxu0 0
        %2067 = vmatprep.subr.bf16.mxu0 0
        %2068 = vmatpush1.bf16.msra.mxu0 0
        %2069 = vmatprep.subr.bf16.mxu0 0
        %2070 = vmatpush1.bf16.msra.mxu0 0
        %2071 = vmatprep.subr.bf16.mxu0 0
        %2072 = vmatpush1.bf16.msra.mxu0 0
        %2073 = vmatprep.subr.bf16.mxu0 0
        %2074 = vmatpush1.bf16.msra.mxu0 0
        %2075 = vmatprep.subr.bf16.mxu0 0
        %2076 = vmatpush1.bf16.msra.mxu0 0
        %2077 = vmatprep.subr.bf16.mxu0 0
        %2078 = vmatpush1.bf16.msra.mxu0 %v2049
        %2079 = vmatprep.subr.bf16.mxu0 0
        %2080 = vmatpush2.bf16.msra.mxu0 0
        %2081 = vmatprep.subr.bf16.mxu0 0
        %2082 = vmatpush2.bf16.msra.mxu0 0
        %2083 = vmatprep.subr.bf16.mxu0 0
        %2084 = vmatpush2.bf16.msra.mxu0 0
        %2085 = vmatprep.subr.bf16.mxu0 0
        %2086 = vmatpush2.bf16.msra.mxu0 0
        %2087 = vmatprep.subr.bf16.mxu0 0
        %2088 = vmatpush2.bf16.msra.mxu0 0
        %2089 = vmatprep.subr.bf16.mxu0 0
        %2090 = vmatpush2.bf16.msra.mxu0 0
        %2091 = vmatprep.subr.bf16.mxu0 0
        %2092 = vmatpush2.bf16.msra.mxu0 0
        %2093 = vmatprep.subr.bf16.mxu0 0
        %2094 = vmatpush2.bf16.msra.mxu0 0
        %2095 = vmatprep.mubr.bf16.mxu0 0
        %2096 = vmatmul.mubr.bf16.gmra.mxu0 %v2052
        %v2097 = vpop.f32.mrf.mxu0
        %v2098 = vadd.f32 0.0, %v2097
        %v2099 = vpop.f32.mrf.mxu0
        %v2100 = vpop.f32.mrf.mxu0
        %v2101 = vadd.f32 0.0, %v2100
        %v2102 = vpop.f32.mrf.mxu0
        %2103 = vmatprep.mubr.bf16.mxu0 0
        %2104 = vmatmul.mubr.bf16.gmra.mxu0 %v2055
        %v2105 = vpop.f32.mrf.mxu0
        %v2106 = vadd.f32 0.0, %v2105
        %v2107 = vpop.f32.mrf.mxu0
        %v2108 = vpop.f32.mrf.mxu0
        %v2109 = vadd.f32 0.0, %v2108
        %v2110 = vpop.f32.mrf.mxu0
        %2111 = vmatprep.mubr.bf16.mxu0 0
        %2112 = vmatmul.mubr.bf16.gmra.mxu0 %v2058
        %v2113 = vpop.f32.mrf.mxu0
        %v2114 = vadd.f32 0.0, %v2113
        %v2115 = vpop.f32.mrf.mxu0
        %v2116 = vpop.f32.mrf.mxu0
        %v2117 = vadd.f32 0.0, %v2116
        %v2118 = vpop.f32.mrf.mxu0
        %2119 = vmatprep.mubr.bf16.mxu0 0
        %2120 = vmatmul.mubr.bf16.gmra.mxu0 %v2061
        %v2121 = vpop.f32.mrf.mxu0
        %v2122 = vadd.f32 0.0, %v2121
        %v2123 = vpop.f32.mrf.mxu0
        %v2124 = vpop.f32.mrf.mxu0
        %v2125 = vadd.f32 0.0, %v2124
        %v2126 = vpop.f32.mrf.mxu0
        %2127 = vdwg.mxu0
        %v2128 = vadd.f32 %v1867, %v2098
        %v2129 = vadd.f32 %v1868, %v2101
        %v2130 = vadd.f32 %v1869, %v2106
        %v2131 = vadd.f32 %v1870, %v2109
        %v2132 = vadd.f32 %v1871, %v2114
        %v2133 = vadd.f32 %v1872, %v2117
        %v2134 = vadd.f32 %v1873, %v2122
        %v2135 = vadd.f32 %v1874, %v2125
        %v2136 = vld [vmem:[#allocation2] sm:$0xc]
        %v2137 = vld [vmem:[#allocation2 + $0x8] sm:$0xc]
        %v2138 = vld [vmem:[#allocation2 + $0x10] sm:$0xc]
        %v2139 = vld [vmem:[#allocation2 + $0x18] sm:$0xc]
        %v2140 = vld [vmem:[#allocation2 + $0x20] sm:$0xc]
        %v2141 = vld [vmem:[#allocation2 + $0x28] sm:$0xc]
        %v2142 = vld [vmem:[#allocation2 + $0x30] sm:$0xc]
        %v2143 = vld [vmem:[#allocation2 + $0x38] sm:$0xc]
        %vm2160 = vcmask 1041408
        %vm2161 = vcmask 1045508
        %vm2162 = vmor %vm2160, %vm2161
        %v2163 = vrot.slane %v2136, 6
        %v2164 = vrot.slane %v2163, 4
        %v2165 = vrot.slane %v1875, 6
        %v2166 = vsel %vm2162, %v2164, %v2165
        %v2167 = vrot.slane %v2137, 6
        %v2168 = vrot.slane %v2167, 4
        %v2169 = vrot.slane %v1876, 6
        %v2170 = vsel %vm2162, %v2168, %v2169
        %v2171 = vrot.slane %v2138, 6
        %v2172 = vrot.slane %v2171, 4
        %v2173 = vrot.slane %v1877, 6
        %v2174 = vsel %vm2162, %v2172, %v2173
        %v2175 = vrot.slane %v2139, 6
        %v2176 = vrot.slane %v2175, 4
        %v2177 = vrot.slane %v1878, 6
        %v2178 = vsel %vm2162, %v2176, %v2177
        %v2179 = vrot.slane %v2140, 6
        %v2180 = vrot.slane %v2179, 4
        %v2181 = vrot.slane %v1879, 6
        %v2182 = vsel %vm2162, %v2180, %v2181
        %v2183 = vrot.slane %v2141, 6
        %v2184 = vrot.slane %v2183, 4
        %v2185 = vrot.slane %v1880, 6
        %v2186 = vsel %vm2162, %v2184, %v2185
        %v2187 = vrot.slane %v2142, 6
        %v2188 = vrot.slane %v2187, 4
        %v2189 = vrot.slane %v1881, 6
        %v2190 = vsel %vm2162, %v2188, %v2189
        %v2191 = vrot.slane %v2143, 6
        %v2192 = vrot.slane %v2191, 4
        %v2193 = vrot.slane %v1882, 6
        %v2194 = vsel %vm2162, %v2192, %v2193
        %s2195 = scalar_lea.vmem [#allocation13], 32
        %v2196 = vld [vmem:[%s2195] sm:$0xf]
        %v2197 = vld [vmem:[%s2195 + $0x4] sm:$0xf]
        %v2198 = vunpack.c.l.b16 %v2166
        %v2199 = vunpack.c.l.b16 %v2170
        %v2200 = vunpack.c.l.b16 %v2174
        %v2201 = vunpack.c.l.b16 %v2178
        %v2202 = vunpack.c.l.b16 %v2182
        %v2203 = vunpack.c.l.b16 %v2186
        %v2204 = vunpack.c.l.b16 %v2190
        %v2205 = vunpack.c.l.b16 %v2194
        %v2206 = vpack.c.b16 %v2199, %v2198
        %v2207 = vpack.c.b16 %v2201, %v2200
        %v2208 = vpack.c.b16 %v2203, %v2202
        %v2209 = vpack.c.b16 %v2205, %v2204
        %v2212 = vunpack.c.l.b16 %v2196
        %v2213 = vunpack.c.l.b16 %v2197
        %v2214 = vpack.c.b16 %v2213, %v2212
        %v2217 = vsel %vm1003, %v2206, 0
        %v2220 = vsel %vm1003, %v2207, 0
        %v2223 = vsel %vm1003, %v2208, 0
        %v2226 = vsel %vm1003, %v2209, 0
        %2228 = vmatprep.subr.bf16.mxu0 0
        %2229 = vmatpush1.bf16.msra.mxu0 0
        %2230 = vmatprep.subr.bf16.mxu0 0
        %2231 = vmatpush1.bf16.msra.mxu0 0
        %2232 = vmatprep.subr.bf16.mxu0 0
        %2233 = vmatpush1.bf16.msra.mxu0 0
        %2234 = vmatprep.subr.bf16.mxu0 0
        %2235 = vmatpush1.bf16.msra.mxu0 0
        %2236 = vmatprep.subr.bf16.mxu0 0
        %2237 = vmatpush1.bf16.msra.mxu0 0
        %2238 = vmatprep.subr.bf16.mxu0 0
        %2239 = vmatpush1.bf16.msra.mxu0 0
        %2240 = vmatprep.subr.bf16.mxu0 0
        %2241 = vmatpush1.bf16.msra.mxu0 0
        %2242 = vmatprep.subr.bf16.mxu0 0
        %2243 = vmatpush1.bf16.msra.mxu0 %v2214
        %2244 = vmatprep.subr.bf16.mxu0 0
        %2245 = vmatpush2.bf16.msra.mxu0 0
        %2246 = vmatprep.subr.bf16.mxu0 0
        %2247 = vmatpush2.bf16.msra.mxu0 0
        %2248 = vmatprep.subr.bf16.mxu0 0
        %2249 = vmatpush2.bf16.msra.mxu0 0
        %2250 = vmatprep.subr.bf16.mxu0 0
        %2251 = vmatpush2.bf16.msra.mxu0 0
        %2252 = vmatprep.subr.bf16.mxu0 0
        %2253 = vmatpush2.bf16.msra.mxu0 0
        %2254 = vmatprep.subr.bf16.mxu0 0
        %2255 = vmatpush2.bf16.msra.mxu0 0
        %2256 = vmatprep.subr.bf16.mxu0 0
        %2257 = vmatpush2.bf16.msra.mxu0 0
        %2258 = vmatprep.subr.bf16.mxu0 0
        %2259 = vmatpush2.bf16.msra.mxu0 0
        %2260 = vmatprep.mubr.bf16.mxu0 0
        %2261 = vmatmul.mubr.bf16.gmra.mxu0 %v2217
        %v2262 = vpop.f32.mrf.mxu0
        %v2263 = vadd.f32 0.0, %v2262
        %v2264 = vpop.f32.mrf.mxu0
        %v2265 = vpop.f32.mrf.mxu0
        %v2266 = vadd.f32 0.0, %v2265
        %v2267 = vpop.f32.mrf.mxu0
        %2268 = vmatprep.mubr.bf16.mxu0 0
        %2269 = vmatmul.mubr.bf16.gmra.mxu0 %v2220
        %v2270 = vpop.f32.mrf.mxu0
        %v2271 = vadd.f32 0.0, %v2270
        %v2272 = vpop.f32.mrf.mxu0
        %v2273 = vpop.f32.mrf.mxu0
        %v2274 = vadd.f32 0.0, %v2273
        %v2275 = vpop.f32.mrf.mxu0
        %2276 = vmatprep.mubr.bf16.mxu0 0
        %2277 = vmatmul.mubr.bf16.gmra.mxu0 %v2223
        %v2278 = vpop.f32.mrf.mxu0
        %v2279 = vadd.f32 0.0, %v2278
        %v2280 = vpop.f32.mrf.mxu0
        %v2281 = vpop.f32.mrf.mxu0
        %v2282 = vadd.f32 0.0, %v2281
        %v2283 = vpop.f32.mrf.mxu0
        %2284 = vmatprep.mubr.bf16.mxu0 0
        %2285 = vmatmul.mubr.bf16.gmra.mxu0 %v2226
        %v2286 = vpop.f32.mrf.mxu0
        %v2287 = vadd.f32 0.0, %v2286
        %v2288 = vpop.f32.mrf.mxu0
        %v2289 = vpop.f32.mrf.mxu0
        %v2290 = vadd.f32 0.0, %v2289
        %v2291 = vpop.f32.mrf.mxu0
        %2292 = vdwg.mxu0
        %v2293 = vadd.f32 %v2128, %v2263
        %v2294 = vadd.f32 %v2129, %v2266
        %v2295 = vadd.f32 %v2130, %v2271
        %v2296 = vadd.f32 %v2131, %v2274
        %v2297 = vadd.f32 %v2132, %v2279
        %v2298 = vadd.f32 %v2133, %v2282
        %v2299 = vadd.f32 %v2134, %v2287
        %v2300 = vadd.f32 %v2135, %v2290
        %v2301 = vld [vmem:[#allocation2 + $0x4] sm:$0x7]
        %v2302 = vld [vmem:[#allocation2 + $0xc] sm:$0x7]
        %v2303 = vld [vmem:[#allocation2 + $0x14] sm:$0x7]
        %v2304 = vld [vmem:[#allocation2 + $0x1c] sm:$0x7]
        %v2305 = vld [vmem:[#allocation2 + $0x24] sm:$0x7]
        %v2306 = vld [vmem:[#allocation2 + $0x2c] sm:$0x7]
        %v2307 = vld [vmem:[#allocation2 + $0x34] sm:$0x7]
        %v2308 = vld [vmem:[#allocation2 + $0x3c] sm:$0x7]
        %vm2309 = vsmask.f32 5392
        %vm2310 = vmor %vm1329, %vm2309
        %v2312 = vshrl.u32 %v2136, 16
        %v2314 = vrot.slane %v2312, 6
        %v2315 = vshll.u32 %v2136, 16
        %v2317 = vrot.slane %v2315, 7
        %v2318 = vor.u32 %v2314, %v2317
        %v2319 = vrot.slane %v2318, 4
        %v2321 = vshrl.u32 %v2301, 16
        %v2323 = vrot.slane %v2321, 6
        %v2324 = vshll.u32 %v2301, 16
        %v2326 = vrot.slane %v2324, 7
        %v2327 = vor.u32 %v2323, %v2326
        %v2328 = vsel %vm2310, %v2319, %v2327
        %v2330 = vshrl.u32 %v2137, 16
        %v2332 = vrot.slane %v2330, 6
        %v2333 = vshll.u32 %v2137, 16
        %v2335 = vrot.slane %v2333, 7
        %v2336 = vor.u32 %v2332, %v2335
        %v2337 = vrot.slane %v2336, 4
        %v2339 = vshrl.u32 %v2302, 16
        %v2341 = vrot.slane %v2339, 6
        %v2342 = vshll.u32 %v2302, 16
        %v2344 = vrot.slane %v2342, 7
        %v2345 = vor.u32 %v2341, %v2344
        %v2346 = vsel %vm2310, %v2337, %v2345
        %v2348 = vshrl.u32 %v2138, 16
        %v2350 = vrot.slane %v2348, 6
        %v2351 = vshll.u32 %v2138, 16
        %v2353 = vrot.slane %v2351, 7
        %v2354 = vor.u32 %v2350, %v2353
        %v2355 = vrot.slane %v2354, 4
        %v2357 = vshrl.u32 %v2303, 16
        %v2359 = vrot.slane %v2357, 6
        %v2360 = vshll.u32 %v2303, 16
        %v2362 = vrot.slane %v2360, 7
        %v2363 = vor.u32 %v2359, %v2362
        %v2364 = vsel %vm2310, %v2355, %v2363
        %v2366 = vshrl.u32 %v2139, 16
        %v2368 = vrot.slane %v2366, 6
        %v2369 = vshll.u32 %v2139, 16
        %v2371 = vrot.slane %v2369, 7
        %v2372 = vor.u32 %v2368, %v2371
        %v2373 = vrot.slane %v2372, 4
        %v2375 = vshrl.u32 %v2304, 16
        %v2377 = vrot.slane %v2375, 6
        %v2378 = vshll.u32 %v2304, 16
        %v2380 = vrot.slane %v2378, 7
        %v2381 = vor.u32 %v2377, %v2380
        %v2382 = vsel %vm2310, %v2373, %v2381
        %v2384 = vshrl.u32 %v2140, 16
        %v2386 = vrot.slane %v2384, 6
        %v2387 = vshll.u32 %v2140, 16
        %v2389 = vrot.slane %v2387, 7
        %v2390 = vor.u32 %v2386, %v2389
        %v2391 = vrot.slane %v2390, 4
        %v2393 = vshrl.u32 %v2305, 16
        %v2395 = vrot.slane %v2393, 6
        %v2396 = vshll.u32 %v2305, 16
        %v2398 = vrot.slane %v2396, 7
        %v2399 = vor.u32 %v2395, %v2398
        %v2400 = vsel %vm2310, %v2391, %v2399
        %v2402 = vshrl.u32 %v2141, 16
        %v2404 = vrot.slane %v2402, 6
        %v2405 = vshll.u32 %v2141, 16
        %v2407 = vrot.slane %v2405, 7
        %v2408 = vor.u32 %v2404, %v2407
        %v2409 = vrot.slane %v2408, 4
        %v2411 = vshrl.u32 %v2306, 16
        %v2413 = vrot.slane %v2411, 6
        %v2414 = vshll.u32 %v2306, 16
        %v2416 = vrot.slane %v2414, 7
        %v2417 = vor.u32 %v2413, %v2416
        %v2418 = vsel %vm2310, %v2409, %v2417
        %v2420 = vshrl.u32 %v2142, 16
        %v2422 = vrot.slane %v2420, 6
        %v2423 = vshll.u32 %v2142, 16
        %v2425 = vrot.slane %v2423, 7
        %v2426 = vor.u32 %v2422, %v2425
        %v2427 = vrot.slane %v2426, 4
        %v2429 = vshrl.u32 %v2307, 16
        %v2431 = vrot.slane %v2429, 6
        %v2432 = vshll.u32 %v2307, 16
        %v2434 = vrot.slane %v2432, 7
        %v2435 = vor.u32 %v2431, %v2434
        %v2436 = vsel %vm2310, %v2427, %v2435
        %v2438 = vshrl.u32 %v2143, 16
        %v2440 = vrot.slane %v2438, 6
        %v2441 = vshll.u32 %v2143, 16
        %v2443 = vrot.slane %v2441, 7
        %v2444 = vor.u32 %v2440, %v2443
        %v2445 = vrot.slane %v2444, 4
        %v2447 = vshrl.u32 %v2308, 16
        %v2449 = vrot.slane %v2447, 6
        %v2450 = vshll.u32 %v2308, 16
        %v2452 = vrot.slane %v2450, 7
        %v2453 = vor.u32 %v2449, %v2452
        %v2454 = vsel %vm2310, %v2445, %v2453
        %s2455 = scalar_lea.vmem [#allocation13], 40
        %v2456 = vld [vmem:[%s2455] sm:$0xf]
        %v2457 = vld [vmem:[%s2455 + $0x4] sm:$0xf]
        %v2458 = vunpack.c.l.b16 %v2328
        %v2459 = vunpack.c.l.b16 %v2346
        %v2460 = vunpack.c.l.b16 %v2364
        %v2461 = vunpack.c.l.b16 %v2382
        %v2462 = vunpack.c.l.b16 %v2400
        %v2463 = vunpack.c.l.b16 %v2418
        %v2464 = vunpack.c.l.b16 %v2436
        %v2465 = vunpack.c.l.b16 %v2454
        %v2466 = vpack.c.b16 %v2459, %v2458
        %v2467 = vpack.c.b16 %v2461, %v2460
        %v2468 = vpack.c.b16 %v2463, %v2462
        %v2469 = vpack.c.b16 %v2465, %v2464
        %v2472 = vunpack.c.l.b16 %v2456
        %v2473 = vunpack.c.l.b16 %v2457
        %v2474 = vpack.c.b16 %v2473, %v2472
        %v2477 = vsel %vm1003, %v2466, 0
        %v2480 = vsel %vm1003, %v2467, 0
        %v2483 = vsel %vm1003, %v2468, 0
        %v2486 = vsel %vm1003, %v2469, 0
        %2488 = vmatprep.subr.bf16.mxu0 0
        %2489 = vmatpush1.bf16.msra.mxu0 0
        %2490 = vmatprep.subr.bf16.mxu0 0
        %2491 = vmatpush1.bf16.msra.mxu0 0
        %2492 = vmatprep.subr.bf16.mxu0 0
        %2493 = vmatpush1.bf16.msra.mxu0 0
        %2494 = vmatprep.subr.bf16.mxu0 0
        %2495 = vmatpush1.bf16.msra.mxu0 0
        %2496 = vmatprep.subr.bf16.mxu0 0
        %2497 = vmatpush1.bf16.msra.mxu0 0
        %2498 = vmatprep.subr.bf16.mxu0 0
        %2499 = vmatpush1.bf16.msra.mxu0 0
        %2500 = vmatprep.subr.bf16.mxu0 0
        %2501 = vmatpush1.bf16.msra.mxu0 0
        %2502 = vmatprep.subr.bf16.mxu0 0
        %2503 = vmatpush1.bf16.msra.mxu0 %v2474
        %2504 = vmatprep.subr.bf16.mxu0 0
        %2505 = vmatpush2.bf16.msra.mxu0 0
        %2506 = vmatprep.subr.bf16.mxu0 0
        %2507 = vmatpush2.bf16.msra.mxu0 0
        %2508 = vmatprep.subr.bf16.mxu0 0
        %2509 = vmatpush2.bf16.msra.mxu0 0
        %2510 = vmatprep.subr.bf16.mxu0 0
        %2511 = vmatpush2.bf16.msra.mxu0 0
        %2512 = vmatprep.subr.bf16.mxu0 0
        %2513 = vmatpush2.bf16.msra.mxu0 0
        %2514 = vmatprep.subr.bf16.mxu0 0
        %2515 = vmatpush2.bf16.msra.mxu0 0
        %2516 = vmatprep.subr.bf16.mxu0 0
        %2517 = vmatpush2.bf16.msra.mxu0 0
        %2518 = vmatprep.subr.bf16.mxu0 0
        %2519 = vmatpush2.bf16.msra.mxu0 0
        %2520 = vmatprep.mubr.bf16.mxu0 0
        %2521 = vmatmul.mubr.bf16.gmra.mxu0 %v2477
        %v2522 = vpop.f32.mrf.mxu0
        %v2523 = vadd.f32 0.0, %v2522
        %v2524 = vpop.f32.mrf.mxu0
        %v2525 = vpop.f32.mrf.mxu0
        %v2526 = vadd.f32 0.0, %v2525
        %v2527 = vpop.f32.mrf.mxu0
        %2528 = vmatprep.mubr.bf16.mxu0 0
        %2529 = vmatmul.mubr.bf16.gmra.mxu0 %v2480
        %v2530 = vpop.f32.mrf.mxu0
        %v2531 = vadd.f32 0.0, %v2530
        %v2532 = vpop.f32.mrf.mxu0
        %v2533 = vpop.f32.mrf.mxu0
        %v2534 = vadd.f32 0.0, %v2533
        %v2535 = vpop.f32.mrf.mxu0
        %2536 = vmatprep.mubr.bf16.mxu0 0
        %2537 = vmatmul.mubr.bf16.gmra.mxu0 %v2483
        %v2538 = vpop.f32.mrf.mxu0
        %v2539 = vadd.f32 0.0, %v2538
        %v2540 = vpop.f32.mrf.mxu0
        %v2541 = vpop.f32.mrf.mxu0
        %v2542 = vadd.f32 0.0, %v2541
        %v2543 = vpop.f32.mrf.mxu0
        %2544 = vmatprep.mubr.bf16.mxu0 0
        %2545 = vmatmul.mubr.bf16.gmra.mxu0 %v2486
        %v2546 = vpop.f32.mrf.mxu0
        %v2547 = vadd.f32 0.0, %v2546
        %v2548 = vpop.f32.mrf.mxu0
        %v2549 = vpop.f32.mrf.mxu0
        %v2550 = vadd.f32 0.0, %v2549
        %v2551 = vpop.f32.mrf.mxu0
        %2552 = vdwg.mxu0
        %v2553 = vadd.f32 %v2293, %v2523
        %v2554 = vadd.f32 %v2294, %v2526
        %v2555 = vadd.f32 %v2295, %v2531
        %v2556 = vadd.f32 %v2296, %v2534
        %v2557 = vadd.f32 %v2297, %v2539
        %v2558 = vadd.f32 %v2298, %v2542
        %v2559 = vadd.f32 %v2299, %v2547
        %v2560 = vadd.f32 %v2300, %v2550
        %v2561 = vld [vmem:[#allocation2] sm:$0x8]
        %v2562 = vld [vmem:[#allocation2 + $0x8] sm:$0x8]
        %v2563 = vld [vmem:[#allocation2 + $0x10] sm:$0x8]
        %v2564 = vld [vmem:[#allocation2 + $0x18] sm:$0x8]
        %v2565 = vld [vmem:[#allocation2 + $0x20] sm:$0x8]
        %v2566 = vld [vmem:[#allocation2 + $0x28] sm:$0x8]
        %v2567 = vld [vmem:[#allocation2 + $0x30] sm:$0x8]
        %v2568 = vld [vmem:[#allocation2 + $0x38] sm:$0x8]
        %vm2585 = vcmask 1040384
        %vm2586 = vcmask 1044484
        %vm2587 = vmor %vm2585, %vm2586
        %v2588 = vrot.slane %v2561, 7
        %v2589 = vrot.slane %v2588, 4
        %v2590 = vrot.slane %v2301, 7
        %v2591 = vsel %vm2587, %v2589, %v2590
        %v2592 = vrot.slane %v2562, 7
        %v2593 = vrot.slane %v2592, 4
        %v2594 = vrot.slane %v2302, 7
        %v2595 = vsel %vm2587, %v2593, %v2594
        %v2596 = vrot.slane %v2563, 7
        %v2597 = vrot.slane %v2596, 4
        %v2598 = vrot.slane %v2303, 7
        %v2599 = vsel %vm2587, %v2597, %v2598
        %v2600 = vrot.slane %v2564, 7
        %v2601 = vrot.slane %v2600, 4
        %v2602 = vrot.slane %v2304, 7
        %v2603 = vsel %vm2587, %v2601, %v2602
        %v2604 = vrot.slane %v2565, 7
        %v2605 = vrot.slane %v2604, 4
        %v2606 = vrot.slane %v2305, 7
        %v2607 = vsel %vm2587, %v2605, %v2606
        %v2608 = vrot.slane %v2566, 7
        %v2609 = vrot.slane %v2608, 4
        %v2610 = vrot.slane %v2306, 7
        %v2611 = vsel %vm2587, %v2609, %v2610
        %v2612 = vrot.slane %v2567, 7
        %v2613 = vrot.slane %v2612, 4
        %v2614 = vrot.slane %v2307, 7
        %v2615 = vsel %vm2587, %v2613, %v2614
        %v2616 = vrot.slane %v2568, 7
        %v2617 = vrot.slane %v2616, 4
        %v2618 = vrot.slane %v2308, 7
        %v2619 = vsel %vm2587, %v2617, %v2618
        %s2620 = scalar_lea.vmem [#allocation13], 48
        %v2621 = vld [vmem:[%s2620] sm:$0xf]
        %v2622 = vld [vmem:[%s2620 + $0x4] sm:$0xf]
        %v2623 = vunpack.c.l.b16 %v2591
        %v2624 = vunpack.c.l.b16 %v2595
        %v2625 = vunpack.c.l.b16 %v2599
        %v2626 = vunpack.c.l.b16 %v2603
        %v2627 = vunpack.c.l.b16 %v2607
        %v2628 = vunpack.c.l.b16 %v2611
        %v2629 = vunpack.c.l.b16 %v2615
        %v2630 = vunpack.c.l.b16 %v2619
        %v2631 = vpack.c.b16 %v2624, %v2623
        %v2632 = vpack.c.b16 %v2626, %v2625
        %v2633 = vpack.c.b16 %v2628, %v2627
        %v2634 = vpack.c.b16 %v2630, %v2629
        %v2637 = vunpack.c.l.b16 %v2621
        %v2638 = vunpack.c.l.b16 %v2622
        %v2639 = vpack.c.b16 %v2638, %v2637
        %v2642 = vsel %vm1003, %v2631, 0
        %v2645 = vsel %vm1003, %v2632, 0
        %v2648 = vsel %vm1003, %v2633, 0
        %v2651 = vsel %vm1003, %v2634, 0
        %2653 = vmatprep.subr.bf16.mxu0 0
        %2654 = vmatpush1.bf16.msra.mxu0 0
        %2655 = vmatprep.subr.bf16.mxu0 0
        %2656 = vmatpush1.bf16.msra.mxu0 0
        %2657 = vmatprep.subr.bf16.mxu0 0
        %2658 = vmatpush1.bf16.msra.mxu0 0
        %2659 = vmatprep.subr.bf16.mxu0 0
        %2660 = vmatpush1.bf16.msra.mxu0 0
        %2661 = vmatprep.subr.bf16.mxu0 0
        %2662 = vmatpush1.bf16.msra.mxu0 0
        %2663 = vmatprep.subr.bf16.mxu0 0
        %2664 = vmatpush1.bf16.msra.mxu0 0
        %2665 = vmatprep.subr.bf16.mxu0 0
        %2666 = vmatpush1.bf16.msra.mxu0 0
        %2667 = vmatprep.subr.bf16.mxu0 0
        %2668 = vmatpush1.bf16.msra.mxu0 %v2639
        %2669 = vmatprep.subr.bf16.mxu0 0
        %2670 = vmatpush2.bf16.msra.mxu0 0
        %2671 = vmatprep.subr.bf16.mxu0 0
        %2672 = vmatpush2.bf16.msra.mxu0 0
        %2673 = vmatprep.subr.bf16.mxu0 0
        %2674 = vmatpush2.bf16.msra.mxu0 0
        %2675 = vmatprep.subr.bf16.mxu0 0
        %2676 = vmatpush2.bf16.msra.mxu0 0
        %2677 = vmatprep.subr.bf16.mxu0 0
        %2678 = vmatpush2.bf16.msra.mxu0 0
        %2679 = vmatprep.subr.bf16.mxu0 0
        %2680 = vmatpush2.bf16.msra.mxu0 0
        %2681 = vmatprep.subr.bf16.mxu0 0
        %2682 = vmatpush2.bf16.msra.mxu0 0
        %2683 = vmatprep.subr.bf16.mxu0 0
        %2684 = vmatpush2.bf16.msra.mxu0 0
        %2685 = vmatprep.mubr.bf16.mxu0 0
        %2686 = vmatmul.mubr.bf16.gmra.mxu0 %v2642
        %v2687 = vpop.f32.mrf.mxu0
        %v2688 = vadd.f32 0.0, %v2687
        %v2689 = vpop.f32.mrf.mxu0
        %v2690 = vpop.f32.mrf.mxu0
        %v2691 = vadd.f32 0.0, %v2690
        %v2692 = vpop.f32.mrf.mxu0
        %2693 = vmatprep.mubr.bf16.mxu0 0
        %2694 = vmatmul.mubr.bf16.gmra.mxu0 %v2645
        %v2695 = vpop.f32.mrf.mxu0
        %v2696 = vadd.f32 0.0, %v2695
        %v2697 = vpop.f32.mrf.mxu0
        %v2698 = vpop.f32.mrf.mxu0
        %v2699 = vadd.f32 0.0, %v2698
        %v2700 = vpop.f32.mrf.mxu0
        %2701 = vmatprep.mubr.bf16.mxu0 0
        %2702 = vmatmul.mubr.bf16.gmra.mxu0 %v2648
        %v2703 = vpop.f32.mrf.mxu0
        %v2704 = vadd.f32 0.0, %v2703
        %v2705 = vpop.f32.mrf.mxu0
        %v2706 = vpop.f32.mrf.mxu0
        %v2707 = vadd.f32 0.0, %v2706
        %v2708 = vpop.f32.mrf.mxu0
        %2709 = vmatprep.mubr.bf16.mxu0 0
        %2710 = vmatmul.mubr.bf16.gmra.mxu0 %v2651
        %v2711 = vpop.f32.mrf.mxu0
        %v2712 = vadd.f32 0.0, %v2711
        %v2713 = vpop.f32.mrf.mxu0
        %v2714 = vpop.f32.mrf.mxu0
        %v2715 = vadd.f32 0.0, %v2714
        %v2716 = vpop.f32.mrf.mxu0
        %2717 = vdwg.mxu0
        %v2718 = vadd.f32 %v2553, %v2688
        %v2719 = vadd.f32 %v2554, %v2691
        %v2720 = vadd.f32 %v2555, %v2696
        %v2721 = vadd.f32 %v2556, %v2699
        %v2722 = vadd.f32 %v2557, %v2704
        %v2723 = vadd.f32 %v2558, %v2707
        %v2724 = vadd.f32 %v2559, %v2712
        %v2725 = vadd.f32 %v2560, %v2715
        %v2726 = vld [vmem:[#allocation14] sm:$0x1]
        %v2728 = vlaneseq
        %v2729 = vshrl.u32 %v2728, 7
        %v2730 = vsub.s32 0, %v2729
        %v2731 = vrot.slane %v2726, %v2730
        %v2733 = vadd.f32 %v2718, %v2731
        %v2734 = vadd.f32 %v2719, %v2731
        %v2735 = vadd.f32 %v2720, %v2731
        %v2736 = vadd.f32 %v2721, %v2731
        %v2737 = vadd.f32 %v2722, %v2731
        %v2738 = vadd.f32 %v2723, %v2731
        %v2739 = vadd.f32 %v2724, %v2731
        %v2740 = vadd.f32 %v2725, %v2731
        %v2741 = vmax.f32 %v2733, 0.0
        %v2742 = vmax.f32 %v2734, 0.0
        %v2743 = vmax.f32 %v2735, 0.0
        %v2744 = vmax.f32 %v2736, 0.0
        %v2745 = vmax.f32 %v2737, 0.0
        %v2746 = vmax.f32 %v2738, 0.0
        %v2747 = vmax.f32 %v2739, 0.0
        %v2748 = vmax.f32 %v2740, 0.0
        %v2749 = vpack.c.bf16 %v2742, %v2741
        %v2750 = vpack.c.bf16 %v2744, %v2743
        %v2751 = vpack.c.bf16 %v2746, %v2745
        %v2752 = vpack.c.bf16 %v2748, %v2747
        %v2757 = vunpack.c.l.b16 %v2749
        %v2758 = vunpack.c.h.b16 %v2749
        %v2759 = vunpack.c.l.b16 %v2750
        %v2760 = vunpack.c.h.b16 %v2750
        %v2761 = vunpack.c.l.b16 %v2751
        %v2762 = vunpack.c.h.b16 %v2751
        %v2763 = vunpack.c.l.b16 %v2752
        %v2764 = vunpack.c.h.b16 %v2752
        %v2765 = vpack.c.b16 %v2757, %v2757
        %v2766 = vpack.c.b16 %v2758, %v2758
        %v2767 = vpack.c.b16 %v2759, %v2759
        %v2768 = vpack.c.b16 %v2760, %v2760
        %v2769 = vpack.c.b16 %v2761, %v2761
        %v2770 = vpack.c.b16 %v2762, %v2762
        %v2771 = vpack.c.b16 %v2763, %v2763
        %v2772 = vpack.c.b16 %v2764, %v2764
        %s2781 = scalar_lea.vmem [#allocation3], 12
        %2782 = vst.msk [vmem:[%s2781] sm:$0xf] %vm898, %v2765
        %2783 = vst.msk [vmem:[%s2781 + $0x4] sm:$0xf] %vm898, %v2766
        %2784 = vst.msk [vmem:[%s2781 + $0x8] sm:$0xf] %vm898, %v2767
        %2785 = vst.msk [vmem:[%s2781 + $0xc] sm:$0xf] %vm898, %v2768
        %2786 = vst.msk [vmem:[%s2781 + $0x10] sm:$0xf] %vm898, %v2769
        %2787 = vst.msk [vmem:[%s2781 + $0x14] sm:$0xf] %vm898, %v2770
        %2788 = vst.msk [vmem:[%s2781 + $0x18] sm:$0xf] %vm898, %v2771
        %2789 = vst.msk [vmem:[%s2781 + $0x1c] sm:$0xf] %vm898, %v2772
        %v2790 = vld [vmem:[#allocation3] sm:$0xf]
        %v2791 = vld [vmem:[#allocation3 + $0x4] sm:$0xf]
        %v2792 = vld [vmem:[#allocation3 + $0x8] sm:$0xf]
        %v2793 = vld [vmem:[#allocation3 + $0xc] sm:$0xf]
        %v2794 = vld [vmem:[#allocation3 + $0x10] sm:$0xf]
        %v2795 = vld [vmem:[#allocation3 + $0x14] sm:$0xf]
        %v2796 = vld [vmem:[#allocation3 + $0x18] sm:$0xf]
        %v2797 = vld [vmem:[#allocation3 + $0x1c] sm:$0xf]
        %v2798 = vld [vmem:[%s7] sm:$0xff]
        %v2799 = vld [vmem:[%s7 + $0x8] sm:$0xff]
        %s2800 = scalar_lea.vmem [#allocation3], 4
        %v2801 = vld [vmem:[%s2800] sm:$0xf]
        %v2802 = vld [vmem:[%s2800 + $0x4] sm:$0xf]
        %v2803 = vld [vmem:[%s2800 + $0x8] sm:$0xf]
        %v2804 = vld [vmem:[%s2800 + $0xc] sm:$0xf]
        %v2805 = vld [vmem:[%s2800 + $0x10] sm:$0xf]
        %v2806 = vld [vmem:[%s2800 + $0x14] sm:$0xf]
        %v2807 = vld [vmem:[%s2800 + $0x18] sm:$0xf]
        %v2808 = vld [vmem:[%s2800 + $0x1c] sm:$0xf]
        %s2809 = scalar_lea.vmem %s7, 16
        %v2810 = vld [vmem:[%s2809] sm:$0xff]
        %v2811 = vld [vmem:[%s2809 + $0x8] sm:$0xff]
        %v2820 = vunpack.c.l.b16 %v2801
        %v2821 = vunpack.c.l.b16 %v2802
        %v2822 = vunpack.c.l.b16 %v2803
        %v2823 = vunpack.c.l.b16 %v2804
        %v2824 = vunpack.c.l.b16 %v2805
        %v2825 = vunpack.c.l.b16 %v2806
        %v2826 = vunpack.c.l.b16 %v2807
        %v2827 = vunpack.c.l.b16 %v2808
        %v2828 = vpack.c.b16 %v2821, %v2820
        %v2829 = vpack.c.b16 %v2823, %v2822
        %v2830 = vpack.c.b16 %v2825, %v2824
        %v2831 = vpack.c.b16 %v2827, %v2826
        %v2834 = vunpack.c.l.b16 %v2810
        %v2835 = vunpack.c.h.b16 %v2810
        %v2836 = vunpack.c.l.b16 %v2811
        %v2837 = vunpack.c.h.b16 %v2811
        %v2838 = vpack.c.b16 %v2836, %v2834
        %v2839 = vpack.c.b16 %v2837, %v2835
        %v2843 = vsel %vm1003, %v2828, 0
        %v2846 = vsel %vm1003, %v2829, 0
        %v2849 = vsel %vm1003, %v2830, 0
        %v2852 = vsel %vm1003, %v2831, 0
        %2854 = vmatprep.subr.bf16.mxu0 0
        %2855 = vmatpush1.bf16.msra.mxu0 0
        %2856 = vmatprep.subr.bf16.mxu0 0
        %2857 = vmatpush1.bf16.msra.mxu0 0
        %2858 = vmatprep.subr.bf16.mxu0 0
        %2859 = vmatpush1.bf16.msra.mxu0 0
        %2860 = vmatprep.subr.bf16.mxu0 0
        %2861 = vmatpush1.bf16.msra.mxu0 0
        %2862 = vmatprep.subr.bf16.mxu0 0
        %2863 = vmatpush1.bf16.msra.mxu0 0
        %2864 = vmatprep.subr.bf16.mxu0 0
        %2865 = vmatpush1.bf16.msra.mxu0 0
        %2866 = vmatprep.subr.bf16.mxu0 0
        %2867 = vmatpush1.bf16.msra.mxu0 0
        %2868 = vmatprep.subr.bf16.mxu0 %v2839
        %2869 = vmatpush1.bf16.msra.mxu0 %v2838
        %2870 = vmatprep.subr.bf16.mxu0 0
        %2871 = vmatpush2.bf16.msra.mxu0 0
        %2872 = vmatprep.subr.bf16.mxu0 0
        %2873 = vmatpush2.bf16.msra.mxu0 0
        %2874 = vmatprep.subr.bf16.mxu0 0
        %2875 = vmatpush2.bf16.msra.mxu0 0
        %2876 = vmatprep.subr.bf16.mxu0 0
        %2877 = vmatpush2.bf16.msra.mxu0 0
        %2878 = vmatprep.subr.bf16.mxu0 0
        %2879 = vmatpush2.bf16.msra.mxu0 0
        %2880 = vmatprep.subr.bf16.mxu0 0
        %2881 = vmatpush2.bf16.msra.mxu0 0
        %2882 = vmatprep.subr.bf16.mxu0 0
        %2883 = vmatpush2.bf16.msra.mxu0 0
        %2884 = vmatprep.subr.bf16.mxu0 0
        %2885 = vmatpush2.bf16.msra.mxu0 0
        %2886 = vmatprep.mubr.bf16.mxu0 0
        %2887 = vmatmul.mubr.bf16.gmra.mxu0 %v2843
        %v2888 = vpop.f32.mrf.mxu0
        %v2889 = vadd.f32 0.0, %v2888
        %v2890 = vpop.f32.mrf.mxu0
        %v2891 = vadd.f32 0.0, %v2890
        %v2892 = vpop.f32.mrf.mxu0
        %v2893 = vadd.f32 0.0, %v2892
        %v2894 = vpop.f32.mrf.mxu0
        %v2895 = vadd.f32 0.0, %v2894
        %2896 = vmatprep.mubr.bf16.mxu0 0
        %2897 = vmatmul.mubr.bf16.gmra.mxu0 %v2846
        %v2898 = vpop.f32.mrf.mxu0
        %v2899 = vadd.f32 0.0, %v2898
        %v2900 = vpop.f32.mrf.mxu0
        %v2901 = vadd.f32 0.0, %v2900
        %v2902 = vpop.f32.mrf.mxu0
        %v2903 = vadd.f32 0.0, %v2902
        %v2904 = vpop.f32.mrf.mxu0
        %v2905 = vadd.f32 0.0, %v2904
        %2906 = vmatprep.mubr.bf16.mxu0 0
        %2907 = vmatmul.mubr.bf16.gmra.mxu0 %v2849
        %v2908 = vpop.f32.mrf.mxu0
        %v2909 = vadd.f32 0.0, %v2908
        %v2910 = vpop.f32.mrf.mxu0
        %v2911 = vadd.f32 0.0, %v2910
        %v2912 = vpop.f32.mrf.mxu0
        %v2913 = vadd.f32 0.0, %v2912
        %v2914 = vpop.f32.mrf.mxu0
        %v2915 = vadd.f32 0.0, %v2914
        %2916 = vmatprep.mubr.bf16.mxu0 0
        %2917 = vmatmul.mubr.bf16.gmra.mxu0 %v2852
        %v2918 = vpop.f32.mrf.mxu0
        %v2919 = vadd.f32 0.0, %v2918
        %v2920 = vpop.f32.mrf.mxu0
        %v2921 = vadd.f32 0.0, %v2920
        %v2922 = vpop.f32.mrf.mxu0
        %v2923 = vadd.f32 0.0, %v2922
        %v2924 = vpop.f32.mrf.mxu0
        %v2925 = vadd.f32 0.0, %v2924
        %2926 = vdwg.mxu0
        %v2935 = vunpack.c.l.b16 %v2790
        %v2936 = vunpack.c.l.b16 %v2791
        %v2937 = vunpack.c.l.b16 %v2792
        %v2938 = vunpack.c.l.b16 %v2793
        %v2939 = vunpack.c.l.b16 %v2794
        %v2940 = vunpack.c.l.b16 %v2795
        %v2941 = vunpack.c.l.b16 %v2796
        %v2942 = vunpack.c.l.b16 %v2797
        %v2943 = vpack.c.b16 %v2936, %v2935
        %v2944 = vpack.c.b16 %v2938, %v2937
        %v2945 = vpack.c.b16 %v2940, %v2939
        %v2946 = vpack.c.b16 %v2942, %v2941
        %v2949 = vunpack.c.l.b16 %v2798
        %v2950 = vunpack.c.h.b16 %v2798
        %v2951 = vunpack.c.l.b16 %v2799
        %v2952 = vunpack.c.h.b16 %v2799
        %v2953 = vpack.c.b16 %v2951, %v2949
        %v2954 = vpack.c.b16 %v2952, %v2950
        %v2958 = vsel %vm1003, %v2943, 0
        %v2961 = vsel %vm1003, %v2944, 0
        %v2964 = vsel %vm1003, %v2945, 0
        %v2967 = vsel %vm1003, %v2946, 0
        %2969 = vmatprep.subr.bf16.mxu0 0
        %2970 = vmatpush1.bf16.msra.mxu0 0
        %2971 = vmatprep.subr.bf16.mxu0 0
        %2972 = vmatpush1.bf16.msra.mxu0 0
        %2973 = vmatprep.subr.bf16.mxu0 0
        %2974 = vmatpush1.bf16.msra.mxu0 0
        %2975 = vmatprep.subr.bf16.mxu0 0
        %2976 = vmatpush1.bf16.msra.mxu0 0
        %2977 = vmatprep.subr.bf16.mxu0 0
        %2978 = vmatpush1.bf16.msra.mxu0 0
        %2979 = vmatprep.subr.bf16.mxu0 0
        %2980 = vmatpush1.bf16.msra.mxu0 0
        %2981 = vmatprep.subr.bf16.mxu0 0
        %2982 = vmatpush1.bf16.msra.mxu0 0
        %2983 = vmatprep.subr.bf16.mxu0 %v2954
        %2984 = vmatpush1.bf16.msra.mxu0 %v2953
        %2985 = vmatprep.subr.bf16.mxu0 0
        %2986 = vmatpush2.bf16.msra.mxu0 0
        %2987 = vmatprep.subr.bf16.mxu0 0
        %2988 = vmatpush2.bf16.msra.mxu0 0
        %2989 = vmatprep.subr.bf16.mxu0 0
        %2990 = vmatpush2.bf16.msra.mxu0 0
        %2991 = vmatprep.subr.bf16.mxu0 0
        %2992 = vmatpush2.bf16.msra.mxu0 0
        %2993 = vmatprep.subr.bf16.mxu0 0
        %2994 = vmatpush2.bf16.msra.mxu0 0
        %2995 = vmatprep.subr.bf16.mxu0 0
        %2996 = vmatpush2.bf16.msra.mxu0 0
        %2997 = vmatprep.subr.bf16.mxu0 0
        %2998 = vmatpush2.bf16.msra.mxu0 0
        %2999 = vmatprep.subr.bf16.mxu0 0
        %3000 = vmatpush2.bf16.msra.mxu0 0
        %3001 = vmatprep.mubr.bf16.mxu0 0
        %3002 = vmatmul.mubr.bf16.gmra.mxu0 %v2958
        %v3003 = vpop.f32.mrf.mxu0
        %v3004 = vadd.f32 %v2889, %v3003
        %v3005 = vpop.f32.mrf.mxu0
        %v3006 = vadd.f32 %v2891, %v3005
        %v3007 = vpop.f32.mrf.mxu0
        %v3008 = vadd.f32 %v2893, %v3007
        %v3009 = vpop.f32.mrf.mxu0
        %v3010 = vadd.f32 %v2895, %v3009
        %3011 = vmatprep.mubr.bf16.mxu0 0
        %3012 = vmatmul.mubr.bf16.gmra.mxu0 %v2961
        %v3013 = vpop.f32.mrf.mxu0
        %v3014 = vadd.f32 %v2899, %v3013
        %v3015 = vpop.f32.mrf.mxu0
        %v3016 = vadd.f32 %v2901, %v3015
        %v3017 = vpop.f32.mrf.mxu0
        %v3018 = vadd.f32 %v2903, %v3017
        %v3019 = vpop.f32.mrf.mxu0
        %v3020 = vadd.f32 %v2905, %v3019
        %3021 = vmatprep.mubr.bf16.mxu0 0
        %3022 = vmatmul.mubr.bf16.gmra.mxu0 %v2964
        %v3023 = vpop.f32.mrf.mxu0
        %v3024 = vadd.f32 %v2909, %v3023
        %v3025 = vpop.f32.mrf.mxu0
        %v3026 = vadd.f32 %v2911, %v3025
        %v3027 = vpop.f32.mrf.mxu0
        %v3028 = vadd.f32 %v2913, %v3027
        %v3029 = vpop.f32.mrf.mxu0
        %v3030 = vadd.f32 %v2915, %v3029
        %3031 = vmatprep.mubr.bf16.mxu0 0
        %3032 = vmatmul.mubr.bf16.gmra.mxu0 %v2967
        %v3033 = vpop.f32.mrf.mxu0
        %v3034 = vadd.f32 %v2919, %v3033
        %v3035 = vpop.f32.mrf.mxu0
        %v3036 = vadd.f32 %v2921, %v3035
        %v3037 = vpop.f32.mrf.mxu0
        %v3038 = vadd.f32 %v2923, %v3037
        %v3039 = vpop.f32.mrf.mxu0
        %v3040 = vadd.f32 %v2925, %v3039
        %3041 = vdwg.mxu0
        %s3042 = scalar_lea.vmem [#allocation3], 8
        %v3043 = vld [vmem:[%s3042] sm:$0xf]
        %v3044 = vld [vmem:[%s3042 + $0x4] sm:$0xf]
        %v3045 = vld [vmem:[%s3042 + $0x8] sm:$0xf]
        %v3046 = vld [vmem:[%s3042 + $0xc] sm:$0xf]
        %v3047 = vld [vmem:[%s3042 + $0x10] sm:$0xf]
        %v3048 = vld [vmem:[%s3042 + $0x14] sm:$0xf]
        %v3049 = vld [vmem:[%s3042 + $0x18] sm:$0xf]
        %v3050 = vld [vmem:[%s3042 + $0x1c] sm:$0xf]
        %s3051 = scalar_lea.vmem %s7, 32
        %v3052 = vld [vmem:[%s3051] sm:$0xff]
        %v3053 = vld [vmem:[%s3051 + $0x8] sm:$0xff]
        %v3062 = vunpack.c.l.b16 %v3043
        %v3063 = vunpack.c.l.b16 %v3044
        %v3064 = vunpack.c.l.b16 %v3045
        %v3065 = vunpack.c.l.b16 %v3046
        %v3066 = vunpack.c.l.b16 %v3047
        %v3067 = vunpack.c.l.b16 %v3048
        %v3068 = vunpack.c.l.b16 %v3049
        %v3069 = vunpack.c.l.b16 %v3050
        %v3070 = vpack.c.b16 %v3063, %v3062
        %v3071 = vpack.c.b16 %v3065, %v3064
        %v3072 = vpack.c.b16 %v3067, %v3066
        %v3073 = vpack.c.b16 %v3069, %v3068
        %v3076 = vunpack.c.l.b16 %v3052
        %v3077 = vunpack.c.h.b16 %v3052
        %v3078 = vunpack.c.l.b16 %v3053
        %v3079 = vunpack.c.h.b16 %v3053
        %v3080 = vpack.c.b16 %v3078, %v3076
        %v3081 = vpack.c.b16 %v3079, %v3077
        %v3085 = vsel %vm1003, %v3070, 0
        %v3088 = vsel %vm1003, %v3071, 0
        %v3091 = vsel %vm1003, %v3072, 0
        %v3094 = vsel %vm1003, %v3073, 0
        %3096 = vmatprep.subr.bf16.mxu0 0
        %3097 = vmatpush1.bf16.msra.mxu0 0
        %3098 = vmatprep.subr.bf16.mxu0 0
        %3099 = vmatpush1.bf16.msra.mxu0 0
        %3100 = vmatprep.subr.bf16.mxu0 0
        %3101 = vmatpush1.bf16.msra.mxu0 0
        %3102 = vmatprep.subr.bf16.mxu0 0
        %3103 = vmatpush1.bf16.msra.mxu0 0
        %3104 = vmatprep.subr.bf16.mxu0 0
        %3105 = vmatpush1.bf16.msra.mxu0 0
        %3106 = vmatprep.subr.bf16.mxu0 0
        %3107 = vmatpush1.bf16.msra.mxu0 0
        %3108 = vmatprep.subr.bf16.mxu0 0
        %3109 = vmatpush1.bf16.msra.mxu0 0
        %3110 = vmatprep.subr.bf16.mxu0 %v3081
        %3111 = vmatpush1.bf16.msra.mxu0 %v3080
        %3112 = vmatprep.subr.bf16.mxu0 0
        %3113 = vmatpush2.bf16.msra.mxu0 0
        %3114 = vmatprep.subr.bf16.mxu0 0
        %3115 = vmatpush2.bf16.msra.mxu0 0
        %3116 = vmatprep.subr.bf16.mxu0 0
        %3117 = vmatpush2.bf16.msra.mxu0 0
        %3118 = vmatprep.subr.bf16.mxu0 0
        %3119 = vmatpush2.bf16.msra.mxu0 0
        %3120 = vmatprep.subr.bf16.mxu0 0
        %3121 = vmatpush2.bf16.msra.mxu0 0
        %3122 = vmatprep.subr.bf16.mxu0 0
        %3123 = vmatpush2.bf16.msra.mxu0 0
        %3124 = vmatprep.subr.bf16.mxu0 0
        %3125 = vmatpush2.bf16.msra.mxu0 0
        %3126 = vmatprep.subr.bf16.mxu0 0
        %3127 = vmatpush2.bf16.msra.mxu0 0
        %3128 = vmatprep.mubr.bf16.mxu0 0
        %3129 = vmatmul.mubr.bf16.gmra.mxu0 %v3085
        %v3130 = vpop.f32.mrf.mxu0
        %v3131 = vadd.f32 0.0, %v3130
        %v3132 = vpop.f32.mrf.mxu0
        %v3133 = vadd.f32 0.0, %v3132
        %v3134 = vpop.f32.mrf.mxu0
        %v3135 = vadd.f32 0.0, %v3134
        %v3136 = vpop.f32.mrf.mxu0
        %v3137 = vadd.f32 0.0, %v3136
        %3138 = vmatprep.mubr.bf16.mxu0 0
        %3139 = vmatmul.mubr.bf16.gmra.mxu0 %v3088
        %v3140 = vpop.f32.mrf.mxu0
        %v3141 = vadd.f32 0.0, %v3140
        %v3142 = vpop.f32.mrf.mxu0
        %v3143 = vadd.f32 0.0, %v3142
        %v3144 = vpop.f32.mrf.mxu0
        %v3145 = vadd.f32 0.0, %v3144
        %v3146 = vpop.f32.mrf.mxu0
        %v3147 = vadd.f32 0.0, %v3146
        %3148 = vmatprep.mubr.bf16.mxu0 0
        %3149 = vmatmul.mubr.bf16.gmra.mxu0 %v3091
        %v3150 = vpop.f32.mrf.mxu0
        %v3151 = vadd.f32 0.0, %v3150
        %v3152 = vpop.f32.mrf.mxu0
        %v3153 = vadd.f32 0.0, %v3152
        %v3154 = vpop.f32.mrf.mxu0
        %v3155 = vadd.f32 0.0, %v3154
        %v3156 = vpop.f32.mrf.mxu0
        %v3157 = vadd.f32 0.0, %v3156
        %3158 = vmatprep.mubr.bf16.mxu0 0
        %3159 = vmatmul.mubr.bf16.gmra.mxu0 %v3094
        %v3160 = vpop.f32.mrf.mxu0
        %v3161 = vadd.f32 0.0, %v3160
        %v3162 = vpop.f32.mrf.mxu0
        %v3163 = vadd.f32 0.0, %v3162
        %v3164 = vpop.f32.mrf.mxu0
        %v3165 = vadd.f32 0.0, %v3164
        %v3166 = vpop.f32.mrf.mxu0
        %v3167 = vadd.f32 0.0, %v3166
        %3168 = vdwg.mxu0
        %v3169 = vadd.f32 %v3004, %v3131
        %v3170 = vadd.f32 %v3006, %v3133
        %v3171 = vadd.f32 %v3008, %v3135
        %v3172 = vadd.f32 %v3010, %v3137
        %v3173 = vadd.f32 %v3014, %v3141
        %v3174 = vadd.f32 %v3016, %v3143
        %v3175 = vadd.f32 %v3018, %v3145
        %v3176 = vadd.f32 %v3020, %v3147
        %v3177 = vadd.f32 %v3024, %v3151
        %v3178 = vadd.f32 %v3026, %v3153
        %v3179 = vadd.f32 %v3028, %v3155
        %v3180 = vadd.f32 %v3030, %v3157
        %v3181 = vadd.f32 %v3034, %v3161
        %v3182 = vadd.f32 %v3036, %v3163
        %v3183 = vadd.f32 %v3038, %v3165
        %v3184 = vadd.f32 %v3040, %v3167
        %v3185 = vld [vmem:[%s2781] sm:$0xf]
        %v3186 = vld [vmem:[%s2781 + $0x4] sm:$0xf]
        %v3187 = vld [vmem:[%s2781 + $0x8] sm:$0xf]
        %v3188 = vld [vmem:[%s2781 + $0xc] sm:$0xf]
        %v3189 = vld [vmem:[%s2781 + $0x10] sm:$0xf]
        %v3190 = vld [vmem:[%s2781 + $0x14] sm:$0xf]
        %v3191 = vld [vmem:[%s2781 + $0x18] sm:$0xf]
        %v3192 = vld [vmem:[%s2781 + $0x1c] sm:$0xf]
        %s3193 = scalar_lea.vmem %s7, 48
        %v3194 = vld [vmem:[%s3193] sm:$0xff]
        %v3195 = vld [vmem:[%s3193 + $0x8] sm:$0xff]
        %v3204 = vunpack.c.l.b16 %v3185
        %v3205 = vunpack.c.l.b16 %v3186
        %v3206 = vunpack.c.l.b16 %v3187
        %v3207 = vunpack.c.l.b16 %v3188
        %v3208 = vunpack.c.l.b16 %v3189
        %v3209 = vunpack.c.l.b16 %v3190
        %v3210 = vunpack.c.l.b16 %v3191
        %v3211 = vunpack.c.l.b16 %v3192
        %v3212 = vpack.c.b16 %v3205, %v3204
        %v3213 = vpack.c.b16 %v3207, %v3206
        %v3214 = vpack.c.b16 %v3209, %v3208
        %v3215 = vpack.c.b16 %v3211, %v3210
        %v3218 = vunpack.c.l.b16 %v3194
        %v3219 = vunpack.c.h.b16 %v3194
        %v3220 = vunpack.c.l.b16 %v3195
        %v3221 = vunpack.c.h.b16 %v3195
        %v3222 = vpack.c.b16 %v3220, %v3218
        %v3223 = vpack.c.b16 %v3221, %v3219
        %v3227 = vsel %vm1003, %v3212, 0
        %v3230 = vsel %vm1003, %v3213, 0
        %v3233 = vsel %vm1003, %v3214, 0
        %v3236 = vsel %vm1003, %v3215, 0
        %3238 = vmatprep.subr.bf16.mxu0 0
        %3239 = vmatpush1.bf16.msra.mxu0 0
        %3240 = vmatprep.subr.bf16.mxu0 0
        %3241 = vmatpush1.bf16.msra.mxu0 0
        %3242 = vmatprep.subr.bf16.mxu0 0
        %3243 = vmatpush1.bf16.msra.mxu0 0
        %3244 = vmatprep.subr.bf16.mxu0 0
        %3245 = vmatpush1.bf16.msra.mxu0 0
        %3246 = vmatprep.subr.bf16.mxu0 0
        %3247 = vmatpush1.bf16.msra.mxu0 0
        %3248 = vmatprep.subr.bf16.mxu0 0
        %3249 = vmatpush1.bf16.msra.mxu0 0
        %3250 = vmatprep.subr.bf16.mxu0 0
        %3251 = vmatpush1.bf16.msra.mxu0 0
        %3252 = vmatprep.subr.bf16.mxu0 %v3223
        %3253 = vmatpush1.bf16.msra.mxu0 %v3222
        %3254 = vmatprep.subr.bf16.mxu0 0
        %3255 = vmatpush2.bf16.msra.mxu0 0
        %3256 = vmatprep.subr.bf16.mxu0 0
        %3257 = vmatpush2.bf16.msra.mxu0 0
        %3258 = vmatprep.subr.bf16.mxu0 0
        %3259 = vmatpush2.bf16.msra.mxu0 0
        %3260 = vmatprep.subr.bf16.mxu0 0
        %3261 = vmatpush2.bf16.msra.mxu0 0
        %3262 = vmatprep.subr.bf16.mxu0 0
        %3263 = vmatpush2.bf16.msra.mxu0 0
        %3264 = vmatprep.subr.bf16.mxu0 0
        %3265 = vmatpush2.bf16.msra.mxu0 0
        %3266 = vmatprep.subr.bf16.mxu0 0
        %3267 = vmatpush2.bf16.msra.mxu0 0
        %3268 = vmatprep.subr.bf16.mxu0 0
        %3269 = vmatpush2.bf16.msra.mxu0 0
        %3270 = vmatprep.mubr.bf16.mxu0 0
        %3271 = vmatmul.mubr.bf16.gmra.mxu0 %v3227
        %v3272 = vpop.f32.mrf.mxu0
        %v3273 = vadd.f32 0.0, %v3272
        %v3274 = vpop.f32.mrf.mxu0
        %v3275 = vadd.f32 0.0, %v3274
        %v3276 = vpop.f32.mrf.mxu0
        %v3277 = vadd.f32 0.0, %v3276
        %v3278 = vpop.f32.mrf.mxu0
        %v3279 = vadd.f32 0.0, %v3278
        %3280 = vmatprep.mubr.bf16.mxu0 0
        %3281 = vmatmul.mubr.bf16.gmra.mxu0 %v3230
        %v3282 = vpop.f32.mrf.mxu0
        %v3283 = vadd.f32 0.0, %v3282
        %v3284 = vpop.f32.mrf.mxu0
        %v3285 = vadd.f32 0.0, %v3284
        %v3286 = vpop.f32.mrf.mxu0
        %v3287 = vadd.f32 0.0, %v3286
        %v3288 = vpop.f32.mrf.mxu0
        %v3289 = vadd.f32 0.0, %v3288
        %3290 = vmatprep.mubr.bf16.mxu0 0
        %3291 = vmatmul.mubr.bf16.gmra.mxu0 %v3233
        %v3292 = vpop.f32.mrf.mxu0
        %v3293 = vadd.f32 0.0, %v3292
        %v3294 = vpop.f32.mrf.mxu0
        %v3295 = vadd.f32 0.0, %v3294
        %v3296 = vpop.f32.mrf.mxu0
        %v3297 = vadd.f32 0.0, %v3296
        %v3298 = vpop.f32.mrf.mxu0
        %v3299 = vadd.f32 0.0, %v3298
        %3300 = vmatprep.mubr.bf16.mxu0 0
        %3301 = vmatmul.mubr.bf16.gmra.mxu0 %v3236
        %v3302 = vpop.f32.mrf.mxu0
        %v3303 = vadd.f32 0.0, %v3302
        %v3304 = vpop.f32.mrf.mxu0
        %v3305 = vadd.f32 0.0, %v3304
        %v3306 = vpop.f32.mrf.mxu0
        %v3307 = vadd.f32 0.0, %v3306
        %v3308 = vpop.f32.mrf.mxu0
        %v3309 = vadd.f32 0.0, %v3308
        %3310 = vdwg.mxu0
        %v3311 = vadd.f32 %v3169, %v3273
        %v3312 = vadd.f32 %v3170, %v3275
        %v3313 = vadd.f32 %v3171, %v3277
        %v3314 = vadd.f32 %v3172, %v3279
        %v3315 = vadd.f32 %v3173, %v3283
        %v3316 = vadd.f32 %v3174, %v3285
        %v3317 = vadd.f32 %v3175, %v3287
        %v3318 = vadd.f32 %v3176, %v3289
        %v3319 = vadd.f32 %v3177, %v3293
        %v3320 = vadd.f32 %v3178, %v3295
        %v3321 = vadd.f32 %v3179, %v3297
        %v3322 = vadd.f32 %v3180, %v3299
        %v3323 = vadd.f32 %v3181, %v3303
        %v3324 = vadd.f32 %v3182, %v3305
        %v3325 = vadd.f32 %v3183, %v3307
        %v3326 = vadd.f32 %v3184, %v3309
        %s3327 = scalar_lea.vmem [#allocation3], 16
        %v3328 = vld [vmem:[%s3327] sm:$0xf]
        %v3329 = vld [vmem:[%s3327 + $0x4] sm:$0xf]
        %v3330 = vld [vmem:[%s3327 + $0x8] sm:$0xf]
        %v3331 = vld [vmem:[%s3327 + $0xc] sm:$0xf]
        %v3332 = vld [vmem:[%s3327 + $0x10] sm:$0xf]
        %v3333 = vld [vmem:[%s3327 + $0x14] sm:$0xf]
        %v3334 = vld [vmem:[%s3327 + $0x18] sm:$0xf]
        %v3335 = vld [vmem:[%s3327 + $0x1c] sm:$0xf]
        %s3336 = scalar_lea.vmem %s7, 64
        %v3337 = vld [vmem:[%s3336] sm:$0xff]
        %v3338 = vld [vmem:[%s3336 + $0x8] sm:$0xff]
        %v3347 = vunpack.c.l.b16 %v3328
        %v3348 = vunpack.c.l.b16 %v3329
        %v3349 = vunpack.c.l.b16 %v3330
        %v3350 = vunpack.c.l.b16 %v3331
        %v3351 = vunpack.c.l.b16 %v3332
        %v3352 = vunpack.c.l.b16 %v3333
        %v3353 = vunpack.c.l.b16 %v3334
        %v3354 = vunpack.c.l.b16 %v3335
        %v3355 = vpack.c.b16 %v3348, %v3347
        %v3356 = vpack.c.b16 %v3350, %v3349
        %v3357 = vpack.c.b16 %v3352, %v3351
        %v3358 = vpack.c.b16 %v3354, %v3353
        %v3361 = vunpack.c.l.b16 %v3337
        %v3362 = vunpack.c.h.b16 %v3337
        %v3363 = vunpack.c.l.b16 %v3338
        %v3364 = vunpack.c.h.b16 %v3338
        %v3365 = vpack.c.b16 %v3363, %v3361
        %v3366 = vpack.c.b16 %v3364, %v3362
        %v3370 = vsel %vm1003, %v3355, 0
        %v3373 = vsel %vm1003, %v3356, 0
        %v3376 = vsel %vm1003, %v3357, 0
        %v3379 = vsel %vm1003, %v3358, 0
        %3381 = vmatprep.subr.bf16.mxu0 0
        %3382 = vmatpush1.bf16.msra.mxu0 0
        %3383 = vmatprep.subr.bf16.mxu0 0
        %3384 = vmatpush1.bf16.msra.mxu0 0
        %3385 = vmatprep.subr.bf16.mxu0 0
        %3386 = vmatpush1.bf16.msra.mxu0 0
        %3387 = vmatprep.subr.bf16.mxu0 0
        %3388 = vmatpush1.bf16.msra.mxu0 0
        %3389 = vmatprep.subr.bf16.mxu0 0
        %3390 = vmatpush1.bf16.msra.mxu0 0
        %3391 = vmatprep.subr.bf16.mxu0 0
        %3392 = vmatpush1.bf16.msra.mxu0 0
        %3393 = vmatprep.subr.bf16.mxu0 0
        %3394 = vmatpush1.bf16.msra.mxu0 0
        %3395 = vmatprep.subr.bf16.mxu0 %v3366
        %3396 = vmatpush1.bf16.msra.mxu0 %v3365
        %3397 = vmatprep.subr.bf16.mxu0 0
        %3398 = vmatpush2.bf16.msra.mxu0 0
        %3399 = vmatprep.subr.bf16.mxu0 0
        %3400 = vmatpush2.bf16.msra.mxu0 0
        %3401 = vmatprep.subr.bf16.mxu0 0
        %3402 = vmatpush2.bf16.msra.mxu0 0
        %3403 = vmatprep.subr.bf16.mxu0 0
        %3404 = vmatpush2.bf16.msra.mxu0 0
        %3405 = vmatprep.subr.bf16.mxu0 0
        %3406 = vmatpush2.bf16.msra.mxu0 0
        %3407 = vmatprep.subr.bf16.mxu0 0
        %3408 = vmatpush2.bf16.msra.mxu0 0
        %3409 = vmatprep.subr.bf16.mxu0 0
        %3410 = vmatpush2.bf16.msra.mxu0 0
        %3411 = vmatprep.subr.bf16.mxu0 0
        %3412 = vmatpush2.bf16.msra.mxu0 0
        %3413 = vmatprep.mubr.bf16.mxu0 0
        %3414 = vmatmul.mubr.bf16.gmra.mxu0 %v3370
        %v3415 = vpop.f32.mrf.mxu0
        %v3416 = vadd.f32 0.0, %v3415
        %v3417 = vpop.f32.mrf.mxu0
        %v3418 = vadd.f32 0.0, %v3417
        %v3419 = vpop.f32.mrf.mxu0
        %v3420 = vadd.f32 0.0, %v3419
        %v3421 = vpop.f32.mrf.mxu0
        %v3422 = vadd.f32 0.0, %v3421
        %3423 = vmatprep.mubr.bf16.mxu0 0
        %3424 = vmatmul.mubr.bf16.gmra.mxu0 %v3373
        %v3425 = vpop.f32.mrf.mxu0
        %v3426 = vadd.f32 0.0, %v3425
        %v3427 = vpop.f32.mrf.mxu0
        %v3428 = vadd.f32 0.0, %v3427
        %v3429 = vpop.f32.mrf.mxu0
        %v3430 = vadd.f32 0.0, %v3429
        %v3431 = vpop.f32.mrf.mxu0
        %v3432 = vadd.f32 0.0, %v3431
        %3433 = vmatprep.mubr.bf16.mxu0 0
        %3434 = vmatmul.mubr.bf16.gmra.mxu0 %v3376
        %v3435 = vpop.f32.mrf.mxu0
        %v3436 = vadd.f32 0.0, %v3435
        %v3437 = vpop.f32.mrf.mxu0
        %v3438 = vadd.f32 0.0, %v3437
        %v3439 = vpop.f32.mrf.mxu0
        %v3440 = vadd.f32 0.0, %v3439
        %v3441 = vpop.f32.mrf.mxu0
        %v3442 = vadd.f32 0.0, %v3441
        %3443 = vmatprep.mubr.bf16.mxu0 0
        %3444 = vmatmul.mubr.bf16.gmra.mxu0 %v3379
        %v3445 = vpop.f32.mrf.mxu0
        %v3446 = vadd.f32 0.0, %v3445
        %v3447 = vpop.f32.mrf.mxu0
        %v3448 = vadd.f32 0.0, %v3447
        %v3449 = vpop.f32.mrf.mxu0
        %v3450 = vadd.f32 0.0, %v3449
        %v3451 = vpop.f32.mrf.mxu0
        %v3452 = vadd.f32 0.0, %v3451
        %3453 = vdwg.mxu0
        %v3454 = vadd.f32 %v3311, %v3416
        %v3455 = vadd.f32 %v3312, %v3418
        %v3456 = vadd.f32 %v3313, %v3420
        %v3457 = vadd.f32 %v3314, %v3422
        %v3458 = vadd.f32 %v3315, %v3426
        %v3459 = vadd.f32 %v3316, %v3428
        %v3460 = vadd.f32 %v3317, %v3430
        %v3461 = vadd.f32 %v3318, %v3432
        %v3462 = vadd.f32 %v3319, %v3436
        %v3463 = vadd.f32 %v3320, %v3438
        %v3464 = vadd.f32 %v3321, %v3440
        %v3465 = vadd.f32 %v3322, %v3442
        %v3466 = vadd.f32 %v3323, %v3446
        %v3467 = vadd.f32 %v3324, %v3448
        %v3468 = vadd.f32 %v3325, %v3450
        %v3469 = vadd.f32 %v3326, %v3452
        %s3470 = scalar_lea.vmem [#allocation3], 20
        %v3471 = vld [vmem:[%s3470] sm:$0xf]
        %v3472 = vld [vmem:[%s3470 + $0x4] sm:$0xf]
        %v3473 = vld [vmem:[%s3470 + $0x8] sm:$0xf]
        %v3474 = vld [vmem:[%s3470 + $0xc] sm:$0xf]
        %v3475 = vld [vmem:[%s3470 + $0x10] sm:$0xf]
        %v3476 = vld [vmem:[%s3470 + $0x14] sm:$0xf]
        %v3477 = vld [vmem:[%s3470 + $0x18] sm:$0xf]
        %v3478 = vld [vmem:[%s3470 + $0x1c] sm:$0xf]
        %s3479 = scalar_lea.vmem %s7, 80
        %v3480 = vld [vmem:[%s3479] sm:$0xff]
        %v3481 = vld [vmem:[%s3479 + $0x8] sm:$0xff]
        %v3490 = vunpack.c.l.b16 %v3471
        %v3491 = vunpack.c.l.b16 %v3472
        %v3492 = vunpack.c.l.b16 %v3473
        %v3493 = vunpack.c.l.b16 %v3474
        %v3494 = vunpack.c.l.b16 %v3475
        %v3495 = vunpack.c.l.b16 %v3476
        %v3496 = vunpack.c.l.b16 %v3477
        %v3497 = vunpack.c.l.b16 %v3478
        %v3498 = vpack.c.b16 %v3491, %v3490
        %v3499 = vpack.c.b16 %v3493, %v3492
        %v3500 = vpack.c.b16 %v3495, %v3494
        %v3501 = vpack.c.b16 %v3497, %v3496
        %v3504 = vunpack.c.l.b16 %v3480
        %v3505 = vunpack.c.h.b16 %v3480
        %v3506 = vunpack.c.l.b16 %v3481
        %v3507 = vunpack.c.h.b16 %v3481
        %v3508 = vpack.c.b16 %v3506, %v3504
        %v3509 = vpack.c.b16 %v3507, %v3505
        %v3513 = vsel %vm1003, %v3498, 0
        %v3516 = vsel %vm1003, %v3499, 0
        %v3519 = vsel %vm1003, %v3500, 0
        %v3522 = vsel %vm1003, %v3501, 0
        %3524 = vmatprep.subr.bf16.mxu0 0
        %3525 = vmatpush1.bf16.msra.mxu0 0
        %3526 = vmatprep.subr.bf16.mxu0 0
        %3527 = vmatpush1.bf16.msra.mxu0 0
        %3528 = vmatprep.subr.bf16.mxu0 0
        %3529 = vmatpush1.bf16.msra.mxu0 0
        %3530 = vmatprep.subr.bf16.mxu0 0
        %3531 = vmatpush1.bf16.msra.mxu0 0
        %3532 = vmatprep.subr.bf16.mxu0 0
        %3533 = vmatpush1.bf16.msra.mxu0 0
        %3534 = vmatprep.subr.bf16.mxu0 0
        %3535 = vmatpush1.bf16.msra.mxu0 0
        %3536 = vmatprep.subr.bf16.mxu0 0
        %3537 = vmatpush1.bf16.msra.mxu0 0
        %3538 = vmatprep.subr.bf16.mxu0 %v3509
        %3539 = vmatpush1.bf16.msra.mxu0 %v3508
        %3540 = vmatprep.subr.bf16.mxu0 0
        %3541 = vmatpush2.bf16.msra.mxu0 0
        %3542 = vmatprep.subr.bf16.mxu0 0
        %3543 = vmatpush2.bf16.msra.mxu0 0
        %3544 = vmatprep.subr.bf16.mxu0 0
        %3545 = vmatpush2.bf16.msra.mxu0 0
        %3546 = vmatprep.subr.bf16.mxu0 0
        %3547 = vmatpush2.bf16.msra.mxu0 0
        %3548 = vmatprep.subr.bf16.mxu0 0
        %3549 = vmatpush2.bf16.msra.mxu0 0
        %3550 = vmatprep.subr.bf16.mxu0 0
        %3551 = vmatpush2.bf16.msra.mxu0 0
        %3552 = vmatprep.subr.bf16.mxu0 0
        %3553 = vmatpush2.bf16.msra.mxu0 0
        %3554 = vmatprep.subr.bf16.mxu0 0
        %3555 = vmatpush2.bf16.msra.mxu0 0
        %3556 = vmatprep.mubr.bf16.mxu0 0
        %3557 = vmatmul.mubr.bf16.gmra.mxu0 %v3513
        %v3558 = vpop.f32.mrf.mxu0
        %v3559 = vadd.f32 0.0, %v3558
        %v3560 = vpop.f32.mrf.mxu0
        %v3561 = vadd.f32 0.0, %v3560
        %v3562 = vpop.f32.mrf.mxu0
        %v3563 = vadd.f32 0.0, %v3562
        %v3564 = vpop.f32.mrf.mxu0
        %v3565 = vadd.f32 0.0, %v3564
        %3566 = vmatprep.mubr.bf16.mxu0 0
        %3567 = vmatmul.mubr.bf16.gmra.mxu0 %v3516
        %v3568 = vpop.f32.mrf.mxu0
        %v3569 = vadd.f32 0.0, %v3568
        %v3570 = vpop.f32.mrf.mxu0
        %v3571 = vadd.f32 0.0, %v3570
        %v3572 = vpop.f32.mrf.mxu0
        %v3573 = vadd.f32 0.0, %v3572
        %v3574 = vpop.f32.mrf.mxu0
        %v3575 = vadd.f32 0.0, %v3574
        %3576 = vmatprep.mubr.bf16.mxu0 0
        %3577 = vmatmul.mubr.bf16.gmra.mxu0 %v3519
        %v3578 = vpop.f32.mrf.mxu0
        %v3579 = vadd.f32 0.0, %v3578
        %v3580 = vpop.f32.mrf.mxu0
        %v3581 = vadd.f32 0.0, %v3580
        %v3582 = vpop.f32.mrf.mxu0
        %v3583 = vadd.f32 0.0, %v3582
        %v3584 = vpop.f32.mrf.mxu0
        %v3585 = vadd.f32 0.0, %v3584
        %3586 = vmatprep.mubr.bf16.mxu0 0
        %3587 = vmatmul.mubr.bf16.gmra.mxu0 %v3522
        %v3588 = vpop.f32.mrf.mxu0
        %v3589 = vadd.f32 0.0, %v3588
        %v3590 = vpop.f32.mrf.mxu0
        %v3591 = vadd.f32 0.0, %v3590
        %v3592 = vpop.f32.mrf.mxu0
        %v3593 = vadd.f32 0.0, %v3592
        %v3594 = vpop.f32.mrf.mxu0
        %v3595 = vadd.f32 0.0, %v3594
        %3596 = vdwg.mxu0
        %v3597 = vadd.f32 %v3454, %v3559
        %v3598 = vadd.f32 %v3455, %v3561
        %v3599 = vadd.f32 %v3456, %v3563
        %v3600 = vadd.f32 %v3457, %v3565
        %v3601 = vadd.f32 %v3458, %v3569
        %v3602 = vadd.f32 %v3459, %v3571
        %v3603 = vadd.f32 %v3460, %v3573
        %v3604 = vadd.f32 %v3461, %v3575
        %v3605 = vadd.f32 %v3462, %v3579
        %v3606 = vadd.f32 %v3463, %v3581
        %v3607 = vadd.f32 %v3464, %v3583
        %v3608 = vadd.f32 %v3465, %v3585
        %v3609 = vadd.f32 %v3466, %v3589
        %v3610 = vadd.f32 %v3467, %v3591
        %v3611 = vadd.f32 %v3468, %v3593
        %v3612 = vadd.f32 %v3469, %v3595
        %s3613 = scalar_lea.vmem [#allocation3], 24
        %v3614 = vld [vmem:[%s3613] sm:$0xf]
        %v3615 = vld [vmem:[%s3613 + $0x4] sm:$0xf]
        %v3616 = vld [vmem:[%s3613 + $0x8] sm:$0xf]
        %v3617 = vld [vmem:[%s3613 + $0xc] sm:$0xf]
        %v3618 = vld [vmem:[%s3613 + $0x10] sm:$0xf]
        %v3619 = vld [vmem:[%s3613 + $0x14] sm:$0xf]
        %v3620 = vld [vmem:[%s3613 + $0x18] sm:$0xf]
        %v3621 = vld [vmem:[%s3613 + $0x1c] sm:$0xf]
        %s3622 = scalar_lea.vmem %s7, 96
        %v3623 = vld [vmem:[%s3622] sm:$0xff]
        %v3624 = vld [vmem:[%s3622 + $0x8] sm:$0xff]
        %v3633 = vunpack.c.l.b16 %v3614
        %v3634 = vunpack.c.l.b16 %v3615
        %v3635 = vunpack.c.l.b16 %v3616
        %v3636 = vunpack.c.l.b16 %v3617
        %v3637 = vunpack.c.l.b16 %v3618
        %v3638 = vunpack.c.l.b16 %v3619
        %v3639 = vunpack.c.l.b16 %v3620
        %v3640 = vunpack.c.l.b16 %v3621
        %v3641 = vpack.c.b16 %v3634, %v3633
        %v3642 = vpack.c.b16 %v3636, %v3635
        %v3643 = vpack.c.b16 %v3638, %v3637
        %v3644 = vpack.c.b16 %v3640, %v3639
        %v3647 = vunpack.c.l.b16 %v3623
        %v3648 = vunpack.c.h.b16 %v3623
        %v3649 = vunpack.c.l.b16 %v3624
        %v3650 = vunpack.c.h.b16 %v3624
        %v3651 = vpack.c.b16 %v3649, %v3647
        %v3652 = vpack.c.b16 %v3650, %v3648
        %v3656 = vsel %vm1003, %v3641, 0
        %v3659 = vsel %vm1003, %v3642, 0
        %v3662 = vsel %vm1003, %v3643, 0
        %v3665 = vsel %vm1003, %v3644, 0
        %3667 = vmatprep.subr.bf16.mxu0 0
        %3668 = vmatpush1.bf16.msra.mxu0 0
        %3669 = vmatprep.subr.bf16.mxu0 0
        %3670 = vmatpush1.bf16.msra.mxu0 0
        %3671 = vmatprep.subr.bf16.mxu0 0
        %3672 = vmatpush1.bf16.msra.mxu0 0
        %3673 = vmatprep.subr.bf16.mxu0 0
        %3674 = vmatpush1.bf16.msra.mxu0 0
        %3675 = vmatprep.subr.bf16.mxu0 0
        %3676 = vmatpush1.bf16.msra.mxu0 0
        %3677 = vmatprep.subr.bf16.mxu0 0
        %3678 = vmatpush1.bf16.msra.mxu0 0
        %3679 = vmatprep.subr.bf16.mxu0 0
        %3680 = vmatpush1.bf16.msra.mxu0 0
        %3681 = vmatprep.subr.bf16.mxu0 %v3652
        %3682 = vmatpush1.bf16.msra.mxu0 %v3651
        %3683 = vmatprep.subr.bf16.mxu0 0
        %3684 = vmatpush2.bf16.msra.mxu0 0
        %3685 = vmatprep.subr.bf16.mxu0 0
        %3686 = vmatpush2.bf16.msra.mxu0 0
        %3687 = vmatprep.subr.bf16.mxu0 0
        %3688 = vmatpush2.bf16.msra.mxu0 0
        %3689 = vmatprep.subr.bf16.mxu0 0
        %3690 = vmatpush2.bf16.msra.mxu0 0
        %3691 = vmatprep.subr.bf16.mxu0 0
        %3692 = vmatpush2.bf16.msra.mxu0 0
        %3693 = vmatprep.subr.bf16.mxu0 0
        %3694 = vmatpush2.bf16.msra.mxu0 0
        %3695 = vmatprep.subr.bf16.mxu0 0
        %3696 = vmatpush2.bf16.msra.mxu0 0
        %3697 = vmatprep.subr.bf16.mxu0 0
        %3698 = vmatpush2.bf16.msra.mxu0 0
        %3699 = vmatprep.mubr.bf16.mxu0 0
        %3700 = vmatmul.mubr.bf16.gmra.mxu0 %v3656
        %v3701 = vpop.f32.mrf.mxu0
        %v3702 = vadd.f32 0.0, %v3701
        %v3703 = vpop.f32.mrf.mxu0
        %v3704 = vadd.f32 0.0, %v3703
        %v3705 = vpop.f32.mrf.mxu0
        %v3706 = vadd.f32 0.0, %v3705
        %v3707 = vpop.f32.mrf.mxu0
        %v3708 = vadd.f32 0.0, %v3707
        %3709 = vmatprep.mubr.bf16.mxu0 0
        %3710 = vmatmul.mubr.bf16.gmra.mxu0 %v3659
        %v3711 = vpop.f32.mrf.mxu0
        %v3712 = vadd.f32 0.0, %v3711
        %v3713 = vpop.f32.mrf.mxu0
        %v3714 = vadd.f32 0.0, %v3713
        %v3715 = vpop.f32.mrf.mxu0
        %v3716 = vadd.f32 0.0, %v3715
        %v3717 = vpop.f32.mrf.mxu0
        %v3718 = vadd.f32 0.0, %v3717
        %3719 = vmatprep.mubr.bf16.mxu0 0
        %3720 = vmatmul.mubr.bf16.gmra.mxu0 %v3662
        %v3721 = vpop.f32.mrf.mxu0
        %v3722 = vadd.f32 0.0, %v3721
        %v3723 = vpop.f32.mrf.mxu0
        %v3724 = vadd.f32 0.0, %v3723
        %v3725 = vpop.f32.mrf.mxu0
        %v3726 = vadd.f32 0.0, %v3725
        %v3727 = vpop.f32.mrf.mxu0
        %v3728 = vadd.f32 0.0, %v3727
        %3729 = vmatprep.mubr.bf16.mxu0 0
        %3730 = vmatmul.mubr.bf16.gmra.mxu0 %v3665
        %v3731 = vpop.f32.mrf.mxu0
        %v3732 = vadd.f32 0.0, %v3731
        %v3733 = vpop.f32.mrf.mxu0
        %v3734 = vadd.f32 0.0, %v3733
        %v3735 = vpop.f32.mrf.mxu0
        %v3736 = vadd.f32 0.0, %v3735
        %v3737 = vpop.f32.mrf.mxu0
        %v3738 = vadd.f32 0.0, %v3737
        %3739 = vdwg.mxu0
        %v3740 = vadd.f32 %v3597, %v3702
        %v3741 = vadd.f32 %v3598, %v3704
        %v3742 = vadd.f32 %v3599, %v3706
        %v3743 = vadd.f32 %v3600, %v3708
        %v3744 = vadd.f32 %v3601, %v3712
        %v3745 = vadd.f32 %v3602, %v3714
        %v3746 = vadd.f32 %v3603, %v3716
        %v3747 = vadd.f32 %v3604, %v3718
        %v3748 = vadd.f32 %v3605, %v3722
        %v3749 = vadd.f32 %v3606, %v3724
        %v3750 = vadd.f32 %v3607, %v3726
        %v3751 = vadd.f32 %v3608, %v3728
        %v3752 = vadd.f32 %v3609, %v3732
        %v3753 = vadd.f32 %v3610, %v3734
        %v3754 = vadd.f32 %v3611, %v3736
        %v3755 = vadd.f32 %v3612, %v3738
        %v3756 = vld [vmem:[#allocation16] sm:$0x3]
        %v3758 = vlaneseq
        %v3759 = vshrl.u32 %v3758, 7
        %v3760 = vsub.s32 0, %v3759
        %v3761 = vrot.slane %v3756, %v3760
        %v3762 = vlaneseq
        %v3763 = vshrl.u32 %v3762, 7
        %v3764 = vsub.s32 1, %v3763
        %v3765 = vrot.slane %v3756, %v3764
        %v3768 = vadd.f32 %v3740, %v3761
        %v3769 = vadd.f32 %v3741, %v3765
        %v3770 = vadd.f32 %v3742, %v3761
        %v3771 = vadd.f32 %v3743, %v3765
        %v3772 = vadd.f32 %v3744, %v3761
        %v3773 = vadd.f32 %v3745, %v3765
        %v3774 = vadd.f32 %v3746, %v3761
        %v3775 = vadd.f32 %v3747, %v3765
        %v3776 = vadd.f32 %v3748, %v3761
        %v3777 = vadd.f32 %v3749, %v3765
        %v3778 = vadd.f32 %v3750, %v3761
        %v3779 = vadd.f32 %v3751, %v3765
        %v3780 = vadd.f32 %v3752, %v3761
        %v3781 = vadd.f32 %v3753, %v3765
        %v3782 = vadd.f32 %v3754, %v3761
        %v3783 = vadd.f32 %v3755, %v3765
        %v3784 = vmax.f32 %v3768, 0.0
        %v3785 = vmax.f32 %v3769, 0.0
        %v3786 = vmax.f32 %v3770, 0.0
        %v3787 = vmax.f32 %v3771, 0.0
        %v3788 = vmax.f32 %v3772, 0.0
        %v3789 = vmax.f32 %v3773, 0.0
        %v3790 = vmax.f32 %v3774, 0.0
        %v3791 = vmax.f32 %v3775, 0.0
        %v3792 = vmax.f32 %v3776, 0.0
        %v3793 = vmax.f32 %v3777, 0.0
        %v3794 = vmax.f32 %v3778, 0.0
        %v3795 = vmax.f32 %v3779, 0.0
        %v3796 = vmax.f32 %v3780, 0.0
        %v3797 = vmax.f32 %v3781, 0.0
        %v3798 = vmax.f32 %v3782, 0.0
        %v3799 = vmax.f32 %v3783, 0.0
        %3816 = vrot.lane.b32.xlu0 %v3784, 64
        %v3817 = vpop.permute.xlu0 %3816
        %3818 = vrot.lane.b32.xlu0 %v3785, 64
        %v3819 = vpop.permute.xlu0 %3818
        %3820 = vrot.lane.b32.xlu0 %v3786, 64
        %v3821 = vpop.permute.xlu0 %3820
        %3822 = vrot.lane.b32.xlu0 %v3787, 64
        %v3823 = vpop.permute.xlu0 %3822
        %3824 = vrot.lane.b32.xlu0 %v3788, 64
        %v3825 = vpop.permute.xlu0 %3824
        %3826 = vrot.lane.b32.xlu0 %v3789, 64
        %v3827 = vpop.permute.xlu0 %3826
        %3828 = vrot.lane.b32.xlu0 %v3790, 64
        %v3829 = vpop.permute.xlu0 %3828
        %3830 = vrot.lane.b32.xlu0 %v3791, 64
        %v3831 = vpop.permute.xlu0 %3830
        %3832 = vrot.lane.b32.xlu0 %v3792, 64
        %v3833 = vpop.permute.xlu0 %3832
        %3834 = vrot.lane.b32.xlu0 %v3793, 64
        %v3835 = vpop.permute.xlu0 %3834
        %3836 = vrot.lane.b32.xlu0 %v3794, 64
        %v3837 = vpop.permute.xlu0 %3836
        %3838 = vrot.lane.b32.xlu0 %v3795, 64
        %v3839 = vpop.permute.xlu0 %3838
        %3840 = vrot.lane.b32.xlu0 %v3796, 64
        %v3841 = vpop.permute.xlu0 %3840
        %3842 = vrot.lane.b32.xlu0 %v3797, 64
        %v3843 = vpop.permute.xlu0 %3842
        %3844 = vrot.lane.b32.xlu0 %v3798, 64
        %v3845 = vpop.permute.xlu0 %3844
        %3846 = vrot.lane.b32.xlu0 %v3799, 64
        %v3847 = vpop.permute.xlu0 %3846
        %v3848 = vsel %vm1106, %v3817, %v3819
        %v3849 = vsel %vm1106, %v3821, %v3823
        %v3850 = vsel %vm1106, %v3825, %v3827
        %v3851 = vsel %vm1106, %v3829, %v3831
        %v3852 = vsel %vm1106, %v3833, %v3835
        %v3853 = vsel %vm1106, %v3837, %v3839
        %v3854 = vsel %vm1106, %v3841, %v3843
        %v3855 = vsel %vm1106, %v3845, %v3847
        %vm3872 = vcmask 1048064
        %3873 = vst.msk [vmem:[%s891 + $0x8] sm:$0xff] %vm3872, %v3817
        %3874 = vst [vmem:[%s891 + $0x10] sm:$0xff] %v3848
        %3875 = vst.msk [vmem:[%s891 + $0x38] sm:$0xff] %vm3872, %v3821
        %3876 = vst [vmem:[%s891 + $0x40] sm:$0xff] %v3849
        %3877 = vst.msk [vmem:[%s891 + $0x68] sm:$0xff] %vm3872, %v3825
        %3878 = vst [vmem:[%s891 + $0x70] sm:$0xff] %v3850
        %3879 = vst.msk [vmem:[%s891 + $0x98] sm:$0xff] %vm3872, %v3829
        %3880 = vst [vmem:[%s891 + $0xa0] sm:$0xff] %v3851
        %3881 = vst.msk [vmem:[%s891 + $0xc8] sm:$0xff] %vm3872, %v3833
        %3882 = vst [vmem:[%s891 + $0xd0] sm:$0xff] %v3852
        %3883 = vst.msk [vmem:[%s891 + $0xf8] sm:$0xff] %vm3872, %v3837
        %3884 = vst [vmem:[%s891 + $0x100] sm:$0xff] %v3853
        %3885 = vst.msk [vmem:[%s891 + $0x128] sm:$0xff] %vm3872, %v3841
        %3886 = vst [vmem:[%s891 + $0x130] sm:$0xff] %v3854
        %3887 = vst.msk [vmem:[%s891 + $0x158] sm:$0xff] %vm3872, %v3845
        %3888 = vst [vmem:[%s891 + $0x160] sm:$0xff] %v3855
        %v3889 = vld [vmem:[#allocation17] sm:$0xf]
        %v3890 = vld [vmem:[#allocation17 + $0x4] sm:$0xf]
        %v3891 = vld [vmem:[#allocation19] sm:$0x1]
        %v3893 = vlaneseq
        %v3894 = vshrl.u32 %v3893, 7
        %v3895 = vsub.s32 0, %v3894
        %v3896 = vrot.slane %v3891, %v3895
        %v3900 = vunpack.c.l.b16 %v3889
        %v3901 = vunpack.c.l.b16 %v3890
        %v3902 = vpack.c.b16 %v3901, %v3900
        %3904 = vmatprep.subr.bf16.mxu0 0
        %3905 = vmatpush1.bf16.msra.mxu0 0
        %3906 = vmatprep.subr.bf16.mxu0 0
        %3907 = vmatpush1.bf16.msra.mxu0 0
        %3908 = vmatprep.subr.bf16.mxu0 0
        %3909 = vmatpush1.bf16.msra.mxu0 0
        %3910 = vmatprep.subr.bf16.mxu0 0
        %3911 = vmatpush1.bf16.msra.mxu0 0
        %3912 = vmatprep.subr.bf16.mxu0 0
        %3913 = vmatpush1.bf16.msra.mxu0 0
        %3914 = vmatprep.subr.bf16.mxu0 0
        %3915 = vmatpush1.bf16.msra.mxu0 0
        %3916 = vmatprep.subr.bf16.mxu0 0
        %3917 = vmatpush1.bf16.msra.mxu0 0
        %3918 = vmatprep.subr.bf16.mxu0 0
        %3919 = vmatpush1.bf16.msra.mxu0 %v3902
        %3920 = vmatprep.subr.bf16.mxu0 0
        %3921 = vmatpush2.bf16.msra.mxu0 0
        %3922 = vmatprep.subr.bf16.mxu0 0
        %3923 = vmatpush2.bf16.msra.mxu0 0
        %3924 = vmatprep.subr.bf16.mxu0 0
        %3925 = vmatpush2.bf16.msra.mxu0 0
        %3926 = vmatprep.subr.bf16.mxu0 0
        %3927 = vmatpush2.bf16.msra.mxu0 0
        %3928 = vmatprep.subr.bf16.mxu0 0
        %3929 = vmatpush2.bf16.msra.mxu0 0
        %3930 = vmatprep.subr.bf16.mxu0 0
        %3931 = vmatpush2.bf16.msra.mxu0 0
        %3932 = vmatprep.subr.bf16.mxu0 0
        %3933 = vmatpush2.bf16.msra.mxu0 0
        %3934 = vmatprep.subr.bf16.mxu0 0
        %3935 = vmatpush2.bf16.msra.mxu0 0
        %3936 = vmatprep.mubr.bf16.mxu0 0
        %3937 = vmatmul.mubr.bf16.gmra.mxu0 %v1005
        %v3938 = vpop.f32.mrf.mxu0
        %v3939 = vadd.f32 %v3896, %v3938
        %v3940 = vpop.f32.mrf.mxu0
        %v3941 = vpop.f32.mrf.mxu0
        %v3942 = vadd.f32 %v3896, %v3941
        %v3943 = vpop.f32.mrf.mxu0
        %3944 = vmatprep.mubr.bf16.mxu0 0
        %3945 = vmatmul.mubr.bf16.gmra.mxu0 %v1008
        %v3946 = vpop.f32.mrf.mxu0
        %v3947 = vadd.f32 %v3896, %v3946
        %v3948 = vpop.f32.mrf.mxu0
        %v3949 = vpop.f32.mrf.mxu0
        %v3950 = vadd.f32 %v3896, %v3949
        %v3951 = vpop.f32.mrf.mxu0
        %3952 = vmatprep.mubr.bf16.mxu0 0
        %3953 = vmatmul.mubr.bf16.gmra.mxu0 %v1011
        %v3954 = vpop.f32.mrf.mxu0
        %v3955 = vadd.f32 %v3896, %v3954
        %v3956 = vpop.f32.mrf.mxu0
        %v3957 = vpop.f32.mrf.mxu0
        %v3958 = vadd.f32 %v3896, %v3957
        %v3959 = vpop.f32.mrf.mxu0
        %3960 = vmatprep.mubr.bf16.mxu0 0
        %3961 = vmatmul.mubr.bf16.gmra.mxu0 %v1014
        %v3962 = vpop.f32.mrf.mxu0
        %v3963 = vadd.f32 %v3896, %v3962
        %v3964 = vpop.f32.mrf.mxu0
        %v3965 = vpop.f32.mrf.mxu0
        %v3966 = vadd.f32 %v3896, %v3965
        %v3967 = vpop.f32.mrf.mxu0
        %3968 = vdwg.mxu0
        %v3969 = vmax.f32 %v3939, 0.0
        %v3970 = vmax.f32 %v3942, 0.0
        %v3971 = vmax.f32 %v3947, 0.0
        %v3972 = vmax.f32 %v3950, 0.0
        %v3973 = vmax.f32 %v3955, 0.0
        %v3974 = vmax.f32 %v3958, 0.0
        %v3975 = vmax.f32 %v3963, 0.0
        %v3976 = vmax.f32 %v3966, 0.0
        %v3977 = vpack.c.bf16 %v3970, %v3969
        %v3978 = vpack.c.bf16 %v3972, %v3971
        %v3979 = vpack.c.bf16 %v3974, %v3973
        %v3980 = vpack.c.bf16 %v3976, %v3975
        %v3985 = vunpack.c.l.b16 %v3977
        %v3986 = vunpack.c.h.b16 %v3977
        %v3987 = vunpack.c.l.b16 %v3978
        %v3988 = vunpack.c.h.b16 %v3978
        %v3989 = vunpack.c.l.b16 %v3979
        %v3990 = vunpack.c.h.b16 %v3979
        %v3991 = vunpack.c.l.b16 %v3980
        %v3992 = vunpack.c.h.b16 %v3980
        %v3993 = vpack.c.b16 %v3985, %v3985
        %v3994 = vpack.c.b16 %v3986, %v3986
        %v3995 = vpack.c.b16 %v3987, %v3987
        %v3996 = vpack.c.b16 %v3988, %v3988
        %v3997 = vpack.c.b16 %v3989, %v3989
        %v3998 = vpack.c.b16 %v3990, %v3990
        %v3999 = vpack.c.b16 %v3991, %v3991
        %v4000 = vpack.c.b16 %v3992, %v3992
        %4009 = vst.msk [vmem:[%s2781] sm:$0xf] %vm898, %v3993
        %4010 = vst.msk [vmem:[%s2781 + $0x4] sm:$0xf] %vm898, %v3994
        %4011 = vst.msk [vmem:[%s2781 + $0x8] sm:$0xf] %vm898, %v3995
        %4012 = vst.msk [vmem:[%s2781 + $0xc] sm:$0xf] %vm898, %v3996
        %4013 = vst.msk [vmem:[%s2781 + $0x10] sm:$0xf] %vm898, %v3997
        %4014 = vst.msk [vmem:[%s2781 + $0x14] sm:$0xf] %vm898, %v3998
        %4015 = vst.msk [vmem:[%s2781 + $0x18] sm:$0xf] %vm898, %v3999
        %4016 = vst.msk [vmem:[%s2781 + $0x1c] sm:$0xf] %vm898, %v4000
        %v4017 = vld [vmem:[#allocation3] sm:$0xf]
        %v4018 = vld [vmem:[#allocation3 + $0x4] sm:$0xf]
        %v4019 = vld [vmem:[#allocation3 + $0x8] sm:$0xf]
        %v4020 = vld [vmem:[#allocation3 + $0xc] sm:$0xf]
        %v4021 = vld [vmem:[#allocation3 + $0x10] sm:$0xf]
        %v4022 = vld [vmem:[#allocation3 + $0x14] sm:$0xf]
        %v4023 = vld [vmem:[#allocation3 + $0x18] sm:$0xf]
        %v4024 = vld [vmem:[#allocation3 + $0x1c] sm:$0xf]
        %v4025 = vld [vmem:[#allocation20] sm:$0xf]
        %v4026 = vld [vmem:[#allocation20 + $0x4] sm:$0xf]
        %v4027 = vld [vmem:[%s2800] sm:$0xf]
        %v4028 = vld [vmem:[%s2800 + $0x4] sm:$0xf]
        %v4029 = vld [vmem:[%s2800 + $0x8] sm:$0xf]
        %v4030 = vld [vmem:[%s2800 + $0xc] sm:$0xf]
        %v4031 = vld [vmem:[%s2800 + $0x10] sm:$0xf]
        %v4032 = vld [vmem:[%s2800 + $0x14] sm:$0xf]
        %v4033 = vld [vmem:[%s2800 + $0x18] sm:$0xf]
        %v4034 = vld [vmem:[%s2800 + $0x1c] sm:$0xf]
        %s4035 = scalar_lea.vmem [#allocation20], 8
        %v4036 = vld [vmem:[%s4035] sm:$0xf]
        %v4037 = vld [vmem:[%s4035 + $0x4] sm:$0xf]
        %v4046 = vunpack.c.l.b16 %v4027
        %v4047 = vunpack.c.l.b16 %v4028
        %v4048 = vunpack.c.l.b16 %v4029
        %v4049 = vunpack.c.l.b16 %v4030
        %v4050 = vunpack.c.l.b16 %v4031
        %v4051 = vunpack.c.l.b16 %v4032
        %v4052 = vunpack.c.l.b16 %v4033
        %v4053 = vunpack.c.l.b16 %v4034
        %v4054 = vpack.c.b16 %v4047, %v4046
        %v4055 = vpack.c.b16 %v4049, %v4048
        %v4056 = vpack.c.b16 %v4051, %v4050
        %v4057 = vpack.c.b16 %v4053, %v4052
        %v4060 = vunpack.c.l.b16 %v4036
        %v4061 = vunpack.c.l.b16 %v4037
        %v4062 = vpack.c.b16 %v4061, %v4060
        %v4065 = vsel %vm1003, %v4054, 0
        %v4068 = vsel %vm1003, %v4055, 0
        %v4071 = vsel %vm1003, %v4056, 0
        %v4074 = vsel %vm1003, %v4057, 0
        %4076 = vmatprep.subr.bf16.mxu0 0
        %4077 = vmatpush1.bf16.msra.mxu0 0
        %4078 = vmatprep.subr.bf16.mxu0 0
        %4079 = vmatpush1.bf16.msra.mxu0 0
        %4080 = vmatprep.subr.bf16.mxu0 0
        %4081 = vmatpush1.bf16.msra.mxu0 0
        %4082 = vmatprep.subr.bf16.mxu0 0
        %4083 = vmatpush1.bf16.msra.mxu0 0
        %4084 = vmatprep.subr.bf16.mxu0 0
        %4085 = vmatpush1.bf16.msra.mxu0 0
        %4086 = vmatprep.subr.bf16.mxu0 0
        %4087 = vmatpush1.bf16.msra.mxu0 0
        %4088 = vmatprep.subr.bf16.mxu0 0
        %4089 = vmatpush1.bf16.msra.mxu0 0
        %4090 = vmatprep.subr.bf16.mxu0 0
        %4091 = vmatpush1.bf16.msra.mxu0 %v4062
        %4092 = vmatprep.subr.bf16.mxu0 0
        %4093 = vmatpush2.bf16.msra.mxu0 0
        %4094 = vmatprep.subr.bf16.mxu0 0
        %4095 = vmatpush2.bf16.msra.mxu0 0
        %4096 = vmatprep.subr.bf16.mxu0 0
        %4097 = vmatpush2.bf16.msra.mxu0 0
        %4098 = vmatprep.subr.bf16.mxu0 0
        %4099 = vmatpush2.bf16.msra.mxu0 0
        %4100 = vmatprep.subr.bf16.mxu0 0
        %4101 = vmatpush2.bf16.msra.mxu0 0
        %4102 = vmatprep.subr.bf16.mxu0 0
        %4103 = vmatpush2.bf16.msra.mxu0 0
        %4104 = vmatprep.subr.bf16.mxu0 0
        %4105 = vmatpush2.bf16.msra.mxu0 0
        %4106 = vmatprep.subr.bf16.mxu0 0
        %4107 = vmatpush2.bf16.msra.mxu0 0
        %4108 = vmatprep.mubr.bf16.mxu0 0
        %4109 = vmatmul.mubr.bf16.gmra.mxu0 %v4065
        %v4110 = vpop.f32.mrf.mxu0
        %v4111 = vadd.f32 0.0, %v4110
        %v4112 = vpop.f32.mrf.mxu0
        %v4113 = vpop.f32.mrf.mxu0
        %v4114 = vadd.f32 0.0, %v4113
        %v4115 = vpop.f32.mrf.mxu0
        %4116 = vmatprep.mubr.bf16.mxu0 0
        %4117 = vmatmul.mubr.bf16.gmra.mxu0 %v4068
        %v4118 = vpop.f32.mrf.mxu0
        %v4119 = vadd.f32 0.0, %v4118
        %v4120 = vpop.f32.mrf.mxu0
        %v4121 = vpop.f32.mrf.mxu0
        %v4122 = vadd.f32 0.0, %v4121
        %v4123 = vpop.f32.mrf.mxu0
        %4124 = vmatprep.mubr.bf16.mxu0 0
        %4125 = vmatmul.mubr.bf16.gmra.mxu0 %v4071
        %v4126 = vpop.f32.mrf.mxu0
        %v4127 = vadd.f32 0.0, %v4126
        %v4128 = vpop.f32.mrf.mxu0
        %v4129 = vpop.f32.mrf.mxu0
        %v4130 = vadd.f32 0.0, %v4129
        %v4131 = vpop.f32.mrf.mxu0
        %4132 = vmatprep.mubr.bf16.mxu0 0
        %4133 = vmatmul.mubr.bf16.gmra.mxu0 %v4074
        %v4134 = vpop.f32.mrf.mxu0
        %v4135 = vadd.f32 0.0, %v4134
        %v4136 = vpop.f32.mrf.mxu0
        %v4137 = vpop.f32.mrf.mxu0
        %v4138 = vadd.f32 0.0, %v4137
        %v4139 = vpop.f32.mrf.mxu0
        %4140 = vdwg.mxu0
        %v4149 = vunpack.c.l.b16 %v4017
        %v4150 = vunpack.c.l.b16 %v4018
        %v4151 = vunpack.c.l.b16 %v4019
        %v4152 = vunpack.c.l.b16 %v4020
        %v4153 = vunpack.c.l.b16 %v4021
        %v4154 = vunpack.c.l.b16 %v4022
        %v4155 = vunpack.c.l.b16 %v4023
        %v4156 = vunpack.c.l.b16 %v4024
        %v4157 = vpack.c.b16 %v4150, %v4149
        %v4158 = vpack.c.b16 %v4152, %v4151
        %v4159 = vpack.c.b16 %v4154, %v4153
        %v4160 = vpack.c.b16 %v4156, %v4155
        %v4163 = vunpack.c.l.b16 %v4025
        %v4164 = vunpack.c.l.b16 %v4026
        %v4165 = vpack.c.b16 %v4164, %v4163
        %v4168 = vsel %vm1003, %v4157, 0
        %v4171 = vsel %vm1003, %v4158, 0
        %v4174 = vsel %vm1003, %v4159, 0
        %v4177 = vsel %vm1003, %v4160, 0
        %4179 = vmatprep.subr.bf16.mxu0 0
        %4180 = vmatpush1.bf16.msra.mxu0 0
        %4181 = vmatprep.subr.bf16.mxu0 0
        %4182 = vmatpush1.bf16.msra.mxu0 0
        %4183 = vmatprep.subr.bf16.mxu0 0
        %4184 = vmatpush1.bf16.msra.mxu0 0
        %4185 = vmatprep.subr.bf16.mxu0 0
        %4186 = vmatpush1.bf16.msra.mxu0 0
        %4187 = vmatprep.subr.bf16.mxu0 0
        %4188 = vmatpush1.bf16.msra.mxu0 0
        %4189 = vmatprep.subr.bf16.mxu0 0
        %4190 = vmatpush1.bf16.msra.mxu0 0
        %4191 = vmatprep.subr.bf16.mxu0 0
        %4192 = vmatpush1.bf16.msra.mxu0 0
        %4193 = vmatprep.subr.bf16.mxu0 0
        %4194 = vmatpush1.bf16.msra.mxu0 %v4165
        %4195 = vmatprep.subr.bf16.mxu0 0
        %4196 = vmatpush2.bf16.msra.mxu0 0
        %4197 = vmatprep.subr.bf16.mxu0 0
        %4198 = vmatpush2.bf16.msra.mxu0 0
        %4199 = vmatprep.subr.bf16.mxu0 0
        %4200 = vmatpush2.bf16.msra.mxu0 0
        %4201 = vmatprep.subr.bf16.mxu0 0
        %4202 = vmatpush2.bf16.msra.mxu0 0
        %4203 = vmatprep.subr.bf16.mxu0 0
        %4204 = vmatpush2.bf16.msra.mxu0 0
        %4205 = vmatprep.subr.bf16.mxu0 0
        %4206 = vmatpush2.bf16.msra.mxu0 0
        %4207 = vmatprep.subr.bf16.mxu0 0
        %4208 = vmatpush2.bf16.msra.mxu0 0
        %4209 = vmatprep.subr.bf16.mxu0 0
        %4210 = vmatpush2.bf16.msra.mxu0 0
        %4211 = vmatprep.mubr.bf16.mxu0 0
        %4212 = vmatmul.mubr.bf16.gmra.mxu0 %v4168
        %v4213 = vpop.f32.mrf.mxu0
        %v4214 = vadd.f32 %v4111, %v4213
        %v4215 = vpop.f32.mrf.mxu0
        %v4216 = vpop.f32.mrf.mxu0
        %v4217 = vadd.f32 %v4114, %v4216
        %v4218 = vpop.f32.mrf.mxu0
        %4219 = vmatprep.mubr.bf16.mxu0 0
        %4220 = vmatmul.mubr.bf16.gmra.mxu0 %v4171
        %v4221 = vpop.f32.mrf.mxu0
        %v4222 = vadd.f32 %v4119, %v4221
        %v4223 = vpop.f32.mrf.mxu0
        %v4224 = vpop.f32.mrf.mxu0
        %v4225 = vadd.f32 %v4122, %v4224
        %v4226 = vpop.f32.mrf.mxu0
        %4227 = vmatprep.mubr.bf16.mxu0 0
        %4228 = vmatmul.mubr.bf16.gmra.mxu0 %v4174
        %v4229 = vpop.f32.mrf.mxu0
        %v4230 = vadd.f32 %v4127, %v4229
        %v4231 = vpop.f32.mrf.mxu0
        %v4232 = vpop.f32.mrf.mxu0
        %v4233 = vadd.f32 %v4130, %v4232
        %v4234 = vpop.f32.mrf.mxu0
        %4235 = vmatprep.mubr.bf16.mxu0 0
        %4236 = vmatmul.mubr.bf16.gmra.mxu0 %v4177
        %v4237 = vpop.f32.mrf.mxu0
        %v4238 = vadd.f32 %v4135, %v4237
        %v4239 = vpop.f32.mrf.mxu0
        %v4240 = vpop.f32.mrf.mxu0
        %v4241 = vadd.f32 %v4138, %v4240
        %v4242 = vpop.f32.mrf.mxu0
        %4243 = vdwg.mxu0
        %v4244 = vld [vmem:[%s3042] sm:$0xf]
        %v4245 = vld [vmem:[%s3042 + $0x4] sm:$0xf]
        %v4246 = vld [vmem:[%s3042 + $0x8] sm:$0xf]
        %v4247 = vld [vmem:[%s3042 + $0xc] sm:$0xf]
        %v4248 = vld [vmem:[%s3042 + $0x10] sm:$0xf]
        %v4249 = vld [vmem:[%s3042 + $0x14] sm:$0xf]
        %v4250 = vld [vmem:[%s3042 + $0x18] sm:$0xf]
        %v4251 = vld [vmem:[%s3042 + $0x1c] sm:$0xf]
        %s4252 = scalar_lea.vmem [#allocation20], 16
        %v4253 = vld [vmem:[%s4252] sm:$0xf]
        %v4254 = vld [vmem:[%s4252 + $0x4] sm:$0xf]
        %v4263 = vunpack.c.l.b16 %v4244
        %v4264 = vunpack.c.l.b16 %v4245
        %v4265 = vunpack.c.l.b16 %v4246
        %v4266 = vunpack.c.l.b16 %v4247
        %v4267 = vunpack.c.l.b16 %v4248
        %v4268 = vunpack.c.l.b16 %v4249
        %v4269 = vunpack.c.l.b16 %v4250
        %v4270 = vunpack.c.l.b16 %v4251
        %v4271 = vpack.c.b16 %v4264, %v4263
        %v4272 = vpack.c.b16 %v4266, %v4265
        %v4273 = vpack.c.b16 %v4268, %v4267
        %v4274 = vpack.c.b16 %v4270, %v4269
        %v4277 = vunpack.c.l.b16 %v4253
        %v4278 = vunpack.c.l.b16 %v4254
        %v4279 = vpack.c.b16 %v4278, %v4277
        %v4282 = vsel %vm1003, %v4271, 0
        %v4285 = vsel %vm1003, %v4272, 0
        %v4288 = vsel %vm1003, %v4273, 0
        %v4291 = vsel %vm1003, %v4274, 0
        %4293 = vmatprep.subr.bf16.mxu0 0
        %4294 = vmatpush1.bf16.msra.mxu0 0
        %4295 = vmatprep.subr.bf16.mxu0 0
        %4296 = vmatpush1.bf16.msra.mxu0 0
        %4297 = vmatprep.subr.bf16.mxu0 0
        %4298 = vmatpush1.bf16.msra.mxu0 0
        %4299 = vmatprep.subr.bf16.mxu0 0
        %4300 = vmatpush1.bf16.msra.mxu0 0
        %4301 = vmatprep.subr.bf16.mxu0 0
        %4302 = vmatpush1.bf16.msra.mxu0 0
        %4303 = vmatprep.subr.bf16.mxu0 0
        %4304 = vmatpush1.bf16.msra.mxu0 0
        %4305 = vmatprep.subr.bf16.mxu0 0
        %4306 = vmatpush1.bf16.msra.mxu0 0
        %4307 = vmatprep.subr.bf16.mxu0 0
        %4308 = vmatpush1.bf16.msra.mxu0 %v4279
        %4309 = vmatprep.subr.bf16.mxu0 0
        %4310 = vmatpush2.bf16.msra.mxu0 0
        %4311 = vmatprep.subr.bf16.mxu0 0
        %4312 = vmatpush2.bf16.msra.mxu0 0
        %4313 = vmatprep.subr.bf16.mxu0 0
        %4314 = vmatpush2.bf16.msra.mxu0 0
        %4315 = vmatprep.subr.bf16.mxu0 0
        %4316 = vmatpush2.bf16.msra.mxu0 0
        %4317 = vmatprep.subr.bf16.mxu0 0
        %4318 = vmatpush2.bf16.msra.mxu0 0
        %4319 = vmatprep.subr.bf16.mxu0 0
        %4320 = vmatpush2.bf16.msra.mxu0 0
        %4321 = vmatprep.subr.bf16.mxu0 0
        %4322 = vmatpush2.bf16.msra.mxu0 0
        %4323 = vmatprep.subr.bf16.mxu0 0
        %4324 = vmatpush2.bf16.msra.mxu0 0
        %4325 = vmatprep.mubr.bf16.mxu0 0
        %4326 = vmatmul.mubr.bf16.gmra.mxu0 %v4282
        %v4327 = vpop.f32.mrf.mxu0
        %v4328 = vadd.f32 0.0, %v4327
        %v4329 = vpop.f32.mrf.mxu0
        %v4330 = vpop.f32.mrf.mxu0
        %v4331 = vadd.f32 0.0, %v4330
        %v4332 = vpop.f32.mrf.mxu0
        %4333 = vmatprep.mubr.bf16.mxu0 0
        %4334 = vmatmul.mubr.bf16.gmra.mxu0 %v4285
        %v4335 = vpop.f32.mrf.mxu0
        %v4336 = vadd.f32 0.0, %v4335
        %v4337 = vpop.f32.mrf.mxu0
        %v4338 = vpop.f32.mrf.mxu0
        %v4339 = vadd.f32 0.0, %v4338
        %v4340 = vpop.f32.mrf.mxu0
        %4341 = vmatprep.mubr.bf16.mxu0 0
        %4342 = vmatmul.mubr.bf16.gmra.mxu0 %v4288
        %v4343 = vpop.f32.mrf.mxu0
        %v4344 = vadd.f32 0.0, %v4343
        %v4345 = vpop.f32.mrf.mxu0
        %v4346 = vpop.f32.mrf.mxu0
        %v4347 = vadd.f32 0.0, %v4346
        %v4348 = vpop.f32.mrf.mxu0
        %4349 = vmatprep.mubr.bf16.mxu0 0
        %4350 = vmatmul.mubr.bf16.gmra.mxu0 %v4291
        %v4351 = vpop.f32.mrf.mxu0
        %v4352 = vadd.f32 0.0, %v4351
        %v4353 = vpop.f32.mrf.mxu0
        %v4354 = vpop.f32.mrf.mxu0
        %v4355 = vadd.f32 0.0, %v4354
        %v4356 = vpop.f32.mrf.mxu0
        %4357 = vdwg.mxu0
        %v4358 = vadd.f32 %v4214, %v4328
        %v4359 = vadd.f32 %v4217, %v4331
        %v4360 = vadd.f32 %v4222, %v4336
        %v4361 = vadd.f32 %v4225, %v4339
        %v4362 = vadd.f32 %v4230, %v4344
        %v4363 = vadd.f32 %v4233, %v4347
        %v4364 = vadd.f32 %v4238, %v4352
        %v4365 = vadd.f32 %v4241, %v4355
        %v4366 = vld [vmem:[%s2781] sm:$0xf]
        %v4367 = vld [vmem:[%s2781 + $0x4] sm:$0xf]
        %v4368 = vld [vmem:[%s2781 + $0x8] sm:$0xf]
        %v4369 = vld [vmem:[%s2781 + $0xc] sm:$0xf]
        %v4370 = vld [vmem:[%s2781 + $0x10] sm:$0xf]
        %v4371 = vld [vmem:[%s2781 + $0x14] sm:$0xf]
        %v4372 = vld [vmem:[%s2781 + $0x18] sm:$0xf]
        %v4373 = vld [vmem:[%s2781 + $0x1c] sm:$0xf]
        %s4374 = scalar_lea.vmem [#allocation20], 24
        %v4375 = vld [vmem:[%s4374] sm:$0xf]
        %v4376 = vld [vmem:[%s4374 + $0x4] sm:$0xf]
        %v4385 = vunpack.c.l.b16 %v4366
        %v4386 = vunpack.c.l.b16 %v4367
        %v4387 = vunpack.c.l.b16 %v4368
        %v4388 = vunpack.c.l.b16 %v4369
        %v4389 = vunpack.c.l.b16 %v4370
        %v4390 = vunpack.c.l.b16 %v4371
        %v4391 = vunpack.c.l.b16 %v4372
        %v4392 = vunpack.c.l.b16 %v4373
        %v4393 = vpack.c.b16 %v4386, %v4385
        %v4394 = vpack.c.b16 %v4388, %v4387
        %v4395 = vpack.c.b16 %v4390, %v4389
        %v4396 = vpack.c.b16 %v4392, %v4391
        %v4399 = vunpack.c.l.b16 %v4375
        %v4400 = vunpack.c.l.b16 %v4376
        %v4401 = vpack.c.b16 %v4400, %v4399
        %v4404 = vsel %vm1003, %v4393, 0
        %v4407 = vsel %vm1003, %v4394, 0
        %v4410 = vsel %vm1003, %v4395, 0
        %v4413 = vsel %vm1003, %v4396, 0
        %4415 = vmatprep.subr.bf16.mxu0 0
        %4416 = vmatpush1.bf16.msra.mxu0 0
        %4417 = vmatprep.subr.bf16.mxu0 0
        %4418 = vmatpush1.bf16.msra.mxu0 0
        %4419 = vmatprep.subr.bf16.mxu0 0
        %4420 = vmatpush1.bf16.msra.mxu0 0
        %4421 = vmatprep.subr.bf16.mxu0 0
        %4422 = vmatpush1.bf16.msra.mxu0 0
        %4423 = vmatprep.subr.bf16.mxu0 0
        %4424 = vmatpush1.bf16.msra.mxu0 0
        %4425 = vmatprep.subr.bf16.mxu0 0
        %4426 = vmatpush1.bf16.msra.mxu0 0
        %4427 = vmatprep.subr.bf16.mxu0 0
        %4428 = vmatpush1.bf16.msra.mxu0 0
        %4429 = vmatprep.subr.bf16.mxu0 0
        %4430 = vmatpush1.bf16.msra.mxu0 %v4401
        %4431 = vmatprep.subr.bf16.mxu0 0
        %4432 = vmatpush2.bf16.msra.mxu0 0
        %4433 = vmatprep.subr.bf16.mxu0 0
        %4434 = vmatpush2.bf16.msra.mxu0 0
        %4435 = vmatprep.subr.bf16.mxu0 0
        %4436 = vmatpush2.bf16.msra.mxu0 0
        %4437 = vmatprep.subr.bf16.mxu0 0
        %4438 = vmatpush2.bf16.msra.mxu0 0
        %4439 = vmatprep.subr.bf16.mxu0 0
        %4440 = vmatpush2.bf16.msra.mxu0 0
        %4441 = vmatprep.subr.bf16.mxu0 0
        %4442 = vmatpush2.bf16.msra.mxu0 0
        %4443 = vmatprep.subr.bf16.mxu0 0
        %4444 = vmatpush2.bf16.msra.mxu0 0
        %4445 = vmatprep.subr.bf16.mxu0 0
        %4446 = vmatpush2.bf16.msra.mxu0 0
        %4447 = vmatprep.mubr.bf16.mxu0 0
        %4448 = vmatmul.mubr.bf16.gmra.mxu0 %v4404
        %v4449 = vpop.f32.mrf.mxu0
        %v4450 = vadd.f32 0.0, %v4449
        %v4451 = vpop.f32.mrf.mxu0
        %v4452 = vpop.f32.mrf.mxu0
        %v4453 = vadd.f32 0.0, %v4452
        %v4454 = vpop.f32.mrf.mxu0
        %4455 = vmatprep.mubr.bf16.mxu0 0
        %4456 = vmatmul.mubr.bf16.gmra.mxu0 %v4407
        %v4457 = vpop.f32.mrf.mxu0
        %v4458 = vadd.f32 0.0, %v4457
        %v4459 = vpop.f32.mrf.mxu0
        %v4460 = vpop.f32.mrf.mxu0
        %v4461 = vadd.f32 0.0, %v4460
        %v4462 = vpop.f32.mrf.mxu0
        %4463 = vmatprep.mubr.bf16.mxu0 0
        %4464 = vmatmul.mubr.bf16.gmra.mxu0 %v4410
        %v4465 = vpop.f32.mrf.mxu0
        %v4466 = vadd.f32 0.0, %v4465
        %v4467 = vpop.f32.mrf.mxu0
        %v4468 = vpop.f32.mrf.mxu0
        %v4469 = vadd.f32 0.0, %v4468
        %v4470 = vpop.f32.mrf.mxu0
        %4471 = vmatprep.mubr.bf16.mxu0 0
        %4472 = vmatmul.mubr.bf16.gmra.mxu0 %v4413
        %v4473 = vpop.f32.mrf.mxu0
        %v4474 = vadd.f32 0.0, %v4473
        %v4475 = vpop.f32.mrf.mxu0
        %v4476 = vpop.f32.mrf.mxu0
        %v4477 = vadd.f32 0.0, %v4476
        %v4478 = vpop.f32.mrf.mxu0
        %4479 = vdwg.mxu0
        %v4480 = vadd.f32 %v4358, %v4450
        %v4481 = vadd.f32 %v4359, %v4453
        %v4482 = vadd.f32 %v4360, %v4458
        %v4483 = vadd.f32 %v4361, %v4461
        %v4484 = vadd.f32 %v4362, %v4466
        %v4485 = vadd.f32 %v4363, %v4469
        %v4486 = vadd.f32 %v4364, %v4474
        %v4487 = vadd.f32 %v4365, %v4477
        %v4488 = vld [vmem:[%s3327] sm:$0xf]
        %v4489 = vld [vmem:[%s3327 + $0x4] sm:$0xf]
        %v4490 = vld [vmem:[%s3327 + $0x8] sm:$0xf]
        %v4491 = vld [vmem:[%s3327 + $0xc] sm:$0xf]
        %v4492 = vld [vmem:[%s3327 + $0x10] sm:$0xf]
        %v4493 = vld [vmem:[%s3327 + $0x14] sm:$0xf]
        %v4494 = vld [vmem:[%s3327 + $0x18] sm:$0xf]
        %v4495 = vld [vmem:[%s3327 + $0x1c] sm:$0xf]
        %s4496 = scalar_lea.vmem [#allocation20], 32
        %v4497 = vld [vmem:[%s4496] sm:$0xf]
        %v4498 = vld [vmem:[%s4496 + $0x4] sm:$0xf]
        %v4507 = vunpack.c.l.b16 %v4488
        %v4508 = vunpack.c.l.b16 %v4489
        %v4509 = vunpack.c.l.b16 %v4490
        %v4510 = vunpack.c.l.b16 %v4491
        %v4511 = vunpack.c.l.b16 %v4492
        %v4512 = vunpack.c.l.b16 %v4493
        %v4513 = vunpack.c.l.b16 %v4494
        %v4514 = vunpack.c.l.b16 %v4495
        %v4515 = vpack.c.b16 %v4508, %v4507
        %v4516 = vpack.c.b16 %v4510, %v4509
        %v4517 = vpack.c.b16 %v4512, %v4511
        %v4518 = vpack.c.b16 %v4514, %v4513
        %v4521 = vunpack.c.l.b16 %v4497
        %v4522 = vunpack.c.l.b16 %v4498
        %v4523 = vpack.c.b16 %v4522, %v4521
        %v4526 = vsel %vm1003, %v4515, 0
        %v4529 = vsel %vm1003, %v4516, 0
        %v4532 = vsel %vm1003, %v4517, 0
        %v4535 = vsel %vm1003, %v4518, 0
        %4537 = vmatprep.subr.bf16.mxu0 0
        %4538 = vmatpush1.bf16.msra.mxu0 0
        %4539 = vmatprep.subr.bf16.mxu0 0
        %4540 = vmatpush1.bf16.msra.mxu0 0
        %4541 = vmatprep.subr.bf16.mxu0 0
        %4542 = vmatpush1.bf16.msra.mxu0 0
        %4543 = vmatprep.subr.bf16.mxu0 0
        %4544 = vmatpush1.bf16.msra.mxu0 0
        %4545 = vmatprep.subr.bf16.mxu0 0
        %4546 = vmatpush1.bf16.msra.mxu0 0
        %4547 = vmatprep.subr.bf16.mxu0 0
        %4548 = vmatpush1.bf16.msra.mxu0 0
        %4549 = vmatprep.subr.bf16.mxu0 0
        %4550 = vmatpush1.bf16.msra.mxu0 0
        %4551 = vmatprep.subr.bf16.mxu0 0
        %4552 = vmatpush1.bf16.msra.mxu0 %v4523
        %4553 = vmatprep.subr.bf16.mxu0 0
        %4554 = vmatpush2.bf16.msra.mxu0 0
        %4555 = vmatprep.subr.bf16.mxu0 0
        %4556 = vmatpush2.bf16.msra.mxu0 0
        %4557 = vmatprep.subr.bf16.mxu0 0
        %4558 = vmatpush2.bf16.msra.mxu0 0
        %4559 = vmatprep.subr.bf16.mxu0 0
        %4560 = vmatpush2.bf16.msra.mxu0 0
        %4561 = vmatprep.subr.bf16.mxu0 0
        %4562 = vmatpush2.bf16.msra.mxu0 0
        %4563 = vmatprep.subr.bf16.mxu0 0
        %4564 = vmatpush2.bf16.msra.mxu0 0
        %4565 = vmatprep.subr.bf16.mxu0 0
        %4566 = vmatpush2.bf16.msra.mxu0 0
        %4567 = vmatprep.subr.bf16.mxu0 0
        %4568 = vmatpush2.bf16.msra.mxu0 0
        %4569 = vmatprep.mubr.bf16.mxu0 0
        %4570 = vmatmul.mubr.bf16.gmra.mxu0 %v4526
        %v4571 = vpop.f32.mrf.mxu0
        %v4572 = vadd.f32 0.0, %v4571
        %v4573 = vpop.f32.mrf.mxu0
        %v4574 = vpop.f32.mrf.mxu0
        %v4575 = vadd.f32 0.0, %v4574
        %v4576 = vpop.f32.mrf.mxu0
        %4577 = vmatprep.mubr.bf16.mxu0 0
        %4578 = vmatmul.mubr.bf16.gmra.mxu0 %v4529
        %v4579 = vpop.f32.mrf.mxu0
        %v4580 = vadd.f32 0.0, %v4579
        %v4581 = vpop.f32.mrf.mxu0
        %v4582 = vpop.f32.mrf.mxu0
        %v4583 = vadd.f32 0.0, %v4582
        %v4584 = vpop.f32.mrf.mxu0
        %4585 = vmatprep.mubr.bf16.mxu0 0
        %4586 = vmatmul.mubr.bf16.gmra.mxu0 %v4532
        %v4587 = vpop.f32.mrf.mxu0
        %v4588 = vadd.f32 0.0, %v4587
        %v4589 = vpop.f32.mrf.mxu0
        %v4590 = vpop.f32.mrf.mxu0
        %v4591 = vadd.f32 0.0, %v4590
        %v4592 = vpop.f32.mrf.mxu0
        %4593 = vmatprep.mubr.bf16.mxu0 0
        %4594 = vmatmul.mubr.bf16.gmra.mxu0 %v4535
        %v4595 = vpop.f32.mrf.mxu0
        %v4596 = vadd.f32 0.0, %v4595
        %v4597 = vpop.f32.mrf.mxu0
        %v4598 = vpop.f32.mrf.mxu0
        %v4599 = vadd.f32 0.0, %v4598
        %v4600 = vpop.f32.mrf.mxu0
        %4601 = vdwg.mxu0
        %v4602 = vadd.f32 %v4480, %v4572
        %v4603 = vadd.f32 %v4481, %v4575
        %v4604 = vadd.f32 %v4482, %v4580
        %v4605 = vadd.f32 %v4483, %v4583
        %v4606 = vadd.f32 %v4484, %v4588
        %v4607 = vadd.f32 %v4485, %v4591
        %v4608 = vadd.f32 %v4486, %v4596
        %v4609 = vadd.f32 %v4487, %v4599
        %v4610 = vld [vmem:[%s3470] sm:$0xf]
        %v4611 = vld [vmem:[%s3470 + $0x4] sm:$0xf]
        %v4612 = vld [vmem:[%s3470 + $0x8] sm:$0xf]
        %v4613 = vld [vmem:[%s3470 + $0xc] sm:$0xf]
        %v4614 = vld [vmem:[%s3470 + $0x10] sm:$0xf]
        %v4615 = vld [vmem:[%s3470 + $0x14] sm:$0xf]
        %v4616 = vld [vmem:[%s3470 + $0x18] sm:$0xf]
        %v4617 = vld [vmem:[%s3470 + $0x1c] sm:$0xf]
        %s4618 = scalar_lea.vmem [#allocation20], 40
        %v4619 = vld [vmem:[%s4618] sm:$0xf]
        %v4620 = vld [vmem:[%s4618 + $0x4] sm:$0xf]
        %v4629 = vunpack.c.l.b16 %v4610
        %v4630 = vunpack.c.l.b16 %v4611
        %v4631 = vunpack.c.l.b16 %v4612
        %v4632 = vunpack.c.l.b16 %v4613
        %v4633 = vunpack.c.l.b16 %v4614
        %v4634 = vunpack.c.l.b16 %v4615
        %v4635 = vunpack.c.l.b16 %v4616
        %v4636 = vunpack.c.l.b16 %v4617
        %v4637 = vpack.c.b16 %v4630, %v4629
        %v4638 = vpack.c.b16 %v4632, %v4631
        %v4639 = vpack.c.b16 %v4634, %v4633
        %v4640 = vpack.c.b16 %v4636, %v4635
        %v4643 = vunpack.c.l.b16 %v4619
        %v4644 = vunpack.c.l.b16 %v4620
        %v4645 = vpack.c.b16 %v4644, %v4643
        %v4648 = vsel %vm1003, %v4637, 0
        %v4651 = vsel %vm1003, %v4638, 0
        %v4654 = vsel %vm1003, %v4639, 0
        %v4657 = vsel %vm1003, %v4640, 0
        %4659 = vmatprep.subr.bf16.mxu0 0
        %4660 = vmatpush1.bf16.msra.mxu0 0
        %4661 = vmatprep.subr.bf16.mxu0 0
        %4662 = vmatpush1.bf16.msra.mxu0 0
        %4663 = vmatprep.subr.bf16.mxu0 0
        %4664 = vmatpush1.bf16.msra.mxu0 0
        %4665 = vmatprep.subr.bf16.mxu0 0
        %4666 = vmatpush1.bf16.msra.mxu0 0
        %4667 = vmatprep.subr.bf16.mxu0 0
        %4668 = vmatpush1.bf16.msra.mxu0 0
        %4669 = vmatprep.subr.bf16.mxu0 0
        %4670 = vmatpush1.bf16.msra.mxu0 0
        %4671 = vmatprep.subr.bf16.mxu0 0
        %4672 = vmatpush1.bf16.msra.mxu0 0
        %4673 = vmatprep.subr.bf16.mxu0 0
        %4674 = vmatpush1.bf16.msra.mxu0 %v4645
        %4675 = vmatprep.subr.bf16.mxu0 0
        %4676 = vmatpush2.bf16.msra.mxu0 0
        %4677 = vmatprep.subr.bf16.mxu0 0
        %4678 = vmatpush2.bf16.msra.mxu0 0
        %4679 = vmatprep.subr.bf16.mxu0 0
        %4680 = vmatpush2.bf16.msra.mxu0 0
        %4681 = vmatprep.subr.bf16.mxu0 0
        %4682 = vmatpush2.bf16.msra.mxu0 0
        %4683 = vmatprep.subr.bf16.mxu0 0
        %4684 = vmatpush2.bf16.msra.mxu0 0
        %4685 = vmatprep.subr.bf16.mxu0 0
        %4686 = vmatpush2.bf16.msra.mxu0 0
        %4687 = vmatprep.subr.bf16.mxu0 0
        %4688 = vmatpush2.bf16.msra.mxu0 0
        %4689 = vmatprep.subr.bf16.mxu0 0
        %4690 = vmatpush2.bf16.msra.mxu0 0
        %4691 = vmatprep.mubr.bf16.mxu0 0
        %4692 = vmatmul.mubr.bf16.gmra.mxu0 %v4648
        %v4693 = vpop.f32.mrf.mxu0
        %v4694 = vadd.f32 0.0, %v4693
        %v4695 = vpop.f32.mrf.mxu0
        %v4696 = vpop.f32.mrf.mxu0
        %v4697 = vadd.f32 0.0, %v4696
        %v4698 = vpop.f32.mrf.mxu0
        %4699 = vmatprep.mubr.bf16.mxu0 0
        %4700 = vmatmul.mubr.bf16.gmra.mxu0 %v4651
        %v4701 = vpop.f32.mrf.mxu0
        %v4702 = vadd.f32 0.0, %v4701
        %v4703 = vpop.f32.mrf.mxu0
        %v4704 = vpop.f32.mrf.mxu0
        %v4705 = vadd.f32 0.0, %v4704
        %v4706 = vpop.f32.mrf.mxu0
        %4707 = vmatprep.mubr.bf16.mxu0 0
        %4708 = vmatmul.mubr.bf16.gmra.mxu0 %v4654
        %v4709 = vpop.f32.mrf.mxu0
        %v4710 = vadd.f32 0.0, %v4709
        %v4711 = vpop.f32.mrf.mxu0
        %v4712 = vpop.f32.mrf.mxu0
        %v4713 = vadd.f32 0.0, %v4712
        %v4714 = vpop.f32.mrf.mxu0
        %4715 = vmatprep.mubr.bf16.mxu0 0
        %4716 = vmatmul.mubr.bf16.gmra.mxu0 %v4657
        %v4717 = vpop.f32.mrf.mxu0
        %v4718 = vadd.f32 0.0, %v4717
        %v4719 = vpop.f32.mrf.mxu0
        %v4720 = vpop.f32.mrf.mxu0
        %v4721 = vadd.f32 0.0, %v4720
        %v4722 = vpop.f32.mrf.mxu0
        %4723 = vdwg.mxu0
        %v4724 = vadd.f32 %v4602, %v4694
        %v4725 = vadd.f32 %v4603, %v4697
        %v4726 = vadd.f32 %v4604, %v4702
        %v4727 = vadd.f32 %v4605, %v4705
        %v4728 = vadd.f32 %v4606, %v4710
        %v4729 = vadd.f32 %v4607, %v4713
        %v4730 = vadd.f32 %v4608, %v4718
        %v4731 = vadd.f32 %v4609, %v4721
        %v4732 = vld [vmem:[%s3613] sm:$0xf]
        %v4733 = vld [vmem:[%s3613 + $0x4] sm:$0xf]
        %v4734 = vld [vmem:[%s3613 + $0x8] sm:$0xf]
        %v4735 = vld [vmem:[%s3613 + $0xc] sm:$0xf]
        %v4736 = vld [vmem:[%s3613 + $0x10] sm:$0xf]
        %v4737 = vld [vmem:[%s3613 + $0x14] sm:$0xf]
        %v4738 = vld [vmem:[%s3613 + $0x18] sm:$0xf]
        %v4739 = vld [vmem:[%s3613 + $0x1c] sm:$0xf]
        %s4740 = scalar_lea.vmem [#allocation20], 48
        %v4741 = vld [vmem:[%s4740] sm:$0xf]
        %v4742 = vld [vmem:[%s4740 + $0x4] sm:$0xf]
        %v4751 = vunpack.c.l.b16 %v4732
        %v4752 = vunpack.c.l.b16 %v4733
        %v4753 = vunpack.c.l.b16 %v4734
        %v4754 = vunpack.c.l.b16 %v4735
        %v4755 = vunpack.c.l.b16 %v4736
        %v4756 = vunpack.c.l.b16 %v4737
        %v4757 = vunpack.c.l.b16 %v4738
        %v4758 = vunpack.c.l.b16 %v4739
        %v4759 = vpack.c.b16 %v4752, %v4751
        %v4760 = vpack.c.b16 %v4754, %v4753
        %v4761 = vpack.c.b16 %v4756, %v4755
        %v4762 = vpack.c.b16 %v4758, %v4757
        %v4765 = vunpack.c.l.b16 %v4741
        %v4766 = vunpack.c.l.b16 %v4742
        %v4767 = vpack.c.b16 %v4766, %v4765
        %v4770 = vsel %vm1003, %v4759, 0
        %v4773 = vsel %vm1003, %v4760, 0
        %v4776 = vsel %vm1003, %v4761, 0
        %v4779 = vsel %vm1003, %v4762, 0
        %4781 = vmatprep.subr.bf16.mxu0 0
        %4782 = vmatpush1.bf16.msra.mxu0 0
        %4783 = vmatprep.subr.bf16.mxu0 0
        %4784 = vmatpush1.bf16.msra.mxu0 0
        %4785 = vmatprep.subr.bf16.mxu0 0
        %4786 = vmatpush1.bf16.msra.mxu0 0
        %4787 = vmatprep.subr.bf16.mxu0 0
        %4788 = vmatpush1.bf16.msra.mxu0 0
        %4789 = vmatprep.subr.bf16.mxu0 0
        %4790 = vmatpush1.bf16.msra.mxu0 0
        %4791 = vmatprep.subr.bf16.mxu0 0
        %4792 = vmatpush1.bf16.msra.mxu0 0
        %4793 = vmatprep.subr.bf16.mxu0 0
        %4794 = vmatpush1.bf16.msra.mxu0 0
        %4795 = vmatprep.subr.bf16.mxu0 0
        %4796 = vmatpush1.bf16.msra.mxu0 %v4767
        %4797 = vmatprep.subr.bf16.mxu0 0
        %4798 = vmatpush2.bf16.msra.mxu0 0
        %4799 = vmatprep.subr.bf16.mxu0 0
        %4800 = vmatpush2.bf16.msra.mxu0 0
        %4801 = vmatprep.subr.bf16.mxu0 0
        %4802 = vmatpush2.bf16.msra.mxu0 0
        %4803 = vmatprep.subr.bf16.mxu0 0
        %4804 = vmatpush2.bf16.msra.mxu0 0
        %4805 = vmatprep.subr.bf16.mxu0 0
        %4806 = vmatpush2.bf16.msra.mxu0 0
        %4807 = vmatprep.subr.bf16.mxu0 0
        %4808 = vmatpush2.bf16.msra.mxu0 0
        %4809 = vmatprep.subr.bf16.mxu0 0
        %4810 = vmatpush2.bf16.msra.mxu0 0
        %4811 = vmatprep.subr.bf16.mxu0 0
        %4812 = vmatpush2.bf16.msra.mxu0 0
        %4813 = vmatprep.mubr.bf16.mxu0 0
        %4814 = vmatmul.mubr.bf16.gmra.mxu0 %v4770
        %v4815 = vpop.f32.mrf.mxu0
        %v4816 = vadd.f32 0.0, %v4815
        %v4817 = vpop.f32.mrf.mxu0
        %v4818 = vpop.f32.mrf.mxu0
        %v4819 = vadd.f32 0.0, %v4818
        %v4820 = vpop.f32.mrf.mxu0
        %4821 = vmatprep.mubr.bf16.mxu0 0
        %4822 = vmatmul.mubr.bf16.gmra.mxu0 %v4773
        %v4823 = vpop.f32.mrf.mxu0
        %v4824 = vadd.f32 0.0, %v4823
        %v4825 = vpop.f32.mrf.mxu0
        %v4826 = vpop.f32.mrf.mxu0
        %v4827 = vadd.f32 0.0, %v4826
        %v4828 = vpop.f32.mrf.mxu0
        %4829 = vmatprep.mubr.bf16.mxu0 0
        %4830 = vmatmul.mubr.bf16.gmra.mxu0 %v4776
        %v4831 = vpop.f32.mrf.mxu0
        %v4832 = vadd.f32 0.0, %v4831
        %v4833 = vpop.f32.mrf.mxu0
        %v4834 = vpop.f32.mrf.mxu0
        %v4835 = vadd.f32 0.0, %v4834
        %v4836 = vpop.f32.mrf.mxu0
        %4837 = vmatprep.mubr.bf16.mxu0 0
        %4838 = vmatmul.mubr.bf16.gmra.mxu0 %v4779
        %v4839 = vpop.f32.mrf.mxu0
        %v4840 = vadd.f32 0.0, %v4839
        %v4841 = vpop.f32.mrf.mxu0
        %v4842 = vpop.f32.mrf.mxu0
        %v4843 = vadd.f32 0.0, %v4842
        %v4844 = vpop.f32.mrf.mxu0
        %4845 = vdwg.mxu0
        %v4846 = vadd.f32 %v4724, %v4816
        %v4847 = vadd.f32 %v4725, %v4819
        %v4848 = vadd.f32 %v4726, %v4824
        %v4849 = vadd.f32 %v4727, %v4827
        %v4850 = vadd.f32 %v4728, %v4832
        %v4851 = vadd.f32 %v4729, %v4835
        %v4852 = vadd.f32 %v4730, %v4840
        %v4853 = vadd.f32 %v4731, %v4843
        %v4854 = vld [vmem:[#allocation22] sm:$0x1]
        %v4856 = vlaneseq
        %v4857 = vshrl.u32 %v4856, 7
        %v4858 = vsub.s32 0, %v4857
        %v4859 = vrot.slane %v4854, %v4858
        %v4861 = vadd.f32 %v4846, %v4859
        %v4862 = vadd.f32 %v4847, %v4859
        %v4863 = vadd.f32 %v4848, %v4859
        %v4864 = vadd.f32 %v4849, %v4859
        %v4865 = vadd.f32 %v4850, %v4859
        %v4866 = vadd.f32 %v4851, %v4859
        %v4867 = vadd.f32 %v4852, %v4859
        %v4868 = vadd.f32 %v4853, %v4859
        %v4869 = vmax.f32 %v4861, 0.0
        %v4870 = vmax.f32 %v4862, 0.0
        %v4871 = vmax.f32 %v4863, 0.0
        %v4872 = vmax.f32 %v4864, 0.0
        %v4873 = vmax.f32 %v4865, 0.0
        %v4874 = vmax.f32 %v4866, 0.0
        %v4875 = vmax.f32 %v4867, 0.0
        %v4876 = vmax.f32 %v4868, 0.0
        %v4877 = vpack.c.bf16 %v4870, %v4869
        %v4878 = vpack.c.bf16 %v4872, %v4871
        %v4879 = vpack.c.bf16 %v4874, %v4873
        %v4880 = vpack.c.bf16 %v4876, %v4875
        %v4885 = vunpack.c.l.b16 %v4877
        %v4886 = vunpack.c.h.b16 %v4877
        %v4887 = vunpack.c.l.b16 %v4878
        %v4888 = vunpack.c.h.b16 %v4878
        %v4889 = vunpack.c.l.b16 %v4879
        %v4890 = vunpack.c.h.b16 %v4879
        %v4891 = vunpack.c.l.b16 %v4880
        %v4892 = vunpack.c.h.b16 %v4880
        %v4893 = vpack.c.b16 %v4885, %v4885
        %v4894 = vpack.c.b16 %v4886, %v4886
        %v4895 = vpack.c.b16 %v4887, %v4887
        %v4896 = vpack.c.b16 %v4888, %v4888
        %v4897 = vpack.c.b16 %v4889, %v4889
        %v4898 = vpack.c.b16 %v4890, %v4890
        %v4899 = vpack.c.b16 %v4891, %v4891
        %v4900 = vpack.c.b16 %v4892, %v4892
        %v4902 = vshrl.u32 %v4893, 16
        %v4904 = vrot.slane %v4902, 6
        %v4905 = vshll.u32 %v4893, 16
        %v4907 = vrot.slane %v4905, 7
        %v4908 = vor.u32 %v4904, %v4907
        %v4909 = vrot.slane %v4908, 4
        %v4911 = vshrl.u32 %v4894, 16
        %v4913 = vrot.slane %v4911, 6
        %v4914 = vshll.u32 %v4894, 16
        %v4916 = vrot.slane %v4914, 7
        %v4917 = vor.u32 %v4913, %v4916
        %v4918 = vrot.slane %v4917, 4
        %v4920 = vshrl.u32 %v4895, 16
        %v4922 = vrot.slane %v4920, 6
        %v4923 = vshll.u32 %v4895, 16
        %v4925 = vrot.slane %v4923, 7
        %v4926 = vor.u32 %v4922, %v4925
        %v4927 = vrot.slane %v4926, 4
        %v4929 = vshrl.u32 %v4896, 16
        %v4931 = vrot.slane %v4929, 6
        %v4932 = vshll.u32 %v4896, 16
        %v4934 = vrot.slane %v4932, 7
        %v4935 = vor.u32 %v4931, %v4934
        %v4936 = vrot.slane %v4935, 4
        %v4938 = vshrl.u32 %v4897, 16
        %v4940 = vrot.slane %v4938, 6
        %v4941 = vshll.u32 %v4897, 16
        %v4943 = vrot.slane %v4941, 7
        %v4944 = vor.u32 %v4940, %v4943
        %v4945 = vrot.slane %v4944, 4
        %v4947 = vshrl.u32 %v4898, 16
        %v4949 = vrot.slane %v4947, 6
        %v4950 = vshll.u32 %v4898, 16
        %v4952 = vrot.slane %v4950, 7
        %v4953 = vor.u32 %v4949, %v4952
        %v4954 = vrot.slane %v4953, 4
        %v4956 = vshrl.u32 %v4899, 16
        %v4958 = vrot.slane %v4956, 6
        %v4959 = vshll.u32 %v4899, 16
        %v4961 = vrot.slane %v4959, 7
        %v4962 = vor.u32 %v4958, %v4961
        %v4963 = vrot.slane %v4962, 4
        %v4965 = vshrl.u32 %v4900, 16
        %v4967 = vrot.slane %v4965, 6
        %v4968 = vshll.u32 %v4900, 16
        %v4970 = vrot.slane %v4968, 7
        %v4971 = vor.u32 %v4967, %v4970
        %v4972 = vrot.slane %v4971, 4
        %v4989 = vld [vmem:[#allocation2] sm:$0xe]
        %v4990 = vsel %vm1324, %v4908, %v4989
        %4991 = vst [vmem:[#allocation2] sm:$0xe] %v4990
        %v4992 = vld [vmem:[#allocation2 + $0x4] sm:$0x3]
        %v4993 = vsel %vm1330, %v4909, %v4992
        %4994 = vst [vmem:[#allocation2 + $0x4] sm:$0x3] %v4993
        %v4995 = vld [vmem:[#allocation2 + $0x8] sm:$0xe]
        %v4996 = vsel %vm1324, %v4917, %v4995
        %4997 = vst [vmem:[#allocation2 + $0x8] sm:$0xe] %v4996
        %v4998 = vld [vmem:[#allocation2 + $0xc] sm:$0x3]
        %v4999 = vsel %vm1330, %v4918, %v4998
        %5000 = vst [vmem:[#allocation2 + $0xc] sm:$0x3] %v4999
        %v5001 = vld [vmem:[#allocation2 + $0x10] sm:$0xe]
        %v5002 = vsel %vm1324, %v4926, %v5001
        %5003 = vst [vmem:[#allocation2 + $0x10] sm:$0xe] %v5002
        %v5004 = vld [vmem:[#allocation2 + $0x14] sm:$0x3]
        %v5005 = vsel %vm1330, %v4927, %v5004
        %5006 = vst [vmem:[#allocation2 + $0x14] sm:$0x3] %v5005
        %v5007 = vld [vmem:[#allocation2 + $0x18] sm:$0xe]
        %v5008 = vsel %vm1324, %v4935, %v5007
        %5009 = vst [vmem:[#allocation2 + $0x18] sm:$0xe] %v5008
        %v5010 = vld [vmem:[#allocation2 + $0x1c] sm:$0x3]
        %v5011 = vsel %vm1330, %v4936, %v5010
        %5012 = vst [vmem:[#allocation2 + $0x1c] sm:$0x3] %v5011
        %v5013 = vld [vmem:[#allocation2 + $0x20] sm:$0xe]
        %v5014 = vsel %vm1324, %v4944, %v5013
        %5015 = vst [vmem:[#allocation2 + $0x20] sm:$0xe] %v5014
        %v5016 = vld [vmem:[#allocation2 + $0x24] sm:$0x3]
        %v5017 = vsel %vm1330, %v4945, %v5016
        %5018 = vst [vmem:[#allocation2 + $0x24] sm:$0x3] %v5017
        %v5019 = vld [vmem:[#allocation2 + $0x28] sm:$0xe]
        %v5020 = vsel %vm1324, %v4953, %v5019
        %5021 = vst [vmem:[#allocation2 + $0x28] sm:$0xe] %v5020
        %v5022 = vld [vmem:[#allocation2 + $0x2c] sm:$0x3]
        %v5023 = vsel %vm1330, %v4954, %v5022
        %5024 = vst [vmem:[#allocation2 + $0x2c] sm:$0x3] %v5023
        %v5025 = vld [vmem:[#allocation2 + $0x30] sm:$0xe]
        %v5026 = vsel %vm1324, %v4962, %v5025
        %5027 = vst [vmem:[#allocation2 + $0x30] sm:$0xe] %v5026
        %v5028 = vld [vmem:[#allocation2 + $0x34] sm:$0x3]
        %v5029 = vsel %vm1330, %v4963, %v5028
        %5030 = vst [vmem:[#allocation2 + $0x34] sm:$0x3] %v5029
        %v5031 = vld [vmem:[#allocation2 + $0x38] sm:$0xe]
        %v5032 = vsel %vm1324, %v4971, %v5031
        %5033 = vst [vmem:[#allocation2 + $0x38] sm:$0xe] %v5032
        %v5034 = vld [vmem:[#allocation2 + $0x3c] sm:$0x3]
        %v5035 = vsel %vm1330, %v4972, %v5034
        %5036 = vst [vmem:[#allocation2 + $0x3c] sm:$0x3] %v5035
        %v5037 = vld [vmem:[#allocation2] sm:$0xf]
        %v5038 = vld [vmem:[#allocation2 + $0x8] sm:$0xf]
        %v5039 = vld [vmem:[#allocation2 + $0x10] sm:$0xf]
        %v5040 = vld [vmem:[#allocation2 + $0x18] sm:$0xf]
        %v5041 = vld [vmem:[#allocation2 + $0x20] sm:$0xf]
        %v5042 = vld [vmem:[#allocation2 + $0x28] sm:$0xf]
        %v5043 = vld [vmem:[#allocation2 + $0x30] sm:$0xf]
        %v5044 = vld [vmem:[#allocation2 + $0x38] sm:$0xf]
        %v5045 = vld [vmem:[#allocation23] sm:$0xf]
        %v5046 = vld [vmem:[#allocation23 + $0x4] sm:$0xf]
        %v5047 = vld [vmem:[#allocation2 + $0x4] sm:$0x1]
        %v5048 = vld [vmem:[#allocation2 + $0xc] sm:$0x1]
        %v5049 = vld [vmem:[#allocation2 + $0x14] sm:$0x1]
        %v5050 = vld [vmem:[#allocation2 + $0x1c] sm:$0x1]
        %v5051 = vld [vmem:[#allocation2 + $0x24] sm:$0x1]
        %v5052 = vld [vmem:[#allocation2 + $0x2c] sm:$0x1]
        %v5053 = vld [vmem:[#allocation2 + $0x34] sm:$0x1]
        %v5054 = vld [vmem:[#allocation2 + $0x3c] sm:$0x1]
        %v5056 = vshrl.u32 %v5037, 16
        %v5058 = vrot.slane %v5056, 4
        %v5059 = vshll.u32 %v5037, 16
        %v5061 = vrot.slane %v5059, 5
        %v5062 = vor.u32 %v5058, %v5061
        %v5063 = vrot.slane %v5062, 4
        %v5065 = vshll.u32 %v5047, 16
        %v5067 = vrot.slane %v5065, 5
        %v5068 = vsel %vm1396, %v5063, %v5067
        %v5070 = vshrl.u32 %v5038, 16
        %v5072 = vrot.slane %v5070, 4
        %v5073 = vshll.u32 %v5038, 16
        %v5075 = vrot.slane %v5073, 5
        %v5076 = vor.u32 %v5072, %v5075
        %v5077 = vrot.slane %v5076, 4
        %v5079 = vshll.u32 %v5048, 16
        %v5081 = vrot.slane %v5079, 5
        %v5082 = vsel %vm1396, %v5077, %v5081
        %v5084 = vshrl.u32 %v5039, 16
        %v5086 = vrot.slane %v5084, 4
        %v5087 = vshll.u32 %v5039, 16
        %v5089 = vrot.slane %v5087, 5
        %v5090 = vor.u32 %v5086, %v5089
        %v5091 = vrot.slane %v5090, 4
        %v5093 = vshll.u32 %v5049, 16
        %v5095 = vrot.slane %v5093, 5
        %v5096 = vsel %vm1396, %v5091, %v5095
        %v5098 = vshrl.u32 %v5040, 16
        %v5100 = vrot.slane %v5098, 4
        %v5101 = vshll.u32 %v5040, 16
        %v5103 = vrot.slane %v5101, 5
        %v5104 = vor.u32 %v5100, %v5103
        %v5105 = vrot.slane %v5104, 4
        %v5107 = vshll.u32 %v5050, 16
        %v5109 = vrot.slane %v5107, 5
        %v5110 = vsel %vm1396, %v5105, %v5109
        %v5112 = vshrl.u32 %v5041, 16
        %v5114 = vrot.slane %v5112, 4
        %v5115 = vshll.u32 %v5041, 16
        %v5117 = vrot.slane %v5115, 5
        %v5118 = vor.u32 %v5114, %v5117
        %v5119 = vrot.slane %v5118, 4
        %v5121 = vshll.u32 %v5051, 16
        %v5123 = vrot.slane %v5121, 5
        %v5124 = vsel %vm1396, %v5119, %v5123
        %v5126 = vshrl.u32 %v5042, 16
        %v5128 = vrot.slane %v5126, 4
        %v5129 = vshll.u32 %v5042, 16
        %v5131 = vrot.slane %v5129, 5
        %v5132 = vor.u32 %v5128, %v5131
        %v5133 = vrot.slane %v5132, 4
        %v5135 = vshll.u32 %v5052, 16
        %v5137 = vrot.slane %v5135, 5
        %v5138 = vsel %vm1396, %v5133, %v5137
        %v5140 = vshrl.u32 %v5043, 16
        %v5142 = vrot.slane %v5140, 4
        %v5143 = vshll.u32 %v5043, 16
        %v5145 = vrot.slane %v5143, 5
        %v5146 = vor.u32 %v5142, %v5145
        %v5147 = vrot.slane %v5146, 4
        %v5149 = vshll.u32 %v5053, 16
        %v5151 = vrot.slane %v5149, 5
        %v5152 = vsel %vm1396, %v5147, %v5151
        %v5154 = vshrl.u32 %v5044, 16
        %v5156 = vrot.slane %v5154, 4
        %v5157 = vshll.u32 %v5044, 16
        %v5159 = vrot.slane %v5157, 5
        %v5160 = vor.u32 %v5156, %v5159
        %v5161 = vrot.slane %v5160, 4
        %v5163 = vshll.u32 %v5054, 16
        %v5165 = vrot.slane %v5163, 5
        %v5166 = vsel %vm1396, %v5161, %v5165
        %s5167 = scalar_lea.vmem [#allocation23], 8
        %v5168 = vld [vmem:[%s5167] sm:$0xf]
        %v5169 = vld [vmem:[%s5167 + $0x4] sm:$0xf]
        %v5170 = vunpack.c.l.b16 %v5068
        %v5171 = vunpack.c.l.b16 %v5082
        %v5172 = vunpack.c.l.b16 %v5096
        %v5173 = vunpack.c.l.b16 %v5110
        %v5174 = vunpack.c.l.b16 %v5124
        %v5175 = vunpack.c.l.b16 %v5138
        %v5176 = vunpack.c.l.b16 %v5152
        %v5177 = vunpack.c.l.b16 %v5166
        %v5178 = vpack.c.b16 %v5171, %v5170
        %v5179 = vpack.c.b16 %v5173, %v5172
        %v5180 = vpack.c.b16 %v5175, %v5174
        %v5181 = vpack.c.b16 %v5177, %v5176
        %v5184 = vunpack.c.l.b16 %v5168
        %v5185 = vunpack.c.l.b16 %v5169
        %v5186 = vpack.c.b16 %v5185, %v5184
        %v5189 = vsel %vm1003, %v5178, 0
        %v5192 = vsel %vm1003, %v5179, 0
        %v5195 = vsel %vm1003, %v5180, 0
        %v5198 = vsel %vm1003, %v5181, 0
        %5200 = vmatprep.subr.bf16.mxu0 0
        %5201 = vmatpush1.bf16.msra.mxu0 0
        %5202 = vmatprep.subr.bf16.mxu0 0
        %5203 = vmatpush1.bf16.msra.mxu0 0
        %5204 = vmatprep.subr.bf16.mxu0 0
        %5205 = vmatpush1.bf16.msra.mxu0 0
        %5206 = vmatprep.subr.bf16.mxu0 0
        %5207 = vmatpush1.bf16.msra.mxu0 0
        %5208 = vmatprep.subr.bf16.mxu0 0
        %5209 = vmatpush1.bf16.msra.mxu0 0
        %5210 = vmatprep.subr.bf16.mxu0 0
        %5211 = vmatpush1.bf16.msra.mxu0 0
        %5212 = vmatprep.subr.bf16.mxu0 0
        %5213 = vmatpush1.bf16.msra.mxu0 0
        %5214 = vmatprep.subr.bf16.mxu0 0
        %5215 = vmatpush1.bf16.msra.mxu0 %v5186
        %5216 = vmatprep.subr.bf16.mxu0 0
        %5217 = vmatpush2.bf16.msra.mxu0 0
        %5218 = vmatprep.subr.bf16.mxu0 0
        %5219 = vmatpush2.bf16.msra.mxu0 0
        %5220 = vmatprep.subr.bf16.mxu0 0
        %5221 = vmatpush2.bf16.msra.mxu0 0
        %5222 = vmatprep.subr.bf16.mxu0 0
        %5223 = vmatpush2.bf16.msra.mxu0 0
        %5224 = vmatprep.subr.bf16.mxu0 0
        %5225 = vmatpush2.bf16.msra.mxu0 0
        %5226 = vmatprep.subr.bf16.mxu0 0
        %5227 = vmatpush2.bf16.msra.mxu0 0
        %5228 = vmatprep.subr.bf16.mxu0 0
        %5229 = vmatpush2.bf16.msra.mxu0 0
        %5230 = vmatprep.subr.bf16.mxu0 0
        %5231 = vmatpush2.bf16.msra.mxu0 0
        %5232 = vmatprep.mubr.bf16.mxu0 0
        %5233 = vmatmul.mubr.bf16.gmra.mxu0 %v5189
        %v5234 = vpop.f32.mrf.mxu0
        %v5235 = vadd.f32 0.0, %v5234
        %v5236 = vpop.f32.mrf.mxu0
        %v5237 = vpop.f32.mrf.mxu0
        %v5238 = vadd.f32 0.0, %v5237
        %v5239 = vpop.f32.mrf.mxu0
        %5240 = vmatprep.mubr.bf16.mxu0 0
        %5241 = vmatmul.mubr.bf16.gmra.mxu0 %v5192
        %v5242 = vpop.f32.mrf.mxu0
        %v5243 = vadd.f32 0.0, %v5242
        %v5244 = vpop.f32.mrf.mxu0
        %v5245 = vpop.f32.mrf.mxu0
        %v5246 = vadd.f32 0.0, %v5245
        %v5247 = vpop.f32.mrf.mxu0
        %5248 = vmatprep.mubr.bf16.mxu0 0
        %5249 = vmatmul.mubr.bf16.gmra.mxu0 %v5195
        %v5250 = vpop.f32.mrf.mxu0
        %v5251 = vadd.f32 0.0, %v5250
        %v5252 = vpop.f32.mrf.mxu0
        %v5253 = vpop.f32.mrf.mxu0
        %v5254 = vadd.f32 0.0, %v5253
        %v5255 = vpop.f32.mrf.mxu0
        %5256 = vmatprep.mubr.bf16.mxu0 0
        %5257 = vmatmul.mubr.bf16.gmra.mxu0 %v5198
        %v5258 = vpop.f32.mrf.mxu0
        %v5259 = vadd.f32 0.0, %v5258
        %v5260 = vpop.f32.mrf.mxu0
        %v5261 = vpop.f32.mrf.mxu0
        %v5262 = vadd.f32 0.0, %v5261
        %v5263 = vpop.f32.mrf.mxu0
        %5264 = vdwg.mxu0
        %v5273 = vunpack.c.l.b16 %v5037
        %v5274 = vunpack.c.l.b16 %v5038
        %v5275 = vunpack.c.l.b16 %v5039
        %v5276 = vunpack.c.l.b16 %v5040
        %v5277 = vunpack.c.l.b16 %v5041
        %v5278 = vunpack.c.l.b16 %v5042
        %v5279 = vunpack.c.l.b16 %v5043
        %v5280 = vunpack.c.l.b16 %v5044
        %v5281 = vpack.c.b16 %v5274, %v5273
        %v5282 = vpack.c.b16 %v5276, %v5275
        %v5283 = vpack.c.b16 %v5278, %v5277
        %v5284 = vpack.c.b16 %v5280, %v5279
        %v5287 = vunpack.c.l.b16 %v5045
        %v5288 = vunpack.c.l.b16 %v5046
        %v5289 = vpack.c.b16 %v5288, %v5287
        %v5292 = vsel %vm1003, %v5281, 0
        %v5295 = vsel %vm1003, %v5282, 0
        %v5298 = vsel %vm1003, %v5283, 0
        %v5301 = vsel %vm1003, %v5284, 0
        %5303 = vmatprep.subr.bf16.mxu0 0
        %5304 = vmatpush1.bf16.msra.mxu0 0
        %5305 = vmatprep.subr.bf16.mxu0 0
        %5306 = vmatpush1.bf16.msra.mxu0 0
        %5307 = vmatprep.subr.bf16.mxu0 0
        %5308 = vmatpush1.bf16.msra.mxu0 0
        %5309 = vmatprep.subr.bf16.mxu0 0
        %5310 = vmatpush1.bf16.msra.mxu0 0
        %5311 = vmatprep.subr.bf16.mxu0 0
        %5312 = vmatpush1.bf16.msra.mxu0 0
        %5313 = vmatprep.subr.bf16.mxu0 0
        %5314 = vmatpush1.bf16.msra.mxu0 0
        %5315 = vmatprep.subr.bf16.mxu0 0
        %5316 = vmatpush1.bf16.msra.mxu0 0
        %5317 = vmatprep.subr.bf16.mxu0 0
        %5318 = vmatpush1.bf16.msra.mxu0 %v5289
        %5319 = vmatprep.subr.bf16.mxu0 0
        %5320 = vmatpush2.bf16.msra.mxu0 0
        %5321 = vmatprep.subr.bf16.mxu0 0
        %5322 = vmatpush2.bf16.msra.mxu0 0
        %5323 = vmatprep.subr.bf16.mxu0 0
        %5324 = vmatpush2.bf16.msra.mxu0 0
        %5325 = vmatprep.subr.bf16.mxu0 0
        %5326 = vmatpush2.bf16.msra.mxu0 0
        %5327 = vmatprep.subr.bf16.mxu0 0
        %5328 = vmatpush2.bf16.msra.mxu0 0
        %5329 = vmatprep.subr.bf16.mxu0 0
        %5330 = vmatpush2.bf16.msra.mxu0 0
        %5331 = vmatprep.subr.bf16.mxu0 0
        %5332 = vmatpush2.bf16.msra.mxu0 0
        %5333 = vmatprep.subr.bf16.mxu0 0
        %5334 = vmatpush2.bf16.msra.mxu0 0
        %5335 = vmatprep.mubr.bf16.mxu0 0
        %5336 = vmatmul.mubr.bf16.gmra.mxu0 %v5292
        %v5337 = vpop.f32.mrf.mxu0
        %v5338 = vadd.f32 %v5235, %v5337
        %v5339 = vpop.f32.mrf.mxu0
        %v5340 = vpop.f32.mrf.mxu0
        %v5341 = vadd.f32 %v5238, %v5340
        %v5342 = vpop.f32.mrf.mxu0
        %5343 = vmatprep.mubr.bf16.mxu0 0
        %5344 = vmatmul.mubr.bf16.gmra.mxu0 %v5295
        %v5345 = vpop.f32.mrf.mxu0
        %v5346 = vadd.f32 %v5243, %v5345
        %v5347 = vpop.f32.mrf.mxu0
        %v5348 = vpop.f32.mrf.mxu0
        %v5349 = vadd.f32 %v5246, %v5348
        %v5350 = vpop.f32.mrf.mxu0
        %5351 = vmatprep.mubr.bf16.mxu0 0
        %5352 = vmatmul.mubr.bf16.gmra.mxu0 %v5298
        %v5353 = vpop.f32.mrf.mxu0
        %v5354 = vadd.f32 %v5251, %v5353
        %v5355 = vpop.f32.mrf.mxu0
        %v5356 = vpop.f32.mrf.mxu0
        %v5357 = vadd.f32 %v5254, %v5356
        %v5358 = vpop.f32.mrf.mxu0
        %5359 = vmatprep.mubr.bf16.mxu0 0
        %5360 = vmatmul.mubr.bf16.gmra.mxu0 %v5301
        %v5361 = vpop.f32.mrf.mxu0
        %v5362 = vadd.f32 %v5259, %v5361
        %v5363 = vpop.f32.mrf.mxu0
        %v5364 = vpop.f32.mrf.mxu0
        %v5365 = vadd.f32 %v5262, %v5364
        %v5366 = vpop.f32.mrf.mxu0
        %5367 = vdwg.mxu0
        %v5368 = vld [vmem:[#allocation2] sm:$0xe]
        %v5369 = vld [vmem:[#allocation2 + $0x8] sm:$0xe]
        %v5370 = vld [vmem:[#allocation2 + $0x10] sm:$0xe]
        %v5371 = vld [vmem:[#allocation2 + $0x18] sm:$0xe]
        %v5372 = vld [vmem:[#allocation2 + $0x20] sm:$0xe]
        %v5373 = vld [vmem:[#allocation2 + $0x28] sm:$0xe]
        %v5374 = vld [vmem:[#allocation2 + $0x30] sm:$0xe]
        %v5375 = vld [vmem:[#allocation2 + $0x38] sm:$0xe]
        %v5392 = vrot.slane %v5368, 5
        %v5393 = vrot.slane %v5392, 4
        %v5394 = vrot.slane %v5047, 5
        %v5395 = vsel %vm1736, %v5393, %v5394
        %v5396 = vrot.slane %v5369, 5
        %v5397 = vrot.slane %v5396, 4
        %v5398 = vrot.slane %v5048, 5
        %v5399 = vsel %vm1736, %v5397, %v5398
        %v5400 = vrot.slane %v5370, 5
        %v5401 = vrot.slane %v5400, 4
        %v5402 = vrot.slane %v5049, 5
        %v5403 = vsel %vm1736, %v5401, %v5402
        %v5404 = vrot.slane %v5371, 5
        %v5405 = vrot.slane %v5404, 4
        %v5406 = vrot.slane %v5050, 5
        %v5407 = vsel %vm1736, %v5405, %v5406
        %v5408 = vrot.slane %v5372, 5
        %v5409 = vrot.slane %v5408, 4
        %v5410 = vrot.slane %v5051, 5
        %v5411 = vsel %vm1736, %v5409, %v5410
        %v5412 = vrot.slane %v5373, 5
        %v5413 = vrot.slane %v5412, 4
        %v5414 = vrot.slane %v5052, 5
        %v5415 = vsel %vm1736, %v5413, %v5414
        %v5416 = vrot.slane %v5374, 5
        %v5417 = vrot.slane %v5416, 4
        %v5418 = vrot.slane %v5053, 5
        %v5419 = vsel %vm1736, %v5417, %v5418
        %v5420 = vrot.slane %v5375, 5
        %v5421 = vrot.slane %v5420, 4
        %v5422 = vrot.slane %v5054, 5
        %v5423 = vsel %vm1736, %v5421, %v5422
        %s5424 = scalar_lea.vmem [#allocation23], 16
        %v5425 = vld [vmem:[%s5424] sm:$0xf]
        %v5426 = vld [vmem:[%s5424 + $0x4] sm:$0xf]
        %v5427 = vunpack.c.l.b16 %v5395
        %v5428 = vunpack.c.l.b16 %v5399
        %v5429 = vunpack.c.l.b16 %v5403
        %v5430 = vunpack.c.l.b16 %v5407
        %v5431 = vunpack.c.l.b16 %v5411
        %v5432 = vunpack.c.l.b16 %v5415
        %v5433 = vunpack.c.l.b16 %v5419
        %v5434 = vunpack.c.l.b16 %v5423
        %v5435 = vpack.c.b16 %v5428, %v5427
        %v5436 = vpack.c.b16 %v5430, %v5429
        %v5437 = vpack.c.b16 %v5432, %v5431
        %v5438 = vpack.c.b16 %v5434, %v5433
        %v5441 = vunpack.c.l.b16 %v5425
        %v5442 = vunpack.c.l.b16 %v5426
        %v5443 = vpack.c.b16 %v5442, %v5441
        %v5446 = vsel %vm1003, %v5435, 0
        %v5449 = vsel %vm1003, %v5436, 0
        %v5452 = vsel %vm1003, %v5437, 0
        %v5455 = vsel %vm1003, %v5438, 0
        %5457 = vmatprep.subr.bf16.mxu0 0
        %5458 = vmatpush1.bf16.msra.mxu0 0
        %5459 = vmatprep.subr.bf16.mxu0 0
        %5460 = vmatpush1.bf16.msra.mxu0 0
        %5461 = vmatprep.subr.bf16.mxu0 0
        %5462 = vmatpush1.bf16.msra.mxu0 0
        %5463 = vmatprep.subr.bf16.mxu0 0
        %5464 = vmatpush1.bf16.msra.mxu0 0
        %5465 = vmatprep.subr.bf16.mxu0 0
        %5466 = vmatpush1.bf16.msra.mxu0 0
        %5467 = vmatprep.subr.bf16.mxu0 0
        %5468 = vmatpush1.bf16.msra.mxu0 0
        %5469 = vmatprep.subr.bf16.mxu0 0
        %5470 = vmatpush1.bf16.msra.mxu0 0
        %5471 = vmatprep.subr.bf16.mxu0 0
        %5472 = vmatpush1.bf16.msra.mxu0 %v5443
        %5473 = vmatprep.subr.bf16.mxu0 0
        %5474 = vmatpush2.bf16.msra.mxu0 0
        %5475 = vmatprep.subr.bf16.mxu0 0
        %5476 = vmatpush2.bf16.msra.mxu0 0
        %5477 = vmatprep.subr.bf16.mxu0 0
        %5478 = vmatpush2.bf16.msra.mxu0 0
        %5479 = vmatprep.subr.bf16.mxu0 0
        %5480 = vmatpush2.bf16.msra.mxu0 0
        %5481 = vmatprep.subr.bf16.mxu0 0
        %5482 = vmatpush2.bf16.msra.mxu0 0
        %5483 = vmatprep.subr.bf16.mxu0 0
        %5484 = vmatpush2.bf16.msra.mxu0 0
        %5485 = vmatprep.subr.bf16.mxu0 0
        %5486 = vmatpush2.bf16.msra.mxu0 0
        %5487 = vmatprep.subr.bf16.mxu0 0
        %5488 = vmatpush2.bf16.msra.mxu0 0
        %5489 = vmatprep.mubr.bf16.mxu0 0
        %5490 = vmatmul.mubr.bf16.gmra.mxu0 %v5446
        %v5491 = vpop.f32.mrf.mxu0
        %v5492 = vadd.f32 0.0, %v5491
        %v5493 = vpop.f32.mrf.mxu0
        %v5494 = vpop.f32.mrf.mxu0
        %v5495 = vadd.f32 0.0, %v5494
        %v5496 = vpop.f32.mrf.mxu0
        %5497 = vmatprep.mubr.bf16.mxu0 0
        %5498 = vmatmul.mubr.bf16.gmra.mxu0 %v5449
        %v5499 = vpop.f32.mrf.mxu0
        %v5500 = vadd.f32 0.0, %v5499
        %v5501 = vpop.f32.mrf.mxu0
        %v5502 = vpop.f32.mrf.mxu0
        %v5503 = vadd.f32 0.0, %v5502
        %v5504 = vpop.f32.mrf.mxu0
        %5505 = vmatprep.mubr.bf16.mxu0 0
        %5506 = vmatmul.mubr.bf16.gmra.mxu0 %v5452
        %v5507 = vpop.f32.mrf.mxu0
        %v5508 = vadd.f32 0.0, %v5507
        %v5509 = vpop.f32.mrf.mxu0
        %v5510 = vpop.f32.mrf.mxu0
        %v5511 = vadd.f32 0.0, %v5510
        %v5512 = vpop.f32.mrf.mxu0
        %5513 = vmatprep.mubr.bf16.mxu0 0
        %5514 = vmatmul.mubr.bf16.gmra.mxu0 %v5455
        %v5515 = vpop.f32.mrf.mxu0
        %v5516 = vadd.f32 0.0, %v5515
        %v5517 = vpop.f32.mrf.mxu0
        %v5518 = vpop.f32.mrf.mxu0
        %v5519 = vadd.f32 0.0, %v5518
        %v5520 = vpop.f32.mrf.mxu0
        %5521 = vdwg.mxu0
        %v5522 = vadd.f32 %v5338, %v5492
        %v5523 = vadd.f32 %v5341, %v5495
        %v5524 = vadd.f32 %v5346, %v5500
        %v5525 = vadd.f32 %v5349, %v5503
        %v5526 = vadd.f32 %v5354, %v5508
        %v5527 = vadd.f32 %v5357, %v5511
        %v5528 = vadd.f32 %v5362, %v5516
        %v5529 = vadd.f32 %v5365, %v5519
        %v5530 = vld [vmem:[#allocation2 + $0x4] sm:$0x3]
        %v5531 = vld [vmem:[#allocation2 + $0xc] sm:$0x3]
        %v5532 = vld [vmem:[#allocation2 + $0x14] sm:$0x3]
        %v5533 = vld [vmem:[#allocation2 + $0x1c] sm:$0x3]
        %v5534 = vld [vmem:[#allocation2 + $0x24] sm:$0x3]
        %v5535 = vld [vmem:[#allocation2 + $0x2c] sm:$0x3]
        %v5536 = vld [vmem:[#allocation2 + $0x34] sm:$0x3]
        %v5537 = vld [vmem:[#allocation2 + $0x3c] sm:$0x3]
        %v5539 = vshrl.u32 %v5368, 16
        %v5541 = vrot.slane %v5539, 5
        %v5542 = vshll.u32 %v5368, 16
        %v5544 = vrot.slane %v5542, 6
        %v5545 = vor.u32 %v5541, %v5544
        %v5546 = vrot.slane %v5545, 4
        %v5548 = vshrl.u32 %v5530, 16
        %v5550 = vrot.slane %v5548, 5
        %v5551 = vshll.u32 %v5530, 16
        %v5553 = vrot.slane %v5551, 6
        %v5554 = vor.u32 %v5550, %v5553
        %v5555 = vsel %vm1885, %v5546, %v5554
        %v5557 = vshrl.u32 %v5369, 16
        %v5559 = vrot.slane %v5557, 5
        %v5560 = vshll.u32 %v5369, 16
        %v5562 = vrot.slane %v5560, 6
        %v5563 = vor.u32 %v5559, %v5562
        %v5564 = vrot.slane %v5563, 4
        %v5566 = vshrl.u32 %v5531, 16
        %v5568 = vrot.slane %v5566, 5
        %v5569 = vshll.u32 %v5531, 16
        %v5571 = vrot.slane %v5569, 6
        %v5572 = vor.u32 %v5568, %v5571
        %v5573 = vsel %vm1885, %v5564, %v5572
        %v5575 = vshrl.u32 %v5370, 16
        %v5577 = vrot.slane %v5575, 5
        %v5578 = vshll.u32 %v5370, 16
        %v5580 = vrot.slane %v5578, 6
        %v5581 = vor.u32 %v5577, %v5580
        %v5582 = vrot.slane %v5581, 4
        %v5584 = vshrl.u32 %v5532, 16
        %v5586 = vrot.slane %v5584, 5
        %v5587 = vshll.u32 %v5532, 16
        %v5589 = vrot.slane %v5587, 6
        %v5590 = vor.u32 %v5586, %v5589
        %v5591 = vsel %vm1885, %v5582, %v5590
        %v5593 = vshrl.u32 %v5371, 16
        %v5595 = vrot.slane %v5593, 5
        %v5596 = vshll.u32 %v5371, 16
        %v5598 = vrot.slane %v5596, 6
        %v5599 = vor.u32 %v5595, %v5598
        %v5600 = vrot.slane %v5599, 4
        %v5602 = vshrl.u32 %v5533, 16
        %v5604 = vrot.slane %v5602, 5
        %v5605 = vshll.u32 %v5533, 16
        %v5607 = vrot.slane %v5605, 6
        %v5608 = vor.u32 %v5604, %v5607
        %v5609 = vsel %vm1885, %v5600, %v5608
        %v5611 = vshrl.u32 %v5372, 16
        %v5613 = vrot.slane %v5611, 5
        %v5614 = vshll.u32 %v5372, 16
        %v5616 = vrot.slane %v5614, 6
        %v5617 = vor.u32 %v5613, %v5616
        %v5618 = vrot.slane %v5617, 4
        %v5620 = vshrl.u32 %v5534, 16
        %v5622 = vrot.slane %v5620, 5
        %v5623 = vshll.u32 %v5534, 16
        %v5625 = vrot.slane %v5623, 6
        %v5626 = vor.u32 %v5622, %v5625
        %v5627 = vsel %vm1885, %v5618, %v5626
        %v5629 = vshrl.u32 %v5373, 16
        %v5631 = vrot.slane %v5629, 5
        %v5632 = vshll.u32 %v5373, 16
        %v5634 = vrot.slane %v5632, 6
        %v5635 = vor.u32 %v5631, %v5634
        %v5636 = vrot.slane %v5635, 4
        %v5638 = vshrl.u32 %v5535, 16
        %v5640 = vrot.slane %v5638, 5
        %v5641 = vshll.u32 %v5535, 16
        %v5643 = vrot.slane %v5641, 6
        %v5644 = vor.u32 %v5640, %v5643
        %v5645 = vsel %vm1885, %v5636, %v5644
        %v5647 = vshrl.u32 %v5374, 16
        %v5649 = vrot.slane %v5647, 5
        %v5650 = vshll.u32 %v5374, 16
        %v5652 = vrot.slane %v5650, 6
        %v5653 = vor.u32 %v5649, %v5652
        %v5654 = vrot.slane %v5653, 4
        %v5656 = vshrl.u32 %v5536, 16
        %v5658 = vrot.slane %v5656, 5
        %v5659 = vshll.u32 %v5536, 16
        %v5661 = vrot.slane %v5659, 6
        %v5662 = vor.u32 %v5658, %v5661
        %v5663 = vsel %vm1885, %v5654, %v5662
        %v5665 = vshrl.u32 %v5375, 16
        %v5667 = vrot.slane %v5665, 5
        %v5668 = vshll.u32 %v5375, 16
        %v5670 = vrot.slane %v5668, 6
        %v5671 = vor.u32 %v5667, %v5670
        %v5672 = vrot.slane %v5671, 4
        %v5674 = vshrl.u32 %v5537, 16
        %v5676 = vrot.slane %v5674, 5
        %v5677 = vshll.u32 %v5537, 16
        %v5679 = vrot.slane %v5677, 6
        %v5680 = vor.u32 %v5676, %v5679
        %v5681 = vsel %vm1885, %v5672, %v5680
        %s5682 = scalar_lea.vmem [#allocation23], 24
        %v5683 = vld [vmem:[%s5682] sm:$0xf]
        %v5684 = vld [vmem:[%s5682 + $0x4] sm:$0xf]
        %v5685 = vunpack.c.l.b16 %v5555
        %v5686 = vunpack.c.l.b16 %v5573
        %v5687 = vunpack.c.l.b16 %v5591
        %v5688 = vunpack.c.l.b16 %v5609
        %v5689 = vunpack.c.l.b16 %v5627
        %v5690 = vunpack.c.l.b16 %v5645
        %v5691 = vunpack.c.l.b16 %v5663
        %v5692 = vunpack.c.l.b16 %v5681
        %v5693 = vpack.c.b16 %v5686, %v5685
        %v5694 = vpack.c.b16 %v5688, %v5687
        %v5695 = vpack.c.b16 %v5690, %v5689
        %v5696 = vpack.c.b16 %v5692, %v5691
        %v5699 = vunpack.c.l.b16 %v5683
        %v5700 = vunpack.c.l.b16 %v5684
        %v5701 = vpack.c.b16 %v5700, %v5699
        %v5704 = vsel %vm1003, %v5693, 0
        %v5707 = vsel %vm1003, %v5694, 0
        %v5710 = vsel %vm1003, %v5695, 0
        %v5713 = vsel %vm1003, %v5696, 0
        %5715 = vmatprep.subr.bf16.mxu0 0
        %5716 = vmatpush1.bf16.msra.mxu0 0
        %5717 = vmatprep.subr.bf16.mxu0 0
        %5718 = vmatpush1.bf16.msra.mxu0 0
        %5719 = vmatprep.subr.bf16.mxu0 0
        %5720 = vmatpush1.bf16.msra.mxu0 0
        %5721 = vmatprep.subr.bf16.mxu0 0
        %5722 = vmatpush1.bf16.msra.mxu0 0
        %5723 = vmatprep.subr.bf16.mxu0 0
        %5724 = vmatpush1.bf16.msra.mxu0 0
        %5725 = vmatprep.subr.bf16.mxu0 0
        %5726 = vmatpush1.bf16.msra.mxu0 0
        %5727 = vmatprep.subr.bf16.mxu0 0
        %5728 = vmatpush1.bf16.msra.mxu0 0
        %5729 = vmatprep.subr.bf16.mxu0 0
        %5730 = vmatpush1.bf16.msra.mxu0 %v5701
        %5731 = vmatprep.subr.bf16.mxu0 0
        %5732 = vmatpush2.bf16.msra.mxu0 0
        %5733 = vmatprep.subr.bf16.mxu0 0
        %5734 = vmatpush2.bf16.msra.mxu0 0
        %5735 = vmatprep.subr.bf16.mxu0 0
        %5736 = vmatpush2.bf16.msra.mxu0 0
        %5737 = vmatprep.subr.bf16.mxu0 0
        %5738 = vmatpush2.bf16.msra.mxu0 0
        %5739 = vmatprep.subr.bf16.mxu0 0
        %5740 = vmatpush2.bf16.msra.mxu0 0
        %5741 = vmatprep.subr.bf16.mxu0 0
        %5742 = vmatpush2.bf16.msra.mxu0 0
        %5743 = vmatprep.subr.bf16.mxu0 0
        %5744 = vmatpush2.bf16.msra.mxu0 0
        %5745 = vmatprep.subr.bf16.mxu0 0
        %5746 = vmatpush2.bf16.msra.mxu0 0
        %5747 = vmatprep.mubr.bf16.mxu0 0
        %5748 = vmatmul.mubr.bf16.gmra.mxu0 %v5704
        %v5749 = vpop.f32.mrf.mxu0
        %v5750 = vadd.f32 0.0, %v5749
        %v5751 = vpop.f32.mrf.mxu0
        %v5752 = vpop.f32.mrf.mxu0
        %v5753 = vadd.f32 0.0, %v5752
        %v5754 = vpop.f32.mrf.mxu0
        %5755 = vmatprep.mubr.bf16.mxu0 0
        %5756 = vmatmul.mubr.bf16.gmra.mxu0 %v5707
        %v5757 = vpop.f32.mrf.mxu0
        %v5758 = vadd.f32 0.0, %v5757
        %v5759 = vpop.f32.mrf.mxu0
        %v5760 = vpop.f32.mrf.mxu0
        %v5761 = vadd.f32 0.0, %v5760
        %v5762 = vpop.f32.mrf.mxu0
        %5763 = vmatprep.mubr.bf16.mxu0 0
        %5764 = vmatmul.mubr.bf16.gmra.mxu0 %v5710
        %v5765 = vpop.f32.mrf.mxu0
        %v5766 = vadd.f32 0.0, %v5765
        %v5767 = vpop.f32.mrf.mxu0
        %v5768 = vpop.f32.mrf.mxu0
        %v5769 = vadd.f32 0.0, %v5768
        %v5770 = vpop.f32.mrf.mxu0
        %5771 = vmatprep.mubr.bf16.mxu0 0
        %5772 = vmatmul.mubr.bf16.gmra.mxu0 %v5713
        %v5773 = vpop.f32.mrf.mxu0
        %v5774 = vadd.f32 0.0, %v5773
        %v5775 = vpop.f32.mrf.mxu0
        %v5776 = vpop.f32.mrf.mxu0
        %v5777 = vadd.f32 0.0, %v5776
        %v5778 = vpop.f32.mrf.mxu0
        %5779 = vdwg.mxu0
        %v5780 = vadd.f32 %v5522, %v5750
        %v5781 = vadd.f32 %v5523, %v5753
        %v5782 = vadd.f32 %v5524, %v5758
        %v5783 = vadd.f32 %v5525, %v5761
        %v5784 = vadd.f32 %v5526, %v5766
        %v5785 = vadd.f32 %v5527, %v5769
        %v5786 = vadd.f32 %v5528, %v5774
        %v5787 = vadd.f32 %v5529, %v5777
        %v5788 = vld [vmem:[#allocation2] sm:$0xc]
        %v5789 = vld [vmem:[#allocation2 + $0x8] sm:$0xc]
        %v5790 = vld [vmem:[#allocation2 + $0x10] sm:$0xc]
        %v5791 = vld [vmem:[#allocation2 + $0x18] sm:$0xc]
        %v5792 = vld [vmem:[#allocation2 + $0x20] sm:$0xc]
        %v5793 = vld [vmem:[#allocation2 + $0x28] sm:$0xc]
        %v5794 = vld [vmem:[#allocation2 + $0x30] sm:$0xc]
        %v5795 = vld [vmem:[#allocation2 + $0x38] sm:$0xc]
        %v5812 = vrot.slane %v5788, 6
        %v5813 = vrot.slane %v5812, 4
        %v5814 = vrot.slane %v5530, 6
        %v5815 = vsel %vm2162, %v5813, %v5814
        %v5816 = vrot.slane %v5789, 6
        %v5817 = vrot.slane %v5816, 4
        %v5818 = vrot.slane %v5531, 6
        %v5819 = vsel %vm2162, %v5817, %v5818
        %v5820 = vrot.slane %v5790, 6
        %v5821 = vrot.slane %v5820, 4
        %v5822 = vrot.slane %v5532, 6
        %v5823 = vsel %vm2162, %v5821, %v5822
        %v5824 = vrot.slane %v5791, 6
        %v5825 = vrot.slane %v5824, 4
        %v5826 = vrot.slane %v5533, 6
        %v5827 = vsel %vm2162, %v5825, %v5826
        %v5828 = vrot.slane %v5792, 6
        %v5829 = vrot.slane %v5828, 4
        %v5830 = vrot.slane %v5534, 6
        %v5831 = vsel %vm2162, %v5829, %v5830
        %v5832 = vrot.slane %v5793, 6
        %v5833 = vrot.slane %v5832, 4
        %v5834 = vrot.slane %v5535, 6
        %v5835 = vsel %vm2162, %v5833, %v5834
        %v5836 = vrot.slane %v5794, 6
        %v5837 = vrot.slane %v5836, 4
        %v5838 = vrot.slane %v5536, 6
        %v5839 = vsel %vm2162, %v5837, %v5838
        %v5840 = vrot.slane %v5795, 6
        %v5841 = vrot.slane %v5840, 4
        %v5842 = vrot.slane %v5537, 6
        %v5843 = vsel %vm2162, %v5841, %v5842
        %s5844 = scalar_lea.vmem [#allocation23], 32
        %v5845 = vld [vmem:[%s5844] sm:$0xf]
        %v5846 = vld [vmem:[%s5844 + $0x4] sm:$0xf]
        %v5847 = vunpack.c.l.b16 %v5815
        %v5848 = vunpack.c.l.b16 %v5819
        %v5849 = vunpack.c.l.b16 %v5823
        %v5850 = vunpack.c.l.b16 %v5827
        %v5851 = vunpack.c.l.b16 %v5831
        %v5852 = vunpack.c.l.b16 %v5835
        %v5853 = vunpack.c.l.b16 %v5839
        %v5854 = vunpack.c.l.b16 %v5843
        %v5855 = vpack.c.b16 %v5848, %v5847
        %v5856 = vpack.c.b16 %v5850, %v5849
        %v5857 = vpack.c.b16 %v5852, %v5851
        %v5858 = vpack.c.b16 %v5854, %v5853
        %v5861 = vunpack.c.l.b16 %v5845
        %v5862 = vunpack.c.l.b16 %v5846
        %v5863 = vpack.c.b16 %v5862, %v5861
        %v5866 = vsel %vm1003, %v5855, 0
        %v5869 = vsel %vm1003, %v5856, 0
        %v5872 = vsel %vm1003, %v5857, 0
        %v5875 = vsel %vm1003, %v5858, 0
        %5877 = vmatprep.subr.bf16.mxu0 0
        %5878 = vmatpush1.bf16.msra.mxu0 0
        %5879 = vmatprep.subr.bf16.mxu0 0
        %5880 = vmatpush1.bf16.msra.mxu0 0
        %5881 = vmatprep.subr.bf16.mxu0 0
        %5882 = vmatpush1.bf16.msra.mxu0 0
        %5883 = vmatprep.subr.bf16.mxu0 0
        %5884 = vmatpush1.bf16.msra.mxu0 0
        %5885 = vmatprep.subr.bf16.mxu0 0
        %5886 = vmatpush1.bf16.msra.mxu0 0
        %5887 = vmatprep.subr.bf16.mxu0 0
        %5888 = vmatpush1.bf16.msra.mxu0 0
        %5889 = vmatprep.subr.bf16.mxu0 0
        %5890 = vmatpush1.bf16.msra.mxu0 0
        %5891 = vmatprep.subr.bf16.mxu0 0
        %5892 = vmatpush1.bf16.msra.mxu0 %v5863
        %5893 = vmatprep.subr.bf16.mxu0 0
        %5894 = vmatpush2.bf16.msra.mxu0 0
        %5895 = vmatprep.subr.bf16.mxu0 0
        %5896 = vmatpush2.bf16.msra.mxu0 0
        %5897 = vmatprep.subr.bf16.mxu0 0
        %5898 = vmatpush2.bf16.msra.mxu0 0
        %5899 = vmatprep.subr.bf16.mxu0 0
        %5900 = vmatpush2.bf16.msra.mxu0 0
        %5901 = vmatprep.subr.bf16.mxu0 0
        %5902 = vmatpush2.bf16.msra.mxu0 0
        %5903 = vmatprep.subr.bf16.mxu0 0
        %5904 = vmatpush2.bf16.msra.mxu0 0
        %5905 = vmatprep.subr.bf16.mxu0 0
        %5906 = vmatpush2.bf16.msra.mxu0 0
        %5907 = vmatprep.subr.bf16.mxu0 0
        %5908 = vmatpush2.bf16.msra.mxu0 0
        %5909 = vmatprep.mubr.bf16.mxu0 0
        %5910 = vmatmul.mubr.bf16.gmra.mxu0 %v5866
        %v5911 = vpop.f32.mrf.mxu0
        %v5912 = vadd.f32 0.0, %v5911
        %v5913 = vpop.f32.mrf.mxu0
        %v5914 = vpop.f32.mrf.mxu0
        %v5915 = vadd.f32 0.0, %v5914
        %v5916 = vpop.f32.mrf.mxu0
        %5917 = vmatprep.mubr.bf16.mxu0 0
        %5918 = vmatmul.mubr.bf16.gmra.mxu0 %v5869
        %v5919 = vpop.f32.mrf.mxu0
        %v5920 = vadd.f32 0.0, %v5919
        %v5921 = vpop.f32.mrf.mxu0
        %v5922 = vpop.f32.mrf.mxu0
        %v5923 = vadd.f32 0.0, %v5922
        %v5924 = vpop.f32.mrf.mxu0
        %5925 = vmatprep.mubr.bf16.mxu0 0
        %5926 = vmatmul.mubr.bf16.gmra.mxu0 %v5872
        %v5927 = vpop.f32.mrf.mxu0
        %v5928 = vadd.f32 0.0, %v5927
        %v5929 = vpop.f32.mrf.mxu0
        %v5930 = vpop.f32.mrf.mxu0
        %v5931 = vadd.f32 0.0, %v5930
        %v5932 = vpop.f32.mrf.mxu0
        %5933 = vmatprep.mubr.bf16.mxu0 0
        %5934 = vmatmul.mubr.bf16.gmra.mxu0 %v5875
        %v5935 = vpop.f32.mrf.mxu0
        %v5936 = vadd.f32 0.0, %v5935
        %v5937 = vpop.f32.mrf.mxu0
        %v5938 = vpop.f32.mrf.mxu0
        %v5939 = vadd.f32 0.0, %v5938
        %v5940 = vpop.f32.mrf.mxu0
        %5941 = vdwg.mxu0
        %v5942 = vadd.f32 %v5780, %v5912
        %v5943 = vadd.f32 %v5781, %v5915
        %v5944 = vadd.f32 %v5782, %v5920
        %v5945 = vadd.f32 %v5783, %v5923
        %v5946 = vadd.f32 %v5784, %v5928
        %v5947 = vadd.f32 %v5785, %v5931
        %v5948 = vadd.f32 %v5786, %v5936
        %v5949 = vadd.f32 %v5787, %v5939
        %v5950 = vld [vmem:[#allocation2 + $0x4] sm:$0x7]
        %v5951 = vld [vmem:[#allocation2 + $0xc] sm:$0x7]
        %v5952 = vld [vmem:[#allocation2 + $0x14] sm:$0x7]
        %v5953 = vld [vmem:[#allocation2 + $0x1c] sm:$0x7]
        %v5954 = vld [vmem:[#allocation2 + $0x24] sm:$0x7]
        %v5955 = vld [vmem:[#allocation2 + $0x2c] sm:$0x7]
        %v5956 = vld [vmem:[#allocation2 + $0x34] sm:$0x7]
        %v5957 = vld [vmem:[#allocation2 + $0x3c] sm:$0x7]
        %v5959 = vshrl.u32 %v5788, 16
        %v5961 = vrot.slane %v5959, 6
        %v5962 = vshll.u32 %v5788, 16
        %v5964 = vrot.slane %v5962, 7
        %v5965 = vor.u32 %v5961, %v5964
        %v5966 = vrot.slane %v5965, 4
        %v5968 = vshrl.u32 %v5950, 16
        %v5970 = vrot.slane %v5968, 6
        %v5971 = vshll.u32 %v5950, 16
        %v5973 = vrot.slane %v5971, 7
        %v5974 = vor.u32 %v5970, %v5973
        %v5975 = vsel %vm2310, %v5966, %v5974
        %v5977 = vshrl.u32 %v5789, 16
        %v5979 = vrot.slane %v5977, 6
        %v5980 = vshll.u32 %v5789, 16
        %v5982 = vrot.slane %v5980, 7
        %v5983 = vor.u32 %v5979, %v5982
        %v5984 = vrot.slane %v5983, 4
        %v5986 = vshrl.u32 %v5951, 16
        %v5988 = vrot.slane %v5986, 6
        %v5989 = vshll.u32 %v5951, 16
        %v5991 = vrot.slane %v5989, 7
        %v5992 = vor.u32 %v5988, %v5991
        %v5993 = vsel %vm2310, %v5984, %v5992
        %v5995 = vshrl.u32 %v5790, 16
        %v5997 = vrot.slane %v5995, 6
        %v5998 = vshll.u32 %v5790, 16
        %v6000 = vrot.slane %v5998, 7
        %v6001 = vor.u32 %v5997, %v6000
        %v6002 = vrot.slane %v6001, 4
        %v6004 = vshrl.u32 %v5952, 16
        %v6006 = vrot.slane %v6004, 6
        %v6007 = vshll.u32 %v5952, 16
        %v6009 = vrot.slane %v6007, 7
        %v6010 = vor.u32 %v6006, %v6009
        %v6011 = vsel %vm2310, %v6002, %v6010
        %v6013 = vshrl.u32 %v5791, 16
        %v6015 = vrot.slane %v6013, 6
        %v6016 = vshll.u32 %v5791, 16
        %v6018 = vrot.slane %v6016, 7
        %v6019 = vor.u32 %v6015, %v6018
        %v6020 = vrot.slane %v6019, 4
        %v6022 = vshrl.u32 %v5953, 16
        %v6024 = vrot.slane %v6022, 6
        %v6025 = vshll.u32 %v5953, 16
        %v6027 = vrot.slane %v6025, 7
        %v6028 = vor.u32 %v6024, %v6027
        %v6029 = vsel %vm2310, %v6020, %v6028
        %v6031 = vshrl.u32 %v5792, 16
        %v6033 = vrot.slane %v6031, 6
        %v6034 = vshll.u32 %v5792, 16
        %v6036 = vrot.slane %v6034, 7
        %v6037 = vor.u32 %v6033, %v6036
        %v6038 = vrot.slane %v6037, 4
        %v6040 = vshrl.u32 %v5954, 16
        %v6042 = vrot.slane %v6040, 6
        %v6043 = vshll.u32 %v5954, 16
        %v6045 = vrot.slane %v6043, 7
        %v6046 = vor.u32 %v6042, %v6045
        %v6047 = vsel %vm2310, %v6038, %v6046
        %v6049 = vshrl.u32 %v5793, 16
        %v6051 = vrot.slane %v6049, 6
        %v6052 = vshll.u32 %v5793, 16
        %v6054 = vrot.slane %v6052, 7
        %v6055 = vor.u32 %v6051, %v6054
        %v6056 = vrot.slane %v6055, 4
        %v6058 = vshrl.u32 %v5955, 16
        %v6060 = vrot.slane %v6058, 6
        %v6061 = vshll.u32 %v5955, 16
        %v6063 = vrot.slane %v6061, 7
        %v6064 = vor.u32 %v6060, %v6063
        %v6065 = vsel %vm2310, %v6056, %v6064
        %v6067 = vshrl.u32 %v5794, 16
        %v6069 = vrot.slane %v6067, 6
        %v6070 = vshll.u32 %v5794, 16
        %v6072 = vrot.slane %v6070, 7
        %v6073 = vor.u32 %v6069, %v6072
        %v6074 = vrot.slane %v6073, 4
        %v6076 = vshrl.u32 %v5956, 16
        %v6078 = vrot.slane %v6076, 6
        %v6079 = vshll.u32 %v5956, 16
        %v6081 = vrot.slane %v6079, 7
        %v6082 = vor.u32 %v6078, %v6081
        %v6083 = vsel %vm2310, %v6074, %v6082
        %v6085 = vshrl.u32 %v5795, 16
        %v6087 = vrot.slane %v6085, 6
        %v6088 = vshll.u32 %v5795, 16
        %v6090 = vrot.slane %v6088, 7
        %v6091 = vor.u32 %v6087, %v6090
        %v6092 = vrot.slane %v6091, 4
        %v6094 = vshrl.u32 %v5957, 16
        %v6096 = vrot.slane %v6094, 6
        %v6097 = vshll.u32 %v5957, 16
        %v6099 = vrot.slane %v6097, 7
        %v6100 = vor.u32 %v6096, %v6099
        %v6101 = vsel %vm2310, %v6092, %v6100
        %s6102 = scalar_lea.vmem [#allocation23], 40
        %v6103 = vld [vmem:[%s6102] sm:$0xf]
        %v6104 = vld [vmem:[%s6102 + $0x4] sm:$0xf]
        %v6105 = vunpack.c.l.b16 %v5975
        %v6106 = vunpack.c.l.b16 %v5993
        %v6107 = vunpack.c.l.b16 %v6011
        %v6108 = vunpack.c.l.b16 %v6029
        %v6109 = vunpack.c.l.b16 %v6047
        %v6110 = vunpack.c.l.b16 %v6065
        %v6111 = vunpack.c.l.b16 %v6083
        %v6112 = vunpack.c.l.b16 %v6101
        %v6113 = vpack.c.b16 %v6106, %v6105
        %v6114 = vpack.c.b16 %v6108, %v6107
        %v6115 = vpack.c.b16 %v6110, %v6109
        %v6116 = vpack.c.b16 %v6112, %v6111
        %v6119 = vunpack.c.l.b16 %v6103
        %v6120 = vunpack.c.l.b16 %v6104
        %v6121 = vpack.c.b16 %v6120, %v6119
        %v6124 = vsel %vm1003, %v6113, 0
        %v6127 = vsel %vm1003, %v6114, 0
        %v6130 = vsel %vm1003, %v6115, 0
        %v6133 = vsel %vm1003, %v6116, 0
        %6135 = vmatprep.subr.bf16.mxu0 0
        %6136 = vmatpush1.bf16.msra.mxu0 0
        %6137 = vmatprep.subr.bf16.mxu0 0
        %6138 = vmatpush1.bf16.msra.mxu0 0
        %6139 = vmatprep.subr.bf16.mxu0 0
        %6140 = vmatpush1.bf16.msra.mxu0 0
        %6141 = vmatprep.subr.bf16.mxu0 0
        %6142 = vmatpush1.bf16.msra.mxu0 0
        %6143 = vmatprep.subr.bf16.mxu0 0
        %6144 = vmatpush1.bf16.msra.mxu0 0
        %6145 = vmatprep.subr.bf16.mxu0 0
        %6146 = vmatpush1.bf16.msra.mxu0 0
        %6147 = vmatprep.subr.bf16.mxu0 0
        %6148 = vmatpush1.bf16.msra.mxu0 0
        %6149 = vmatprep.subr.bf16.mxu0 0
        %6150 = vmatpush1.bf16.msra.mxu0 %v6121
        %6151 = vmatprep.subr.bf16.mxu0 0
        %6152 = vmatpush2.bf16.msra.mxu0 0
        %6153 = vmatprep.subr.bf16.mxu0 0
        %6154 = vmatpush2.bf16.msra.mxu0 0
        %6155 = vmatprep.subr.bf16.mxu0 0
        %6156 = vmatpush2.bf16.msra.mxu0 0
        %6157 = vmatprep.subr.bf16.mxu0 0
        %6158 = vmatpush2.bf16.msra.mxu0 0
        %6159 = vmatprep.subr.bf16.mxu0 0
        %6160 = vmatpush2.bf16.msra.mxu0 0
        %6161 = vmatprep.subr.bf16.mxu0 0
        %6162 = vmatpush2.bf16.msra.mxu0 0
        %6163 = vmatprep.subr.bf16.mxu0 0
        %6164 = vmatpush2.bf16.msra.mxu0 0
        %6165 = vmatprep.subr.bf16.mxu0 0
        %6166 = vmatpush2.bf16.msra.mxu0 0
        %6167 = vmatprep.mubr.bf16.mxu0 0
        %6168 = vmatmul.mubr.bf16.gmra.mxu0 %v6124
        %v6169 = vpop.f32.mrf.mxu0
        %v6170 = vadd.f32 0.0, %v6169
        %v6171 = vpop.f32.mrf.mxu0
        %v6172 = vpop.f32.mrf.mxu0
        %v6173 = vadd.f32 0.0, %v6172
        %v6174 = vpop.f32.mrf.mxu0
        %6175 = vmatprep.mubr.bf16.mxu0 0
        %6176 = vmatmul.mubr.bf16.gmra.mxu0 %v6127
        %v6177 = vpop.f32.mrf.mxu0
        %v6178 = vadd.f32 0.0, %v6177
        %v6179 = vpop.f32.mrf.mxu0
        %v6180 = vpop.f32.mrf.mxu0
        %v6181 = vadd.f32 0.0, %v6180
        %v6182 = vpop.f32.mrf.mxu0
        %6183 = vmatprep.mubr.bf16.mxu0 0
        %6184 = vmatmul.mubr.bf16.gmra.mxu0 %v6130
        %v6185 = vpop.f32.mrf.mxu0
        %v6186 = vadd.f32 0.0, %v6185
        %v6187 = vpop.f32.mrf.mxu0
        %v6188 = vpop.f32.mrf.mxu0
        %v6189 = vadd.f32 0.0, %v6188
        %v6190 = vpop.f32.mrf.mxu0
        %6191 = vmatprep.mubr.bf16.mxu0 0
        %6192 = vmatmul.mubr.bf16.gmra.mxu0 %v6133
        %v6193 = vpop.f32.mrf.mxu0
        %v6194 = vadd.f32 0.0, %v6193
        %v6195 = vpop.f32.mrf.mxu0
        %v6196 = vpop.f32.mrf.mxu0
        %v6197 = vadd.f32 0.0, %v6196
        %v6198 = vpop.f32.mrf.mxu0
        %6199 = vdwg.mxu0
        %v6200 = vadd.f32 %v5942, %v6170
        %v6201 = vadd.f32 %v5943, %v6173
        %v6202 = vadd.f32 %v5944, %v6178
        %v6203 = vadd.f32 %v5945, %v6181
        %v6204 = vadd.f32 %v5946, %v6186
        %v6205 = vadd.f32 %v5947, %v6189
        %v6206 = vadd.f32 %v5948, %v6194
        %v6207 = vadd.f32 %v5949, %v6197
        %v6208 = vld [vmem:[#allocation2] sm:$0x8]
        %v6209 = vld [vmem:[#allocation2 + $0x8] sm:$0x8]
        %v6210 = vld [vmem:[#allocation2 + $0x10] sm:$0x8]
        %v6211 = vld [vmem:[#allocation2 + $0x18] sm:$0x8]
        %v6212 = vld [vmem:[#allocation2 + $0x20] sm:$0x8]
        %v6213 = vld [vmem:[#allocation2 + $0x28] sm:$0x8]
        %v6214 = vld [vmem:[#allocation2 + $0x30] sm:$0x8]
        %v6215 = vld [vmem:[#allocation2 + $0x38] sm:$0x8]
        %v6232 = vrot.slane %v6208, 7
        %v6233 = vrot.slane %v6232, 4
        %v6234 = vrot.slane %v5950, 7
        %v6235 = vsel %vm2587, %v6233, %v6234
        %v6236 = vrot.slane %v6209, 7
        %v6237 = vrot.slane %v6236, 4
        %v6238 = vrot.slane %v5951, 7
        %v6239 = vsel %vm2587, %v6237, %v6238
        %v6240 = vrot.slane %v6210, 7
        %v6241 = vrot.slane %v6240, 4
        %v6242 = vrot.slane %v5952, 7
        %v6243 = vsel %vm2587, %v6241, %v6242
        %v6244 = vrot.slane %v6211, 7
        %v6245 = vrot.slane %v6244, 4
        %v6246 = vrot.slane %v5953, 7
        %v6247 = vsel %vm2587, %v6245, %v6246
        %v6248 = vrot.slane %v6212, 7
        %v6249 = vrot.slane %v6248, 4
        %v6250 = vrot.slane %v5954, 7
        %v6251 = vsel %vm2587, %v6249, %v6250
        %v6252 = vrot.slane %v6213, 7
        %v6253 = vrot.slane %v6252, 4
        %v6254 = vrot.slane %v5955, 7
        %v6255 = vsel %vm2587, %v6253, %v6254
        %v6256 = vrot.slane %v6214, 7
        %v6257 = vrot.slane %v6256, 4
        %v6258 = vrot.slane %v5956, 7
        %v6259 = vsel %vm2587, %v6257, %v6258
        %v6260 = vrot.slane %v6215, 7
        %v6261 = vrot.slane %v6260, 4
        %v6262 = vrot.slane %v5957, 7
        %v6263 = vsel %vm2587, %v6261, %v6262
        %s6264 = scalar_lea.vmem [#allocation23], 48
        %v6265 = vld [vmem:[%s6264] sm:$0xf]
        %v6266 = vld [vmem:[%s6264 + $0x4] sm:$0xf]
        %v6267 = vunpack.c.l.b16 %v6235
        %v6268 = vunpack.c.l.b16 %v6239
        %v6269 = vunpack.c.l.b16 %v6243
        %v6270 = vunpack.c.l.b16 %v6247
        %v6271 = vunpack.c.l.b16 %v6251
        %v6272 = vunpack.c.l.b16 %v6255
        %v6273 = vunpack.c.l.b16 %v6259
        %v6274 = vunpack.c.l.b16 %v6263
        %v6275 = vpack.c.b16 %v6268, %v6267
        %v6276 = vpack.c.b16 %v6270, %v6269
        %v6277 = vpack.c.b16 %v6272, %v6271
        %v6278 = vpack.c.b16 %v6274, %v6273
        %v6281 = vunpack.c.l.b16 %v6265
        %v6282 = vunpack.c.l.b16 %v6266
        %v6283 = vpack.c.b16 %v6282, %v6281
        %v6286 = vsel %vm1003, %v6275, 0
        %v6289 = vsel %vm1003, %v6276, 0
        %v6292 = vsel %vm1003, %v6277, 0
        %v6295 = vsel %vm1003, %v6278, 0
        %6297 = vmatprep.subr.bf16.mxu0 0
        %6298 = vmatpush1.bf16.msra.mxu0 0
        %6299 = vmatprep.subr.bf16.mxu0 0
        %6300 = vmatpush1.bf16.msra.mxu0 0
        %6301 = vmatprep.subr.bf16.mxu0 0
        %6302 = vmatpush1.bf16.msra.mxu0 0
        %6303 = vmatprep.subr.bf16.mxu0 0
        %6304 = vmatpush1.bf16.msra.mxu0 0
        %6305 = vmatprep.subr.bf16.mxu0 0
        %6306 = vmatpush1.bf16.msra.mxu0 0
        %6307 = vmatprep.subr.bf16.mxu0 0
        %6308 = vmatpush1.bf16.msra.mxu0 0
        %6309 = vmatprep.subr.bf16.mxu0 0
        %6310 = vmatpush1.bf16.msra.mxu0 0
        %6311 = vmatprep.subr.bf16.mxu0 0
        %6312 = vmatpush1.bf16.msra.mxu0 %v6283
        %6313 = vmatprep.subr.bf16.mxu0 0
        %6314 = vmatpush2.bf16.msra.mxu0 0
        %6315 = vmatprep.subr.bf16.mxu0 0
        %6316 = vmatpush2.bf16.msra.mxu0 0
        %6317 = vmatprep.subr.bf16.mxu0 0
        %6318 = vmatpush2.bf16.msra.mxu0 0
        %6319 = vmatprep.subr.bf16.mxu0 0
        %6320 = vmatpush2.bf16.msra.mxu0 0
        %6321 = vmatprep.subr.bf16.mxu0 0
        %6322 = vmatpush2.bf16.msra.mxu0 0
        %6323 = vmatprep.subr.bf16.mxu0 0
        %6324 = vmatpush2.bf16.msra.mxu0 0
        %6325 = vmatprep.subr.bf16.mxu0 0
        %6326 = vmatpush2.bf16.msra.mxu0 0
        %6327 = vmatprep.subr.bf16.mxu0 0
        %6328 = vmatpush2.bf16.msra.mxu0 0
        %6329 = vmatprep.mubr.bf16.mxu0 0
        %6330 = vmatmul.mubr.bf16.gmra.mxu0 %v6286
        %v6331 = vpop.f32.mrf.mxu0
        %v6332 = vadd.f32 0.0, %v6331
        %v6333 = vpop.f32.mrf.mxu0
        %v6334 = vpop.f32.mrf.mxu0
        %v6335 = vadd.f32 0.0, %v6334
        %v6336 = vpop.f32.mrf.mxu0
        %6337 = vmatprep.mubr.bf16.mxu0 0
        %6338 = vmatmul.mubr.bf16.gmra.mxu0 %v6289
        %v6339 = vpop.f32.mrf.mxu0
        %v6340 = vadd.f32 0.0, %v6339
        %v6341 = vpop.f32.mrf.mxu0
        %v6342 = vpop.f32.mrf.mxu0
        %v6343 = vadd.f32 0.0, %v6342
        %v6344 = vpop.f32.mrf.mxu0
        %6345 = vmatprep.mubr.bf16.mxu0 0
        %6346 = vmatmul.mubr.bf16.gmra.mxu0 %v6292
        %v6347 = vpop.f32.mrf.mxu0
        %v6348 = vadd.f32 0.0, %v6347
        %v6349 = vpop.f32.mrf.mxu0
        %v6350 = vpop.f32.mrf.mxu0
        %v6351 = vadd.f32 0.0, %v6350
        %v6352 = vpop.f32.mrf.mxu0
        %6353 = vmatprep.mubr.bf16.mxu0 0
        %6354 = vmatmul.mubr.bf16.gmra.mxu0 %v6295
        %v6355 = vpop.f32.mrf.mxu0
        %v6356 = vadd.f32 0.0, %v6355
        %v6357 = vpop.f32.mrf.mxu0
        %v6358 = vpop.f32.mrf.mxu0
        %v6359 = vadd.f32 0.0, %v6358
        %v6360 = vpop.f32.mrf.mxu0
        %6361 = vdwg.mxu0
        %v6362 = vadd.f32 %v6200, %v6332
        %v6363 = vadd.f32 %v6201, %v6335
        %v6364 = vadd.f32 %v6202, %v6340
        %v6365 = vadd.f32 %v6203, %v6343
        %v6366 = vadd.f32 %v6204, %v6348
        %v6367 = vadd.f32 %v6205, %v6351
        %v6368 = vadd.f32 %v6206, %v6356
        %v6369 = vadd.f32 %v6207, %v6359
        %v6370 = vld [vmem:[#allocation25] sm:$0x1]
        %v6372 = vlaneseq
        %v6373 = vshrl.u32 %v6372, 7
        %v6374 = vsub.s32 0, %v6373
        %v6375 = vrot.slane %v6370, %v6374
        %v6377 = vadd.f32 %v6362, %v6375
        %v6378 = vadd.f32 %v6363, %v6375
        %v6379 = vadd.f32 %v6364, %v6375
        %v6380 = vadd.f32 %v6365, %v6375
        %v6381 = vadd.f32 %v6366, %v6375
        %v6382 = vadd.f32 %v6367, %v6375
        %v6383 = vadd.f32 %v6368, %v6375
        %v6384 = vadd.f32 %v6369, %v6375
        %v6385 = vmax.f32 %v6377, 0.0
        %v6386 = vmax.f32 %v6378, 0.0
        %v6387 = vmax.f32 %v6379, 0.0
        %v6388 = vmax.f32 %v6380, 0.0
        %v6389 = vmax.f32 %v6381, 0.0
        %v6390 = vmax.f32 %v6382, 0.0
        %v6391 = vmax.f32 %v6383, 0.0
        %v6392 = vmax.f32 %v6384, 0.0
        %v6393 = vpack.c.bf16 %v6386, %v6385
        %v6394 = vpack.c.bf16 %v6388, %v6387
        %v6395 = vpack.c.bf16 %v6390, %v6389
        %v6396 = vpack.c.bf16 %v6392, %v6391
        %v6401 = vunpack.c.l.b16 %v6393
        %v6402 = vunpack.c.h.b16 %v6393
        %v6403 = vunpack.c.l.b16 %v6394
        %v6404 = vunpack.c.h.b16 %v6394
        %v6405 = vunpack.c.l.b16 %v6395
        %v6406 = vunpack.c.h.b16 %v6395
        %v6407 = vunpack.c.l.b16 %v6396
        %v6408 = vunpack.c.h.b16 %v6396
        %v6409 = vpack.c.b16 %v6401, %v6401
        %v6410 = vpack.c.b16 %v6402, %v6402
        %v6411 = vpack.c.b16 %v6403, %v6403
        %v6412 = vpack.c.b16 %v6404, %v6404
        %v6413 = vpack.c.b16 %v6405, %v6405
        %v6414 = vpack.c.b16 %v6406, %v6406
        %v6415 = vpack.c.b16 %v6407, %v6407
        %v6416 = vpack.c.b16 %v6408, %v6408
        %6425 = vst.msk [vmem:[%s2781] sm:$0xf] %vm898, %v6409
        %6426 = vst.msk [vmem:[%s2781 + $0x4] sm:$0xf] %vm898, %v6410
        %6427 = vst.msk [vmem:[%s2781 + $0x8] sm:$0xf] %vm898, %v6411
        %6428 = vst.msk [vmem:[%s2781 + $0xc] sm:$0xf] %vm898, %v6412
        %6429 = vst.msk [vmem:[%s2781 + $0x10] sm:$0xf] %vm898, %v6413
        %6430 = vst.msk [vmem:[%s2781 + $0x14] sm:$0xf] %vm898, %v6414
        %6431 = vst.msk [vmem:[%s2781 + $0x18] sm:$0xf] %vm898, %v6415
        %6432 = vst.msk [vmem:[%s2781 + $0x1c] sm:$0xf] %vm898, %v6416
        %v6433 = vld [vmem:[#allocation3] sm:$0xf]
        %v6434 = vld [vmem:[#allocation3 + $0x4] sm:$0xf]
        %v6435 = vld [vmem:[#allocation3 + $0x8] sm:$0xf]
        %v6436 = vld [vmem:[#allocation3 + $0xc] sm:$0xf]
        %v6437 = vld [vmem:[#allocation3 + $0x10] sm:$0xf]
        %v6438 = vld [vmem:[#allocation3 + $0x14] sm:$0xf]
        %v6439 = vld [vmem:[#allocation3 + $0x18] sm:$0xf]
        %v6440 = vld [vmem:[#allocation3 + $0x1c] sm:$0xf]
        %v6441 = vld [vmem:[#allocation26] sm:$0xf]
        %v6442 = vld [vmem:[#allocation26 + $0x4] sm:$0xf]
        %v6443 = vld [vmem:[%s2800] sm:$0xf]
        %v6444 = vld [vmem:[%s2800 + $0x4] sm:$0xf]
        %v6445 = vld [vmem:[%s2800 + $0x8] sm:$0xf]
        %v6446 = vld [vmem:[%s2800 + $0xc] sm:$0xf]
        %v6447 = vld [vmem:[%s2800 + $0x10] sm:$0xf]
        %v6448 = vld [vmem:[%s2800 + $0x14] sm:$0xf]
        %v6449 = vld [vmem:[%s2800 + $0x18] sm:$0xf]
        %v6450 = vld [vmem:[%s2800 + $0x1c] sm:$0xf]
        %s6451 = scalar_lea.vmem [#allocation26], 8
        %v6452 = vld [vmem:[%s6451] sm:$0xf]
        %v6453 = vld [vmem:[%s6451 + $0x4] sm:$0xf]
        %v6462 = vunpack.c.l.b16 %v6443
        %v6463 = vunpack.c.l.b16 %v6444
        %v6464 = vunpack.c.l.b16 %v6445
        %v6465 = vunpack.c.l.b16 %v6446
        %v6466 = vunpack.c.l.b16 %v6447
        %v6467 = vunpack.c.l.b16 %v6448
        %v6468 = vunpack.c.l.b16 %v6449
        %v6469 = vunpack.c.l.b16 %v6450
        %v6470 = vpack.c.b16 %v6463, %v6462
        %v6471 = vpack.c.b16 %v6465, %v6464
        %v6472 = vpack.c.b16 %v6467, %v6466
        %v6473 = vpack.c.b16 %v6469, %v6468
        %v6476 = vunpack.c.l.b16 %v6452
        %v6477 = vunpack.c.l.b16 %v6453
        %v6478 = vpack.c.b16 %v6477, %v6476
        %v6481 = vsel %vm1003, %v6470, 0
        %v6484 = vsel %vm1003, %v6471, 0
        %v6487 = vsel %vm1003, %v6472, 0
        %v6490 = vsel %vm1003, %v6473, 0
        %6492 = vmatprep.subr.bf16.mxu0 0
        %6493 = vmatpush1.bf16.msra.mxu0 0
        %6494 = vmatprep.subr.bf16.mxu0 0
        %6495 = vmatpush1.bf16.msra.mxu0 0
        %6496 = vmatprep.subr.bf16.mxu0 0
        %6497 = vmatpush1.bf16.msra.mxu0 0
        %6498 = vmatprep.subr.bf16.mxu0 0
        %6499 = vmatpush1.bf16.msra.mxu0 0
        %6500 = vmatprep.subr.bf16.mxu0 0
        %6501 = vmatpush1.bf16.msra.mxu0 0
        %6502 = vmatprep.subr.bf16.mxu0 0
        %6503 = vmatpush1.bf16.msra.mxu0 0
        %6504 = vmatprep.subr.bf16.mxu0 0
        %6505 = vmatpush1.bf16.msra.mxu0 0
        %6506 = vmatprep.subr.bf16.mxu0 0
        %6507 = vmatpush1.bf16.msra.mxu0 %v6478
        %6508 = vmatprep.subr.bf16.mxu0 0
        %6509 = vmatpush2.bf16.msra.mxu0 0
        %6510 = vmatprep.subr.bf16.mxu0 0
        %6511 = vmatpush2.bf16.msra.mxu0 0
        %6512 = vmatprep.subr.bf16.mxu0 0
        %6513 = vmatpush2.bf16.msra.mxu0 0
        %6514 = vmatprep.subr.bf16.mxu0 0
        %6515 = vmatpush2.bf16.msra.mxu0 0
        %6516 = vmatprep.subr.bf16.mxu0 0
        %6517 = vmatpush2.bf16.msra.mxu0 0
        %6518 = vmatprep.subr.bf16.mxu0 0
        %6519 = vmatpush2.bf16.msra.mxu0 0
        %6520 = vmatprep.subr.bf16.mxu0 0
        %6521 = vmatpush2.bf16.msra.mxu0 0
        %6522 = vmatprep.subr.bf16.mxu0 0
        %6523 = vmatpush2.bf16.msra.mxu0 0
        %6524 = vmatprep.mubr.bf16.mxu0 0
        %6525 = vmatmul.mubr.bf16.gmra.mxu0 %v6481
        %v6526 = vpop.f32.mrf.mxu0
        %v6527 = vadd.f32 0.0, %v6526
        %v6528 = vpop.f32.mrf.mxu0
        %v6529 = vpop.f32.mrf.mxu0
        %v6530 = vadd.f32 0.0, %v6529
        %v6531 = vpop.f32.mrf.mxu0
        %6532 = vmatprep.mubr.bf16.mxu0 0
        %6533 = vmatmul.mubr.bf16.gmra.mxu0 %v6484
        %v6534 = vpop.f32.mrf.mxu0
        %v6535 = vadd.f32 0.0, %v6534
        %v6536 = vpop.f32.mrf.mxu0
        %v6537 = vpop.f32.mrf.mxu0
        %v6538 = vadd.f32 0.0, %v6537
        %v6539 = vpop.f32.mrf.mxu0
        %6540 = vmatprep.mubr.bf16.mxu0 0
        %6541 = vmatmul.mubr.bf16.gmra.mxu0 %v6487
        %v6542 = vpop.f32.mrf.mxu0
        %v6543 = vadd.f32 0.0, %v6542
        %v6544 = vpop.f32.mrf.mxu0
        %v6545 = vpop.f32.mrf.mxu0
        %v6546 = vadd.f32 0.0, %v6545
        %v6547 = vpop.f32.mrf.mxu0
        %6548 = vmatprep.mubr.bf16.mxu0 0
        %6549 = vmatmul.mubr.bf16.gmra.mxu0 %v6490
        %v6550 = vpop.f32.mrf.mxu0
        %v6551 = vadd.f32 0.0, %v6550
        %v6552 = vpop.f32.mrf.mxu0
        %v6553 = vpop.f32.mrf.mxu0
        %v6554 = vadd.f32 0.0, %v6553
        %v6555 = vpop.f32.mrf.mxu0
        %6556 = vdwg.mxu0
        %v6565 = vunpack.c.l.b16 %v6433
        %v6566 = vunpack.c.l.b16 %v6434
        %v6567 = vunpack.c.l.b16 %v6435
        %v6568 = vunpack.c.l.b16 %v6436
        %v6569 = vunpack.c.l.b16 %v6437
        %v6570 = vunpack.c.l.b16 %v6438
        %v6571 = vunpack.c.l.b16 %v6439
        %v6572 = vunpack.c.l.b16 %v6440
        %v6573 = vpack.c.b16 %v6566, %v6565
        %v6574 = vpack.c.b16 %v6568, %v6567
        %v6575 = vpack.c.b16 %v6570, %v6569
        %v6576 = vpack.c.b16 %v6572, %v6571
        %v6579 = vunpack.c.l.b16 %v6441
        %v6580 = vunpack.c.l.b16 %v6442
        %v6581 = vpack.c.b16 %v6580, %v6579
        %v6584 = vsel %vm1003, %v6573, 0
        %v6587 = vsel %vm1003, %v6574, 0
        %v6590 = vsel %vm1003, %v6575, 0
        %v6593 = vsel %vm1003, %v6576, 0
        %6595 = vmatprep.subr.bf16.mxu0 0
        %6596 = vmatpush1.bf16.msra.mxu0 0
        %6597 = vmatprep.subr.bf16.mxu0 0
        %6598 = vmatpush1.bf16.msra.mxu0 0
        %6599 = vmatprep.subr.bf16.mxu0 0
        %6600 = vmatpush1.bf16.msra.mxu0 0
        %6601 = vmatprep.subr.bf16.mxu0 0
        %6602 = vmatpush1.bf16.msra.mxu0 0
        %6603 = vmatprep.subr.bf16.mxu0 0
        %6604 = vmatpush1.bf16.msra.mxu0 0
        %6605 = vmatprep.subr.bf16.mxu0 0
        %6606 = vmatpush1.bf16.msra.mxu0 0
        %6607 = vmatprep.subr.bf16.mxu0 0
        %6608 = vmatpush1.bf16.msra.mxu0 0
        %6609 = vmatprep.subr.bf16.mxu0 0
        %6610 = vmatpush1.bf16.msra.mxu0 %v6581
        %6611 = vmatprep.subr.bf16.mxu0 0
        %6612 = vmatpush2.bf16.msra.mxu0 0
        %6613 = vmatprep.subr.bf16.mxu0 0
        %6614 = vmatpush2.bf16.msra.mxu0 0
        %6615 = vmatprep.subr.bf16.mxu0 0
        %6616 = vmatpush2.bf16.msra.mxu0 0
        %6617 = vmatprep.subr.bf16.mxu0 0
        %6618 = vmatpush2.bf16.msra.mxu0 0
        %6619 = vmatprep.subr.bf16.mxu0 0
        %6620 = vmatpush2.bf16.msra.mxu0 0
        %6621 = vmatprep.subr.bf16.mxu0 0
        %6622 = vmatpush2.bf16.msra.mxu0 0
        %6623 = vmatprep.subr.bf16.mxu0 0
        %6624 = vmatpush2.bf16.msra.mxu0 0
        %6625 = vmatprep.subr.bf16.mxu0 0
        %6626 = vmatpush2.bf16.msra.mxu0 0
        %6627 = vmatprep.mubr.bf16.mxu0 0
        %6628 = vmatmul.mubr.bf16.gmra.mxu0 %v6584
        %v6629 = vpop.f32.mrf.mxu0
        %v6630 = vadd.f32 %v6527, %v6629
        %v6631 = vpop.f32.mrf.mxu0
        %v6632 = vpop.f32.mrf.mxu0
        %v6633 = vadd.f32 %v6530, %v6632
        %v6634 = vpop.f32.mrf.mxu0
        %6635 = vmatprep.mubr.bf16.mxu0 0
        %6636 = vmatmul.mubr.bf16.gmra.mxu0 %v6587
        %v6637 = vpop.f32.mrf.mxu0
        %v6638 = vadd.f32 %v6535, %v6637
        %v6639 = vpop.f32.mrf.mxu0
        %v6640 = vpop.f32.mrf.mxu0
        %v6641 = vadd.f32 %v6538, %v6640
        %v6642 = vpop.f32.mrf.mxu0
        %6643 = vmatprep.mubr.bf16.mxu0 0
        %6644 = vmatmul.mubr.bf16.gmra.mxu0 %v6590
        %v6645 = vpop.f32.mrf.mxu0
        %v6646 = vadd.f32 %v6543, %v6645
        %v6647 = vpop.f32.mrf.mxu0
        %v6648 = vpop.f32.mrf.mxu0
        %v6649 = vadd.f32 %v6546, %v6648
        %v6650 = vpop.f32.mrf.mxu0
        %6651 = vmatprep.mubr.bf16.mxu0 0
        %6652 = vmatmul.mubr.bf16.gmra.mxu0 %v6593
        %v6653 = vpop.f32.mrf.mxu0
        %v6654 = vadd.f32 %v6551, %v6653
        %v6655 = vpop.f32.mrf.mxu0
        %v6656 = vpop.f32.mrf.mxu0
        %v6657 = vadd.f32 %v6554, %v6656
        %v6658 = vpop.f32.mrf.mxu0
        %6659 = vdwg.mxu0
        %v6660 = vld [vmem:[%s3042] sm:$0xf]
        %v6661 = vld [vmem:[%s3042 + $0x4] sm:$0xf]
        %v6662 = vld [vmem:[%s3042 + $0x8] sm:$0xf]
        %v6663 = vld [vmem:[%s3042 + $0xc] sm:$0xf]
        %v6664 = vld [vmem:[%s3042 + $0x10] sm:$0xf]
        %v6665 = vld [vmem:[%s3042 + $0x14] sm:$0xf]
        %v6666 = vld [vmem:[%s3042 + $0x18] sm:$0xf]
        %v6667 = vld [vmem:[%s3042 + $0x1c] sm:$0xf]
        %s6668 = scalar_lea.vmem [#allocation26], 16
        %v6669 = vld [vmem:[%s6668] sm:$0xf]
        %v6670 = vld [vmem:[%s6668 + $0x4] sm:$0xf]
        %v6679 = vunpack.c.l.b16 %v6660
        %v6680 = vunpack.c.l.b16 %v6661
        %v6681 = vunpack.c.l.b16 %v6662
        %v6682 = vunpack.c.l.b16 %v6663
        %v6683 = vunpack.c.l.b16 %v6664
        %v6684 = vunpack.c.l.b16 %v6665
        %v6685 = vunpack.c.l.b16 %v6666
        %v6686 = vunpack.c.l.b16 %v6667
        %v6687 = vpack.c.b16 %v6680, %v6679
        %v6688 = vpack.c.b16 %v6682, %v6681
        %v6689 = vpack.c.b16 %v6684, %v6683
        %v6690 = vpack.c.b16 %v6686, %v6685
        %v6693 = vunpack.c.l.b16 %v6669
        %v6694 = vunpack.c.l.b16 %v6670
        %v6695 = vpack.c.b16 %v6694, %v6693
        %v6698 = vsel %vm1003, %v6687, 0
        %v6701 = vsel %vm1003, %v6688, 0
        %v6704 = vsel %vm1003, %v6689, 0
        %v6707 = vsel %vm1003, %v6690, 0
        %6709 = vmatprep.subr.bf16.mxu0 0
        %6710 = vmatpush1.bf16.msra.mxu0 0
        %6711 = vmatprep.subr.bf16.mxu0 0
        %6712 = vmatpush1.bf16.msra.mxu0 0
        %6713 = vmatprep.subr.bf16.mxu0 0
        %6714 = vmatpush1.bf16.msra.mxu0 0
        %6715 = vmatprep.subr.bf16.mxu0 0
        %6716 = vmatpush1.bf16.msra.mxu0 0
        %6717 = vmatprep.subr.bf16.mxu0 0
        %6718 = vmatpush1.bf16.msra.mxu0 0
        %6719 = vmatprep.subr.bf16.mxu0 0
        %6720 = vmatpush1.bf16.msra.mxu0 0
        %6721 = vmatprep.subr.bf16.mxu0 0
        %6722 = vmatpush1.bf16.msra.mxu0 0
        %6723 = vmatprep.subr.bf16.mxu0 0
        %6724 = vmatpush1.bf16.msra.mxu0 %v6695
        %6725 = vmatprep.subr.bf16.mxu0 0
        %6726 = vmatpush2.bf16.msra.mxu0 0
        %6727 = vmatprep.subr.bf16.mxu0 0
        %6728 = vmatpush2.bf16.msra.mxu0 0
        %6729 = vmatprep.subr.bf16.mxu0 0
        %6730 = vmatpush2.bf16.msra.mxu0 0
        %6731 = vmatprep.subr.bf16.mxu0 0
        %6732 = vmatpush2.bf16.msra.mxu0 0
        %6733 = vmatprep.subr.bf16.mxu0 0
        %6734 = vmatpush2.bf16.msra.mxu0 0
        %6735 = vmatprep.subr.bf16.mxu0 0
        %6736 = vmatpush2.bf16.msra.mxu0 0
        %6737 = vmatprep.subr.bf16.mxu0 0
        %6738 = vmatpush2.bf16.msra.mxu0 0
        %6739 = vmatprep.subr.bf16.mxu0 0
        %6740 = vmatpush2.bf16.msra.mxu0 0
        %6741 = vmatprep.mubr.bf16.mxu0 0
        %6742 = vmatmul.mubr.bf16.gmra.mxu0 %v6698
        %v6743 = vpop.f32.mrf.mxu0
        %v6744 = vadd.f32 0.0, %v6743
        %v6745 = vpop.f32.mrf.mxu0
        %v6746 = vpop.f32.mrf.mxu0
        %v6747 = vadd.f32 0.0, %v6746
        %v6748 = vpop.f32.mrf.mxu0
        %6749 = vmatprep.mubr.bf16.mxu0 0
        %6750 = vmatmul.mubr.bf16.gmra.mxu0 %v6701
        %v6751 = vpop.f32.mrf.mxu0
        %v6752 = vadd.f32 0.0, %v6751
        %v6753 = vpop.f32.mrf.mxu0
        %v6754 = vpop.f32.mrf.mxu0
        %v6755 = vadd.f32 0.0, %v6754
        %v6756 = vpop.f32.mrf.mxu0
        %6757 = vmatprep.mubr.bf16.mxu0 0
        %6758 = vmatmul.mubr.bf16.gmra.mxu0 %v6704
        %v6759 = vpop.f32.mrf.mxu0
        %v6760 = vadd.f32 0.0, %v6759
        %v6761 = vpop.f32.mrf.mxu0
        %v6762 = vpop.f32.mrf.mxu0
        %v6763 = vadd.f32 0.0, %v6762
        %v6764 = vpop.f32.mrf.mxu0
        %6765 = vmatprep.mubr.bf16.mxu0 0
        %6766 = vmatmul.mubr.bf16.gmra.mxu0 %v6707
        %v6767 = vpop.f32.mrf.mxu0
        %v6768 = vadd.f32 0.0, %v6767
        %v6769 = vpop.f32.mrf.mxu0
        %v6770 = vpop.f32.mrf.mxu0
        %v6771 = vadd.f32 0.0, %v6770
        %v6772 = vpop.f32.mrf.mxu0
        %6773 = vdwg.mxu0
        %v6774 = vadd.f32 %v6630, %v6744
        %v6775 = vadd.f32 %v6633, %v6747
        %v6776 = vadd.f32 %v6638, %v6752
        %v6777 = vadd.f32 %v6641, %v6755
        %v6778 = vadd.f32 %v6646, %v6760
        %v6779 = vadd.f32 %v6649, %v6763
        %v6780 = vadd.f32 %v6654, %v6768
        %v6781 = vadd.f32 %v6657, %v6771
        %v6782 = vld [vmem:[%s2781] sm:$0xf]
        %v6783 = vld [vmem:[%s2781 + $0x4] sm:$0xf]
        %v6784 = vld [vmem:[%s2781 + $0x8] sm:$0xf]
        %v6785 = vld [vmem:[%s2781 + $0xc] sm:$0xf]
        %v6786 = vld [vmem:[%s2781 + $0x10] sm:$0xf]
        %v6787 = vld [vmem:[%s2781 + $0x14] sm:$0xf]
        %v6788 = vld [vmem:[%s2781 + $0x18] sm:$0xf]
        %v6789 = vld [vmem:[%s2781 + $0x1c] sm:$0xf]
        %s6790 = scalar_lea.vmem [#allocation26], 24
        %v6791 = vld [vmem:[%s6790] sm:$0xf]
        %v6792 = vld [vmem:[%s6790 + $0x4] sm:$0xf]
        %v6801 = vunpack.c.l.b16 %v6782
        %v6802 = vunpack.c.l.b16 %v6783
        %v6803 = vunpack.c.l.b16 %v6784
        %v6804 = vunpack.c.l.b16 %v6785
        %v6805 = vunpack.c.l.b16 %v6786
        %v6806 = vunpack.c.l.b16 %v6787
        %v6807 = vunpack.c.l.b16 %v6788
        %v6808 = vunpack.c.l.b16 %v6789
        %v6809 = vpack.c.b16 %v6802, %v6801
        %v6810 = vpack.c.b16 %v6804, %v6803
        %v6811 = vpack.c.b16 %v6806, %v6805
        %v6812 = vpack.c.b16 %v6808, %v6807
        %v6815 = vunpack.c.l.b16 %v6791
        %v6816 = vunpack.c.l.b16 %v6792
        %v6817 = vpack.c.b16 %v6816, %v6815
        %v6820 = vsel %vm1003, %v6809, 0
        %v6823 = vsel %vm1003, %v6810, 0
        %v6826 = vsel %vm1003, %v6811, 0
        %v6829 = vsel %vm1003, %v6812, 0
        %6831 = vmatprep.subr.bf16.mxu0 0
        %6832 = vmatpush1.bf16.msra.mxu0 0
        %6833 = vmatprep.subr.bf16.mxu0 0
        %6834 = vmatpush1.bf16.msra.mxu0 0
        %6835 = vmatprep.subr.bf16.mxu0 0
        %6836 = vmatpush1.bf16.msra.mxu0 0
        %6837 = vmatprep.subr.bf16.mxu0 0
        %6838 = vmatpush1.bf16.msra.mxu0 0
        %6839 = vmatprep.subr.bf16.mxu0 0
        %6840 = vmatpush1.bf16.msra.mxu0 0
        %6841 = vmatprep.subr.bf16.mxu0 0
        %6842 = vmatpush1.bf16.msra.mxu0 0
        %6843 = vmatprep.subr.bf16.mxu0 0
        %6844 = vmatpush1.bf16.msra.mxu0 0
        %6845 = vmatprep.subr.bf16.mxu0 0
        %6846 = vmatpush1.bf16.msra.mxu0 %v6817
        %6847 = vmatprep.subr.bf16.mxu0 0
        %6848 = vmatpush2.bf16.msra.mxu0 0
        %6849 = vmatprep.subr.bf16.mxu0 0
        %6850 = vmatpush2.bf16.msra.mxu0 0
        %6851 = vmatprep.subr.bf16.mxu0 0
        %6852 = vmatpush2.bf16.msra.mxu0 0
        %6853 = vmatprep.subr.bf16.mxu0 0
        %6854 = vmatpush2.bf16.msra.mxu0 0
        %6855 = vmatprep.subr.bf16.mxu0 0
        %6856 = vmatpush2.bf16.msra.mxu0 0
        %6857 = vmatprep.subr.bf16.mxu0 0
        %6858 = vmatpush2.bf16.msra.mxu0 0
        %6859 = vmatprep.subr.bf16.mxu0 0
        %6860 = vmatpush2.bf16.msra.mxu0 0
        %6861 = vmatprep.subr.bf16.mxu0 0
        %6862 = vmatpush2.bf16.msra.mxu0 0
        %6863 = vmatprep.mubr.bf16.mxu0 0
        %6864 = vmatmul.mubr.bf16.gmra.mxu0 %v6820
        %v6865 = vpop.f32.mrf.mxu0
        %v6866 = vadd.f32 0.0, %v6865
        %v6867 = vpop.f32.mrf.mxu0
        %v6868 = vpop.f32.mrf.mxu0
        %v6869 = vadd.f32 0.0, %v6868
        %v6870 = vpop.f32.mrf.mxu0
        %6871 = vmatprep.mubr.bf16.mxu0 0
        %6872 = vmatmul.mubr.bf16.gmra.mxu0 %v6823
        %v6873 = vpop.f32.mrf.mxu0
        %v6874 = vadd.f32 0.0, %v6873
        %v6875 = vpop.f32.mrf.mxu0
        %v6876 = vpop.f32.mrf.mxu0
        %v6877 = vadd.f32 0.0, %v6876
        %v6878 = vpop.f32.mrf.mxu0
        %6879 = vmatprep.mubr.bf16.mxu0 0
        %6880 = vmatmul.mubr.bf16.gmra.mxu0 %v6826
        %v6881 = vpop.f32.mrf.mxu0
        %v6882 = vadd.f32 0.0, %v6881
        %v6883 = vpop.f32.mrf.mxu0
        %v6884 = vpop.f32.mrf.mxu0
        %v6885 = vadd.f32 0.0, %v6884
        %v6886 = vpop.f32.mrf.mxu0
        %6887 = vmatprep.mubr.bf16.mxu0 0
        %6888 = vmatmul.mubr.bf16.gmra.mxu0 %v6829
        %v6889 = vpop.f32.mrf.mxu0
        %v6890 = vadd.f32 0.0, %v6889
        %v6891 = vpop.f32.mrf.mxu0
        %v6892 = vpop.f32.mrf.mxu0
        %v6893 = vadd.f32 0.0, %v6892
        %v6894 = vpop.f32.mrf.mxu0
        %6895 = vdwg.mxu0
        %v6896 = vadd.f32 %v6774, %v6866
        %v6897 = vadd.f32 %v6775, %v6869
        %v6898 = vadd.f32 %v6776, %v6874
        %v6899 = vadd.f32 %v6777, %v6877
        %v6900 = vadd.f32 %v6778, %v6882
        %v6901 = vadd.f32 %v6779, %v6885
        %v6902 = vadd.f32 %v6780, %v6890
        %v6903 = vadd.f32 %v6781, %v6893
        %v6904 = vld [vmem:[%s3327] sm:$0xf]
        %v6905 = vld [vmem:[%s3327 + $0x4] sm:$0xf]
        %v6906 = vld [vmem:[%s3327 + $0x8] sm:$0xf]
        %v6907 = vld [vmem:[%s3327 + $0xc] sm:$0xf]
        %v6908 = vld [vmem:[%s3327 + $0x10] sm:$0xf]
        %v6909 = vld [vmem:[%s3327 + $0x14] sm:$0xf]
        %v6910 = vld [vmem:[%s3327 + $0x18] sm:$0xf]
        %v6911 = vld [vmem:[%s3327 + $0x1c] sm:$0xf]
        %s6912 = scalar_lea.vmem [#allocation26], 32
        %v6913 = vld [vmem:[%s6912] sm:$0xf]
        %v6914 = vld [vmem:[%s6912 + $0x4] sm:$0xf]
        %v6923 = vunpack.c.l.b16 %v6904
        %v6924 = vunpack.c.l.b16 %v6905
        %v6925 = vunpack.c.l.b16 %v6906
        %v6926 = vunpack.c.l.b16 %v6907
        %v6927 = vunpack.c.l.b16 %v6908
        %v6928 = vunpack.c.l.b16 %v6909
        %v6929 = vunpack.c.l.b16 %v6910
        %v6930 = vunpack.c.l.b16 %v6911
        %v6931 = vpack.c.b16 %v6924, %v6923
        %v6932 = vpack.c.b16 %v6926, %v6925
        %v6933 = vpack.c.b16 %v6928, %v6927
        %v6934 = vpack.c.b16 %v6930, %v6929
        %v6937 = vunpack.c.l.b16 %v6913
        %v6938 = vunpack.c.l.b16 %v6914
        %v6939 = vpack.c.b16 %v6938, %v6937
        %v6942 = vsel %vm1003, %v6931, 0
        %v6945 = vsel %vm1003, %v6932, 0
        %v6948 = vsel %vm1003, %v6933, 0
        %v6951 = vsel %vm1003, %v6934, 0
        %6953 = vmatprep.subr.bf16.mxu0 0
        %6954 = vmatpush1.bf16.msra.mxu0 0
        %6955 = vmatprep.subr.bf16.mxu0 0
        %6956 = vmatpush1.bf16.msra.mxu0 0
        %6957 = vmatprep.subr.bf16.mxu0 0
        %6958 = vmatpush1.bf16.msra.mxu0 0
        %6959 = vmatprep.subr.bf16.mxu0 0
        %6960 = vmatpush1.bf16.msra.mxu0 0
        %6961 = vmatprep.subr.bf16.mxu0 0
        %6962 = vmatpush1.bf16.msra.mxu0 0
        %6963 = vmatprep.subr.bf16.mxu0 0
        %6964 = vmatpush1.bf16.msra.mxu0 0
        %6965 = vmatprep.subr.bf16.mxu0 0
        %6966 = vmatpush1.bf16.msra.mxu0 0
        %6967 = vmatprep.subr.bf16.mxu0 0
        %6968 = vmatpush1.bf16.msra.mxu0 %v6939
        %6969 = vmatprep.subr.bf16.mxu0 0
        %6970 = vmatpush2.bf16.msra.mxu0 0
        %6971 = vmatprep.subr.bf16.mxu0 0
        %6972 = vmatpush2.bf16.msra.mxu0 0
        %6973 = vmatprep.subr.bf16.mxu0 0
        %6974 = vmatpush2.bf16.msra.mxu0 0
        %6975 = vmatprep.subr.bf16.mxu0 0
        %6976 = vmatpush2.bf16.msra.mxu0 0
        %6977 = vmatprep.subr.bf16.mxu0 0
        %6978 = vmatpush2.bf16.msra.mxu0 0
        %6979 = vmatprep.subr.bf16.mxu0 0
        %6980 = vmatpush2.bf16.msra.mxu0 0
        %6981 = vmatprep.subr.bf16.mxu0 0
        %6982 = vmatpush2.bf16.msra.mxu0 0
        %6983 = vmatprep.subr.bf16.mxu0 0
        %6984 = vmatpush2.bf16.msra.mxu0 0
        %6985 = vmatprep.mubr.bf16.mxu0 0
        %6986 = vmatmul.mubr.bf16.gmra.mxu0 %v6942
        %v6987 = vpop.f32.mrf.mxu0
        %v6988 = vadd.f32 0.0, %v6987
        %v6989 = vpop.f32.mrf.mxu0
        %v6990 = vpop.f32.mrf.mxu0
        %v6991 = vadd.f32 0.0, %v6990
        %v6992 = vpop.f32.mrf.mxu0
        %6993 = vmatprep.mubr.bf16.mxu0 0
        %6994 = vmatmul.mubr.bf16.gmra.mxu0 %v6945
        %v6995 = vpop.f32.mrf.mxu0
        %v6996 = vadd.f32 0.0, %v6995
        %v6997 = vpop.f32.mrf.mxu0
        %v6998 = vpop.f32.mrf.mxu0
        %v6999 = vadd.f32 0.0, %v6998
        %v7000 = vpop.f32.mrf.mxu0
        %7001 = vmatprep.mubr.bf16.mxu0 0
        %7002 = vmatmul.mubr.bf16.gmra.mxu0 %v6948
        %v7003 = vpop.f32.mrf.mxu0
        %v7004 = vadd.f32 0.0, %v7003
        %v7005 = vpop.f32.mrf.mxu0
        %v7006 = vpop.f32.mrf.mxu0
        %v7007 = vadd.f32 0.0, %v7006
        %v7008 = vpop.f32.mrf.mxu0
        %7009 = vmatprep.mubr.bf16.mxu0 0
        %7010 = vmatmul.mubr.bf16.gmra.mxu0 %v6951
        %v7011 = vpop.f32.mrf.mxu0
        %v7012 = vadd.f32 0.0, %v7011
        %v7013 = vpop.f32.mrf.mxu0
        %v7014 = vpop.f32.mrf.mxu0
        %v7015 = vadd.f32 0.0, %v7014
        %v7016 = vpop.f32.mrf.mxu0
        %7017 = vdwg.mxu0
        %v7018 = vadd.f32 %v6896, %v6988
        %v7019 = vadd.f32 %v6897, %v6991
        %v7020 = vadd.f32 %v6898, %v6996
        %v7021 = vadd.f32 %v6899, %v6999
        %v7022 = vadd.f32 %v6900, %v7004
        %v7023 = vadd.f32 %v6901, %v7007
        %v7024 = vadd.f32 %v6902, %v7012
        %v7025 = vadd.f32 %v6903, %v7015
        %v7026 = vld [vmem:[%s3470] sm:$0xf]
        %v7027 = vld [vmem:[%s3470 + $0x4] sm:$0xf]
        %v7028 = vld [vmem:[%s3470 + $0x8] sm:$0xf]
        %v7029 = vld [vmem:[%s3470 + $0xc] sm:$0xf]
        %v7030 = vld [vmem:[%s3470 + $0x10] sm:$0xf]
        %v7031 = vld [vmem:[%s3470 + $0x14] sm:$0xf]
        %v7032 = vld [vmem:[%s3470 + $0x18] sm:$0xf]
        %v7033 = vld [vmem:[%s3470 + $0x1c] sm:$0xf]
        %s7034 = scalar_lea.vmem [#allocation26], 40
        %v7035 = vld [vmem:[%s7034] sm:$0xf]
        %v7036 = vld [vmem:[%s7034 + $0x4] sm:$0xf]
        %v7045 = vunpack.c.l.b16 %v7026
        %v7046 = vunpack.c.l.b16 %v7027
        %v7047 = vunpack.c.l.b16 %v7028
        %v7048 = vunpack.c.l.b16 %v7029
        %v7049 = vunpack.c.l.b16 %v7030
        %v7050 = vunpack.c.l.b16 %v7031
        %v7051 = vunpack.c.l.b16 %v7032
        %v7052 = vunpack.c.l.b16 %v7033
        %v7053 = vpack.c.b16 %v7046, %v7045
        %v7054 = vpack.c.b16 %v7048, %v7047
        %v7055 = vpack.c.b16 %v7050, %v7049
        %v7056 = vpack.c.b16 %v7052, %v7051
        %v7059 = vunpack.c.l.b16 %v7035
        %v7060 = vunpack.c.l.b16 %v7036
        %v7061 = vpack.c.b16 %v7060, %v7059
        %v7064 = vsel %vm1003, %v7053, 0
        %v7067 = vsel %vm1003, %v7054, 0
        %v7070 = vsel %vm1003, %v7055, 0
        %v7073 = vsel %vm1003, %v7056, 0
        %7075 = vmatprep.subr.bf16.mxu0 0
        %7076 = vmatpush1.bf16.msra.mxu0 0
        %7077 = vmatprep.subr.bf16.mxu0 0
        %7078 = vmatpush1.bf16.msra.mxu0 0
        %7079 = vmatprep.subr.bf16.mxu0 0
        %7080 = vmatpush1.bf16.msra.mxu0 0
        %7081 = vmatprep.subr.bf16.mxu0 0
        %7082 = vmatpush1.bf16.msra.mxu0 0
        %7083 = vmatprep.subr.bf16.mxu0 0
        %7084 = vmatpush1.bf16.msra.mxu0 0
        %7085 = vmatprep.subr.bf16.mxu0 0
        %7086 = vmatpush1.bf16.msra.mxu0 0
        %7087 = vmatprep.subr.bf16.mxu0 0
        %7088 = vmatpush1.bf16.msra.mxu0 0
        %7089 = vmatprep.subr.bf16.mxu0 0
        %7090 = vmatpush1.bf16.msra.mxu0 %v7061
        %7091 = vmatprep.subr.bf16.mxu0 0
        %7092 = vmatpush2.bf16.msra.mxu0 0
        %7093 = vmatprep.subr.bf16.mxu0 0
        %7094 = vmatpush2.bf16.msra.mxu0 0
        %7095 = vmatprep.subr.bf16.mxu0 0
        %7096 = vmatpush2.bf16.msra.mxu0 0
        %7097 = vmatprep.subr.bf16.mxu0 0
        %7098 = vmatpush2.bf16.msra.mxu0 0
        %7099 = vmatprep.subr.bf16.mxu0 0
        %7100 = vmatpush2.bf16.msra.mxu0 0
        %7101 = vmatprep.subr.bf16.mxu0 0
        %7102 = vmatpush2.bf16.msra.mxu0 0
        %7103 = vmatprep.subr.bf16.mxu0 0
        %7104 = vmatpush2.bf16.msra.mxu0 0
        %7105 = vmatprep.subr.bf16.mxu0 0
        %7106 = vmatpush2.bf16.msra.mxu0 0
        %7107 = vmatprep.mubr.bf16.mxu0 0
        %7108 = vmatmul.mubr.bf16.gmra.mxu0 %v7064
        %v7109 = vpop.f32.mrf.mxu0
        %v7110 = vadd.f32 0.0, %v7109
        %v7111 = vpop.f32.mrf.mxu0
        %v7112 = vpop.f32.mrf.mxu0
        %v7113 = vadd.f32 0.0, %v7112
        %v7114 = vpop.f32.mrf.mxu0
        %7115 = vmatprep.mubr.bf16.mxu0 0
        %7116 = vmatmul.mubr.bf16.gmra.mxu0 %v7067
        %v7117 = vpop.f32.mrf.mxu0
        %v7118 = vadd.f32 0.0, %v7117
        %v7119 = vpop.f32.mrf.mxu0
        %v7120 = vpop.f32.mrf.mxu0
        %v7121 = vadd.f32 0.0, %v7120
        %v7122 = vpop.f32.mrf.mxu0
        %7123 = vmatprep.mubr.bf16.mxu0 0
        %7124 = vmatmul.mubr.bf16.gmra.mxu0 %v7070
        %v7125 = vpop.f32.mrf.mxu0
        %v7126 = vadd.f32 0.0, %v7125
        %v7127 = vpop.f32.mrf.mxu0
        %v7128 = vpop.f32.mrf.mxu0
        %v7129 = vadd.f32 0.0, %v7128
        %v7130 = vpop.f32.mrf.mxu0
        %7131 = vmatprep.mubr.bf16.mxu0 0
        %7132 = vmatmul.mubr.bf16.gmra.mxu0 %v7073
        %v7133 = vpop.f32.mrf.mxu0
        %v7134 = vadd.f32 0.0, %v7133
        %v7135 = vpop.f32.mrf.mxu0
        %v7136 = vpop.f32.mrf.mxu0
        %v7137 = vadd.f32 0.0, %v7136
        %v7138 = vpop.f32.mrf.mxu0
        %7139 = vdwg.mxu0
        %v7140 = vadd.f32 %v7018, %v7110
        %v7141 = vadd.f32 %v7019, %v7113
        %v7142 = vadd.f32 %v7020, %v7118
        %v7143 = vadd.f32 %v7021, %v7121
        %v7144 = vadd.f32 %v7022, %v7126
        %v7145 = vadd.f32 %v7023, %v7129
        %v7146 = vadd.f32 %v7024, %v7134
        %v7147 = vadd.f32 %v7025, %v7137
        %v7148 = vld [vmem:[%s3613] sm:$0xf]
        %v7149 = vld [vmem:[%s3613 + $0x4] sm:$0xf]
        %v7150 = vld [vmem:[%s3613 + $0x8] sm:$0xf]
        %v7151 = vld [vmem:[%s3613 + $0xc] sm:$0xf]
        %v7152 = vld [vmem:[%s3613 + $0x10] sm:$0xf]
        %v7153 = vld [vmem:[%s3613 + $0x14] sm:$0xf]
        %v7154 = vld [vmem:[%s3613 + $0x18] sm:$0xf]
        %v7155 = vld [vmem:[%s3613 + $0x1c] sm:$0xf]
        %s7156 = scalar_lea.vmem [#allocation26], 48
        %v7157 = vld [vmem:[%s7156] sm:$0xf]
        %v7158 = vld [vmem:[%s7156 + $0x4] sm:$0xf]
        %v7167 = vunpack.c.l.b16 %v7148
        %v7168 = vunpack.c.l.b16 %v7149
        %v7169 = vunpack.c.l.b16 %v7150
        %v7170 = vunpack.c.l.b16 %v7151
        %v7171 = vunpack.c.l.b16 %v7152
        %v7172 = vunpack.c.l.b16 %v7153
        %v7173 = vunpack.c.l.b16 %v7154
        %v7174 = vunpack.c.l.b16 %v7155
        %v7175 = vpack.c.b16 %v7168, %v7167
        %v7176 = vpack.c.b16 %v7170, %v7169
        %v7177 = vpack.c.b16 %v7172, %v7171
        %v7178 = vpack.c.b16 %v7174, %v7173
        %v7181 = vunpack.c.l.b16 %v7157
        %v7182 = vunpack.c.l.b16 %v7158
        %v7183 = vpack.c.b16 %v7182, %v7181
        %v7186 = vsel %vm1003, %v7175, 0
        %v7189 = vsel %vm1003, %v7176, 0
        %v7192 = vsel %vm1003, %v7177, 0
        %v7195 = vsel %vm1003, %v7178, 0
        %7197 = vmatprep.subr.bf16.mxu0 0
        %7198 = vmatpush1.bf16.msra.mxu0 0
        %7199 = vmatprep.subr.bf16.mxu0 0
        %7200 = vmatpush1.bf16.msra.mxu0 0
        %7201 = vmatprep.subr.bf16.mxu0 0
        %7202 = vmatpush1.bf16.msra.mxu0 0
        %7203 = vmatprep.subr.bf16.mxu0 0
        %7204 = vmatpush1.bf16.msra.mxu0 0
        %7205 = vmatprep.subr.bf16.mxu0 0
        %7206 = vmatpush1.bf16.msra.mxu0 0
        %7207 = vmatprep.subr.bf16.mxu0 0
        %7208 = vmatpush1.bf16.msra.mxu0 0
        %7209 = vmatprep.subr.bf16.mxu0 0
        %7210 = vmatpush1.bf16.msra.mxu0 0
        %7211 = vmatprep.subr.bf16.mxu0 0
        %7212 = vmatpush1.bf16.msra.mxu0 %v7183
        %7213 = vmatprep.subr.bf16.mxu0 0
        %7214 = vmatpush2.bf16.msra.mxu0 0
        %7215 = vmatprep.subr.bf16.mxu0 0
        %7216 = vmatpush2.bf16.msra.mxu0 0
        %7217 = vmatprep.subr.bf16.mxu0 0
        %7218 = vmatpush2.bf16.msra.mxu0 0
        %7219 = vmatprep.subr.bf16.mxu0 0
        %7220 = vmatpush2.bf16.msra.mxu0 0
        %7221 = vmatprep.subr.bf16.mxu0 0
        %7222 = vmatpush2.bf16.msra.mxu0 0
        %7223 = vmatprep.subr.bf16.mxu0 0
        %7224 = vmatpush2.bf16.msra.mxu0 0
        %7225 = vmatprep.subr.bf16.mxu0 0
        %7226 = vmatpush2.bf16.msra.mxu0 0
        %7227 = vmatprep.subr.bf16.mxu0 0
        %7228 = vmatpush2.bf16.msra.mxu0 0
        %7229 = vmatprep.mubr.bf16.mxu0 0
        %7230 = vmatmul.mubr.bf16.gmra.mxu0 %v7186
        %v7231 = vpop.f32.mrf.mxu0
        %v7232 = vadd.f32 0.0, %v7231
        %v7233 = vpop.f32.mrf.mxu0
        %v7234 = vpop.f32.mrf.mxu0
        %v7235 = vadd.f32 0.0, %v7234
        %v7236 = vpop.f32.mrf.mxu0
        %7237 = vmatprep.mubr.bf16.mxu0 0
        %7238 = vmatmul.mubr.bf16.gmra.mxu0 %v7189
        %v7239 = vpop.f32.mrf.mxu0
        %v7240 = vadd.f32 0.0, %v7239
        %v7241 = vpop.f32.mrf.mxu0
        %v7242 = vpop.f32.mrf.mxu0
        %v7243 = vadd.f32 0.0, %v7242
        %v7244 = vpop.f32.mrf.mxu0
        %7245 = vmatprep.mubr.bf16.mxu0 0
        %7246 = vmatmul.mubr.bf16.gmra.mxu0 %v7192
        %v7247 = vpop.f32.mrf.mxu0
        %v7248 = vadd.f32 0.0, %v7247
        %v7249 = vpop.f32.mrf.mxu0
        %v7250 = vpop.f32.mrf.mxu0
        %v7251 = vadd.f32 0.0, %v7250
        %v7252 = vpop.f32.mrf.mxu0
        %7253 = vmatprep.mubr.bf16.mxu0 0
        %7254 = vmatmul.mubr.bf16.gmra.mxu0 %v7195
        %v7255 = vpop.f32.mrf.mxu0
        %v7256 = vadd.f32 0.0, %v7255
        %v7257 = vpop.f32.mrf.mxu0
        %v7258 = vpop.f32.mrf.mxu0
        %v7259 = vadd.f32 0.0, %v7258
        %v7260 = vpop.f32.mrf.mxu0
        %7261 = vdwg.mxu0
        %v7262 = vadd.f32 %v7140, %v7232
        %v7263 = vadd.f32 %v7141, %v7235
        %v7264 = vadd.f32 %v7142, %v7240
        %v7265 = vadd.f32 %v7143, %v7243
        %v7266 = vadd.f32 %v7144, %v7248
        %v7267 = vadd.f32 %v7145, %v7251
        %v7268 = vadd.f32 %v7146, %v7256
        %v7269 = vadd.f32 %v7147, %v7259
        %v7270 = vld [vmem:[#allocation28] sm:$0x1]
        %v7272 = vlaneseq
        %v7273 = vshrl.u32 %v7272, 7
        %v7274 = vsub.s32 0, %v7273
        %v7275 = vrot.slane %v7270, %v7274
        %v7277 = vadd.f32 %v7262, %v7275
        %v7278 = vadd.f32 %v7263, %v7275
        %v7279 = vadd.f32 %v7264, %v7275
        %v7280 = vadd.f32 %v7265, %v7275
        %v7281 = vadd.f32 %v7266, %v7275
        %v7282 = vadd.f32 %v7267, %v7275
        %v7283 = vadd.f32 %v7268, %v7275
        %v7284 = vadd.f32 %v7269, %v7275
        %v7285 = vmax.f32 %v7277, 0.0
        %v7286 = vmax.f32 %v7278, 0.0
        %v7287 = vmax.f32 %v7279, 0.0
        %v7288 = vmax.f32 %v7280, 0.0
        %v7289 = vmax.f32 %v7281, 0.0
        %v7290 = vmax.f32 %v7282, 0.0
        %v7291 = vmax.f32 %v7283, 0.0
        %v7292 = vmax.f32 %v7284, 0.0
        %v7293 = vpack.c.bf16 %v7286, %v7285
        %v7294 = vpack.c.bf16 %v7288, %v7287
        %v7295 = vpack.c.bf16 %v7290, %v7289
        %v7296 = vpack.c.bf16 %v7292, %v7291
        %v7301 = vunpack.c.l.b16 %v7293
        %v7302 = vunpack.c.h.b16 %v7293
        %v7303 = vunpack.c.l.b16 %v7294
        %v7304 = vunpack.c.h.b16 %v7294
        %v7305 = vunpack.c.l.b16 %v7295
        %v7306 = vunpack.c.h.b16 %v7295
        %v7307 = vunpack.c.l.b16 %v7296
        %v7308 = vunpack.c.h.b16 %v7296
        %v7309 = vpack.c.b16 %v7301, %v7301
        %v7310 = vpack.c.b16 %v7302, %v7302
        %v7311 = vpack.c.b16 %v7303, %v7303
        %v7312 = vpack.c.b16 %v7304, %v7304
        %v7313 = vpack.c.b16 %v7305, %v7305
        %v7314 = vpack.c.b16 %v7306, %v7306
        %v7315 = vpack.c.b16 %v7307, %v7307
        %v7316 = vpack.c.b16 %v7308, %v7308
        %v7318 = vshrl.u32 %v7309, 16
        %v7320 = vrot.slane %v7318, 6
        %v7321 = vshll.u32 %v7309, 16
        %v7323 = vrot.slane %v7321, 7
        %v7324 = vor.u32 %v7320, %v7323
        %v7325 = vrot.slane %v7324, 4
        %v7327 = vshrl.u32 %v7310, 16
        %v7329 = vrot.slane %v7327, 6
        %v7330 = vshll.u32 %v7310, 16
        %v7332 = vrot.slane %v7330, 7
        %v7333 = vor.u32 %v7329, %v7332
        %v7334 = vrot.slane %v7333, 4
        %v7336 = vshrl.u32 %v7311, 16
        %v7338 = vrot.slane %v7336, 6
        %v7339 = vshll.u32 %v7311, 16
        %v7341 = vrot.slane %v7339, 7
        %v7342 = vor.u32 %v7338, %v7341
        %v7343 = vrot.slane %v7342, 4
        %v7345 = vshrl.u32 %v7312, 16
        %v7347 = vrot.slane %v7345, 6
        %v7348 = vshll.u32 %v7312, 16
        %v7350 = vrot.slane %v7348, 7
        %v7351 = vor.u32 %v7347, %v7350
        %v7352 = vrot.slane %v7351, 4
        %v7354 = vshrl.u32 %v7313, 16
        %v7356 = vrot.slane %v7354, 6
        %v7357 = vshll.u32 %v7313, 16
        %v7359 = vrot.slane %v7357, 7
        %v7360 = vor.u32 %v7356, %v7359
        %v7361 = vrot.slane %v7360, 4
        %v7363 = vshrl.u32 %v7314, 16
        %v7365 = vrot.slane %v7363, 6
        %v7366 = vshll.u32 %v7314, 16
        %v7368 = vrot.slane %v7366, 7
        %v7369 = vor.u32 %v7365, %v7368
        %v7370 = vrot.slane %v7369, 4
        %v7372 = vshrl.u32 %v7315, 16
        %v7374 = vrot.slane %v7372, 6
        %v7375 = vshll.u32 %v7315, 16
        %v7377 = vrot.slane %v7375, 7
        %v7378 = vor.u32 %v7374, %v7377
        %v7379 = vrot.slane %v7378, 4
        %v7381 = vshrl.u32 %v7316, 16
        %v7383 = vrot.slane %v7381, 6
        %v7384 = vshll.u32 %v7316, 16
        %v7386 = vrot.slane %v7384, 7
        %v7387 = vor.u32 %v7383, %v7386
        %v7388 = vrot.slane %v7387, 4
        %v7405 = vld [vmem:[#allocation2] sm:$0xe]
        %v7406 = vsel %vm1324, %v7324, %v7405
        %7407 = vst [vmem:[#allocation2] sm:$0xe] %v7406
        %v7408 = vld [vmem:[#allocation2 + $0x4] sm:$0x3]
        %v7409 = vsel %vm1330, %v7325, %v7408
        %7410 = vst [vmem:[#allocation2 + $0x4] sm:$0x3] %v7409
        %v7411 = vld [vmem:[#allocation2 + $0x8] sm:$0xe]
        %v7412 = vsel %vm1324, %v7333, %v7411
        %7413 = vst [vmem:[#allocation2 + $0x8] sm:$0xe] %v7412
        %v7414 = vld [vmem:[#allocation2 + $0xc] sm:$0x3]
        %v7415 = vsel %vm1330, %v7334, %v7414
        %7416 = vst [vmem:[#allocation2 + $0xc] sm:$0x3] %v7415
        %v7417 = vld [vmem:[#allocation2 + $0x10] sm:$0xe]
        %v7418 = vsel %vm1324, %v7342, %v7417
        %7419 = vst [vmem:[#allocation2 + $0x10] sm:$0xe] %v7418
        %v7420 = vld [vmem:[#allocation2 + $0x14] sm:$0x3]
        %v7421 = vsel %vm1330, %v7343, %v7420
        %7422 = vst [vmem:[#allocation2 + $0x14] sm:$0x3] %v7421
        %v7423 = vld [vmem:[#allocation2 + $0x18] sm:$0xe]
        %v7424 = vsel %vm1324, %v7351, %v7423
        %7425 = vst [vmem:[#allocation2 + $0x18] sm:$0xe] %v7424
        %v7426 = vld [vmem:[#allocation2 + $0x1c] sm:$0x3]
        %v7427 = vsel %vm1330, %v7352, %v7426
        %7428 = vst [vmem:[#allocation2 + $0x1c] sm:$0x3] %v7427
        %v7429 = vld [vmem:[#allocation2 + $0x20] sm:$0xe]
        %v7430 = vsel %vm1324, %v7360, %v7429
        %7431 = vst [vmem:[#allocation2 + $0x20] sm:$0xe] %v7430
        %v7432 = vld [vmem:[#allocation2 + $0x24] sm:$0x3]
        %v7433 = vsel %vm1330, %v7361, %v7432
        %7434 = vst [vmem:[#allocation2 + $0x24] sm:$0x3] %v7433
        %v7435 = vld [vmem:[#allocation2 + $0x28] sm:$0xe]
        %v7436 = vsel %vm1324, %v7369, %v7435
        %7437 = vst [vmem:[#allocation2 + $0x28] sm:$0xe] %v7436
        %v7438 = vld [vmem:[#allocation2 + $0x2c] sm:$0x3]
        %v7439 = vsel %vm1330, %v7370, %v7438
        %7440 = vst [vmem:[#allocation2 + $0x2c] sm:$0x3] %v7439
        %v7441 = vld [vmem:[#allocation2 + $0x30] sm:$0xe]
        %v7442 = vsel %vm1324, %v7378, %v7441
        %7443 = vst [vmem:[#allocation2 + $0x30] sm:$0xe] %v7442
        %v7444 = vld [vmem:[#allocation2 + $0x34] sm:$0x3]
        %v7445 = vsel %vm1330, %v7379, %v7444
        %7446 = vst [vmem:[#allocation2 + $0x34] sm:$0x3] %v7445
        %v7447 = vld [vmem:[#allocation2 + $0x38] sm:$0xe]
        %v7448 = vsel %vm1324, %v7387, %v7447
        %7449 = vst [vmem:[#allocation2 + $0x38] sm:$0xe] %v7448
        %v7450 = vld [vmem:[#allocation2 + $0x3c] sm:$0x3]
        %v7451 = vsel %vm1330, %v7388, %v7450
        %7452 = vst [vmem:[#allocation2 + $0x3c] sm:$0x3] %v7451
        %v7453 = vld [vmem:[#allocation2] sm:$0xf]
        %v7454 = vld [vmem:[#allocation2 + $0x8] sm:$0xf]
        %v7455 = vld [vmem:[#allocation2 + $0x10] sm:$0xf]
        %v7456 = vld [vmem:[#allocation2 + $0x18] sm:$0xf]
        %v7457 = vld [vmem:[#allocation2 + $0x20] sm:$0xf]
        %v7458 = vld [vmem:[#allocation2 + $0x28] sm:$0xf]
        %v7459 = vld [vmem:[#allocation2 + $0x30] sm:$0xf]
        %v7460 = vld [vmem:[#allocation2 + $0x38] sm:$0xf]
        %v7461 = vld [vmem:[%s17] sm:$0xff]
        %v7462 = vld [vmem:[%s17 + $0x8] sm:$0xff]
        %v7463 = vld [vmem:[#allocation2 + $0x4] sm:$0x1]
        %v7464 = vld [vmem:[#allocation2 + $0xc] sm:$0x1]
        %v7465 = vld [vmem:[#allocation2 + $0x14] sm:$0x1]
        %v7466 = vld [vmem:[#allocation2 + $0x1c] sm:$0x1]
        %v7467 = vld [vmem:[#allocation2 + $0x24] sm:$0x1]
        %v7468 = vld [vmem:[#allocation2 + $0x2c] sm:$0x1]
        %v7469 = vld [vmem:[#allocation2 + $0x34] sm:$0x1]
        %v7470 = vld [vmem:[#allocation2 + $0x3c] sm:$0x1]
        %v7472 = vshrl.u32 %v7453, 16
        %v7474 = vrot.slane %v7472, 4
        %v7475 = vshll.u32 %v7453, 16
        %v7477 = vrot.slane %v7475, 5
        %v7478 = vor.u32 %v7474, %v7477
        %v7479 = vrot.slane %v7478, 4
        %v7481 = vshll.u32 %v7463, 16
        %v7483 = vrot.slane %v7481, 5
        %v7484 = vsel %vm1396, %v7479, %v7483
        %v7486 = vshrl.u32 %v7454, 16
        %v7488 = vrot.slane %v7486, 4
        %v7489 = vshll.u32 %v7454, 16
        %v7491 = vrot.slane %v7489, 5
        %v7492 = vor.u32 %v7488, %v7491
        %v7493 = vrot.slane %v7492, 4
        %v7495 = vshll.u32 %v7464, 16
        %v7497 = vrot.slane %v7495, 5
        %v7498 = vsel %vm1396, %v7493, %v7497
        %v7500 = vshrl.u32 %v7455, 16
        %v7502 = vrot.slane %v7500, 4
        %v7503 = vshll.u32 %v7455, 16
        %v7505 = vrot.slane %v7503, 5
        %v7506 = vor.u32 %v7502, %v7505
        %v7507 = vrot.slane %v7506, 4
        %v7509 = vshll.u32 %v7465, 16
        %v7511 = vrot.slane %v7509, 5
        %v7512 = vsel %vm1396, %v7507, %v7511
        %v7514 = vshrl.u32 %v7456, 16
        %v7516 = vrot.slane %v7514, 4
        %v7517 = vshll.u32 %v7456, 16
        %v7519 = vrot.slane %v7517, 5
        %v7520 = vor.u32 %v7516, %v7519
        %v7521 = vrot.slane %v7520, 4
        %v7523 = vshll.u32 %v7466, 16
        %v7525 = vrot.slane %v7523, 5
        %v7526 = vsel %vm1396, %v7521, %v7525
        %v7528 = vshrl.u32 %v7457, 16
        %v7530 = vrot.slane %v7528, 4
        %v7531 = vshll.u32 %v7457, 16
        %v7533 = vrot.slane %v7531, 5
        %v7534 = vor.u32 %v7530, %v7533
        %v7535 = vrot.slane %v7534, 4
        %v7537 = vshll.u32 %v7467, 16
        %v7539 = vrot.slane %v7537, 5
        %v7540 = vsel %vm1396, %v7535, %v7539
        %v7542 = vshrl.u32 %v7458, 16
        %v7544 = vrot.slane %v7542, 4
        %v7545 = vshll.u32 %v7458, 16
        %v7547 = vrot.slane %v7545, 5
        %v7548 = vor.u32 %v7544, %v7547
        %v7549 = vrot.slane %v7548, 4
        %v7551 = vshll.u32 %v7468, 16
        %v7553 = vrot.slane %v7551, 5
        %v7554 = vsel %vm1396, %v7549, %v7553
        %v7556 = vshrl.u32 %v7459, 16
        %v7558 = vrot.slane %v7556, 4
        %v7559 = vshll.u32 %v7459, 16
        %v7561 = vrot.slane %v7559, 5
        %v7562 = vor.u32 %v7558, %v7561
        %v7563 = vrot.slane %v7562, 4
        %v7565 = vshll.u32 %v7469, 16
        %v7567 = vrot.slane %v7565, 5
        %v7568 = vsel %vm1396, %v7563, %v7567
        %v7570 = vshrl.u32 %v7460, 16
        %v7572 = vrot.slane %v7570, 4
        %v7573 = vshll.u32 %v7460, 16
        %v7575 = vrot.slane %v7573, 5
        %v7576 = vor.u32 %v7572, %v7575
        %v7577 = vrot.slane %v7576, 4
        %v7579 = vshll.u32 %v7470, 16
        %v7581 = vrot.slane %v7579, 5
        %v7582 = vsel %vm1396, %v7577, %v7581
        %s7583 = scalar_lea.vmem %s17, 16
        %v7584 = vld [vmem:[%s7583] sm:$0xff]
        %v7585 = vld [vmem:[%s7583 + $0x8] sm:$0xff]
        %v7586 = vunpack.c.l.b16 %v7484
        %v7587 = vunpack.c.l.b16 %v7498
        %v7588 = vunpack.c.l.b16 %v7512
        %v7589 = vunpack.c.l.b16 %v7526
        %v7590 = vunpack.c.l.b16 %v7540
        %v7591 = vunpack.c.l.b16 %v7554
        %v7592 = vunpack.c.l.b16 %v7568
        %v7593 = vunpack.c.l.b16 %v7582
        %v7594 = vpack.c.b16 %v7587, %v7586
        %v7595 = vpack.c.b16 %v7589, %v7588
        %v7596 = vpack.c.b16 %v7591, %v7590
        %v7597 = vpack.c.b16 %v7593, %v7592
        %v7600 = vunpack.c.l.b16 %v7584
        %v7601 = vunpack.c.h.b16 %v7584
        %v7602 = vunpack.c.l.b16 %v7585
        %v7603 = vunpack.c.h.b16 %v7585
        %v7604 = vpack.c.b16 %v7602, %v7600
        %v7605 = vpack.c.b16 %v7603, %v7601
        %v7609 = vsel %vm1003, %v7594, 0
        %v7612 = vsel %vm1003, %v7595, 0
        %v7615 = vsel %vm1003, %v7596, 0
        %v7618 = vsel %vm1003, %v7597, 0
        %7620 = vmatprep.subr.bf16.mxu0 0
        %7621 = vmatpush1.bf16.msra.mxu0 0
        %7622 = vmatprep.subr.bf16.mxu0 0
        %7623 = vmatpush1.bf16.msra.mxu0 0
        %7624 = vmatprep.subr.bf16.mxu0 0
        %7625 = vmatpush1.bf16.msra.mxu0 0
        %7626 = vmatprep.subr.bf16.mxu0 0
        %7627 = vmatpush1.bf16.msra.mxu0 0
        %7628 = vmatprep.subr.bf16.mxu0 0
        %7629 = vmatpush1.bf16.msra.mxu0 0
        %7630 = vmatprep.subr.bf16.mxu0 0
        %7631 = vmatpush1.bf16.msra.mxu0 0
        %7632 = vmatprep.subr.bf16.mxu0 0
        %7633 = vmatpush1.bf16.msra.mxu0 0
        %7634 = vmatprep.subr.bf16.mxu0 %v7605
        %7635 = vmatpush1.bf16.msra.mxu0 %v7604
        %7636 = vmatprep.subr.bf16.mxu0 0
        %7637 = vmatpush2.bf16.msra.mxu0 0
        %7638 = vmatprep.subr.bf16.mxu0 0
        %7639 = vmatpush2.bf16.msra.mxu0 0
        %7640 = vmatprep.subr.bf16.mxu0 0
        %7641 = vmatpush2.bf16.msra.mxu0 0
        %7642 = vmatprep.subr.bf16.mxu0 0
        %7643 = vmatpush2.bf16.msra.mxu0 0
        %7644 = vmatprep.subr.bf16.mxu0 0
        %7645 = vmatpush2.bf16.msra.mxu0 0
        %7646 = vmatprep.subr.bf16.mxu0 0
        %7647 = vmatpush2.bf16.msra.mxu0 0
        %7648 = vmatprep.subr.bf16.mxu0 0
        %7649 = vmatpush2.bf16.msra.mxu0 0
        %7650 = vmatprep.subr.bf16.mxu0 0
        %7651 = vmatpush2.bf16.msra.mxu0 0
        %7652 = vmatprep.mubr.bf16.mxu0 0
        %7653 = vmatmul.mubr.bf16.gmra.mxu0 %v7609
        %v7654 = vpop.f32.mrf.mxu0
        %v7655 = vadd.f32 0.0, %v7654
        %v7656 = vpop.f32.mrf.mxu0
        %v7657 = vadd.f32 0.0, %v7656
        %v7658 = vpop.f32.mrf.mxu0
        %v7659 = vadd.f32 0.0, %v7658
        %v7660 = vpop.f32.mrf.mxu0
        %v7661 = vadd.f32 0.0, %v7660
        %7662 = vmatprep.mubr.bf16.mxu0 0
        %7663 = vmatmul.mubr.bf16.gmra.mxu0 %v7612
        %v7664 = vpop.f32.mrf.mxu0
        %v7665 = vadd.f32 0.0, %v7664
        %v7666 = vpop.f32.mrf.mxu0
        %v7667 = vadd.f32 0.0, %v7666
        %v7668 = vpop.f32.mrf.mxu0
        %v7669 = vadd.f32 0.0, %v7668
        %v7670 = vpop.f32.mrf.mxu0
        %v7671 = vadd.f32 0.0, %v7670
        %7672 = vmatprep.mubr.bf16.mxu0 0
        %7673 = vmatmul.mubr.bf16.gmra.mxu0 %v7615
        %v7674 = vpop.f32.mrf.mxu0
        %v7675 = vadd.f32 0.0, %v7674
        %v7676 = vpop.f32.mrf.mxu0
        %v7677 = vadd.f32 0.0, %v7676
        %v7678 = vpop.f32.mrf.mxu0
        %v7679 = vadd.f32 0.0, %v7678
        %v7680 = vpop.f32.mrf.mxu0
        %v7681 = vadd.f32 0.0, %v7680
        %7682 = vmatprep.mubr.bf16.mxu0 0
        %7683 = vmatmul.mubr.bf16.gmra.mxu0 %v7618
        %v7684 = vpop.f32.mrf.mxu0
        %v7685 = vadd.f32 0.0, %v7684
        %v7686 = vpop.f32.mrf.mxu0
        %v7687 = vadd.f32 0.0, %v7686
        %v7688 = vpop.f32.mrf.mxu0
        %v7689 = vadd.f32 0.0, %v7688
        %v7690 = vpop.f32.mrf.mxu0
        %v7691 = vadd.f32 0.0, %v7690
        %7692 = vdwg.mxu0
        %v7701 = vunpack.c.l.b16 %v7453
        %v7702 = vunpack.c.l.b16 %v7454
        %v7703 = vunpack.c.l.b16 %v7455
        %v7704 = vunpack.c.l.b16 %v7456
        %v7705 = vunpack.c.l.b16 %v7457
        %v7706 = vunpack.c.l.b16 %v7458
        %v7707 = vunpack.c.l.b16 %v7459
        %v7708 = vunpack.c.l.b16 %v7460
        %v7709 = vpack.c.b16 %v7702, %v7701
        %v7710 = vpack.c.b16 %v7704, %v7703
        %v7711 = vpack.c.b16 %v7706, %v7705
        %v7712 = vpack.c.b16 %v7708, %v7707
        %v7715 = vunpack.c.l.b16 %v7461
        %v7716 = vunpack.c.h.b16 %v7461
        %v7717 = vunpack.c.l.b16 %v7462
        %v7718 = vunpack.c.h.b16 %v7462
        %v7719 = vpack.c.b16 %v7717, %v7715
        %v7720 = vpack.c.b16 %v7718, %v7716
        %v7724 = vsel %vm1003, %v7709, 0
        %v7727 = vsel %vm1003, %v7710, 0
        %v7730 = vsel %vm1003, %v7711, 0
        %v7733 = vsel %vm1003, %v7712, 0
        %7735 = vmatprep.subr.bf16.mxu0 0
        %7736 = vmatpush1.bf16.msra.mxu0 0
        %7737 = vmatprep.subr.bf16.mxu0 0
        %7738 = vmatpush1.bf16.msra.mxu0 0
        %7739 = vmatprep.subr.bf16.mxu0 0
        %7740 = vmatpush1.bf16.msra.mxu0 0
        %7741 = vmatprep.subr.bf16.mxu0 0
        %7742 = vmatpush1.bf16.msra.mxu0 0
        %7743 = vmatprep.subr.bf16.mxu0 0
        %7744 = vmatpush1.bf16.msra.mxu0 0
        %7745 = vmatprep.subr.bf16.mxu0 0
        %7746 = vmatpush1.bf16.msra.mxu0 0
        %7747 = vmatprep.subr.bf16.mxu0 0
        %7748 = vmatpush1.bf16.msra.mxu0 0
        %7749 = vmatprep.subr.bf16.mxu0 %v7720
        %7750 = vmatpush1.bf16.msra.mxu0 %v7719
        %7751 = vmatprep.subr.bf16.mxu0 0
        %7752 = vmatpush2.bf16.msra.mxu0 0
        %7753 = vmatprep.subr.bf16.mxu0 0
        %7754 = vmatpush2.bf16.msra.mxu0 0
        %7755 = vmatprep.subr.bf16.mxu0 0
        %7756 = vmatpush2.bf16.msra.mxu0 0
        %7757 = vmatprep.subr.bf16.mxu0 0
        %7758 = vmatpush2.bf16.msra.mxu0 0
        %7759 = vmatprep.subr.bf16.mxu0 0
        %7760 = vmatpush2.bf16.msra.mxu0 0
        %7761 = vmatprep.subr.bf16.mxu0 0
        %7762 = vmatpush2.bf16.msra.mxu0 0
        %7763 = vmatprep.subr.bf16.mxu0 0
        %7764 = vmatpush2.bf16.msra.mxu0 0
        %7765 = vmatprep.subr.bf16.mxu0 0
        %7766 = vmatpush2.bf16.msra.mxu0 0
        %7767 = vmatprep.mubr.bf16.mxu0 0
        %7768 = vmatmul.mubr.bf16.gmra.mxu0 %v7724
        %v7769 = vpop.f32.mrf.mxu0
        %v7770 = vadd.f32 %v7655, %v7769
        %v7771 = vpop.f32.mrf.mxu0
        %v7772 = vadd.f32 %v7657, %v7771
        %v7773 = vpop.f32.mrf.mxu0
        %v7774 = vadd.f32 %v7659, %v7773
        %v7775 = vpop.f32.mrf.mxu0
        %v7776 = vadd.f32 %v7661, %v7775
        %7777 = vmatprep.mubr.bf16.mxu0 0
        %7778 = vmatmul.mubr.bf16.gmra.mxu0 %v7727
        %v7779 = vpop.f32.mrf.mxu0
        %v7780 = vadd.f32 %v7665, %v7779
        %v7781 = vpop.f32.mrf.mxu0
        %v7782 = vadd.f32 %v7667, %v7781
        %v7783 = vpop.f32.mrf.mxu0
        %v7784 = vadd.f32 %v7669, %v7783
        %v7785 = vpop.f32.mrf.mxu0
        %v7786 = vadd.f32 %v7671, %v7785
        %7787 = vmatprep.mubr.bf16.mxu0 0
        %7788 = vmatmul.mubr.bf16.gmra.mxu0 %v7730
        %v7789 = vpop.f32.mrf.mxu0
        %v7790 = vadd.f32 %v7675, %v7789
        %v7791 = vpop.f32.mrf.mxu0
        %v7792 = vadd.f32 %v7677, %v7791
        %v7793 = vpop.f32.mrf.mxu0
        %v7794 = vadd.f32 %v7679, %v7793
        %v7795 = vpop.f32.mrf.mxu0
        %v7796 = vadd.f32 %v7681, %v7795
        %7797 = vmatprep.mubr.bf16.mxu0 0
        %7798 = vmatmul.mubr.bf16.gmra.mxu0 %v7733
        %v7799 = vpop.f32.mrf.mxu0
        %v7800 = vadd.f32 %v7685, %v7799
        %v7801 = vpop.f32.mrf.mxu0
        %v7802 = vadd.f32 %v7687, %v7801
        %v7803 = vpop.f32.mrf.mxu0
        %v7804 = vadd.f32 %v7689, %v7803
        %v7805 = vpop.f32.mrf.mxu0
        %v7806 = vadd.f32 %v7691, %v7805
        %7807 = vdwg.mxu0
        %v7808 = vld [vmem:[#allocation2] sm:$0xe]
        %v7809 = vld [vmem:[#allocation2 + $0x8] sm:$0xe]
        %v7810 = vld [vmem:[#allocation2 + $0x10] sm:$0xe]
        %v7811 = vld [vmem:[#allocation2 + $0x18] sm:$0xe]
        %v7812 = vld [vmem:[#allocation2 + $0x20] sm:$0xe]
        %v7813 = vld [vmem:[#allocation2 + $0x28] sm:$0xe]
        %v7814 = vld [vmem:[#allocation2 + $0x30] sm:$0xe]
        %v7815 = vld [vmem:[#allocation2 + $0x38] sm:$0xe]
        %v7832 = vrot.slane %v7808, 5
        %v7833 = vrot.slane %v7832, 4
        %v7834 = vrot.slane %v7463, 5
        %v7835 = vsel %vm1736, %v7833, %v7834
        %v7836 = vrot.slane %v7809, 5
        %v7837 = vrot.slane %v7836, 4
        %v7838 = vrot.slane %v7464, 5
        %v7839 = vsel %vm1736, %v7837, %v7838
        %v7840 = vrot.slane %v7810, 5
        %v7841 = vrot.slane %v7840, 4
        %v7842 = vrot.slane %v7465, 5
        %v7843 = vsel %vm1736, %v7841, %v7842
        %v7844 = vrot.slane %v7811, 5
        %v7845 = vrot.slane %v7844, 4
        %v7846 = vrot.slane %v7466, 5
        %v7847 = vsel %vm1736, %v7845, %v7846
        %v7848 = vrot.slane %v7812, 5
        %v7849 = vrot.slane %v7848, 4
        %v7850 = vrot.slane %v7467, 5
        %v7851 = vsel %vm1736, %v7849, %v7850
        %v7852 = vrot.slane %v7813, 5
        %v7853 = vrot.slane %v7852, 4
        %v7854 = vrot.slane %v7468, 5
        %v7855 = vsel %vm1736, %v7853, %v7854
        %v7856 = vrot.slane %v7814, 5
        %v7857 = vrot.slane %v7856, 4
        %v7858 = vrot.slane %v7469, 5
        %v7859 = vsel %vm1736, %v7857, %v7858
        %v7860 = vrot.slane %v7815, 5
        %v7861 = vrot.slane %v7860, 4
        %v7862 = vrot.slane %v7470, 5
        %v7863 = vsel %vm1736, %v7861, %v7862
        %s7864 = scalar_lea.vmem %s17, 32
        %v7865 = vld [vmem:[%s7864] sm:$0xff]
        %v7866 = vld [vmem:[%s7864 + $0x8] sm:$0xff]
        %v7867 = vunpack.c.l.b16 %v7835
        %v7868 = vunpack.c.l.b16 %v7839
        %v7869 = vunpack.c.l.b16 %v7843
        %v7870 = vunpack.c.l.b16 %v7847
        %v7871 = vunpack.c.l.b16 %v7851
        %v7872 = vunpack.c.l.b16 %v7855
        %v7873 = vunpack.c.l.b16 %v7859
        %v7874 = vunpack.c.l.b16 %v7863
        %v7875 = vpack.c.b16 %v7868, %v7867
        %v7876 = vpack.c.b16 %v7870, %v7869
        %v7877 = vpack.c.b16 %v7872, %v7871
        %v7878 = vpack.c.b16 %v7874, %v7873
        %v7881 = vunpack.c.l.b16 %v7865
        %v7882 = vunpack.c.h.b16 %v7865
        %v7883 = vunpack.c.l.b16 %v7866
        %v7884 = vunpack.c.h.b16 %v7866
        %v7885 = vpack.c.b16 %v7883, %v7881
        %v7886 = vpack.c.b16 %v7884, %v7882
        %v7890 = vsel %vm1003, %v7875, 0
        %v7893 = vsel %vm1003, %v7876, 0
        %v7896 = vsel %vm1003, %v7877, 0
        %v7899 = vsel %vm1003, %v7878, 0
        %7901 = vmatprep.subr.bf16.mxu0 0
        %7902 = vmatpush1.bf16.msra.mxu0 0
        %7903 = vmatprep.subr.bf16.mxu0 0
        %7904 = vmatpush1.bf16.msra.mxu0 0
        %7905 = vmatprep.subr.bf16.mxu0 0
        %7906 = vmatpush1.bf16.msra.mxu0 0
        %7907 = vmatprep.subr.bf16.mxu0 0
        %7908 = vmatpush1.bf16.msra.mxu0 0
        %7909 = vmatprep.subr.bf16.mxu0 0
        %7910 = vmatpush1.bf16.msra.mxu0 0
        %7911 = vmatprep.subr.bf16.mxu0 0
        %7912 = vmatpush1.bf16.msra.mxu0 0
        %7913 = vmatprep.subr.bf16.mxu0 0
        %7914 = vmatpush1.bf16.msra.mxu0 0
        %7915 = vmatprep.subr.bf16.mxu0 %v7886
        %7916 = vmatpush1.bf16.msra.mxu0 %v7885
        %7917 = vmatprep.subr.bf16.mxu0 0
        %7918 = vmatpush2.bf16.msra.mxu0 0
        %7919 = vmatprep.subr.bf16.mxu0 0
        %7920 = vmatpush2.bf16.msra.mxu0 0
        %7921 = vmatprep.subr.bf16.mxu0 0
        %7922 = vmatpush2.bf16.msra.mxu0 0
        %7923 = vmatprep.subr.bf16.mxu0 0
        %7924 = vmatpush2.bf16.msra.mxu0 0
        %7925 = vmatprep.subr.bf16.mxu0 0
        %7926 = vmatpush2.bf16.msra.mxu0 0
        %7927 = vmatprep.subr.bf16.mxu0 0
        %7928 = vmatpush2.bf16.msra.mxu0 0
        %7929 = vmatprep.subr.bf16.mxu0 0
        %7930 = vmatpush2.bf16.msra.mxu0 0
        %7931 = vmatprep.subr.bf16.mxu0 0
        %7932 = vmatpush2.bf16.msra.mxu0 0
        %7933 = vmatprep.mubr.bf16.mxu0 0
        %7934 = vmatmul.mubr.bf16.gmra.mxu0 %v7890
        %v7935 = vpop.f32.mrf.mxu0
        %v7936 = vadd.f32 0.0, %v7935
        %v7937 = vpop.f32.mrf.mxu0
        %v7938 = vadd.f32 0.0, %v7937
        %v7939 = vpop.f32.mrf.mxu0
        %v7940 = vadd.f32 0.0, %v7939
        %v7941 = vpop.f32.mrf.mxu0
        %v7942 = vadd.f32 0.0, %v7941
        %7943 = vmatprep.mubr.bf16.mxu0 0
        %7944 = vmatmul.mubr.bf16.gmra.mxu0 %v7893
        %v7945 = vpop.f32.mrf.mxu0
        %v7946 = vadd.f32 0.0, %v7945
        %v7947 = vpop.f32.mrf.mxu0
        %v7948 = vadd.f32 0.0, %v7947
        %v7949 = vpop.f32.mrf.mxu0
        %v7950 = vadd.f32 0.0, %v7949
        %v7951 = vpop.f32.mrf.mxu0
        %v7952 = vadd.f32 0.0, %v7951
        %7953 = vmatprep.mubr.bf16.mxu0 0
        %7954 = vmatmul.mubr.bf16.gmra.mxu0 %v7896
        %v7955 = vpop.f32.mrf.mxu0
        %v7956 = vadd.f32 0.0, %v7955
        %v7957 = vpop.f32.mrf.mxu0
        %v7958 = vadd.f32 0.0, %v7957
        %v7959 = vpop.f32.mrf.mxu0
        %v7960 = vadd.f32 0.0, %v7959
        %v7961 = vpop.f32.mrf.mxu0
        %v7962 = vadd.f32 0.0, %v7961
        %7963 = vmatprep.mubr.bf16.mxu0 0
        %7964 = vmatmul.mubr.bf16.gmra.mxu0 %v7899
        %v7965 = vpop.f32.mrf.mxu0
        %v7966 = vadd.f32 0.0, %v7965
        %v7967 = vpop.f32.mrf.mxu0
        %v7968 = vadd.f32 0.0, %v7967
        %v7969 = vpop.f32.mrf.mxu0
        %v7970 = vadd.f32 0.0, %v7969
        %v7971 = vpop.f32.mrf.mxu0
        %v7972 = vadd.f32 0.0, %v7971
        %7973 = vdwg.mxu0
        %v7974 = vadd.f32 %v7770, %v7936
        %v7975 = vadd.f32 %v7772, %v7938
        %v7976 = vadd.f32 %v7774, %v7940
        %v7977 = vadd.f32 %v7776, %v7942
        %v7978 = vadd.f32 %v7780, %v7946
        %v7979 = vadd.f32 %v7782, %v7948
        %v7980 = vadd.f32 %v7784, %v7950
        %v7981 = vadd.f32 %v7786, %v7952
        %v7982 = vadd.f32 %v7790, %v7956
        %v7983 = vadd.f32 %v7792, %v7958
        %v7984 = vadd.f32 %v7794, %v7960
        %v7985 = vadd.f32 %v7796, %v7962
        %v7986 = vadd.f32 %v7800, %v7966
        %v7987 = vadd.f32 %v7802, %v7968
        %v7988 = vadd.f32 %v7804, %v7970
        %v7989 = vadd.f32 %v7806, %v7972
        %v7990 = vld [vmem:[#allocation2 + $0x4] sm:$0x3]
        %v7991 = vld [vmem:[#allocation2 + $0xc] sm:$0x3]
        %v7992 = vld [vmem:[#allocation2 + $0x14] sm:$0x3]
        %v7993 = vld [vmem:[#allocation2 + $0x1c] sm:$0x3]
        %v7994 = vld [vmem:[#allocation2 + $0x24] sm:$0x3]
        %v7995 = vld [vmem:[#allocation2 + $0x2c] sm:$0x3]
        %v7996 = vld [vmem:[#allocation2 + $0x34] sm:$0x3]
        %v7997 = vld [vmem:[#allocation2 + $0x3c] sm:$0x3]
        %v7999 = vshrl.u32 %v7808, 16
        %v8001 = vrot.slane %v7999, 5
        %v8002 = vshll.u32 %v7808, 16
        %v8004 = vrot.slane %v8002, 6
        %v8005 = vor.u32 %v8001, %v8004
        %v8006 = vrot.slane %v8005, 4
        %v8008 = vshrl.u32 %v7990, 16
        %v8010 = vrot.slane %v8008, 5
        %v8011 = vshll.u32 %v7990, 16
        %v8013 = vrot.slane %v8011, 6
        %v8014 = vor.u32 %v8010, %v8013
        %v8015 = vsel %vm1885, %v8006, %v8014
        %v8017 = vshrl.u32 %v7809, 16
        %v8019 = vrot.slane %v8017, 5
        %v8020 = vshll.u32 %v7809, 16
        %v8022 = vrot.slane %v8020, 6
        %v8023 = vor.u32 %v8019, %v8022
        %v8024 = vrot.slane %v8023, 4
        %v8026 = vshrl.u32 %v7991, 16
        %v8028 = vrot.slane %v8026, 5
        %v8029 = vshll.u32 %v7991, 16
        %v8031 = vrot.slane %v8029, 6
        %v8032 = vor.u32 %v8028, %v8031
        %v8033 = vsel %vm1885, %v8024, %v8032
        %v8035 = vshrl.u32 %v7810, 16
        %v8037 = vrot.slane %v8035, 5
        %v8038 = vshll.u32 %v7810, 16
        %v8040 = vrot.slane %v8038, 6
        %v8041 = vor.u32 %v8037, %v8040
        %v8042 = vrot.slane %v8041, 4
        %v8044 = vshrl.u32 %v7992, 16
        %v8046 = vrot.slane %v8044, 5
        %v8047 = vshll.u32 %v7992, 16
        %v8049 = vrot.slane %v8047, 6
        %v8050 = vor.u32 %v8046, %v8049
        %v8051 = vsel %vm1885, %v8042, %v8050
        %v8053 = vshrl.u32 %v7811, 16
        %v8055 = vrot.slane %v8053, 5
        %v8056 = vshll.u32 %v7811, 16
        %v8058 = vrot.slane %v8056, 6
        %v8059 = vor.u32 %v8055, %v8058
        %v8060 = vrot.slane %v8059, 4
        %v8062 = vshrl.u32 %v7993, 16
        %v8064 = vrot.slane %v8062, 5
        %v8065 = vshll.u32 %v7993, 16
        %v8067 = vrot.slane %v8065, 6
        %v8068 = vor.u32 %v8064, %v8067
        %v8069 = vsel %vm1885, %v8060, %v8068
        %v8071 = vshrl.u32 %v7812, 16
        %v8073 = vrot.slane %v8071, 5
        %v8074 = vshll.u32 %v7812, 16
        %v8076 = vrot.slane %v8074, 6
        %v8077 = vor.u32 %v8073, %v8076
        %v8078 = vrot.slane %v8077, 4
        %v8080 = vshrl.u32 %v7994, 16
        %v8082 = vrot.slane %v8080, 5
        %v8083 = vshll.u32 %v7994, 16
        %v8085 = vrot.slane %v8083, 6
        %v8086 = vor.u32 %v8082, %v8085
        %v8087 = vsel %vm1885, %v8078, %v8086
        %v8089 = vshrl.u32 %v7813, 16
        %v8091 = vrot.slane %v8089, 5
        %v8092 = vshll.u32 %v7813, 16
        %v8094 = vrot.slane %v8092, 6
        %v8095 = vor.u32 %v8091, %v8094
        %v8096 = vrot.slane %v8095, 4
        %v8098 = vshrl.u32 %v7995, 16
        %v8100 = vrot.slane %v8098, 5
        %v8101 = vshll.u32 %v7995, 16
        %v8103 = vrot.slane %v8101, 6
        %v8104 = vor.u32 %v8100, %v8103
        %v8105 = vsel %vm1885, %v8096, %v8104
        %v8107 = vshrl.u32 %v7814, 16
        %v8109 = vrot.slane %v8107, 5
        %v8110 = vshll.u32 %v7814, 16
        %v8112 = vrot.slane %v8110, 6
        %v8113 = vor.u32 %v8109, %v8112
        %v8114 = vrot.slane %v8113, 4
        %v8116 = vshrl.u32 %v7996, 16
        %v8118 = vrot.slane %v8116, 5
        %v8119 = vshll.u32 %v7996, 16
        %v8121 = vrot.slane %v8119, 6
        %v8122 = vor.u32 %v8118, %v8121
        %v8123 = vsel %vm1885, %v8114, %v8122
        %v8125 = vshrl.u32 %v7815, 16
        %v8127 = vrot.slane %v8125, 5
        %v8128 = vshll.u32 %v7815, 16
        %v8130 = vrot.slane %v8128, 6
        %v8131 = vor.u32 %v8127, %v8130
        %v8132 = vrot.slane %v8131, 4
        %v8134 = vshrl.u32 %v7997, 16
        %v8136 = vrot.slane %v8134, 5
        %v8137 = vshll.u32 %v7997, 16
        %v8139 = vrot.slane %v8137, 6
        %v8140 = vor.u32 %v8136, %v8139
        %v8141 = vsel %vm1885, %v8132, %v8140
        %s8142 = scalar_lea.vmem %s17, 48
        %v8143 = vld [vmem:[%s8142] sm:$0xff]
        %v8144 = vld [vmem:[%s8142 + $0x8] sm:$0xff]
        %v8145 = vunpack.c.l.b16 %v8015
        %v8146 = vunpack.c.l.b16 %v8033
        %v8147 = vunpack.c.l.b16 %v8051
        %v8148 = vunpack.c.l.b16 %v8069
        %v8149 = vunpack.c.l.b16 %v8087
        %v8150 = vunpack.c.l.b16 %v8105
        %v8151 = vunpack.c.l.b16 %v8123
        %v8152 = vunpack.c.l.b16 %v8141
        %v8153 = vpack.c.b16 %v8146, %v8145
        %v8154 = vpack.c.b16 %v8148, %v8147
        %v8155 = vpack.c.b16 %v8150, %v8149
        %v8156 = vpack.c.b16 %v8152, %v8151
        %v8159 = vunpack.c.l.b16 %v8143
        %v8160 = vunpack.c.h.b16 %v8143
        %v8161 = vunpack.c.l.b16 %v8144
        %v8162 = vunpack.c.h.b16 %v8144
        %v8163 = vpack.c.b16 %v8161, %v8159
        %v8164 = vpack.c.b16 %v8162, %v8160
        %v8168 = vsel %vm1003, %v8153, 0
        %v8171 = vsel %vm1003, %v8154, 0
        %v8174 = vsel %vm1003, %v8155, 0
        %v8177 = vsel %vm1003, %v8156, 0
        %8179 = vmatprep.subr.bf16.mxu0 0
        %8180 = vmatpush1.bf16.msra.mxu0 0
        %8181 = vmatprep.subr.bf16.mxu0 0
        %8182 = vmatpush1.bf16.msra.mxu0 0
        %8183 = vmatprep.subr.bf16.mxu0 0
        %8184 = vmatpush1.bf16.msra.mxu0 0
        %8185 = vmatprep.subr.bf16.mxu0 0
        %8186 = vmatpush1.bf16.msra.mxu0 0
        %8187 = vmatprep.subr.bf16.mxu0 0
        %8188 = vmatpush1.bf16.msra.mxu0 0
        %8189 = vmatprep.subr.bf16.mxu0 0
        %8190 = vmatpush1.bf16.msra.mxu0 0
        %8191 = vmatprep.subr.bf16.mxu0 0
        %8192 = vmatpush1.bf16.msra.mxu0 0
        %8193 = vmatprep.subr.bf16.mxu0 %v8164
        %8194 = vmatpush1.bf16.msra.mxu0 %v8163
        %8195 = vmatprep.subr.bf16.mxu0 0
        %8196 = vmatpush2.bf16.msra.mxu0 0
        %8197 = vmatprep.subr.bf16.mxu0 0
        %8198 = vmatpush2.bf16.msra.mxu0 0
        %8199 = vmatprep.subr.bf16.mxu0 0
        %8200 = vmatpush2.bf16.msra.mxu0 0
        %8201 = vmatprep.subr.bf16.mxu0 0
        %8202 = vmatpush2.bf16.msra.mxu0 0
        %8203 = vmatprep.subr.bf16.mxu0 0
        %8204 = vmatpush2.bf16.msra.mxu0 0
        %8205 = vmatprep.subr.bf16.mxu0 0
        %8206 = vmatpush2.bf16.msra.mxu0 0
        %8207 = vmatprep.subr.bf16.mxu0 0
        %8208 = vmatpush2.bf16.msra.mxu0 0
        %8209 = vmatprep.subr.bf16.mxu0 0
        %8210 = vmatpush2.bf16.msra.mxu0 0
        %8211 = vmatprep.mubr.bf16.mxu0 0
        %8212 = vmatmul.mubr.bf16.gmra.mxu0 %v8168
        %v8213 = vpop.f32.mrf.mxu0
        %v8214 = vadd.f32 0.0, %v8213
        %v8215 = vpop.f32.mrf.mxu0
        %v8216 = vadd.f32 0.0, %v8215
        %v8217 = vpop.f32.mrf.mxu0
        %v8218 = vadd.f32 0.0, %v8217
        %v8219 = vpop.f32.mrf.mxu0
        %v8220 = vadd.f32 0.0, %v8219
        %8221 = vmatprep.mubr.bf16.mxu0 0
        %8222 = vmatmul.mubr.bf16.gmra.mxu0 %v8171
        %v8223 = vpop.f32.mrf.mxu0
        %v8224 = vadd.f32 0.0, %v8223
        %v8225 = vpop.f32.mrf.mxu0
        %v8226 = vadd.f32 0.0, %v8225
        %v8227 = vpop.f32.mrf.mxu0
        %v8228 = vadd.f32 0.0, %v8227
        %v8229 = vpop.f32.mrf.mxu0
        %v8230 = vadd.f32 0.0, %v8229
        %8231 = vmatprep.mubr.bf16.mxu0 0
        %8232 = vmatmul.mubr.bf16.gmra.mxu0 %v8174
        %v8233 = vpop.f32.mrf.mxu0
        %v8234 = vadd.f32 0.0, %v8233
        %v8235 = vpop.f32.mrf.mxu0
        %v8236 = vadd.f32 0.0, %v8235
        %v8237 = vpop.f32.mrf.mxu0
        %v8238 = vadd.f32 0.0, %v8237
        %v8239 = vpop.f32.mrf.mxu0
        %v8240 = vadd.f32 0.0, %v8239
        %8241 = vmatprep.mubr.bf16.mxu0 0
        %8242 = vmatmul.mubr.bf16.gmra.mxu0 %v8177
        %v8243 = vpop.f32.mrf.mxu0
        %v8244 = vadd.f32 0.0, %v8243
        %v8245 = vpop.f32.mrf.mxu0
        %v8246 = vadd.f32 0.0, %v8245
        %v8247 = vpop.f32.mrf.mxu0
        %v8248 = vadd.f32 0.0, %v8247
        %v8249 = vpop.f32.mrf.mxu0
        %v8250 = vadd.f32 0.0, %v8249
        %8251 = vdwg.mxu0
        %v8252 = vadd.f32 %v7974, %v8214
        %v8253 = vadd.f32 %v7975, %v8216
        %v8254 = vadd.f32 %v7976, %v8218
        %v8255 = vadd.f32 %v7977, %v8220
        %v8256 = vadd.f32 %v7978, %v8224
        %v8257 = vadd.f32 %v7979, %v8226
        %v8258 = vadd.f32 %v7980, %v8228
        %v8259 = vadd.f32 %v7981, %v8230
        %v8260 = vadd.f32 %v7982, %v8234
        %v8261 = vadd.f32 %v7983, %v8236
        %v8262 = vadd.f32 %v7984, %v8238
        %v8263 = vadd.f32 %v7985, %v8240
        %v8264 = vadd.f32 %v7986, %v8244
        %v8265 = vadd.f32 %v7987, %v8246
        %v8266 = vadd.f32 %v7988, %v8248
        %v8267 = vadd.f32 %v7989, %v8250
        %v8268 = vld [vmem:[#allocation2] sm:$0xc]
        %v8269 = vld [vmem:[#allocation2 + $0x8] sm:$0xc]
        %v8270 = vld [vmem:[#allocation2 + $0x10] sm:$0xc]
        %v8271 = vld [vmem:[#allocation2 + $0x18] sm:$0xc]
        %v8272 = vld [vmem:[#allocation2 + $0x20] sm:$0xc]
        %v8273 = vld [vmem:[#allocation2 + $0x28] sm:$0xc]
        %v8274 = vld [vmem:[#allocation2 + $0x30] sm:$0xc]
        %v8275 = vld [vmem:[#allocation2 + $0x38] sm:$0xc]
        %v8292 = vrot.slane %v8268, 6
        %v8293 = vrot.slane %v8292, 4
        %v8294 = vrot.slane %v7990, 6
        %v8295 = vsel %vm2162, %v8293, %v8294
        %v8296 = vrot.slane %v8269, 6
        %v8297 = vrot.slane %v8296, 4
        %v8298 = vrot.slane %v7991, 6
        %v8299 = vsel %vm2162, %v8297, %v8298
        %v8300 = vrot.slane %v8270, 6
        %v8301 = vrot.slane %v8300, 4
        %v8302 = vrot.slane %v7992, 6
        %v8303 = vsel %vm2162, %v8301, %v8302
        %v8304 = vrot.slane %v8271, 6
        %v8305 = vrot.slane %v8304, 4
        %v8306 = vrot.slane %v7993, 6
        %v8307 = vsel %vm2162, %v8305, %v8306
        %v8308 = vrot.slane %v8272, 6
        %v8309 = vrot.slane %v8308, 4
        %v8310 = vrot.slane %v7994, 6
        %v8311 = vsel %vm2162, %v8309, %v8310
        %v8312 = vrot.slane %v8273, 6
        %v8313 = vrot.slane %v8312, 4
        %v8314 = vrot.slane %v7995, 6
        %v8315 = vsel %vm2162, %v8313, %v8314
        %v8316 = vrot.slane %v8274, 6
        %v8317 = vrot.slane %v8316, 4
        %v8318 = vrot.slane %v7996, 6
        %v8319 = vsel %vm2162, %v8317, %v8318
        %v8320 = vrot.slane %v8275, 6
        %v8321 = vrot.slane %v8320, 4
        %v8322 = vrot.slane %v7997, 6
        %v8323 = vsel %vm2162, %v8321, %v8322
        %s8324 = scalar_lea.vmem %s17, 64
        %v8325 = vld [vmem:[%s8324] sm:$0xff]
        %v8326 = vld [vmem:[%s8324 + $0x8] sm:$0xff]
        %v8327 = vunpack.c.l.b16 %v8295
        %v8328 = vunpack.c.l.b16 %v8299
        %v8329 = vunpack.c.l.b16 %v8303
        %v8330 = vunpack.c.l.b16 %v8307
        %v8331 = vunpack.c.l.b16 %v8311
        %v8332 = vunpack.c.l.b16 %v8315
        %v8333 = vunpack.c.l.b16 %v8319
        %v8334 = vunpack.c.l.b16 %v8323
        %v8335 = vpack.c.b16 %v8328, %v8327
        %v8336 = vpack.c.b16 %v8330, %v8329
        %v8337 = vpack.c.b16 %v8332, %v8331
        %v8338 = vpack.c.b16 %v8334, %v8333
        %v8341 = vunpack.c.l.b16 %v8325
        %v8342 = vunpack.c.h.b16 %v8325
        %v8343 = vunpack.c.l.b16 %v8326
        %v8344 = vunpack.c.h.b16 %v8326
        %v8345 = vpack.c.b16 %v8343, %v8341
        %v8346 = vpack.c.b16 %v8344, %v8342
        %v8350 = vsel %vm1003, %v8335, 0
        %v8353 = vsel %vm1003, %v8336, 0
        %v8356 = vsel %vm1003, %v8337, 0
        %v8359 = vsel %vm1003, %v8338, 0
        %8361 = vmatprep.subr.bf16.mxu0 0
        %8362 = vmatpush1.bf16.msra.mxu0 0
        %8363 = vmatprep.subr.bf16.mxu0 0
        %8364 = vmatpush1.bf16.msra.mxu0 0
        %8365 = vmatprep.subr.bf16.mxu0 0
        %8366 = vmatpush1.bf16.msra.mxu0 0
        %8367 = vmatprep.subr.bf16.mxu0 0
        %8368 = vmatpush1.bf16.msra.mxu0 0
        %8369 = vmatprep.subr.bf16.mxu0 0
        %8370 = vmatpush1.bf16.msra.mxu0 0
        %8371 = vmatprep.subr.bf16.mxu0 0
        %8372 = vmatpush1.bf16.msra.mxu0 0
        %8373 = vmatprep.subr.bf16.mxu0 0
        %8374 = vmatpush1.bf16.msra.mxu0 0
        %8375 = vmatprep.subr.bf16.mxu0 %v8346
        %8376 = vmatpush1.bf16.msra.mxu0 %v8345
        %8377 = vmatprep.subr.bf16.mxu0 0
        %8378 = vmatpush2.bf16.msra.mxu0 0
        %8379 = vmatprep.subr.bf16.mxu0 0
        %8380 = vmatpush2.bf16.msra.mxu0 0
        %8381 = vmatprep.subr.bf16.mxu0 0
        %8382 = vmatpush2.bf16.msra.mxu0 0
        %8383 = vmatprep.subr.bf16.mxu0 0
        %8384 = vmatpush2.bf16.msra.mxu0 0
        %8385 = vmatprep.subr.bf16.mxu0 0
        %8386 = vmatpush2.bf16.msra.mxu0 0
        %8387 = vmatprep.subr.bf16.mxu0 0
        %8388 = vmatpush2.bf16.msra.mxu0 0
        %8389 = vmatprep.subr.bf16.mxu0 0
        %8390 = vmatpush2.bf16.msra.mxu0 0
        %8391 = vmatprep.subr.bf16.mxu0 0
        %8392 = vmatpush2.bf16.msra.mxu0 0
        %8393 = vmatprep.mubr.bf16.mxu0 0
        %8394 = vmatmul.mubr.bf16.gmra.mxu0 %v8350
        %v8395 = vpop.f32.mrf.mxu0
        %v8396 = vadd.f32 0.0, %v8395
        %v8397 = vpop.f32.mrf.mxu0
        %v8398 = vadd.f32 0.0, %v8397
        %v8399 = vpop.f32.mrf.mxu0
        %v8400 = vadd.f32 0.0, %v8399
        %v8401 = vpop.f32.mrf.mxu0
        %v8402 = vadd.f32 0.0, %v8401
        %8403 = vmatprep.mubr.bf16.mxu0 0
        %8404 = vmatmul.mubr.bf16.gmra.mxu0 %v8353
        %v8405 = vpop.f32.mrf.mxu0
        %v8406 = vadd.f32 0.0, %v8405
        %v8407 = vpop.f32.mrf.mxu0
        %v8408 = vadd.f32 0.0, %v8407
        %v8409 = vpop.f32.mrf.mxu0
        %v8410 = vadd.f32 0.0, %v8409
        %v8411 = vpop.f32.mrf.mxu0
        %v8412 = vadd.f32 0.0, %v8411
        %8413 = vmatprep.mubr.bf16.mxu0 0
        %8414 = vmatmul.mubr.bf16.gmra.mxu0 %v8356
        %v8415 = vpop.f32.mrf.mxu0
        %v8416 = vadd.f32 0.0, %v8415
        %v8417 = vpop.f32.mrf.mxu0
        %v8418 = vadd.f32 0.0, %v8417
        %v8419 = vpop.f32.mrf.mxu0
        %v8420 = vadd.f32 0.0, %v8419
        %v8421 = vpop.f32.mrf.mxu0
        %v8422 = vadd.f32 0.0, %v8421
        %8423 = vmatprep.mubr.bf16.mxu0 0
        %8424 = vmatmul.mubr.bf16.gmra.mxu0 %v8359
        %v8425 = vpop.f32.mrf.mxu0
        %v8426 = vadd.f32 0.0, %v8425
        %v8427 = vpop.f32.mrf.mxu0
        %v8428 = vadd.f32 0.0, %v8427
        %v8429 = vpop.f32.mrf.mxu0
        %v8430 = vadd.f32 0.0, %v8429
        %v8431 = vpop.f32.mrf.mxu0
        %v8432 = vadd.f32 0.0, %v8431
        %8433 = vdwg.mxu0
        %v8434 = vadd.f32 %v8252, %v8396
        %v8435 = vadd.f32 %v8253, %v8398
        %v8436 = vadd.f32 %v8254, %v8400
        %v8437 = vadd.f32 %v8255, %v8402
        %v8438 = vadd.f32 %v8256, %v8406
        %v8439 = vadd.f32 %v8257, %v8408
        %v8440 = vadd.f32 %v8258, %v8410
        %v8441 = vadd.f32 %v8259, %v8412
        %v8442 = vadd.f32 %v8260, %v8416
        %v8443 = vadd.f32 %v8261, %v8418
        %v8444 = vadd.f32 %v8262, %v8420
        %v8445 = vadd.f32 %v8263, %v8422
        %v8446 = vadd.f32 %v8264, %v8426
        %v8447 = vadd.f32 %v8265, %v8428
        %v8448 = vadd.f32 %v8266, %v8430
        %v8449 = vadd.f32 %v8267, %v8432
        %v8450 = vld [vmem:[#allocation2 + $0x4] sm:$0x7]
        %v8451 = vld [vmem:[#allocation2 + $0xc] sm:$0x7]
        %v8452 = vld [vmem:[#allocation2 + $0x14] sm:$0x7]
        %v8453 = vld [vmem:[#allocation2 + $0x1c] sm:$0x7]
        %v8454 = vld [vmem:[#allocation2 + $0x24] sm:$0x7]
        %v8455 = vld [vmem:[#allocation2 + $0x2c] sm:$0x7]
        %v8456 = vld [vmem:[#allocation2 + $0x34] sm:$0x7]
        %v8457 = vld [vmem:[#allocation2 + $0x3c] sm:$0x7]
        %v8459 = vshrl.u32 %v8268, 16
        %v8461 = vrot.slane %v8459, 6
        %v8462 = vshll.u32 %v8268, 16
        %v8464 = vrot.slane %v8462, 7
        %v8465 = vor.u32 %v8461, %v8464
        %v8466 = vrot.slane %v8465, 4
        %v8468 = vshrl.u32 %v8450, 16
        %v8470 = vrot.slane %v8468, 6
        %v8471 = vshll.u32 %v8450, 16
        %v8473 = vrot.slane %v8471, 7
        %v8474 = vor.u32 %v8470, %v8473
        %v8475 = vsel %vm2310, %v8466, %v8474
        %v8477 = vshrl.u32 %v8269, 16
        %v8479 = vrot.slane %v8477, 6
        %v8480 = vshll.u32 %v8269, 16
        %v8482 = vrot.slane %v8480, 7
        %v8483 = vor.u32 %v8479, %v8482
        %v8484 = vrot.slane %v8483, 4
        %v8486 = vshrl.u32 %v8451, 16
        %v8488 = vrot.slane %v8486, 6
        %v8489 = vshll.u32 %v8451, 16
        %v8491 = vrot.slane %v8489, 7
        %v8492 = vor.u32 %v8488, %v8491
        %v8493 = vsel %vm2310, %v8484, %v8492
        %v8495 = vshrl.u32 %v8270, 16
        %v8497 = vrot.slane %v8495, 6
        %v8498 = vshll.u32 %v8270, 16
        %v8500 = vrot.slane %v8498, 7
        %v8501 = vor.u32 %v8497, %v8500
        %v8502 = vrot.slane %v8501, 4
        %v8504 = vshrl.u32 %v8452, 16
        %v8506 = vrot.slane %v8504, 6
        %v8507 = vshll.u32 %v8452, 16
        %v8509 = vrot.slane %v8507, 7
        %v8510 = vor.u32 %v8506, %v8509
        %v8511 = vsel %vm2310, %v8502, %v8510
        %v8513 = vshrl.u32 %v8271, 16
        %v8515 = vrot.slane %v8513, 6
        %v8516 = vshll.u32 %v8271, 16
        %v8518 = vrot.slane %v8516, 7
        %v8519 = vor.u32 %v8515, %v8518
        %v8520 = vrot.slane %v8519, 4
        %v8522 = vshrl.u32 %v8453, 16
        %v8524 = vrot.slane %v8522, 6
        %v8525 = vshll.u32 %v8453, 16
        %v8527 = vrot.slane %v8525, 7
        %v8528 = vor.u32 %v8524, %v8527
        %v8529 = vsel %vm2310, %v8520, %v8528
        %v8531 = vshrl.u32 %v8272, 16
        %v8533 = vrot.slane %v8531, 6
        %v8534 = vshll.u32 %v8272, 16
        %v8536 = vrot.slane %v8534, 7
        %v8537 = vor.u32 %v8533, %v8536
        %v8538 = vrot.slane %v8537, 4
        %v8540 = vshrl.u32 %v8454, 16
        %v8542 = vrot.slane %v8540, 6
        %v8543 = vshll.u32 %v8454, 16
        %v8545 = vrot.slane %v8543, 7
        %v8546 = vor.u32 %v8542, %v8545
        %v8547 = vsel %vm2310, %v8538, %v8546
        %v8549 = vshrl.u32 %v8273, 16
        %v8551 = vrot.slane %v8549, 6
        %v8552 = vshll.u32 %v8273, 16
        %v8554 = vrot.slane %v8552, 7
        %v8555 = vor.u32 %v8551, %v8554
        %v8556 = vrot.slane %v8555, 4
        %v8558 = vshrl.u32 %v8455, 16
        %v8560 = vrot.slane %v8558, 6
        %v8561 = vshll.u32 %v8455, 16
        %v8563 = vrot.slane %v8561, 7
        %v8564 = vor.u32 %v8560, %v8563
        %v8565 = vsel %vm2310, %v8556, %v8564
        %v8567 = vshrl.u32 %v8274, 16
        %v8569 = vrot.slane %v8567, 6
        %v8570 = vshll.u32 %v8274, 16
        %v8572 = vrot.slane %v8570, 7
        %v8573 = vor.u32 %v8569, %v8572
        %v8574 = vrot.slane %v8573, 4
        %v8576 = vshrl.u32 %v8456, 16
        %v8578 = vrot.slane %v8576, 6
        %v8579 = vshll.u32 %v8456, 16
        %v8581 = vrot.slane %v8579, 7
        %v8582 = vor.u32 %v8578, %v8581
        %v8583 = vsel %vm2310, %v8574, %v8582
        %v8585 = vshrl.u32 %v8275, 16
        %v8587 = vrot.slane %v8585, 6
        %v8588 = vshll.u32 %v8275, 16
        %v8590 = vrot.slane %v8588, 7
        %v8591 = vor.u32 %v8587, %v8590
        %v8592 = vrot.slane %v8591, 4
        %v8594 = vshrl.u32 %v8457, 16
        %v8596 = vrot.slane %v8594, 6
        %v8597 = vshll.u32 %v8457, 16
        %v8599 = vrot.slane %v8597, 7
        %v8600 = vor.u32 %v8596, %v8599
        %v8601 = vsel %vm2310, %v8592, %v8600
        %s8602 = scalar_lea.vmem %s17, 80
        %v8603 = vld [vmem:[%s8602] sm:$0xff]
        %v8604 = vld [vmem:[%s8602 + $0x8] sm:$0xff]
        %v8605 = vunpack.c.l.b16 %v8475
        %v8606 = vunpack.c.l.b16 %v8493
        %v8607 = vunpack.c.l.b16 %v8511
        %v8608 = vunpack.c.l.b16 %v8529
        %v8609 = vunpack.c.l.b16 %v8547
        %v8610 = vunpack.c.l.b16 %v8565
        %v8611 = vunpack.c.l.b16 %v8583
        %v8612 = vunpack.c.l.b16 %v8601
        %v8613 = vpack.c.b16 %v8606, %v8605
        %v8614 = vpack.c.b16 %v8608, %v8607
        %v8615 = vpack.c.b16 %v8610, %v8609
        %v8616 = vpack.c.b16 %v8612, %v8611
        %v8619 = vunpack.c.l.b16 %v8603
        %v8620 = vunpack.c.h.b16 %v8603
        %v8621 = vunpack.c.l.b16 %v8604
        %v8622 = vunpack.c.h.b16 %v8604
        %v8623 = vpack.c.b16 %v8621, %v8619
        %v8624 = vpack.c.b16 %v8622, %v8620
        %v8628 = vsel %vm1003, %v8613, 0
        %v8631 = vsel %vm1003, %v8614, 0
        %v8634 = vsel %vm1003, %v8615, 0
        %v8637 = vsel %vm1003, %v8616, 0
        %8639 = vmatprep.subr.bf16.mxu0 0
        %8640 = vmatpush1.bf16.msra.mxu0 0
        %8641 = vmatprep.subr.bf16.mxu0 0
        %8642 = vmatpush1.bf16.msra.mxu0 0
        %8643 = vmatprep.subr.bf16.mxu0 0
        %8644 = vmatpush1.bf16.msra.mxu0 0
        %8645 = vmatprep.subr.bf16.mxu0 0
        %8646 = vmatpush1.bf16.msra.mxu0 0
        %8647 = vmatprep.subr.bf16.mxu0 0
        %8648 = vmatpush1.bf16.msra.mxu0 0
        %8649 = vmatprep.subr.bf16.mxu0 0
        %8650 = vmatpush1.bf16.msra.mxu0 0
        %8651 = vmatprep.subr.bf16.mxu0 0
        %8652 = vmatpush1.bf16.msra.mxu0 0
        %8653 = vmatprep.subr.bf16.mxu0 %v8624
        %8654 = vmatpush1.bf16.msra.mxu0 %v8623
        %8655 = vmatprep.subr.bf16.mxu0 0
        %8656 = vmatpush2.bf16.msra.mxu0 0
        %8657 = vmatprep.subr.bf16.mxu0 0
        %8658 = vmatpush2.bf16.msra.mxu0 0
        %8659 = vmatprep.subr.bf16.mxu0 0
        %8660 = vmatpush2.bf16.msra.mxu0 0
        %8661 = vmatprep.subr.bf16.mxu0 0
        %8662 = vmatpush2.bf16.msra.mxu0 0
        %8663 = vmatprep.subr.bf16.mxu0 0
        %8664 = vmatpush2.bf16.msra.mxu0 0
        %8665 = vmatprep.subr.bf16.mxu0 0
        %8666 = vmatpush2.bf16.msra.mxu0 0
        %8667 = vmatprep.subr.bf16.mxu0 0
        %8668 = vmatpush2.bf16.msra.mxu0 0
        %8669 = vmatprep.subr.bf16.mxu0 0
        %8670 = vmatpush2.bf16.msra.mxu0 0
        %8671 = vmatprep.mubr.bf16.mxu0 0
        %8672 = vmatmul.mubr.bf16.gmra.mxu0 %v8628
        %v8673 = vpop.f32.mrf.mxu0
        %v8674 = vadd.f32 0.0, %v8673
        %v8675 = vpop.f32.mrf.mxu0
        %v8676 = vadd.f32 0.0, %v8675
        %v8677 = vpop.f32.mrf.mxu0
        %v8678 = vadd.f32 0.0, %v8677
        %v8679 = vpop.f32.mrf.mxu0
        %v8680 = vadd.f32 0.0, %v8679
        %8681 = vmatprep.mubr.bf16.mxu0 0
        %8682 = vmatmul.mubr.bf16.gmra.mxu0 %v8631
        %v8683 = vpop.f32.mrf.mxu0
        %v8684 = vadd.f32 0.0, %v8683
        %v8685 = vpop.f32.mrf.mxu0
        %v8686 = vadd.f32 0.0, %v8685
        %v8687 = vpop.f32.mrf.mxu0
        %v8688 = vadd.f32 0.0, %v8687
        %v8689 = vpop.f32.mrf.mxu0
        %v8690 = vadd.f32 0.0, %v8689
        %8691 = vmatprep.mubr.bf16.mxu0 0
        %8692 = vmatmul.mubr.bf16.gmra.mxu0 %v8634
        %v8693 = vpop.f32.mrf.mxu0
        %v8694 = vadd.f32 0.0, %v8693
        %v8695 = vpop.f32.mrf.mxu0
        %v8696 = vadd.f32 0.0, %v8695
        %v8697 = vpop.f32.mrf.mxu0
        %v8698 = vadd.f32 0.0, %v8697
        %v8699 = vpop.f32.mrf.mxu0
        %v8700 = vadd.f32 0.0, %v8699
        %8701 = vmatprep.mubr.bf16.mxu0 0
        %8702 = vmatmul.mubr.bf16.gmra.mxu0 %v8637
        %v8703 = vpop.f32.mrf.mxu0
        %v8704 = vadd.f32 0.0, %v8703
        %v8705 = vpop.f32.mrf.mxu0
        %v8706 = vadd.f32 0.0, %v8705
        %v8707 = vpop.f32.mrf.mxu0
        %v8708 = vadd.f32 0.0, %v8707
        %v8709 = vpop.f32.mrf.mxu0
        %v8710 = vadd.f32 0.0, %v8709
        %8711 = vdwg.mxu0
        %v8712 = vadd.f32 %v8434, %v8674
        %v8713 = vadd.f32 %v8435, %v8676
        %v8714 = vadd.f32 %v8436, %v8678
        %v8715 = vadd.f32 %v8437, %v8680
        %v8716 = vadd.f32 %v8438, %v8684
        %v8717 = vadd.f32 %v8439, %v8686
        %v8718 = vadd.f32 %v8440, %v8688
        %v8719 = vadd.f32 %v8441, %v8690
        %v8720 = vadd.f32 %v8442, %v8694
        %v8721 = vadd.f32 %v8443, %v8696
        %v8722 = vadd.f32 %v8444, %v8698
        %v8723 = vadd.f32 %v8445, %v8700
        %v8724 = vadd.f32 %v8446, %v8704
        %v8725 = vadd.f32 %v8447, %v8706
        %v8726 = vadd.f32 %v8448, %v8708
        %v8727 = vadd.f32 %v8449, %v8710
        %v8728 = vld [vmem:[#allocation2] sm:$0x8]
        %v8729 = vld [vmem:[#allocation2 + $0x8] sm:$0x8]
        %v8730 = vld [vmem:[#allocation2 + $0x10] sm:$0x8]
        %v8731 = vld [vmem:[#allocation2 + $0x18] sm:$0x8]
        %v8732 = vld [vmem:[#allocation2 + $0x20] sm:$0x8]
        %v8733 = vld [vmem:[#allocation2 + $0x28] sm:$0x8]
        %v8734 = vld [vmem:[#allocation2 + $0x30] sm:$0x8]
        %v8735 = vld [vmem:[#allocation2 + $0x38] sm:$0x8]
        %v8752 = vrot.slane %v8728, 7
        %v8753 = vrot.slane %v8752, 4
        %v8754 = vrot.slane %v8450, 7
        %v8755 = vsel %vm2587, %v8753, %v8754
        %v8756 = vrot.slane %v8729, 7
        %v8757 = vrot.slane %v8756, 4
        %v8758 = vrot.slane %v8451, 7
        %v8759 = vsel %vm2587, %v8757, %v8758
        %v8760 = vrot.slane %v8730, 7
        %v8761 = vrot.slane %v8760, 4
        %v8762 = vrot.slane %v8452, 7
        %v8763 = vsel %vm2587, %v8761, %v8762
        %v8764 = vrot.slane %v8731, 7
        %v8765 = vrot.slane %v8764, 4
        %v8766 = vrot.slane %v8453, 7
        %v8767 = vsel %vm2587, %v8765, %v8766
        %v8768 = vrot.slane %v8732, 7
        %v8769 = vrot.slane %v8768, 4
        %v8770 = vrot.slane %v8454, 7
        %v8771 = vsel %vm2587, %v8769, %v8770
        %v8772 = vrot.slane %v8733, 7
        %v8773 = vrot.slane %v8772, 4
        %v8774 = vrot.slane %v8455, 7
        %v8775 = vsel %vm2587, %v8773, %v8774
        %v8776 = vrot.slane %v8734, 7
        %v8777 = vrot.slane %v8776, 4
        %v8778 = vrot.slane %v8456, 7
        %v8779 = vsel %vm2587, %v8777, %v8778
        %v8780 = vrot.slane %v8735, 7
        %v8781 = vrot.slane %v8780, 4
        %v8782 = vrot.slane %v8457, 7
        %v8783 = vsel %vm2587, %v8781, %v8782
        %s8784 = scalar_lea.vmem %s17, 96
        %v8785 = vld [vmem:[%s8784] sm:$0xff]
        %v8786 = vld [vmem:[%s8784 + $0x8] sm:$0xff]
        %v8787 = vunpack.c.l.b16 %v8755
        %v8788 = vunpack.c.l.b16 %v8759
        %v8789 = vunpack.c.l.b16 %v8763
        %v8790 = vunpack.c.l.b16 %v8767
        %v8791 = vunpack.c.l.b16 %v8771
        %v8792 = vunpack.c.l.b16 %v8775
        %v8793 = vunpack.c.l.b16 %v8779
        %v8794 = vunpack.c.l.b16 %v8783
        %v8795 = vpack.c.b16 %v8788, %v8787
        %v8796 = vpack.c.b16 %v8790, %v8789
        %v8797 = vpack.c.b16 %v8792, %v8791
        %v8798 = vpack.c.b16 %v8794, %v8793
        %v8801 = vunpack.c.l.b16 %v8785
        %v8802 = vunpack.c.h.b16 %v8785
        %v8803 = vunpack.c.l.b16 %v8786
        %v8804 = vunpack.c.h.b16 %v8786
        %v8805 = vpack.c.b16 %v8803, %v8801
        %v8806 = vpack.c.b16 %v8804, %v8802
        %v8810 = vsel %vm1003, %v8795, 0
        %v8813 = vsel %vm1003, %v8796, 0
        %v8816 = vsel %vm1003, %v8797, 0
        %v8819 = vsel %vm1003, %v8798, 0
        %8821 = vmatprep.subr.bf16.mxu0 0
        %8822 = vmatpush1.bf16.msra.mxu0 0
        %8823 = vmatprep.subr.bf16.mxu0 0
        %8824 = vmatpush1.bf16.msra.mxu0 0
        %8825 = vmatprep.subr.bf16.mxu0 0
        %8826 = vmatpush1.bf16.msra.mxu0 0
        %8827 = vmatprep.subr.bf16.mxu0 0
        %8828 = vmatpush1.bf16.msra.mxu0 0
        %8829 = vmatprep.subr.bf16.mxu0 0
        %8830 = vmatpush1.bf16.msra.mxu0 0
        %8831 = vmatprep.subr.bf16.mxu0 0
        %8832 = vmatpush1.bf16.msra.mxu0 0
        %8833 = vmatprep.subr.bf16.mxu0 0
        %8834 = vmatpush1.bf16.msra.mxu0 0
        %8835 = vmatprep.subr.bf16.mxu0 %v8806
        %8836 = vmatpush1.bf16.msra.mxu0 %v8805
        %8837 = vmatprep.subr.bf16.mxu0 0
        %8838 = vmatpush2.bf16.msra.mxu0 0
        %8839 = vmatprep.subr.bf16.mxu0 0
        %8840 = vmatpush2.bf16.msra.mxu0 0
        %8841 = vmatprep.subr.bf16.mxu0 0
        %8842 = vmatpush2.bf16.msra.mxu0 0
        %8843 = vmatprep.subr.bf16.mxu0 0
        %8844 = vmatpush2.bf16.msra.mxu0 0
        %8845 = vmatprep.subr.bf16.mxu0 0
        %8846 = vmatpush2.bf16.msra.mxu0 0
        %8847 = vmatprep.subr.bf16.mxu0 0
        %8848 = vmatpush2.bf16.msra.mxu0 0
        %8849 = vmatprep.subr.bf16.mxu0 0
        %8850 = vmatpush2.bf16.msra.mxu0 0
        %8851 = vmatprep.subr.bf16.mxu0 0
        %8852 = vmatpush2.bf16.msra.mxu0 0
        %8853 = vmatprep.mubr.bf16.mxu0 0
        %8854 = vmatmul.mubr.bf16.gmra.mxu0 %v8810
        %v8855 = vpop.f32.mrf.mxu0
        %v8856 = vadd.f32 0.0, %v8855
        %v8857 = vpop.f32.mrf.mxu0
        %v8858 = vadd.f32 0.0, %v8857
        %v8859 = vpop.f32.mrf.mxu0
        %v8860 = vadd.f32 0.0, %v8859
        %v8861 = vpop.f32.mrf.mxu0
        %v8862 = vadd.f32 0.0, %v8861
        %8863 = vmatprep.mubr.bf16.mxu0 0
        %8864 = vmatmul.mubr.bf16.gmra.mxu0 %v8813
        %v8865 = vpop.f32.mrf.mxu0
        %v8866 = vadd.f32 0.0, %v8865
        %v8867 = vpop.f32.mrf.mxu0
        %v8868 = vadd.f32 0.0, %v8867
        %v8869 = vpop.f32.mrf.mxu0
        %v8870 = vadd.f32 0.0, %v8869
        %v8871 = vpop.f32.mrf.mxu0
        %v8872 = vadd.f32 0.0, %v8871
        %8873 = vmatprep.mubr.bf16.mxu0 0
        %8874 = vmatmul.mubr.bf16.gmra.mxu0 %v8816
        %v8875 = vpop.f32.mrf.mxu0
        %v8876 = vadd.f32 0.0, %v8875
        %v8877 = vpop.f32.mrf.mxu0
        %v8878 = vadd.f32 0.0, %v8877
        %v8879 = vpop.f32.mrf.mxu0
        %v8880 = vadd.f32 0.0, %v8879
        %v8881 = vpop.f32.mrf.mxu0
        %v8882 = vadd.f32 0.0, %v8881
        %8883 = vmatprep.mubr.bf16.mxu0 0
        %8884 = vmatmul.mubr.bf16.gmra.mxu0 %v8819
        %v8885 = vpop.f32.mrf.mxu0
        %v8886 = vadd.f32 0.0, %v8885
        %v8887 = vpop.f32.mrf.mxu0
        %v8888 = vadd.f32 0.0, %v8887
        %v8889 = vpop.f32.mrf.mxu0
        %v8890 = vadd.f32 0.0, %v8889
        %v8891 = vpop.f32.mrf.mxu0
        %v8892 = vadd.f32 0.0, %v8891
        %8893 = vdwg.mxu0
        %v8894 = vadd.f32 %v8712, %v8856
        %v8895 = vadd.f32 %v8713, %v8858
        %v8896 = vadd.f32 %v8714, %v8860
        %v8897 = vadd.f32 %v8715, %v8862
        %v8898 = vadd.f32 %v8716, %v8866
        %v8899 = vadd.f32 %v8717, %v8868
        %v8900 = vadd.f32 %v8718, %v8870
        %v8901 = vadd.f32 %v8719, %v8872
        %v8902 = vadd.f32 %v8720, %v8876
        %v8903 = vadd.f32 %v8721, %v8878
        %v8904 = vadd.f32 %v8722, %v8880
        %v8905 = vadd.f32 %v8723, %v8882
        %v8906 = vadd.f32 %v8724, %v8886
        %v8907 = vadd.f32 %v8725, %v8888
        %v8908 = vadd.f32 %v8726, %v8890
        %v8909 = vadd.f32 %v8727, %v8892
        %v8910 = vld [vmem:[#allocation29] sm:$0x3]
        %v8912 = vlaneseq
        %v8913 = vshrl.u32 %v8912, 7
        %v8914 = vsub.s32 0, %v8913
        %v8915 = vrot.slane %v8910, %v8914
        %v8916 = vlaneseq
        %v8917 = vshrl.u32 %v8916, 7
        %v8918 = vsub.s32 1, %v8917
        %v8919 = vrot.slane %v8910, %v8918
        %v8922 = vadd.f32 %v8894, %v8915
        %v8923 = vadd.f32 %v8895, %v8919
        %v8924 = vadd.f32 %v8896, %v8915
        %v8925 = vadd.f32 %v8897, %v8919
        %v8926 = vadd.f32 %v8898, %v8915
        %v8927 = vadd.f32 %v8899, %v8919
        %v8928 = vadd.f32 %v8900, %v8915
        %v8929 = vadd.f32 %v8901, %v8919
        %v8930 = vadd.f32 %v8902, %v8915
        %v8931 = vadd.f32 %v8903, %v8919
        %v8932 = vadd.f32 %v8904, %v8915
        %v8933 = vadd.f32 %v8905, %v8919
        %v8934 = vadd.f32 %v8906, %v8915
        %v8935 = vadd.f32 %v8907, %v8919
        %v8936 = vadd.f32 %v8908, %v8915
        %v8937 = vadd.f32 %v8909, %v8919
        %v8938 = vmax.f32 %v8922, 0.0
        %v8939 = vmax.f32 %v8923, 0.0
        %v8940 = vmax.f32 %v8924, 0.0
        %v8941 = vmax.f32 %v8925, 0.0
        %v8942 = vmax.f32 %v8926, 0.0
        %v8943 = vmax.f32 %v8927, 0.0
        %v8944 = vmax.f32 %v8928, 0.0
        %v8945 = vmax.f32 %v8929, 0.0
        %v8946 = vmax.f32 %v8930, 0.0
        %v8947 = vmax.f32 %v8931, 0.0
        %v8948 = vmax.f32 %v8932, 0.0
        %v8949 = vmax.f32 %v8933, 0.0
        %v8950 = vmax.f32 %v8934, 0.0
        %v8951 = vmax.f32 %v8935, 0.0
        %v8952 = vmax.f32 %v8936, 0.0
        %v8953 = vmax.f32 %v8937, 0.0
        %8954 = vst [vmem:[%s891 + $0x18] sm:$0xff] %v8938
        %8955 = vst.msk [vmem:[%s891 + $0x20] sm:$0xff] %vm1106, %v8939
        %8956 = vst [vmem:[%s891 + $0x48] sm:$0xff] %v8940
        %8957 = vst.msk [vmem:[%s891 + $0x50] sm:$0xff] %vm1106, %v8941
        %8958 = vst [vmem:[%s891 + $0x78] sm:$0xff] %v8942
        %8959 = vst.msk [vmem:[%s891 + $0x80] sm:$0xff] %vm1106, %v8943
        %8960 = vst [vmem:[%s891 + $0xa8] sm:$0xff] %v8944
        %8961 = vst.msk [vmem:[%s891 + $0xb0] sm:$0xff] %vm1106, %v8945
        %8962 = vst [vmem:[%s891 + $0xd8] sm:$0xff] %v8946
        %8963 = vst.msk [vmem:[%s891 + $0xe0] sm:$0xff] %vm1106, %v8947
        %8964 = vst [vmem:[%s891 + $0x108] sm:$0xff] %v8948
        %8965 = vst.msk [vmem:[%s891 + $0x110] sm:$0xff] %vm1106, %v8949
        %8966 = vst [vmem:[%s891 + $0x138] sm:$0xff] %v8950
        %8967 = vst.msk [vmem:[%s891 + $0x140] sm:$0xff] %vm1106, %v8951
        %8968 = vst [vmem:[%s891 + $0x168] sm:$0xff] %v8952
        %8969 = vst.msk [vmem:[%s891 + $0x170] sm:$0xff] %vm1106, %v8953
        %v8971 = vshrl.u32 %v951, 16
        %v8973 = vrot.slane %v8971, 7
        %v8974 = vshll.u32 %v951, 16
        %v8976 = vor.u32 %v8973, %v8974
        %v8977 = vrot.slane %v8973, 4
        %v8979 = vshrl.u32 %v952, 16
        %v8981 = vrot.slane %v8979, 7
        %v8982 = vshll.u32 %v952, 16
        %v8984 = vor.u32 %v8981, %v8982
        %v8985 = vrot.slane %v8981, 4
        %v8987 = vshrl.u32 %v953, 16
        %v8989 = vrot.slane %v8987, 7
        %v8990 = vshll.u32 %v953, 16
        %v8992 = vor.u32 %v8989, %v8990
        %v8993 = vrot.slane %v8989, 4
        %v8995 = vshrl.u32 %v954, 16
        %v8997 = vrot.slane %v8995, 7
        %v8998 = vshll.u32 %v954, 16
        %v9000 = vor.u32 %v8997, %v8998
        %v9001 = vrot.slane %v8997, 4
        %v9003 = vshrl.u32 %v955, 16
        %v9005 = vrot.slane %v9003, 7
        %v9006 = vshll.u32 %v955, 16
        %v9008 = vor.u32 %v9005, %v9006
        %v9009 = vrot.slane %v9005, 4
        %v9011 = vshrl.u32 %v956, 16
        %v9013 = vrot.slane %v9011, 7
        %v9014 = vshll.u32 %v956, 16
        %v9016 = vor.u32 %v9013, %v9014
        %v9017 = vrot.slane %v9013, 4
        %v9019 = vshrl.u32 %v957, 16
        %v9021 = vrot.slane %v9019, 7
        %v9022 = vshll.u32 %v957, 16
        %v9024 = vor.u32 %v9021, %v9022
        %v9025 = vrot.slane %v9021, 4
        %v9027 = vshrl.u32 %v958, 16
        %v9029 = vrot.slane %v9027, 7
        %v9030 = vshll.u32 %v958, 16
        %v9032 = vor.u32 %v9029, %v9030
        %v9033 = vrot.slane %v9029, 4
        %s9050 = scalar_lea.vmem [#allocation4], 8
        %vm9051 = vcmask 125952
        %vm9052 = vsmask.f32 7938
        %vm9053 = vmand %vm9051, %vm9052
        %v9054 = vld [vmem:[%s9050] sm:$0xf]
        %v9055 = vsel %vm9053, %v8976, %v9054
        %9056 = vst [vmem:[%s9050] sm:$0xf] %v9055
        %vm9057 = vcmask 122880
        %vm9058 = vsmask.f32 256
        %vm9059 = vmand %vm9057, %vm9058
        %v9060 = vld [vmem:[%s9050 + $0x4] sm:$0x1]
        %v9061 = vsel %vm9059, %v8977, %v9060
        %9062 = vst [vmem:[%s9050 + $0x4] sm:$0x1] %v9061
        %v9063 = vld [vmem:[%s9050 + $0x8] sm:$0xf]
        %v9064 = vsel %vm9053, %v8984, %v9063
        %9065 = vst [vmem:[%s9050 + $0x8] sm:$0xf] %v9064
        %v9066 = vld [vmem:[%s9050 + $0xc] sm:$0x1]
        %v9067 = vsel %vm9059, %v8985, %v9066
        %9068 = vst [vmem:[%s9050 + $0xc] sm:$0x1] %v9067
        %v9069 = vld [vmem:[%s9050 + $0x10] sm:$0xf]
        %v9070 = vsel %vm9053, %v8992, %v9069
        %9071 = vst [vmem:[%s9050 + $0x10] sm:$0xf] %v9070
        %v9072 = vld [vmem:[%s9050 + $0x14] sm:$0x1]
        %v9073 = vsel %vm9059, %v8993, %v9072
        %9074 = vst [vmem:[%s9050 + $0x14] sm:$0x1] %v9073
        %v9075 = vld [vmem:[%s9050 + $0x18] sm:$0xf]
        %v9076 = vsel %vm9053, %v9000, %v9075
        %9077 = vst [vmem:[%s9050 + $0x18] sm:$0xf] %v9076
        %v9078 = vld [vmem:[%s9050 + $0x1c] sm:$0x1]
        %v9079 = vsel %vm9059, %v9001, %v9078
        %9080 = vst [vmem:[%s9050 + $0x1c] sm:$0x1] %v9079
        %v9081 = vld [vmem:[%s9050 + $0x20] sm:$0xf]
        %v9082 = vsel %vm9053, %v9008, %v9081
        %9083 = vst [vmem:[%s9050 + $0x20] sm:$0xf] %v9082
        %v9084 = vld [vmem:[%s9050 + $0x24] sm:$0x1]
        %v9085 = vsel %vm9059, %v9009, %v9084
        %9086 = vst [vmem:[%s9050 + $0x24] sm:$0x1] %v9085
        %v9087 = vld [vmem:[%s9050 + $0x28] sm:$0xf]
        %v9088 = vsel %vm9053, %v9016, %v9087
        %9089 = vst [vmem:[%s9050 + $0x28] sm:$0xf] %v9088
        %v9090 = vld [vmem:[%s9050 + $0x2c] sm:$0x1]
        %v9091 = vsel %vm9059, %v9017, %v9090
        %9092 = vst [vmem:[%s9050 + $0x2c] sm:$0x1] %v9091
        %v9093 = vld [vmem:[%s9050 + $0x30] sm:$0xf]
        %v9094 = vsel %vm9053, %v9024, %v9093
        %9095 = vst [vmem:[%s9050 + $0x30] sm:$0xf] %v9094
        %v9096 = vld [vmem:[%s9050 + $0x34] sm:$0x1]
        %v9097 = vsel %vm9059, %v9025, %v9096
        %9098 = vst [vmem:[%s9050 + $0x34] sm:$0x1] %v9097
        %v9099 = vld [vmem:[%s9050 + $0x38] sm:$0xf]
        %v9100 = vsel %vm9053, %v9032, %v9099
        %9101 = vst [vmem:[%s9050 + $0x38] sm:$0xf] %v9100
        %v9102 = vld [vmem:[%s9050 + $0x3c] sm:$0x1]
        %v9103 = vsel %vm9059, %v9033, %v9102
        %9104 = vst [vmem:[%s9050 + $0x3c] sm:$0x1] %v9103
        %v9105 = vld [vmem:[#allocation4] sm:$0xf]
        %v9106 = vld [vmem:[#allocation4 + $0x8] sm:$0xf]
        %v9107 = vld [vmem:[#allocation4 + $0x10] sm:$0xf]
        %v9108 = vld [vmem:[#allocation4 + $0x18] sm:$0xf]
        %v9109 = vld [vmem:[#allocation4 + $0x20] sm:$0xf]
        %v9110 = vld [vmem:[#allocation4 + $0x28] sm:$0xf]
        %v9111 = vld [vmem:[#allocation4 + $0x30] sm:$0xf]
        %v9112 = vld [vmem:[#allocation4 + $0x38] sm:$0xf]
        %v9113 = vld [vmem:[#allocation4 + $0x40] sm:$0xf]
        %v9114 = vld [vmem:[#allocation4 + $0x48] sm:$0xf]
        %v9115 = vunpack.c.l.bf16 %v9105
        %v9116 = vunpack.c.l.bf16 %v9106
        %v9117 = vunpack.c.l.bf16 %v9107
        %v9118 = vunpack.c.l.bf16 %v9108
        %v9119 = vunpack.c.l.bf16 %v9109
        %v9120 = vunpack.c.l.bf16 %v9110
        %v9121 = vunpack.c.l.bf16 %v9111
        %v9122 = vunpack.c.l.bf16 %v9112
        %v9123 = vunpack.c.l.bf16 %v9113
        %v9124 = vunpack.c.l.bf16 %v9114
        %v9125 = vld [vmem:[#allocation4 + $0x4] sm:$0x1]
        %v9126 = vld [vmem:[#allocation4 + $0xc] sm:$0x1]
        %v9127 = vld [vmem:[#allocation4 + $0x14] sm:$0x1]
        %v9128 = vld [vmem:[#allocation4 + $0x1c] sm:$0x1]
        %v9129 = vld [vmem:[#allocation4 + $0x24] sm:$0x1]
        %v9130 = vld [vmem:[#allocation4 + $0x2c] sm:$0x1]
        %v9131 = vld [vmem:[#allocation4 + $0x34] sm:$0x1]
        %v9132 = vld [vmem:[#allocation4 + $0x3c] sm:$0x1]
        %v9133 = vld [vmem:[#allocation4 + $0x44] sm:$0x1]
        %v9134 = vld [vmem:[#allocation4 + $0x4c] sm:$0x1]
        %v9135 = vunpack.c.l.bf16 %v9125
        %v9136 = vunpack.c.l.bf16 %v9126
        %v9137 = vunpack.c.l.bf16 %v9127
        %v9138 = vunpack.c.l.bf16 %v9128
        %v9139 = vunpack.c.l.bf16 %v9129
        %v9140 = vunpack.c.l.bf16 %v9130
        %v9141 = vunpack.c.l.bf16 %v9131
        %v9142 = vunpack.c.l.bf16 %v9132
        %v9143 = vunpack.c.l.bf16 %v9133
        %v9144 = vunpack.c.l.bf16 %v9134
        %vm9165 = vcmask 1046528
        %v9166 = vrot.slane %v9115, 1
        %v9167 = vrot.slane %v9135, 1
        %v9168 = vsel %vm9165, %v9166, %v9167
        %v9169 = vrot.slane %v9116, 1
        %v9170 = vrot.slane %v9136, 1
        %v9171 = vsel %vm9165, %v9169, %v9170
        %v9172 = vrot.slane %v9117, 1
        %v9173 = vrot.slane %v9137, 1
        %v9174 = vsel %vm9165, %v9172, %v9173
        %v9175 = vrot.slane %v9118, 1
        %v9176 = vrot.slane %v9138, 1
        %v9177 = vsel %vm9165, %v9175, %v9176
        %v9178 = vrot.slane %v9119, 1
        %v9179 = vrot.slane %v9139, 1
        %v9180 = vsel %vm9165, %v9178, %v9179
        %v9181 = vrot.slane %v9120, 1
        %v9182 = vrot.slane %v9140, 1
        %v9183 = vsel %vm9165, %v9181, %v9182
        %v9184 = vrot.slane %v9121, 1
        %v9185 = vrot.slane %v9141, 1
        %v9186 = vsel %vm9165, %v9184, %v9185
        %v9187 = vrot.slane %v9122, 1
        %v9188 = vrot.slane %v9142, 1
        %v9189 = vsel %vm9165, %v9187, %v9188
        %v9190 = vrot.slane %v9123, 1
        %v9191 = vrot.slane %v9143, 1
        %v9192 = vsel %vm9165, %v9190, %v9191
        %v9193 = vrot.slane %v9124, 1
        %v9194 = vrot.slane %v9144, 1
        %v9195 = vsel %vm9165, %v9193, %v9194
        %v9206 = vadd.f32 %v9115, %v9168
        %v9207 = vadd.f32 %v9116, %v9171
        %v9208 = vadd.f32 %v9117, %v9174
        %v9209 = vadd.f32 %v9118, %v9177
        %v9210 = vadd.f32 %v9119, %v9180
        %v9211 = vadd.f32 %v9120, %v9183
        %v9212 = vadd.f32 %v9121, %v9186
        %v9213 = vadd.f32 %v9122, %v9189
        %v9214 = vadd.f32 %v9123, %v9192
        %v9215 = vadd.f32 %v9124, %v9195
        %v9216 = vld [vmem:[#allocation4] sm:$0xe]
        %v9217 = vld [vmem:[#allocation4 + $0x8] sm:$0xe]
        %v9218 = vld [vmem:[#allocation4 + $0x10] sm:$0xe]
        %v9219 = vld [vmem:[#allocation4 + $0x18] sm:$0xe]
        %v9220 = vld [vmem:[#allocation4 + $0x20] sm:$0xe]
        %v9221 = vld [vmem:[#allocation4 + $0x28] sm:$0xe]
        %v9222 = vld [vmem:[#allocation4 + $0x30] sm:$0xe]
        %v9223 = vld [vmem:[#allocation4 + $0x38] sm:$0xe]
        %v9224 = vld [vmem:[#allocation4 + $0x40] sm:$0xe]
        %v9225 = vld [vmem:[#allocation4 + $0x48] sm:$0xe]
        %v9226 = vunpack.c.l.bf16 %v9216
        %v9227 = vunpack.c.l.bf16 %v9217
        %v9228 = vunpack.c.l.bf16 %v9218
        %v9229 = vunpack.c.l.bf16 %v9219
        %v9230 = vunpack.c.l.bf16 %v9220
        %v9231 = vunpack.c.l.bf16 %v9221
        %v9232 = vunpack.c.l.bf16 %v9222
        %v9233 = vunpack.c.l.bf16 %v9223
        %v9234 = vunpack.c.l.bf16 %v9224
        %v9235 = vunpack.c.l.bf16 %v9225
        %vm9246 = vcmask 1045504
        %v9247 = vrot.slane %v9226, 2
        %v9248 = vrot.slane %v9135, 2
        %v9249 = vsel %vm9246, %v9247, %v9248
        %v9250 = vrot.slane %v9227, 2
        %v9251 = vrot.slane %v9136, 2
        %v9252 = vsel %vm9246, %v9250, %v9251
        %v9253 = vrot.slane %v9228, 2
        %v9254 = vrot.slane %v9137, 2
        %v9255 = vsel %vm9246, %v9253, %v9254
        %v9256 = vrot.slane %v9229, 2
        %v9257 = vrot.slane %v9138, 2
        %v9258 = vsel %vm9246, %v9256, %v9257
        %v9259 = vrot.slane %v9230, 2
        %v9260 = vrot.slane %v9139, 2
        %v9261 = vsel %vm9246, %v9259, %v9260
        %v9262 = vrot.slane %v9231, 2
        %v9263 = vrot.slane %v9140, 2
        %v9264 = vsel %vm9246, %v9262, %v9263
        %v9265 = vrot.slane %v9232, 2
        %v9266 = vrot.slane %v9141, 2
        %v9267 = vsel %vm9246, %v9265, %v9266
        %v9268 = vrot.slane %v9233, 2
        %v9269 = vrot.slane %v9142, 2
        %v9270 = vsel %vm9246, %v9268, %v9269
        %v9271 = vrot.slane %v9234, 2
        %v9272 = vrot.slane %v9143, 2
        %v9273 = vsel %vm9246, %v9271, %v9272
        %v9274 = vrot.slane %v9235, 2
        %v9275 = vrot.slane %v9144, 2
        %v9276 = vsel %vm9246, %v9274, %v9275
        %v9287 = vadd.f32 %v9206, %v9249
        %v9288 = vadd.f32 %v9207, %v9252
        %v9289 = vadd.f32 %v9208, %v9255
        %v9290 = vadd.f32 %v9209, %v9258
        %v9291 = vadd.f32 %v9210, %v9261
        %v9292 = vadd.f32 %v9211, %v9264
        %v9293 = vadd.f32 %v9212, %v9267
        %v9294 = vadd.f32 %v9213, %v9270
        %v9295 = vadd.f32 %v9214, %v9273
        %v9296 = vadd.f32 %v9215, %v9276
        %v9297 = vadd.f32 %v9287, %v9288
        %v9298 = vadd.f32 %v9288, %v9289
        %v9299 = vadd.f32 %v9289, %v9290
        %v9300 = vadd.f32 %v9290, %v9291
        %v9301 = vadd.f32 %v9291, %v9292
        %v9302 = vadd.f32 %v9292, %v9293
        %v9303 = vadd.f32 %v9293, %v9294
        %v9304 = vadd.f32 %v9294, %v9295
        %v9305 = vadd.f32 %v9297, %v9289
        %v9306 = vadd.f32 %v9298, %v9290
        %v9307 = vadd.f32 %v9299, %v9291
        %v9308 = vadd.f32 %v9300, %v9292
        %v9309 = vadd.f32 %v9301, %v9293
        %v9310 = vadd.f32 %v9302, %v9294
        %v9311 = vadd.f32 %v9303, %v9295
        %v9312 = vadd.f32 %v9304, %v9296
        %v9313 = vmul.f32 %v9305, 0.11111111
        %v9314 = vmul.f32 %v9306, 0.11111111
        %v9315 = vmul.f32 %v9307, 0.11111111
        %v9316 = vmul.f32 %v9308, 0.11111111
        %v9317 = vmul.f32 %v9309, 0.11111111
        %v9318 = vmul.f32 %v9310, 0.11111111
        %v9319 = vmul.f32 %v9311, 0.11111111
        %v9320 = vmul.f32 %v9312, 0.11111111
        %v9321 = vpack.c.bf16 %v9313, %v9313
        %v9322 = vpack.c.bf16 %v9314, %v9314
        %v9323 = vpack.c.bf16 %v9315, %v9315
        %v9324 = vpack.c.bf16 %v9316, %v9316
        %v9325 = vpack.c.bf16 %v9317, %v9317
        %v9326 = vpack.c.bf16 %v9318, %v9318
        %v9327 = vpack.c.bf16 %v9319, %v9319
        %v9328 = vpack.c.bf16 %v9320, %v9320
        %v9329 = vld [vmem:[#allocation31] sm:$0xff]
        %v9330 = vld [vmem:[#allocation31 + $0x8] sm:$0xff]
        %v9331 = vld [vmem:[#allocation32] sm:$0x3]
        %v9333 = vlaneseq
        %v9334 = vshrl.u32 %v9333, 7
        %v9335 = vsub.s32 0, %v9334
        %v9336 = vrot.slane %v9331, %v9335
        %v9337 = vlaneseq
        %v9338 = vshrl.u32 %v9337, 7
        %v9339 = vsub.s32 1, %v9338
        %v9340 = vrot.slane %v9331, %v9339
        %v9351 = vunpack.c.l.b16 %v9321
        %v9352 = vunpack.c.l.b16 %v9322
        %v9353 = vunpack.c.l.b16 %v9323
        %v9354 = vunpack.c.l.b16 %v9324
        %v9355 = vunpack.c.l.b16 %v9325
        %v9356 = vunpack.c.l.b16 %v9326
        %v9357 = vunpack.c.l.b16 %v9327
        %v9358 = vunpack.c.l.b16 %v9328
        %v9359 = vpack.c.b16 %v9352, %v9351
        %v9360 = vpack.c.b16 %v9354, %v9353
        %v9361 = vpack.c.b16 %v9356, %v9355
        %v9362 = vpack.c.b16 %v9358, %v9357
        %v9365 = vunpack.c.l.b16 %v9329
        %v9366 = vunpack.c.h.b16 %v9329
        %v9367 = vunpack.c.l.b16 %v9330
        %v9368 = vunpack.c.h.b16 %v9330
        %v9369 = vpack.c.b16 %v9367, %v9365
        %v9370 = vpack.c.b16 %v9368, %v9366
        %v9374 = vsel %vm1003, %v9359, 0
        %v9377 = vsel %vm1003, %v9360, 0
        %v9380 = vsel %vm1003, %v9361, 0
        %v9383 = vsel %vm1003, %v9362, 0
        %9385 = vmatprep.subr.bf16.mxu0 0
        %9386 = vmatpush1.bf16.msra.mxu0 0
        %9387 = vmatprep.subr.bf16.mxu0 0
        %9388 = vmatpush1.bf16.msra.mxu0 0
        %9389 = vmatprep.subr.bf16.mxu0 0
        %9390 = vmatpush1.bf16.msra.mxu0 0
        %9391 = vmatprep.subr.bf16.mxu0 0
        %9392 = vmatpush1.bf16.msra.mxu0 0
        %9393 = vmatprep.subr.bf16.mxu0 0
        %9394 = vmatpush1.bf16.msra.mxu0 0
        %9395 = vmatprep.subr.bf16.mxu0 0
        %9396 = vmatpush1.bf16.msra.mxu0 0
        %9397 = vmatprep.subr.bf16.mxu0 0
        %9398 = vmatpush1.bf16.msra.mxu0 0
        %9399 = vmatprep.subr.bf16.mxu0 %v9370
        %9400 = vmatpush1.bf16.msra.mxu0 %v9369
        %9401 = vmatprep.subr.bf16.mxu0 0
        %9402 = vmatpush2.bf16.msra.mxu0 0
        %9403 = vmatprep.subr.bf16.mxu0 0
        %9404 = vmatpush2.bf16.msra.mxu0 0
        %9405 = vmatprep.subr.bf16.mxu0 0
        %9406 = vmatpush2.bf16.msra.mxu0 0
        %9407 = vmatprep.subr.bf16.mxu0 0
        %9408 = vmatpush2.bf16.msra.mxu0 0
        %9409 = vmatprep.subr.bf16.mxu0 0
        %9410 = vmatpush2.bf16.msra.mxu0 0
        %9411 = vmatprep.subr.bf16.mxu0 0
        %9412 = vmatpush2.bf16.msra.mxu0 0
        %9413 = vmatprep.subr.bf16.mxu0 0
        %9414 = vmatpush2.bf16.msra.mxu0 0
        %9415 = vmatprep.subr.bf16.mxu0 0
        %9416 = vmatpush2.bf16.msra.mxu0 0
        %9417 = vmatprep.mubr.bf16.mxu0 0
        %9418 = vmatmul.mubr.bf16.gmra.mxu0 %v9374
        %v9419 = vpop.f32.mrf.mxu0
        %v9420 = vadd.f32 %v9336, %v9419
        %v9421 = vpop.f32.mrf.mxu0
        %v9422 = vadd.f32 %v9340, %v9421
        %v9423 = vpop.f32.mrf.mxu0
        %v9424 = vadd.f32 %v9336, %v9423
        %v9425 = vpop.f32.mrf.mxu0
        %v9426 = vadd.f32 %v9340, %v9425
        %9427 = vmatprep.mubr.bf16.mxu0 0
        %9428 = vmatmul.mubr.bf16.gmra.mxu0 %v9377
        %v9429 = vpop.f32.mrf.mxu0
        %v9430 = vadd.f32 %v9336, %v9429
        %v9431 = vpop.f32.mrf.mxu0
        %v9432 = vadd.f32 %v9340, %v9431
        %v9433 = vpop.f32.mrf.mxu0
        %v9434 = vadd.f32 %v9336, %v9433
        %v9435 = vpop.f32.mrf.mxu0
        %v9436 = vadd.f32 %v9340, %v9435
        %9437 = vmatprep.mubr.bf16.mxu0 0
        %9438 = vmatmul.mubr.bf16.gmra.mxu0 %v9380
        %v9439 = vpop.f32.mrf.mxu0
        %v9440 = vadd.f32 %v9336, %v9439
        %v9441 = vpop.f32.mrf.mxu0
        %v9442 = vadd.f32 %v9340, %v9441
        %v9443 = vpop.f32.mrf.mxu0
        %v9444 = vadd.f32 %v9336, %v9443
        %v9445 = vpop.f32.mrf.mxu0
        %v9446 = vadd.f32 %v9340, %v9445
        %9447 = vmatprep.mubr.bf16.mxu0 0
        %9448 = vmatmul.mubr.bf16.gmra.mxu0 %v9383
        %v9449 = vpop.f32.mrf.mxu0
        %v9450 = vadd.f32 %v9336, %v9449
        %v9451 = vpop.f32.mrf.mxu0
        %v9452 = vadd.f32 %v9340, %v9451
        %v9453 = vpop.f32.mrf.mxu0
        %v9454 = vadd.f32 %v9336, %v9453
        %v9455 = vpop.f32.mrf.mxu0
        %v9456 = vadd.f32 %v9340, %v9455
        %9457 = vdwg.mxu0
        %v9458 = vmax.f32 %v9420, 0.0
        %v9459 = vmax.f32 %v9422, 0.0
        %v9460 = vmax.f32 %v9424, 0.0
        %v9461 = vmax.f32 %v9426, 0.0
        %v9462 = vmax.f32 %v9430, 0.0
        %v9463 = vmax.f32 %v9432, 0.0
        %v9464 = vmax.f32 %v9434, 0.0
        %v9465 = vmax.f32 %v9436, 0.0
        %v9466 = vmax.f32 %v9440, 0.0
        %v9467 = vmax.f32 %v9442, 0.0
        %v9468 = vmax.f32 %v9444, 0.0
        %v9469 = vmax.f32 %v9446, 0.0
        %v9470 = vmax.f32 %v9450, 0.0
        %v9471 = vmax.f32 %v9452, 0.0
        %v9472 = vmax.f32 %v9454, 0.0
        %v9473 = vmax.f32 %v9456, 0.0
        %9490 = vrot.lane.b32.xlu0 %v9458, 64
        %v9491 = vpop.permute.xlu0 %9490
        %9492 = vrot.lane.b32.xlu0 %v9459, 64
        %v9493 = vpop.permute.xlu0 %9492
        %9494 = vrot.lane.b32.xlu0 %v9460, 64
        %v9495 = vpop.permute.xlu0 %9494
        %9496 = vrot.lane.b32.xlu0 %v9461, 64
        %v9497 = vpop.permute.xlu0 %9496
        %9498 = vrot.lane.b32.xlu0 %v9462, 64
        %v9499 = vpop.permute.xlu0 %9498
        %9500 = vrot.lane.b32.xlu0 %v9463, 64
        %v9501 = vpop.permute.xlu0 %9500
        %9502 = vrot.lane.b32.xlu0 %v9464, 64
        %v9503 = vpop.permute.xlu0 %9502
        %9504 = vrot.lane.b32.xlu0 %v9465, 64
        %v9505 = vpop.permute.xlu0 %9504
        %9506 = vrot.lane.b32.xlu0 %v9466, 64
        %v9507 = vpop.permute.xlu0 %9506
        %9508 = vrot.lane.b32.xlu0 %v9467, 64
        %v9509 = vpop.permute.xlu0 %9508
        %9510 = vrot.lane.b32.xlu0 %v9468, 64
        %v9511 = vpop.permute.xlu0 %9510
        %9512 = vrot.lane.b32.xlu0 %v9469, 64
        %v9513 = vpop.permute.xlu0 %9512
        %9514 = vrot.lane.b32.xlu0 %v9470, 64
        %v9515 = vpop.permute.xlu0 %9514
        %9516 = vrot.lane.b32.xlu0 %v9471, 64
        %v9517 = vpop.permute.xlu0 %9516
        %9518 = vrot.lane.b32.xlu0 %v9472, 64
        %v9519 = vpop.permute.xlu0 %9518
        %9520 = vrot.lane.b32.xlu0 %v9473, 64
        %v9521 = vpop.permute.xlu0 %9520
        %v9522 = vsel %vm1106, %v9491, %v9493
        %v9523 = vsel %vm1106, %v9495, %v9497
        %v9524 = vsel %vm1106, %v9499, %v9501
        %v9525 = vsel %vm1106, %v9503, %v9505
        %v9526 = vsel %vm1106, %v9507, %v9509
        %v9527 = vsel %vm1106, %v9511, %v9513
        %v9528 = vsel %vm1106, %v9515, %v9517
        %v9529 = vsel %vm1106, %v9519, %v9521
        %9546 = vst.msk [vmem:[%s891 + $0x20] sm:$0xff] %vm3872, %v9491
        %9547 = vst [vmem:[%s891 + $0x28] sm:$0xff] %v9522
        %9548 = vst.msk [vmem:[%s891 + $0x50] sm:$0xff] %vm3872, %v9495
        %9549 = vst [vmem:[%s891 + $0x58] sm:$0xff] %v9523
        %9550 = vst.msk [vmem:[%s891 + $0x80] sm:$0xff] %vm3872, %v9499
        %9551 = vst [vmem:[%s891 + $0x88] sm:$0xff] %v9524
        %9552 = vst.msk [vmem:[%s891 + $0xb0] sm:$0xff] %vm3872, %v9503
        %9553 = vst [vmem:[%s891 + $0xb8] sm:$0xff] %v9525
        %9554 = vst.msk [vmem:[%s891 + $0xe0] sm:$0xff] %vm3872, %v9507
        %9555 = vst [vmem:[%s891 + $0xe8] sm:$0xff] %v9526
        %9556 = vst.msk [vmem:[%s891 + $0x110] sm:$0xff] %vm3872, %v9511
        %9557 = vst [vmem:[%s891 + $0x118] sm:$0xff] %v9527
        %9558 = vst.msk [vmem:[%s891 + $0x140] sm:$0xff] %vm3872, %v9515
        %9559 = vst [vmem:[%s891 + $0x148] sm:$0xff] %v9528
        %9560 = vst.msk [vmem:[%s891 + $0x170] sm:$0xff] %vm3872, %v9519
        %9561 = vst [vmem:[%s891 + $0x178] sm:$0xff] %v9529
        %s9562 = sand.u32 %s499, 1
        %s9563 = scalar_lea.sflag [#allocation7], %s9562
        %s9564 = sand.u32 %s499, 1
        %s9565 = smul.addr %s9564, 384
        %s9566 = scalar_lea.vmem [#allocation34], %s9565
        // Predicated region
        $region177: #{inception_c.1} parent=103 // pred_check
          %p9567 = pneg %p509
        $region178: #{inception_c.1} parent=103 // pred_check_branch
          %9569 = sbr.rel (%p9567) target = $region180
        $region179: #{inception_c.1} parent=103 // pred_region
          %s9571 = ssub.s32 6144, 6144
          %9572 = vsyncadd %s9563, %s9571
          %s9573 = smul.addr %s45, 48
          %s9574 = smul.addr %s9573, 128
          %s9575 = scalar_lea.hbm %s21, %s9574
          %s9576 = sshll.u32 %s9566, 4
          %s9577 = int_to_ptr.vmem [resolvable:$true] %s9576
          %9582 = dma.vmem_to_hbm [thread:$0]  %s9577, 6144, %s9575, %s9563, 768, 768, 48
        $region180: #{inception_c.1} parent=103 // pred_fallthru
          _
      $region104: #{inception_c.1} parent=5 // pred_fallthru
        _
      %p9583 = scmp.le.s32.totalorder 2, %s40
      // Predicated region
      $region181: #{inception_c.1} parent=5 // pred_check
        %p9584 = pneg %p9583
      $region182: #{inception_c.1} parent=5 // pred_check_branch
        %9586 = sbr.rel (%p9584) target = $region184
      $region183: #{inception_c.1} parent=5 // pred_region
        %s9587 = ssub.s32 %s40, 2
        // Predicated region
        $region185: #{inception_c.1} parent=183 // pred_check
          %p9588 = pneg %p515
        $region186: #{inception_c.1} parent=183 // pred_check_branch
          %9590 = sbr.rel (%p9588) target = $region188
        $region187: #{inception_c.1} parent=183 // pred_region
          %s9591 = sand.u32 %s500, 1
          %s9592 = scalar_lea.sflag [#allocation7], %s9591
          %s9593 = sand.u32 %s500, 1
          %s9594 = smul.addr %s9593, 384
          %s9595 = scalar_lea.vmem [#allocation34], %s9594
          %9596 = dma.done %s9592, 6144
        $region188: #{inception_c.1} parent=183 // pred_fallthru
          _
      $region184: #{inception_c.1} parent=5 // pred_fallthru
        _
    $region6: #{inception_c.1} parent=1 // loop_footer
      %s44 = sadd.s32 1, %s40
    $region7: #{inception_c.1} parent=1 // loop_footer_branch
      %39 = sbr.rel target = $region3
    $region8: #{inception_c.1} parent=1 // loop_exit
      _
    %9597 = vsyncpa [#allocation6], 1
    %s9598 = scalar_lea.sflag [#allocation6], 1
    %9599 = vsyncpa %s9598, 1
    %9600 = vsyncpa [#allocation9], 1
    %9601 = vsyncpa [#allocation12], 1
    %9602 = vsyncpa [#allocation15], 1
    %9603 = vsyncpa [#allocation18], 1
    %9604 = vsyncpa [#allocation21], 1
    %9605 = vsyncpa [#allocation24], 1
    %9606 = vsyncpa [#allocation27], 1
    %9607 = vsyncpa [#allocation30], 1
    %9608 = vsyncpa [#allocation33], 1
    %9609 = vsyncpa [#allocation7], 1
    %s9610 = scalar_lea.sflag [#allocation7], 1
    %9611 = vsyncpa %s9610, 1

</llo_original>
